<compile_context>
chip_gen: v7x
topology: tpu7x:2x2x1
jax: 0.10.0
libtpu: 0.0.40
codegen_flags: <defaults>
</compile_context>

<pallas_src>
import functools
import math

import jax
import jax.numpy as jnp
from jax import lax
from jax.experimental import pallas as pl
from jax.experimental.pallas import tpu as pltpu


# ----------------------------- Pallas kernels ------------------------------

def fc_kernel(z_ref, w1_ref, b1_ref, w2_ref, b2_ref, o_ref):
    """Fused Linear(latent,256)+ReLU and one column tile of Linear(256,12800)+ReLU.

    fc1 is recomputed per grid step (it is tiny: [B,latent]x[latent,256]),
    which keeps the grid axis embarrassingly parallel / megacore-safe.
    """
    h = jnp.dot(z_ref[...], w1_ref[...], preferred_element_type=jnp.float32)
    h = jnp.maximum(h + b1_ref[...], 0.0)
    y = jnp.dot(h.astype(jnp.bfloat16), w2_ref[...],
                preferred_element_type=jnp.float32)
    o_ref[...] = jnp.maximum(y + b2_ref[...], 0.0)


def ct_kernel(x_ref, w_ref, shift_ref, o_ref, *, act):
    """ConvTranspose2d(k=4, s=2, p=1) [+ folded BN] + activation, phase-packed.

      x_ref:     [tile_m, 9*Cin]    bf16 im2col rows of the padded input;
                                    column block (sy*3+sx) = view shifted (sy,sx)
      w_ref:     [9*Cin, 4*Cout]    bf16; column block p = py*2+px holds that
                                    phase's taps folded into K (unused taps 0),
                                    BN scale pre-folded
      shift_ref: [1, 4*Cout]        f32 conv-bias + BN shift, tiled per phase
      o_ref:     [tile_m, 4*Cout]   f32, lane-dense
    """
    y = jnp.dot(x_ref[...], w_ref[...], preferred_element_type=jnp.float32)
    y = y + shift_ref[...]
    if act == "relu":
        y = jnp.maximum(y, 0.0)
    else:  # sigmoid
        y = jax.nn.sigmoid(y)
    o_ref[...] = y


# ------------------------------ call wrappers ------------------------------

def decoder_fc(z, w1, b1, w2, b2, *, tile_n=3200):
    B, latent = z.shape
    K, N = w2.shape
    assert N % tile_n == 0 and tile_n % 128 == 0
    return pl.pallas_call(
        fc_kernel,
        out_shape=jax.ShapeDtypeStruct((B, N), jnp.float32),
        grid_spec=pltpu.PrefetchScalarGridSpec(
            num_scalar_prefetch=0,
            grid=(N // tile_n,),
            in_specs=[
                pl.BlockSpec((B, latent), lambda i: (0, 0)),
                pl.BlockSpec((latent, K), lambda i: (0, 0)),
                pl.BlockSpec((1, K), lambda i: (0, 0)),
                pl.BlockSpec((K, tile_n), lambda i: (0, i)),
                pl.BlockSpec((1, tile_n), lambda i: (0, i)),
            ],
            out_specs=pl.BlockSpec((B, tile_n), lambda i: (0, i)),
        ),
        compiler_params=pltpu.CompilerParams(dimension_semantics=("parallel",)),
    )(z, w1, b1, w2, b2)


def _pick_tile_m(m, cap=1024):
    """Largest divisor of m that is a multiple of 8 and <= cap; falls back to m."""
    if m <= cap:
        return m
    best = m
    for d in range(8, min(m // 2, cap) + 1, 8):
        if m % d == 0:
            best = d
    return best


def conv_transpose_2x(x_nhwc, w_folded, shift4, act):
    """ConvTranspose2d(kernel=4, stride=2, padding=1) in NHWC via one phase-packed matmul."""
    B, H, W, Cin = x_nhwc.shape
    K, N4 = w_folded.shape
    Cout = N4 // 4
    M = B * H * W
    assert K == 9 * Cin

    # Lane-dense im2col of the zero-padded input: [M, 9*Cin], column block
    # (sy*3+sx) holds xpad[:, sy:sy+H, sx:sx+W, :] flattened over (b, i, j).
    xpad = jnp.pad(x_nhwc, ((0, 0), (1, 1), (1, 1), (0, 0)))
    views = [xpad[:, sy:sy + H, sx:sx + W, :]
             for sy in range(3) for sx in range(3)]
    lhs = jnp.concatenate(views, axis=-1).reshape(M, 9 * Cin).astype(jnp.bfloat16)

    tile_m = _pick_tile_m(M)
    assert M % tile_m == 0

    out = pl.pallas_call(
        functools.partial(ct_kernel, act=act),
        out_shape=jax.ShapeDtypeStruct((M, N4), jnp.float32),
        grid_spec=pltpu.PrefetchScalarGridSpec(
            num_scalar_prefetch=0,
            grid=(M // tile_m,),
            in_specs=[
                pl.BlockSpec((tile_m, 9 * Cin), lambda i: (i, 0)),
                pl.BlockSpec((K, N4), lambda i: (0, 0)),
                pl.BlockSpec((1, N4), lambda i: (0, 0)),
            ],
            out_specs=pl.BlockSpec((tile_m, N4), lambda i: (i, 0)),
        ),
        compiler_params=pltpu.CompilerParams(dimension_semantics=("parallel",)),
    )(lhs, w_folded, shift4)

    # Un-pack the phases: out[b*H*W + i*W + j, (py*2+px)*Cout + c]
    #   -> y[b, 2i+py, 2j+px, c]
    phases = out.reshape(B, H, W, 2, 2, Cout)
    return jnp.transpose(phases, (0, 1, 3, 2, 4, 5)).reshape(B, 2 * H, 2 * W, Cout)


# ------------------------------- parameters --------------------------------

def make_folded_ct_weight(w_pt, scale):
    """PyTorch ConvTranspose2d weight [Cin, Cout, 4, 4] -> [9*Cin, 4*Cout] bf16.

    Output column block p = py*2+px.  The K axis is the (sy, sx, cin) im2col
    order; the 4 valid taps for phase (py, px) are placed at (sy, sx) =
    (py+dy, px+dx), dy,dx in {0,1}, using kernel entry wk[3-py-2dy, 3-px-2dx];
    all other tap blocks are zero.  BN scale is folded in before the bf16 cast.
    """
    Cin, Cout = w_pt.shape[0], w_pt.shape[1]
    wk = jnp.transpose(w_pt, (2, 3, 0, 1)) * scale          # [ky, kx, Cin, Cout]
    zeros = jnp.zeros((Cin, Cout), jnp.float32)
    cols = []
    for py in range(2):
        for px in range(2):
            blocks = []
            for sy in range(3):
                for sx in range(3):
                    dy, dx = sy - py, sx - px
                    if 0 <= dy <= 1 and 0 <= dx <= 1:
                        blocks.append(wk[3 - py - 2 * dy, 3 - px - 2 * dx])
                    else:
                        blocks.append(zeros)
            cols.append(jnp.concatenate(blocks, axis=0))     # [9*Cin, Cout]
    return jnp.concatenate(cols, axis=1).astype(jnp.bfloat16)  # [9*Cin, 4*Cout]


def init_params(key, latent_dim, state_channels):
    ks = jax.random.split(key, 10)
    eps = 1e-5

    def u(k, shape, fan_in):
        bound = 1.0 / math.sqrt(fan_in)
        return jax.random.uniform(k, shape, jnp.float32, -bound, bound)

    # ---- raw params (PyTorch layout), used by the pure-JAX reference ----
    raw = {}
    raw["w1"] = u(ks[0], (latent_dim, 256), latent_dim)        # [in, out]
    raw["b1"] = u(ks[1], (256,), latent_dim)
    raw["w2_pt"] = u(ks[2], (128 * 10 * 10, 256), 256)         # PyTorch [out, in]
    raw["b2_pt"] = u(ks[3], (128 * 10 * 10,), 256)

    def ct_raw(kw, kb, cin, cout, with_bn):
        w = u(kw, (cin, cout, 4, 4), cout * 16)                # [Cin, Cout, 4, 4]
        b = u(kb, (cout,), cout * 16)
        bn = None
        if with_bn:
            bn = (jnp.ones((cout,), jnp.float32),              # gamma
                  jnp.zeros((cout,), jnp.float32),             # beta
                  jnp.zeros((cout,), jnp.float32),             # running_mean
                  jnp.ones((cout,), jnp.float32))              # running_var
        return (w, b, bn)

    raw["ct1"] = ct_raw(ks[4], ks[5], 128, 64, True)
    raw["ct2"] = ct_raw(ks[6], ks[7], 64, 32, True)
    raw["ct3"] = ct_raw(ks[8], ks[9], 32, state_channels, False)

    # ---- kernel params (folded / permuted / bf16) ----
    ker = {}
    ker["w1"] = raw["w1"]
    ker["b1"] = raw["b1"].reshape(1, 256)
    # Permute fc2 output features from (C=128,H=10,W=10) flat order (PyTorch
    # x.view(-1,128,10,10)) into NHWC flat order so the kernel output reshapes
    # directly to [B, 10, 10, 128].  Weight stored bf16 (halves the HBM stream).
    w2 = jnp.transpose(raw["w2_pt"].T.reshape(256, 128, 10, 10), (0, 2, 3, 1))
    ker["w2"] = w2.reshape(256, 12800).astype(jnp.bfloat16)
    ker["b2"] = jnp.transpose(raw["b2_pt"].reshape(128, 10, 10),
                              (1, 2, 0)).reshape(1, 12800)

    def fold(ct):
        w, b, bn = ct
        cout = w.shape[1]
        if bn is not None:
            gamma, beta, mean, var = bn
            scale = gamma / jnp.sqrt(var + eps)
            shift = beta + (b - mean) * scale
        else:
            scale = jnp.ones((cout,), jnp.float32)
            shift = b
        w_folded = make_folded_ct_weight(w, scale)             # BN scale folded in
        shift4 = jnp.tile(shift, 4).reshape(1, 4 * cout)       # same shift per phase
        return w_folded, shift4

    ker["ct1"] = fold(raw["ct1"])
    ker["ct2"] = fold(raw["ct2"])
    ker["ct3"] = fold(raw["ct3"])
    return ker, raw


# -------------------------------- forward ----------------------------------

@jax.jit
def decoder_forward(params, z):
    B = z.shape[0]
    h = decoder_fc(z, params["w1"], params["b1"],
                   params["w2"], params["b2"])                 # [B, 12800]
    x = h.reshape(B, 10, 10, 128)                              # NHWC
    x = conv_transpose_2x(x, *params["ct1"], act="relu")       # [B, 20, 20, 64]
    x = conv_transpose_2x(x, *params["ct2"], act="relu")       # [B, 40, 40, 32]
    x = conv_transpose_2x(x, *params["ct3"], act="sigmoid")    # [B, 80, 80, Cs]
    return jnp.transpose(x, (0, 3, 1, 2))                      # NCHW, like PyTorch


@jax.jit
def decoder_reference(raw, z):
    """Pure-JAX (no Pallas) reference of the PyTorch Decoder forward (eval mode)."""
    eps = 1e-5
    h = jnp.maximum(z @ raw["w1"] + raw["b1"], 0.0)
    x = jnp.maximum(h @ raw["w2_pt"].T + raw["b2_pt"], 0.0)
    x = x.reshape(-1, 128, 10, 10)
    for name, act in (("ct1", "relu"), ("ct2", "relu"), ("ct3", "sigmoid")):
        w, b, bn = raw[name]
        # ConvTranspose2d(k=4,s=2,p=1) == conv(lhs_dilation=2, pad=2, flipped kernel).
        wf = jnp.transpose(jnp.flip(w, (2, 3)), (1, 0, 2, 3))  # [Cout, Cin, 4, 4]
        x = lax.conv_general_dilated(
            x, wf, window_strides=(1, 1), padding=((2, 2), (2, 2)),
            lhs_dilation=(2, 2), dimension_numbers=("NCHW", "OIHW", "NCHW"))
        x = x + b[None, :, None, None]
        if bn is not None:
            gamma, beta, mean, var = bn
            inv = (gamma / jnp.sqrt(var + eps))[None, :, None, None]
            x = (x - mean[None, :, None, None]) * inv + beta[None, :, None, None]
        x = jnp.maximum(x, 0.0) if act == "relu" else jax.nn.sigmoid(x)
    return x


if __name__ == "__main__":
    latent_dim, state_channels, batch = 32, 4, 2
    key = jax.random.PRNGKey(0)
    kp, kz = jax.random.split(key)
    params, raw = init_params(kp, latent_dim, state_channels)
    z = jax.random.normal(kz, (batch, latent_dim), jnp.float32)

    out = jax.block_until_ready(decoder_forward(params, z))
    assert out.shape == (batch, state_channels, 80, 80), out.shape
    assert bool(jnp.isfinite(out).all())
    assert bool((out >= 0.0).all()) and bool((out <= 1.0).all())  # sigmoid range

    ref = jax.block_until_ready(decoder_reference(raw, z))
    max_err = float(jnp.max(jnp.abs(out - ref)))
    assert max_err < 3e-2, f"max abs error vs reference: {max_err}"

    print("KERNEL_OK")
</pallas_src>

<mosaic_0001>
module attributes {stable_mosaic.version = 11 : i64} {
  func.func @fc_kernel(%arg0: i32, %arg1: memref<2x32xf32, #tpu.memory_space<vmem>>, %arg2: memref<32x256xf32, #tpu.memory_space<vmem>>, %arg3: memref<1x256xf32, #tpu.memory_space<vmem>>, %arg4: memref<256x3200xbf16, #tpu.memory_space<vmem>>, %arg5: memref<1x3200xf32, #tpu.memory_space<vmem>>, %arg6: memref<2x3200xf32, #tpu.memory_space<vmem>>) attributes {dimension_semantics = [#tpu.dimension_semantics<parallel>], iteration_bounds = array<i64: 4>, scalar_prefetch = 0 : i64, scratch_operands = 0 : i64, tpu.core_type = #tpu.core_type<tc>, window_params = [{pipeline_mode = #tpu.pipeline_mode<synchronous>, transform_indices = @transform_0, window_bounds = array<i64: 2, 32>}, {pipeline_mode = #tpu.pipeline_mode<synchronous>, transform_indices = @transform_1, window_bounds = array<i64: 32, 256>}, {pipeline_mode = #tpu.pipeline_mode<synchronous>, transform_indices = @transform_2, window_bounds = array<i64: 1, 256>}, {transform_indices = @transform_3, window_bounds = array<i64: 256, 3200>}, {transform_indices = @transform_4, window_bounds = array<i64: 1, 3200>}, {transform_indices = @transform_5, window_bounds = array<i64: 2, 3200>}]} {
    %c0 = arith.constant 0 : index
    %c0_0 = arith.constant 0 : index
    %0 = vector.load %arg1[%c0, %c0_0] : memref<2x32xf32, #tpu.memory_space<vmem>>, vector<2x32xf32>
    %c0_1 = arith.constant 0 : index
    %c0_2 = arith.constant 0 : index
    %1 = vector.load %arg2[%c0_1, %c0_2] : memref<32x256xf32, #tpu.memory_space<vmem>>, vector<32x256xf32>
    %cst = arith.constant dense<0.000000e+00> : vector<2x256xf32>
    %2 = tpu.matmul %0, %1, %cst {dimension_numbers = #tpu.dot_dimension_numbers<[1], [0], [0], [1], [0, 0, 1, 1], [], []>} : vector<2x32xf32>, vector<32x256xf32>, vector<2x256xf32> -> vector<2x256xf32>
    %c0_3 = arith.constant 0 : index
    %c0_4 = arith.constant 0 : index
    %3 = vector.load %arg3[%c0_3, %c0_4] : memref<1x256xf32, #tpu.memory_space<vmem>>, vector<1x256xf32>
    %4 = vector.broadcast %3 : vector<1x256xf32> to vector<2x256xf32>
    %5 = arith.addf %2, %4 : vector<2x256xf32>
    %cst_5 = arith.constant 0.000000e+00 : f32
    %6 = vector.broadcast %cst_5 : f32 to vector<2x256xf32>
    %7 = arith.maximumf %5, %6 : vector<2x256xf32>
    %8 = arith.truncf %7 : vector<2x256xf32> to vector<2x256xbf16>
    %c0_6 = arith.constant 0 : index
    %c0_7 = arith.constant 0 : index
    %9 = vector.load %arg4[%c0_6, %c0_7] : memref<256x3200xbf16, #tpu.memory_space<vmem>>, vector<256x3200xbf16>
    %cst_8 = arith.constant dense<0.000000e+00> : vector<2x3200xf32>
    %10 = tpu.matmul %8, %9, %cst_8 {dimension_numbers = #tpu.dot_dimension_numbers<[1], [0], [0], [1], [0, 0, 1, 1], [], []>} : vector<2x256xbf16>, vector<256x3200xbf16>, vector<2x3200xf32> -> vector<2x3200xf32>
    %c0_9 = arith.constant 0 : index
    %c0_10 = arith.constant 0 : index
    %11 = vector.load %arg5[%c0_9, %c0_10] : memref<1x3200xf32, #tpu.memory_space<vmem>>, vector<1x3200xf32>
    %12 = vector.broadcast %11 : vector<1x3200xf32> to vector<2x3200xf32>
    %13 = arith.addf %10, %12 : vector<2x3200xf32>
    %cst_11 = arith.constant 0.000000e+00 : f32
    %14 = vector.broadcast %cst_11 : f32 to vector<2x3200xf32>
    %15 = arith.maximumf %13, %14 : vector<2x3200xf32>
    %c0_12 = arith.constant 0 : index
    %c0_13 = arith.constant 0 : index
    %16 = vector.load %arg6[%c0_12, %c0_13] : memref<2x3200xf32, #tpu.memory_space<vmem>>, vector<2x3200xf32>
    tpu.vector_store %arg6[%c0_12, %c0_13], %15 {strides = array<i32>} : memref<2x3200xf32, #tpu.memory_space<vmem>>, vector<2x3200xf32>,
    return
  }
  func.func @transform_0(%arg0: i32) -> (i32, i32) {
    %c0_i32 = arith.constant 0 : i32
    %c0_i32_0 = arith.constant 0 : i32
    %c0_i32_1 = arith.constant 0 : i32
    return %c0_i32, %c0_i32_0 : i32, i32
  }
  func.func @transform_1(%arg0: i32) -> (i32, i32) {
    %c0_i32 = arith.constant 0 : i32
    %c0_i32_0 = arith.constant 0 : i32
    %c0_i32_1 = arith.constant 0 : i32
    return %c0_i32, %c0_i32_0 : i32, i32
  }
  func.func @transform_2(%arg0: i32) -> (i32, i32) {
    %c0_i32 = arith.constant 0 : i32
    %c0_i32_0 = arith.constant 0 : i32
    %c0_i32_1 = arith.constant 0 : i32
    return %c0_i32, %c0_i32_0 : i32, i32
  }
  func.func @transform_3(%arg0: i32) -> (i32, i32) {
    %c0_i32 = arith.constant 0 : i32
    %c0_i32_0 = arith.constant 0 : i32
    return %c0_i32, %arg0 : i32, i32
  }
  func.func @transform_4(%arg0: i32) -> (i32, i32) {
    %c0_i32 = arith.constant 0 : i32
    %c0_i32_0 = arith.constant 0 : i32
    return %c0_i32, %arg0 : i32, i32
  }
  func.func @transform_5(%arg0: i32) -> (i32, i32) {
    %c0_i32 = arith.constant 0 : i32
    %c0_i32_0 = arith.constant 0 : i32
    return %c0_i32, %arg0 : i32, i32
  }
}

module attributes {stable_mosaic.version = 11 : i64} {
  func.func @ct_kernel(%arg0: i32, %arg1: memref<200x1152xbf16, #tpu.memory_space<vmem>>, %arg2: memref<1152x256xbf16, #tpu.memory_space<vmem>>, %arg3: memref<1x256xf32, #tpu.memory_space<vmem>>, %arg4: memref<200x256xf32, #tpu.memory_space<vmem>>) attributes {dimension_semantics = [#tpu.dimension_semantics<parallel>], iteration_bounds = array<i64: 1>, scalar_prefetch = 0 : i64, scratch_operands = 0 : i64, tpu.core_type = #tpu.core_type<tc>, window_params = [{transform_indices = @transform_0, window_bounds = array<i64: 200, 1152>}, {pipeline_mode = #tpu.pipeline_mode<synchronous>, transform_indices = @transform_1, window_bounds = array<i64: 1152, 256>}, {pipeline_mode = #tpu.pipeline_mode<synchronous>, transform_indices = @transform_2, window_bounds = array<i64: 1, 256>}, {transform_indices = @transform_3, window_bounds = array<i64: 200, 256>}]} {
    %c0 = arith.constant 0 : index
    %c0_0 = arith.constant 0 : index
    %0 = vector.load %arg1[%c0, %c0_0] : memref<200x1152xbf16, #tpu.memory_space<vmem>>, vector<200x1152xbf16>
    %c0_1 = arith.constant 0 : index
    %c0_2 = arith.constant 0 : index
    %1 = vector.load %arg2[%c0_1, %c0_2] : memref<1152x256xbf16, #tpu.memory_space<vmem>>, vector<1152x256xbf16>
    %cst = arith.constant dense<0.000000e+00> : vector<200x256xf32>
    %2 = tpu.matmul %0, %1, %cst {dimension_numbers = #tpu.dot_dimension_numbers<[1], [0], [0], [1], [0, 0, 1, 1], [], []>} : vector<200x1152xbf16>, vector<1152x256xbf16>, vector<200x256xf32> -> vector<200x256xf32>
    %c0_3 = arith.constant 0 : index
    %c0_4 = arith.constant 0 : index
    %3 = vector.load %arg3[%c0_3, %c0_4] : memref<1x256xf32, #tpu.memory_space<vmem>>, vector<1x256xf32>
    %4 = vector.broadcast %3 : vector<1x256xf32> to vector<200x256xf32>
    %5 = arith.addf %2, %4 : vector<200x256xf32>
    %cst_5 = arith.constant 0.000000e+00 : f32
    %6 = vector.broadcast %cst_5 : f32 to vector<200x256xf32>
    %7 = arith.maximumf %5, %6 : vector<200x256xf32>
    %c0_6 = arith.constant 0 : index
    %c0_7 = arith.constant 0 : index
    %8 = vector.load %arg4[%c0_6, %c0_7] : memref<200x256xf32, #tpu.memory_space<vmem>>, vector<200x256xf32>
    tpu.vector_store %arg4[%c0_6, %c0_7], %7 {strides = array<i32>} : memref<200x256xf32, #tpu.memory_space<vmem>>, vector<200x256xf32>,
    return
  }
  func.func @transform_0(%arg0: i32) -> (i32, i32) {
    %c0_i32 = arith.constant 0 : i32
    %c0_i32_0 = arith.constant 0 : i32
    return %arg0, %c0_i32 : i32, i32
  }
  func.func @transform_1(%arg0: i32) -> (i32, i32) {
    %c0_i32 = arith.constant 0 : i32
    %c0_i32_0 = arith.constant 0 : i32
    %c0_i32_1 = arith.constant 0 : i32
    return %c0_i32, %c0_i32_0 : i32, i32
  }
  func.func @transform_2(%arg0: i32) -> (i32, i32) {
    %c0_i32 = arith.constant 0 : i32
    %c0_i32_0 = arith.constant 0 : i32
    %c0_i32_1 = arith.constant 0 : i32
    return %c0_i32, %c0_i32_0 : i32, i32
  }
  func.func @transform_3(%arg0: i32) -> (i32, i32) {
    %c0_i32 = arith.constant 0 : i32
    %c0_i32_0 = arith.constant 0 : i32
    return %arg0, %c0_i32 : i32, i32
  }
}

module attributes {stable_mosaic.version = 11 : i64} {
  func.func @ct_kernel(%arg0: i32, %arg1: memref<800x576xbf16, #tpu.memory_space<vmem>>, %arg2: memref<576x128xbf16, #tpu.memory_space<vmem>>, %arg3: memref<1x128xf32, #tpu.memory_space<vmem>>, %arg4: memref<800x128xf32, #tpu.memory_space<vmem>>) attributes {dimension_semantics = [#tpu.dimension_semantics<parallel>], iteration_bounds = array<i64: 1>, scalar_prefetch = 0 : i64, scratch_operands = 0 : i64, tpu.core_type = #tpu.core_type<tc>, window_params = [{transform_indices = @transform_0, window_bounds = array<i64: 800, 576>}, {pipeline_mode = #tpu.pipeline_mode<synchronous>, transform_indices = @transform_1, window_bounds = array<i64: 576, 128>}, {pipeline_mode = #tpu.pipeline_mode<synchronous>, transform_indices = @transform_2, window_bounds = array<i64: 1, 128>}, {transform_indices = @transform_3, window_bounds = array<i64: 800, 128>}]} {
    %c0 = arith.constant 0 : index
    %c0_0 = arith.constant 0 : index
    %0 = vector.load %arg1[%c0, %c0_0] : memref<800x576xbf16, #tpu.memory_space<vmem>>, vector<800x576xbf16>
    %c0_1 = arith.constant 0 : index
    %c0_2 = arith.constant 0 : index
    %1 = vector.load %arg2[%c0_1, %c0_2] : memref<576x128xbf16, #tpu.memory_space<vmem>>, vector<576x128xbf16>
    %cst = arith.constant dense<0.000000e+00> : vector<800x128xf32>
    %2 = tpu.matmul %0, %1, %cst {dimension_numbers = #tpu.dot_dimension_numbers<[1], [0], [0], [1], [0, 0, 1, 1], [], []>} : vector<800x576xbf16>, vector<576x128xbf16>, vector<800x128xf32> -> vector<800x128xf32>
    %c0_3 = arith.constant 0 : index
    %c0_4 = arith.constant 0 : index
    %3 = vector.load %arg3[%c0_3, %c0_4] : memref<1x128xf32, #tpu.memory_space<vmem>>, vector<1x128xf32>
    %4 = vector.broadcast %3 : vector<1x128xf32> to vector<800x128xf32>
    %5 = arith.addf %2, %4 : vector<800x128xf32>
    %cst_5 = arith.constant 0.000000e+00 : f32
    %6 = vector.broadcast %cst_5 : f32 to vector<800x128xf32>
    %7 = arith.maximumf %5, %6 : vector<800x128xf32>
    %c0_6 = arith.constant 0 : index
    %c0_7 = arith.constant 0 : index
    %8 = vector.load %arg4[%c0_6, %c0_7] : memref<800x128xf32, #tpu.memory_space<vmem>>, vector<800x128xf32>
    tpu.vector_store %arg4[%c0_6, %c0_7], %7 {strides = array<i32>} : memref<800x128xf32, #tpu.memory_space<vmem>>, vector<800x128xf32>,
    return
  }
  func.func @transform_0(%arg0: i32) -> (i32, i32) {
    %c0_i32 = arith.constant 0 : i32
    %c0_i32_0 = arith.constant 0 : i32
    return %arg0, %c0_i32 : i32, i32
  }
  func.func @transform_1(%arg0: i32) -> (i32, i32) {
    %c0_i32 = arith.constant 0 : i32
    %c0_i32_0 = arith.constant 0 : i32
    %c0_i32_1 = arith.constant 0 : i32
    return %c0_i32, %c0_i32_0 : i32, i32
  }
  func.func @transform_2(%arg0: i32) -> (i32, i32) {
    %c0_i32 = arith.constant 0 : i32
    %c0_i32_0 = arith.constant 0 : i32
    %c0_i32_1 = arith.constant 0 : i32
    return %c0_i32, %c0_i32_0 : i32, i32
  }
  func.func @transform_3(%arg0: i32) -> (i32, i32) {
    %c0_i32 = arith.constant 0 : i32
    %c0_i32_0 = arith.constant 0 : i32
    return %arg0, %c0_i32 : i32, i32
  }
}

module attributes {stable_mosaic.version = 11 : i64} {
  func.func @ct_kernel(%arg0: i32, %arg1: memref<800x288xbf16, #tpu.memory_space<vmem>>, %arg2: memref<288x16xbf16, #tpu.memory_space<vmem>>, %arg3: memref<1x16xf32, #tpu.memory_space<vmem>>, %arg4: memref<800x16xf32, #tpu.memory_space<vmem>>) attributes {dimension_semantics = [#tpu.dimension_semantics<parallel>], iteration_bounds = array<i64: 4>, scalar_prefetch = 0 : i64, scratch_operands = 0 : i64, tpu.core_type = #tpu.core_type<tc>, window_params = [{transform_indices = @transform_0, window_bounds = array<i64: 800, 288>}, {pipeline_mode = #tpu.pipeline_mode<synchronous>, transform_indices = @transform_1, window_bounds = array<i64: 288, 16>}, {pipeline_mode = #tpu.pipeline_mode<synchronous>, transform_indices = @transform_2, window_bounds = array<i64: 1, 16>}, {transform_indices = @transform_3, window_bounds = array<i64: 800, 16>}]} {
    %c0 = arith.constant 0 : index
    %c0_0 = arith.constant 0 : index
    %0 = vector.load %arg1[%c0, %c0_0] : memref<800x288xbf16, #tpu.memory_space<vmem>>, vector<800x288xbf16>
    %c0_1 = arith.constant 0 : index
    %c0_2 = arith.constant 0 : index
    %1 = vector.load %arg2[%c0_1, %c0_2] : memref<288x16xbf16, #tpu.memory_space<vmem>>, vector<288x16xbf16>
    %cst = arith.constant dense<0.000000e+00> : vector<800x16xf32>
    %2 = tpu.matmul %0, %1, %cst {dimension_numbers = #tpu.dot_dimension_numbers<[1], [0], [0], [1], [0, 0, 1, 1], [], []>} : vector<800x288xbf16>, vector<288x16xbf16>, vector<800x16xf32> -> vector<800x16xf32>
    %c0_3 = arith.constant 0 : index
    %c0_4 = arith.constant 0 : index
    %3 = vector.load %arg3[%c0_3, %c0_4] : memref<1x16xf32, #tpu.memory_space<vmem>>, vector<1x16xf32>
    %4 = vector.broadcast %3 : vector<1x16xf32> to vector<800x16xf32>
    %5 = arith.addf %2, %4 : vector<800x16xf32>
    %6 = arith.negf %5 : vector<800x16xf32>
    %7 = math.exp %6 : vector<800x16xf32>
    %cst_5 = arith.constant 1.000000e+00 : f32
    %8 = vector.broadcast %cst_5 : f32 to vector<800x16xf32>
    %9 = arith.addf %8, %7 : vector<800x16xf32>
    %10 = arith.divf %8, %9 : vector<800x16xf32>
    %c0_6 = arith.constant 0 : index
    %c0_7 = arith.constant 0 : index
    %11 = vector.load %arg4[%c0_6, %c0_7] : memref<800x16xf32, #tpu.memory_space<vmem>>, vector<800x16xf32>
    tpu.vector_store %arg4[%c0_6, %c0_7], %10 {strides = array<i32>} : memref<800x16xf32, #tpu.memory_space<vmem>>, vector<800x16xf32>,
    return
  }
  func.func @transform_0(%arg0: i32) -> (i32, i32) {
    %c0_i32 = arith.constant 0 : i32
    %c0_i32_0 = arith.constant 0 : i32
    return %arg0, %c0_i32 : i32, i32
  }
  func.func @transform_1(%arg0: i32) -> (i32, i32) {
    %c0_i32 = arith.constant 0 : i32
    %c0_i32_0 = arith.constant 0 : i32
    %c0_i32_1 = arith.constant 0 : i32
    return %c0_i32, %c0_i32_0 : i32, i32
  }
  func.func @transform_2(%arg0: i32) -> (i32, i32) {
    %c0_i32 = arith.constant 0 : i32
    %c0_i32_0 = arith.constant 0 : i32
    %c0_i32_1 = arith.constant 0 : i32
    return %c0_i32, %c0_i32_0 : i32, i32
  }
  func.func @transform_3(%arg0: i32) -> (i32, i32) {
    %c0_i32 = arith.constant 0 : i32
    %c0_i32_0 = arith.constant 0 : i32
    return %arg0, %c0_i32 : i32, i32
  }
}

</mosaic_0001>

<llo_original>
// kernel: decoder_forward.4
$region0: #{decoder_forward.4}
  #allocation0 [shape = 'u32[]', space=smem, size = 0x4, offset = 0x4, fixed_abs, tag = 'smem constant byte address 0x4 - core index']
  #allocation1 [shape = 'u32[144,128]{1,0:T(1,128)}', space=vmem, size = 0x12000, scoped, tag = 'internal scratch']
  %s0 = inlined_call_operand.hbm [shape: f32[2,32], index: 0, kind: input, shape index: {}]
  %s1 = inlined_call_operand.hbm [shape: f32[32,256], index: 1, kind: input, shape index: {}]
  %s2 = inlined_call_operand.hbm [shape: f32[1,256], index: 2, kind: input, shape index: {}]
  %s3 = inlined_call_operand.hbm [shape: bf16[256,12800], index: 3, kind: input, shape index: {}]
  %s4 = inlined_call_operand.hbm [shape: f32[1,12800], index: 4, kind: input, shape index: {}]
  %s5 = inlined_call_operand.vmem [shape: f32[2,12800], index: 5, kind: output, shape index: {}]
  %s6 = sld [smem:[#allocation0]]
  $region73: #{decoder_forward.4} parent=0
    _
  %s8 = ssub.s32 1, %s6
  %s9 = scalar_select 0, %s8, %s6
  $region1: #{decoder_forward.4} parent=0
    #allocation2 [shape = 'u8[1024]{0}', space=vmem, size = 0x400, scoped, tag = 'input window, operand 0, single buffered']
    #allocation3 [shape = 's32[2]{0}', space=sflag, size = 0x8, scoped, tag = 'scoped memory for decoder_forward.4']
    #allocation4 [shape = 'u8[32768]{0}', space=vmem, size = 0x8000, scoped, tag = 'input window, operand 1, single buffered']
    #allocation5 [shape = 's32[1]{0}', space=sflag, size = 0x4, scoped, tag = 'scoped memory for decoder_forward.4']
    #allocation6 [shape = 'u8[1024]{0}', space=vmem, size = 0x400, scoped, tag = 'input window, operand 2, single buffered']
    #allocation7 [shape = 'u8[3276800]{0}', space=vmem, size = 0x320000, scoped, tag = 'input window, operand 3']
    #allocation8 [shape = 's32[2]{0}', space=sflag, size = 0x8, scoped, tag = 'scoped memory for decoder_forward.4']
    #allocation9 [shape = 'u8[25600]{0}', space=vmem, size = 0x6400, scoped, tag = 'input window, operand 4']
    %10 = vsyncpa [#allocation3], 0
    %11 = vsyncpa [#allocation5], 0
    %12 = vsyncpa [#allocation8], 0
    %s13 = scalar_lea.sflag [#allocation8], 1
    %14 = vsyncpa %s13, 0
    loop: start=0, step=1, limit=6
    $region2: #{decoder_forward.4} parent=1 // loop_pre_header
      _
    $region3: #{decoder_forward.4} parent=1 // loop_header
      %s16 = sphi 0, %s20
      %p17 = scmp.ge.s32.totalorder %s16, 6
      %s24 = sphi 0, %s24
      %s26 = sphi 0, %s24
      %s27 = sphi 0, %s26
      %s41 = sphi 0, %s27
      %s45 = sphi 0, %s45
      %s47 = sphi 0, %s45
      %s48 = sphi 0, %s47
      %s62 = sphi 0, %s48
      %s66 = sphi 0, %s66
      %s68 = sphi 0, %s66
      %s69 = sphi 0, %s68
      %s83 = sphi 0, %s69
      %s89 = sphi 0, %s91
      %s92 = sphi 0, %s89
      %s93 = sphi 0, %s92
      %s109 = sphi 0, %s93
      %s115 = sphi 0, %s117
      %s118 = sphi 0, %s115
      %s119 = sphi 0, %s118
      %s135 = sphi 0, %s119
      %s141 = sphi 0, %s143
      %s144 = sphi 0, %s141
      %s145 = sphi 0, %s144
      %s161 = sphi 0, %s145
    $region4: #{decoder_forward.4} parent=1 // loop_header_branch
      %19 = sbr.rel (%p17) target = $region8
    $region5: #{decoder_forward.4} parent=1 // loop_body
      %s21 = ssub.s32 %s16, 1
      %s22 = ssub.s32 %s16, 2
      %s23 = sadd.s32 %s16, 1
      %s25 = sadd.s32 %s24, 1
      %p28 = scmp.eq.s32.totalorder %s16, 3
      %p29 = scmp.ne.s32.totalorder %s24, %s26
      %p30 = scmp.eq.s32.totalorder %s16, 0
      %p31 = por %p29, %p30
      %p32 = scmp.ne.s32.totalorder %s24, %s26
      %p33 = scmp.eq.s32.totalorder %s21, 3
      %p34 = por %p32, %p33
      %p35 = scmp.ne.s32.totalorder %s26, %s27
      %p36 = scmp.eq.s32.totalorder %s21, 0
      %p37 = por %p35, %p36
      %p38 = scmp.ne.s32.totalorder %s26, %s27
      %p39 = scmp.eq.s32.totalorder %s22, 3
      %p40 = por %p38, %p39
      %p42 = scmp.ne.s32.totalorder %s27, %s41
      %p43 = scmp.eq.s32.totalorder %s22, 0
      %p44 = por %p42, %p43
      %s46 = sadd.s32 %s45, 1
      %p49 = scmp.eq.s32.totalorder %s16, 3
      %p50 = scmp.ne.s32.totalorder %s45, %s47
      %p51 = scmp.eq.s32.totalorder %s16, 0
      %p52 = por %p50, %p51
      %p53 = scmp.ne.s32.totalorder %s45, %s47
      %p54 = scmp.eq.s32.totalorder %s21, 3
      %p55 = por %p53, %p54
      %p56 = scmp.ne.s32.totalorder %s47, %s48
      %p57 = scmp.eq.s32.totalorder %s21, 0
      %p58 = por %p56, %p57
      %p59 = scmp.ne.s32.totalorder %s47, %s48
      %p60 = scmp.eq.s32.totalorder %s22, 3
      %p61 = por %p59, %p60
      %p63 = scmp.ne.s32.totalorder %s48, %s62
      %p64 = scmp.eq.s32.totalorder %s22, 0
      %p65 = por %p63, %p64
      %s67 = sadd.s32 %s66, 1
      %p70 = scmp.eq.s32.totalorder %s16, 3
      %p71 = scmp.ne.s32.totalorder %s66, %s68
      %p72 = scmp.eq.s32.totalorder %s16, 0
      %p73 = por %p71, %p72
      %p74 = scmp.ne.s32.totalorder %s66, %s68
      %p75 = scmp.eq.s32.totalorder %s21, 3
      %p76 = por %p74, %p75
      %p77 = scmp.ne.s32.totalorder %s68, %s69
      %p78 = scmp.eq.s32.totalorder %s21, 0
      %p79 = por %p77, %p78
      %p80 = scmp.ne.s32.totalorder %s68, %s69
      %p81 = scmp.eq.s32.totalorder %s22, 3
      %p82 = por %p80, %p81
      %p84 = scmp.ne.s32.totalorder %s69, %s83
      %p85 = scmp.eq.s32.totalorder %s22, 0
      %p86 = por %p84, %p85
      %s87 = ssub.s32 %s16, %s23
      %p88 = scmp.eq.s32.totalorder %s87, 0
      %s90 = sadd.s32 %s89, 1
      %s91 = scalar_select %p88, %s89, %s90
      %p94 = pneg %p88
      %p95 = scmp.eq.s32.totalorder %s16, 3
      %p96 = por %p94, %p95
      %p97 = scmp.ne.s32.totalorder %s89, %s92
      %p98 = scmp.eq.s32.totalorder %s16, 0
      %p99 = por %p97, %p98
      %p100 = scmp.ne.s32.totalorder %s89, %s92
      %p101 = scmp.eq.s32.totalorder %s21, 3
      %p102 = por %p100, %p101
      %p103 = scmp.ne.s32.totalorder %s92, %s93
      %p104 = scmp.eq.s32.totalorder %s21, 0
      %p105 = por %p103, %p104
      %p106 = scmp.ne.s32.totalorder %s92, %s93
      %p107 = scmp.eq.s32.totalorder %s22, 3
      %p108 = por %p106, %p107
      %p110 = scmp.ne.s32.totalorder %s93, %s109
      %p111 = scmp.eq.s32.totalorder %s22, 0
      %p112 = por %p110, %p111
      %s113 = ssub.s32 %s16, %s23
      %p114 = scmp.eq.s32.totalorder %s113, 0
      %s116 = sadd.s32 %s115, 1
      %s117 = scalar_select %p114, %s115, %s116
      %p120 = pneg %p114
      %p121 = scmp.eq.s32.totalorder %s16, 3
      %p122 = por %p120, %p121
      %p123 = scmp.ne.s32.totalorder %s115, %s118
      %p124 = scmp.eq.s32.totalorder %s16, 0
      %p125 = por %p123, %p124
      %p126 = scmp.ne.s32.totalorder %s115, %s118
      %p127 = scmp.eq.s32.totalorder %s21, 3
      %p128 = por %p126, %p127
      %p129 = scmp.ne.s32.totalorder %s118, %s119
      %p130 = scmp.eq.s32.totalorder %s21, 0
      %p131 = por %p129, %p130
      %p132 = scmp.ne.s32.totalorder %s118, %s119
      %p133 = scmp.eq.s32.totalorder %s22, 3
      %p134 = por %p132, %p133
      %p136 = scmp.ne.s32.totalorder %s119, %s135
      %p137 = scmp.eq.s32.totalorder %s22, 0
      %p138 = por %p136, %p137
      %s139 = ssub.s32 %s16, %s23
      %p140 = scmp.eq.s32.totalorder %s139, 0
      %s142 = sadd.s32 %s141, 1
      %s143 = scalar_select %p140, %s141, %s142
      %p146 = pneg %p140
      %p147 = scmp.eq.s32.totalorder %s16, 3
      %p148 = por %p146, %p147
      %p149 = scmp.ne.s32.totalorder %s141, %s144
      %p150 = scmp.eq.s32.totalorder %s16, 0
      %p151 = por %p149, %p150
      %p152 = scmp.ne.s32.totalorder %s141, %s144
      %p153 = scmp.eq.s32.totalorder %s21, 3
      %p154 = por %p152, %p153
      %p155 = scmp.ne.s32.totalorder %s144, %s145
      %p156 = scmp.eq.s32.totalorder %s21, 0
      %p157 = por %p155, %p156
      %p158 = scmp.ne.s32.totalorder %s144, %s145
      %p159 = scmp.eq.s32.totalorder %s22, 3
      %p160 = por %p158, %p159
      %p162 = scmp.ne.s32.totalorder %s145, %s161
      %p163 = scmp.eq.s32.totalorder %s22, 0
      %p164 = por %p162, %p163
      %p165 = scmp.le.s32.totalorder 1, %s16
      %p166 = scmp.lt.s32.totalorder %s16, 5
      %p167 = pnand %p165, %p166
      %p168 = pneg %p167
      // Predicated region
      $region9: #{decoder_forward.4} parent=5 // pred_check
        _
      $region10: #{decoder_forward.4} parent=5 // pred_check_branch
        %170 = sbr.rel (%p167) target = $region12
      $region11: #{decoder_forward.4} parent=5 // pred_region
        %s171 = ssub.s32 %s16, 1
        // Predicated region
        $region13: #{decoder_forward.4} parent=11 // pred_check
          %p172 = pneg %p37
        $region14: #{decoder_forward.4} parent=11 // pred_check_branch
          %174 = sbr.rel (%p172) target = $region16
        $region15: #{decoder_forward.4} parent=11 // pred_region
          %s176 = ssub.s32 32, 32
          %177 = vsyncadd [#allocation3], %s176
          %s179 = sshll.u32 [#allocation2], 4
          %s180 = int_to_ptr.vmem [resolvable:$true] %s179
          %182 = dma.hbm_to_vmem [thread:$0]  %s0, 32, %s180, [#allocation3]
        $region16: #{decoder_forward.4} parent=11 // pred_fallthru
          _
        // Predicated region
        $region17: #{decoder_forward.4} parent=11 // pred_check
          %p183 = pneg %p58
        $region18: #{decoder_forward.4} parent=11 // pred_check_branch
          %185 = sbr.rel (%p183) target = $region20
        $region19: #{decoder_forward.4} parent=11 // pred_region
          %s187 = ssub.s32 1024, 1024
          %188 = vsyncadd [#allocation5], %s187
          %s189 = sshll.u32 [#allocation4], 4
          %s190 = int_to_ptr.vmem [resolvable:$true] %s189
          %195 = dma.hbm_to_vmem [thread:$0]  %s1, 1024, %s190, [#allocation5], 256, 256, 16
        $region20: #{decoder_forward.4} parent=11 // pred_fallthru
          _
        // Predicated region
        $region21: #{decoder_forward.4} parent=11 // pred_check
          %p196 = pneg %p79
        $region22: #{decoder_forward.4} parent=11 // pred_check_branch
          %198 = sbr.rel (%p196) target = $region24
        $region23: #{decoder_forward.4} parent=11 // pred_region
          %s200 = ssub.s32 32, 32
          %201 = vsyncadd [#allocation5], %s200
          %s203 = sshll.u32 [#allocation6], 4
          %s204 = int_to_ptr.vmem [resolvable:$true] %s203
          %206 = dma.hbm_to_vmem [thread:$0]  %s2, 32, %s204, [#allocation5]
        $region24: #{decoder_forward.4} parent=11 // pred_fallthru
          _
      $region12: #{decoder_forward.4} parent=5 // pred_fallthru
        _
      %p207 = scmp.lt.s32.totalorder %s16, 4
      // Predicated region
      $region25: #{decoder_forward.4} parent=5 // pred_check
        %p208 = pneg %p207
      $region26: #{decoder_forward.4} parent=5 // pred_check_branch
        %210 = sbr.rel (%p208) target = $region28
      $region27: #{decoder_forward.4} parent=5 // pred_region
        // Predicated region
        $region29: #{decoder_forward.4} parent=27 // pred_check
          %p211 = pneg %p99
        $region30: #{decoder_forward.4} parent=27 // pred_check_branch
          %213 = sbr.rel (%p211) target = $region32
        $region31: #{decoder_forward.4} parent=27 // pred_region
          %s214 = sand.u32 %s16, 1
          %s215 = scalar_lea.sflag [#allocation8], %s214
          %s216 = sand.u32 %s89, 1
          %s217 = smul.addr %s216, 3200
          %s218 = scalar_lea.vmem [#allocation7], %s217
          %s219 = smul.u32 25, %s16
          %s221 = ssub.s32 51200, 51200
          %222 = vsyncadd %s215, %s221
          %s223 = smul.addr %s219, 64
          %s224 = scalar_lea.hbm %s3, %s223
          %s225 = sshll.u32 %s218, 4
          %s226 = int_to_ptr.vmem [resolvable:$true] %s225
          %231 = dma.hbm_to_vmem [thread:$0]  %s224, 51200, %s226, %s215, 6400, 1600, 100
        $region32: #{decoder_forward.4} parent=27 // pred_fallthru
          _
        // Predicated region
        $region33: #{decoder_forward.4} parent=27 // pred_check
          %p232 = pneg %p125
        $region34: #{decoder_forward.4} parent=27 // pred_check_branch
          %234 = sbr.rel (%p232) target = $region36
        $region35: #{decoder_forward.4} parent=27 // pred_region
          %s235 = sand.u32 %s16, 1
          %s236 = scalar_lea.sflag [#allocation8], %s235
          %s237 = sand.u32 %s115, 1
          %s238 = smul.addr %s237, 25
          %s239 = scalar_lea.vmem [#allocation9], %s238
          %s240 = smul.u32 25, %s16
          %s242 = ssub.s32 400, 400
          %243 = vsyncadd %s236, %s242
          %s244 = smul.addr %s240, 16
          %s245 = scalar_lea.hbm %s4, %s244
          %s247 = sshll.u32 %s239, 4
          %s248 = int_to_ptr.vmem [resolvable:$true] %s247
          %250 = dma.hbm_to_vmem [thread:$0]  %s245, 400, %s248, %s236
        $region36: #{decoder_forward.4} parent=27 // pred_fallthru
          _
      $region28: #{decoder_forward.4} parent=5 // pred_fallthru
        _
      %p251 = scmp.le.s32.totalorder 1, %s16
      %p252 = scmp.lt.s32.totalorder %s16, 5
      %p253 = pnand %p251, %p252
      %p254 = pneg %p253
      // Predicated region
      $region37: #{decoder_forward.4} parent=5 // pred_check
        _
      $region38: #{decoder_forward.4} parent=5 // pred_check_branch
        %256 = sbr.rel (%p253) target = $region40
      $region39: #{decoder_forward.4} parent=5 // pred_region
        %s257 = ssub.s32 %s16, 1
        // Predicated region
        $region41: #{decoder_forward.4} parent=39 // pred_check
          %p258 = pneg %p37
        $region42: #{decoder_forward.4} parent=39 // pred_check_branch
          %260 = sbr.rel (%p258) target = $region44
        $region43: #{decoder_forward.4} parent=39 // pred_region
          %261 = dma.done [#allocation3], 32
        $region44: #{decoder_forward.4} parent=39 // pred_fallthru
          _
        // Predicated region
        $region45: #{decoder_forward.4} parent=39 // pred_check
          %p262 = pneg %p58
        $region46: #{decoder_forward.4} parent=39 // pred_check_branch
          %264 = sbr.rel (%p262) target = $region48
        $region47: #{decoder_forward.4} parent=39 // pred_region
          %265 = dma.done [#allocation5], 1024
        $region48: #{decoder_forward.4} parent=39 // pred_fallthru
          _
        // Predicated region
        $region49: #{decoder_forward.4} parent=39 // pred_check
          %p266 = pneg %p79
        $region50: #{decoder_forward.4} parent=39 // pred_check_branch
          %268 = sbr.rel (%p266) target = $region52
        $region51: #{decoder_forward.4} parent=39 // pred_region
          %269 = dma.done [#allocation5], 32
        $region52: #{decoder_forward.4} parent=39 // pred_fallthru
          _
        %s270 = sand.u32 %s21, 1
        %s271 = scalar_lea.sflag [#allocation8], %s270
        %s272 = sand.u32 %s92, 1
        %s273 = smul.addr %s272, 3200
        %s274 = scalar_lea.vmem [#allocation7], %s273
        // Predicated region
        $region53: #{decoder_forward.4} parent=39 // pred_check
          %p275 = pneg %p105
        $region54: #{decoder_forward.4} parent=39 // pred_check_branch
          %277 = sbr.rel (%p275) target = $region56
        $region55: #{decoder_forward.4} parent=39 // pred_region
          %278 = dma.done %s271, 51200
        $region56: #{decoder_forward.4} parent=39 // pred_fallthru
          _
        %s279 = sand.u32 %s21, 1
        %s280 = scalar_lea.sflag [#allocation8], %s279
        %s281 = sand.u32 %s118, 1
        %s282 = smul.addr %s281, 25
        %s283 = scalar_lea.vmem [#allocation9], %s282
        // Predicated region
        $region57: #{decoder_forward.4} parent=39 // pred_check
          %p284 = pneg %p131
        $region58: #{decoder_forward.4} parent=39 // pred_check_branch
          %286 = sbr.rel (%p284) target = $region60
        $region59: #{decoder_forward.4} parent=39 // pred_region
          %287 = dma.done %s280, 400
        $region60: #{decoder_forward.4} parent=39 // pred_fallthru
          _
        %p288 = pneg %p37
        %p289 = pneg %p34
        %p290 = pneg %p58
        %p291 = pneg %p55
        %p292 = pneg %p79
        %p293 = pneg %p76
        %s294 = sand.u32 %s21, 1
        %s295 = scalar_lea.sflag [#allocation8], %s294
        %s296 = sand.u32 %s92, 1
        %s297 = smul.addr %s296, 3200
        %s298 = scalar_lea.vmem [#allocation7], %s297
        %p299 = pneg %p105
        %p300 = pneg %p102
        %s301 = sand.u32 %s21, 1
        %s302 = scalar_lea.sflag [#allocation8], %s301
        %s303 = sand.u32 %s118, 1
        %s304 = smul.addr %s303, 25
        %s305 = scalar_lea.vmem [#allocation9], %s304
        %p306 = pneg %p131
        %p307 = pneg %p128
        %p308 = pneg %p157
        %p309 = pneg %p154
        %s310 = smul.u32 25, %s21
        %p311 = scmp.lt.s32.totalorder %s310, 99
        %s312 = scalar_select %p311, %s310, 99
        %s313 = smul.addr %s312, 2
        %s314 = scalar_lea.vmem %s5, %s313
        %s315 = smul.u32 25, %s21
        %s316 = smul.u32 25, %s21
        %s317 = smul.u32 25, %s21
        %p318 = scmp.lt.s32.totalorder %s317, 99
        %s319 = scalar_select %p318, %s317, 99
        %s320 = smul.addr %s319, 2
        %s321 = scalar_lea.vmem %s5, %s320
        %s322 = smul.u32 25, %s21
        %v324 = vld [vmem:[#allocation2] sm:$0x3]
        %v325 = vld [vmem:[#allocation4] sm:$0xff]
        %v326 = vld [vmem:[#allocation4 + $0x8] sm:$0xff]
        %v327 = vld [vmem:[#allocation4 + $0x10] sm:$0xff]
        %v328 = vld [vmem:[#allocation4 + $0x18] sm:$0xff]
        %v329 = vld [vmem:[#allocation4 + $0x20] sm:$0xff]
        %v330 = vld [vmem:[#allocation4 + $0x28] sm:$0xff]
        %v331 = vld [vmem:[#allocation4 + $0x30] sm:$0xff]
        %v332 = vld [vmem:[#allocation4 + $0x38] sm:$0xff]
        %v333 = vld [vmem:[#allocation6] sm:$0x3]
        %v335 = vlaneseq
        %v336 = vshrl.u32 %v335, 7
        %v337 = vsub.s32 0, %v336
        %v338 = vrot.slane %v333, %v337
        %v339 = vlaneseq
        %v340 = vshrl.u32 %v339, 7
        %v341 = vsub.s32 1, %v340
        %v342 = vrot.slane %v333, %v341
        %vm345 = vcmask 261120
        %v347 = vsel %vm345, %v324, 0
        %349 = vmatprep.subr.mxu0 %v326
        %350 = vmatpush1.msra.mxu0 %v325
        %351 = vmatprep.subr.mxu0 %v328
        %352 = vmatpush1.msra.mxu0 %v327
        %353 = vmatprep.subr.mxu0 %v330
        %354 = vmatpush1.msra.mxu0 %v329
        %355 = vmatprep.subr.mxu0 %v332
        %356 = vmatpush1.msra.mxu0 %v331
        %357 = vmatprep.subr.mxu0 0.0
        %358 = vmatpush1.msra.mxu0 0.0
        %359 = vmatprep.subr.mxu0 0.0
        %360 = vmatpush1.msra.mxu0 0.0
        %361 = vmatprep.subr.mxu0 0.0
        %362 = vmatpush1.msra.mxu0 0.0
        %363 = vmatprep.subr.mxu0 0.0
        %364 = vmatpush1.msra.mxu0 0.0
        %365 = vmatprep.subr.mxu0 0.0
        %366 = vmatpush1.msra.mxu0 0.0
        %367 = vmatprep.subr.mxu0 0.0
        %368 = vmatpush1.msra.mxu0 0.0
        %369 = vmatprep.subr.mxu0 0.0
        %370 = vmatpush1.msra.mxu0 0.0
        %371 = vmatprep.subr.mxu0 0.0
        %372 = vmatpush1.msra.mxu0 0.0
        %373 = vmatprep.subr.mxu0 0.0
        %374 = vmatpush1.msra.mxu0 0.0
        %375 = vmatprep.subr.mxu0 0.0
        %376 = vmatpush1.msra.mxu0 0.0
        %377 = vmatprep.subr.mxu0 0.0
        %378 = vmatpush1.msra.mxu0 0.0
        %379 = vmatprep.subr.mxu0 0.0
        %380 = vmatpush1.msra.mxu0 0.0
        %381 = vmatprep.subr.mxu0 0.0
        %382 = vmatpush1.msra.mxu0 0.0
        %383 = vmatprep.subr.mxu0 0.0
        %384 = vmatpush1.msra.mxu0 0.0
        %385 = vmatprep.subr.mxu0 0.0
        %386 = vmatpush1.msra.mxu0 0.0
        %387 = vmatprep.subr.mxu0 0.0
        %388 = vmatpush1.msra.mxu0 0.0
        %389 = vmatprep.subr.mxu0 0.0
        %390 = vmatpush1.msra.mxu0 0.0
        %391 = vmatprep.subr.mxu0 0.0
        %392 = vmatpush1.msra.mxu0 0.0
        %393 = vmatprep.subr.mxu0 0.0
        %394 = vmatpush1.msra.mxu0 0.0
        %395 = vmatprep.subr.mxu0 0.0
        %396 = vmatpush1.msra.mxu0 0.0
        %397 = vmatprep.subr.mxu0 0.0
        %398 = vmatpush1.msra.mxu0 0.0
        %399 = vmatprep.subr.mxu0 0.0
        %400 = vmatpush1.msra.mxu0 0.0
        %401 = vmatprep.subr.mxu0 0.0
        %402 = vmatpush1.msra.mxu0 0.0
        %403 = vmatprep.subr.mxu0 0.0
        %404 = vmatpush1.msra.mxu0 0.0
        %405 = vmatprep.subr.mxu0 0.0
        %406 = vmatpush1.msra.mxu0 0.0
        %407 = vmatprep.subr.mxu0 0.0
        %408 = vmatpush1.msra.mxu0 0.0
        %409 = vmatprep.subr.mxu0 0.0
        %410 = vmatpush1.msra.mxu0 0.0
        %411 = vmatprep.subr.mxu0 0.0
        %412 = vmatpush1.msra.mxu0 0.0
        %413 = vmatprep.mubr.f32.mxu0 0.0
        %414 = vmatmul.mubr.f32.gmra.mrb[0].mxu0 %v347
        %v415 = vpop.f32.mrb[0].mxu0
        %v416 = vadd.f32 %v338, %v415
        %v417 = vpop.f32.mrb[0].mxu0
        %v418 = vadd.f32 %v342, %v417
        %419 = vdwg.mxu0
        %v420 = vmax.f32 %v416, 0.0
        %v421 = vmax.f32 %v418, 0.0
        %v422 = vpack.c.bf16 %v420, %v420
        %v423 = vpack.c.bf16 %v421, %v421
        %v424 = vld [vmem:[%s274] sm:$0xff]
        %v425 = vld [vmem:[%s274 + $0x8] sm:$0xff]
        %v426 = vld [vmem:[%s274 + $0x10] sm:$0xff]
        %v427 = vld [vmem:[%s274 + $0x18] sm:$0xff]
        %v428 = vld [vmem:[%s274 + $0x20] sm:$0xff]
        %v429 = vld [vmem:[%s274 + $0x28] sm:$0xff]
        %v430 = vld [vmem:[%s274 + $0x30] sm:$0xff]
        %v431 = vld [vmem:[%s274 + $0x38] sm:$0xff]
        %v432 = vld [vmem:[%s274 + $0x40] sm:$0xff]
        %v433 = vld [vmem:[%s274 + $0x48] sm:$0xff]
        %v434 = vld [vmem:[%s274 + $0x50] sm:$0xff]
        %v435 = vld [vmem:[%s274 + $0x58] sm:$0xff]
        %v436 = vld [vmem:[%s274 + $0x60] sm:$0xf]
        %v437 = vld [vmem:[%s274 + $0x64] sm:$0xff]
        %v438 = vld [vmem:[%s274 + $0x6c] sm:$0xff]
        %v439 = vld [vmem:[%s274 + $0x74] sm:$0xff]
        %v440 = vld [vmem:[%s274 + $0x7c] sm:$0xff]
        %v441 = vld [vmem:[%s274 + $0x84] sm:$0xff]
        %v442 = vld [vmem:[%s274 + $0x8c] sm:$0xff]
        %v443 = vld [vmem:[%s274 + $0x94] sm:$0xff]
        %v444 = vld [vmem:[%s274 + $0x9c] sm:$0xff]
        %v445 = vld [vmem:[%s274 + $0xa4] sm:$0xff]
        %v446 = vld [vmem:[%s274 + $0xac] sm:$0xff]
        %v447 = vld [vmem:[%s274 + $0xb4] sm:$0xff]
        %v448 = vld [vmem:[%s274 + $0xbc] sm:$0xff]
        %v449 = vld [vmem:[%s274 + $0xc4] sm:$0xf]
        %v450 = vld [vmem:[%s274 + $0xc8] sm:$0xff]
        %v451 = vld [vmem:[%s274 + $0xd0] sm:$0xff]
        %v452 = vld [vmem:[%s274 + $0xd8] sm:$0xff]
        %v453 = vld [vmem:[%s274 + $0xe0] sm:$0xff]
        %v454 = vld [vmem:[%s274 + $0xe8] sm:$0xff]
        %v455 = vld [vmem:[%s274 + $0xf0] sm:$0xff]
        %v456 = vld [vmem:[%s274 + $0xf8] sm:$0xff]
        %v457 = vld [vmem:[%s274 + $0x100] sm:$0xff]
        %v458 = vld [vmem:[%s274 + $0x108] sm:$0xff]
        %v459 = vld [vmem:[%s274 + $0x110] sm:$0xff]
        %v460 = vld [vmem:[%s274 + $0x118] sm:$0xff]
        %v461 = vld [vmem:[%s274 + $0x120] sm:$0xff]
        %v462 = vld [vmem:[%s274 + $0x128] sm:$0xf]
        %v463 = vld [vmem:[%s274 + $0x12c] sm:$0xff]
        %v464 = vld [vmem:[%s274 + $0x134] sm:$0xff]
        %v465 = vld [vmem:[%s274 + $0x13c] sm:$0xff]
        %v466 = vld [vmem:[%s274 + $0x144] sm:$0xff]
        %v467 = vld [vmem:[%s274 + $0x14c] sm:$0xff]
        %v468 = vld [vmem:[%s274 + $0x154] sm:$0xff]
        %v469 = vld [vmem:[%s274 + $0x15c] sm:$0xff]
        %v470 = vld [vmem:[%s274 + $0x164] sm:$0xff]
        %v471 = vld [vmem:[%s274 + $0x16c] sm:$0xff]
        %v472 = vld [vmem:[%s274 + $0x174] sm:$0xff]
        %v473 = vld [vmem:[%s274 + $0x17c] sm:$0xff]
        %v474 = vld [vmem:[%s274 + $0x184] sm:$0xff]
        %v475 = vld [vmem:[%s274 + $0x18c] sm:$0xf]
        %v476 = vld [vmem:[%s274 + $0x190] sm:$0xff]
        %v477 = vld [vmem:[%s274 + $0x198] sm:$0xff]
        %v478 = vld [vmem:[%s274 + $0x1a0] sm:$0xff]
        %v479 = vld [vmem:[%s274 + $0x1a8] sm:$0xff]
        %v480 = vld [vmem:[%s274 + $0x1b0] sm:$0xff]
        %v481 = vld [vmem:[%s274 + $0x1b8] sm:$0xff]
        %v482 = vld [vmem:[%s274 + $0x1c0] sm:$0xff]
        %v483 = vld [vmem:[%s274 + $0x1c8] sm:$0xff]
        %v484 = vld [vmem:[%s274 + $0x1d0] sm:$0xff]
        %v485 = vld [vmem:[%s274 + $0x1d8] sm:$0xff]
        %v486 = vld [vmem:[%s274 + $0x1e0] sm:$0xff]
        %v487 = vld [vmem:[%s274 + $0x1e8] sm:$0xff]
        %v488 = vld [vmem:[%s274 + $0x1f0] sm:$0xf]
        %v489 = vld [vmem:[%s274 + $0x1f4] sm:$0xff]
        %v490 = vld [vmem:[%s274 + $0x1fc] sm:$0xff]
        %v491 = vld [vmem:[%s274 + $0x204] sm:$0xff]
        %v492 = vld [vmem:[%s274 + $0x20c] sm:$0xff]
        %v493 = vld [vmem:[%s274 + $0x214] sm:$0xff]
        %v494 = vld [vmem:[%s274 + $0x21c] sm:$0xff]
        %v495 = vld [vmem:[%s274 + $0x224] sm:$0xff]
        %v496 = vld [vmem:[%s274 + $0x22c] sm:$0xff]
        %v497 = vld [vmem:[%s274 + $0x234] sm:$0xff]
        %v498 = vld [vmem:[%s274 + $0x23c] sm:$0xff]
        %v499 = vld [vmem:[%s274 + $0x244] sm:$0xff]
        %v500 = vld [vmem:[%s274 + $0x24c] sm:$0xff]
        %v501 = vld [vmem:[%s274 + $0x254] sm:$0xf]
        %v502 = vld [vmem:[%s274 + $0x258] sm:$0xff]
        %v503 = vld [vmem:[%s274 + $0x260] sm:$0xff]
        %v504 = vld [vmem:[%s274 + $0x268] sm:$0xff]
        %v505 = vld [vmem:[%s274 + $0x270] sm:$0xff]
        %v506 = vld [vmem:[%s274 + $0x278] sm:$0xff]
        %v507 = vld [vmem:[%s274 + $0x280] sm:$0xff]
        %v508 = vld [vmem:[%s274 + $0x288] sm:$0xff]
        %v509 = vld [vmem:[%s274 + $0x290] sm:$0xff]
        %v510 = vld [vmem:[%s274 + $0x298] sm:$0xff]
        %v511 = vld [vmem:[%s274 + $0x2a0] sm:$0xff]
        %v512 = vld [vmem:[%s274 + $0x2a8] sm:$0xff]
        %v513 = vld [vmem:[%s274 + $0x2b0] sm:$0xff]
        %v514 = vld [vmem:[%s274 + $0x2b8] sm:$0xf]
        %v515 = vld [vmem:[%s274 + $0x2bc] sm:$0xff]
        %v516 = vld [vmem:[%s274 + $0x2c4] sm:$0xff]
        %v517 = vld [vmem:[%s274 + $0x2cc] sm:$0xff]
        %v518 = vld [vmem:[%s274 + $0x2d4] sm:$0xff]
        %v519 = vld [vmem:[%s274 + $0x2dc] sm:$0xff]
        %v520 = vld [vmem:[%s274 + $0x2e4] sm:$0xff]
        %v521 = vld [vmem:[%s274 + $0x2ec] sm:$0xff]
        %v522 = vld [vmem:[%s274 + $0x2f4] sm:$0xff]
        %v523 = vld [vmem:[%s274 + $0x2fc] sm:$0xff]
        %v524 = vld [vmem:[%s274 + $0x304] sm:$0xff]
        %v525 = vld [vmem:[%s274 + $0x30c] sm:$0xff]
        %v526 = vld [vmem:[%s274 + $0x314] sm:$0xff]
        %v527 = vld [vmem:[%s274 + $0x31c] sm:$0xf]
        %v528 = vld [vmem:[%s274 + $0x320] sm:$0xff]
        %v529 = vld [vmem:[%s274 + $0x328] sm:$0xff]
        %v530 = vld [vmem:[%s274 + $0x330] sm:$0xff]
        %v531 = vld [vmem:[%s274 + $0x338] sm:$0xff]
        %v532 = vld [vmem:[%s274 + $0x340] sm:$0xff]
        %v533 = vld [vmem:[%s274 + $0x348] sm:$0xff]
        %v534 = vld [vmem:[%s274 + $0x350] sm:$0xff]
        %v535 = vld [vmem:[%s274 + $0x358] sm:$0xff]
        %v536 = vld [vmem:[%s274 + $0x360] sm:$0xff]
        %v537 = vld [vmem:[%s274 + $0x368] sm:$0xff]
        %v538 = vld [vmem:[%s274 + $0x370] sm:$0xff]
        %v539 = vld [vmem:[%s274 + $0x378] sm:$0xff]
        %v540 = vld [vmem:[%s274 + $0x380] sm:$0xf]
        %v541 = vld [vmem:[%s274 + $0x384] sm:$0xff]
        %v542 = vld [vmem:[%s274 + $0x38c] sm:$0xff]
        %v543 = vld [vmem:[%s274 + $0x394] sm:$0xff]
        %v544 = vld [vmem:[%s274 + $0x39c] sm:$0xff]
        %v545 = vld [vmem:[%s274 + $0x3a4] sm:$0xff]
        %v546 = vld [vmem:[%s274 + $0x3ac] sm:$0xff]
        %v547 = vld [vmem:[%s274 + $0x3b4] sm:$0xff]
        %v548 = vld [vmem:[%s274 + $0x3bc] sm:$0xff]
        %v549 = vld [vmem:[%s274 + $0x3c4] sm:$0xff]
        %v550 = vld [vmem:[%s274 + $0x3cc] sm:$0xff]
        %v551 = vld [vmem:[%s274 + $0x3d4] sm:$0xff]
        %v552 = vld [vmem:[%s274 + $0x3dc] sm:$0xff]
        %v553 = vld [vmem:[%s274 + $0x3e4] sm:$0xf]
        %v554 = vld [vmem:[%s274 + $0x3e8] sm:$0xff]
        %v555 = vld [vmem:[%s274 + $0x3f0] sm:$0xff]
        %v556 = vld [vmem:[%s274 + $0x3f8] sm:$0xff]
        %v557 = vld [vmem:[%s274 + $0x400] sm:$0xff]
        %v558 = vld [vmem:[%s274 + $0x408] sm:$0xff]
        %v559 = vld [vmem:[%s274 + $0x410] sm:$0xff]
        %v560 = vld [vmem:[%s274 + $0x418] sm:$0xff]
        %v561 = vld [vmem:[%s274 + $0x420] sm:$0xff]
        %v562 = vld [vmem:[%s274 + $0x428] sm:$0xff]
        %v563 = vld [vmem:[%s274 + $0x430] sm:$0xff]
        %v564 = vld [vmem:[%s274 + $0x438] sm:$0xff]
        %v565 = vld [vmem:[%s274 + $0x440] sm:$0xff]
        %v566 = vld [vmem:[%s274 + $0x448] sm:$0xf]
        %v567 = vld [vmem:[%s274 + $0x44c] sm:$0xff]
        %v568 = vld [vmem:[%s274 + $0x454] sm:$0xff]
        %v569 = vld [vmem:[%s274 + $0x45c] sm:$0xff]
        %v570 = vld [vmem:[%s274 + $0x464] sm:$0xff]
        %v571 = vld [vmem:[%s274 + $0x46c] sm:$0xff]
        %v572 = vld [vmem:[%s274 + $0x474] sm:$0xff]
        %v573 = vld [vmem:[%s274 + $0x47c] sm:$0xff]
        %v574 = vld [vmem:[%s274 + $0x484] sm:$0xff]
        %v575 = vld [vmem:[%s274 + $0x48c] sm:$0xff]
        %v576 = vld [vmem:[%s274 + $0x494] sm:$0xff]
        %v577 = vld [vmem:[%s274 + $0x49c] sm:$0xff]
        %v578 = vld [vmem:[%s274 + $0x4a4] sm:$0xff]
        %v579 = vld [vmem:[%s274 + $0x4ac] sm:$0xf]
        %v580 = vld [vmem:[%s274 + $0x4b0] sm:$0xff]
        %v581 = vld [vmem:[%s274 + $0x4b8] sm:$0xff]
        %v582 = vld [vmem:[%s274 + $0x4c0] sm:$0xff]
        %v583 = vld [vmem:[%s274 + $0x4c8] sm:$0xff]
        %v584 = vld [vmem:[%s274 + $0x4d0] sm:$0xff]
        %v585 = vld [vmem:[%s274 + $0x4d8] sm:$0xff]
        %v586 = vld [vmem:[%s274 + $0x4e0] sm:$0xff]
        %v587 = vld [vmem:[%s274 + $0x4e8] sm:$0xff]
        %v588 = vld [vmem:[%s274 + $0x4f0] sm:$0xff]
        %v589 = vld [vmem:[%s274 + $0x4f8] sm:$0xff]
        %v590 = vld [vmem:[%s274 + $0x500] sm:$0xff]
        %v591 = vld [vmem:[%s274 + $0x508] sm:$0xff]
        %v592 = vld [vmem:[%s274 + $0x510] sm:$0xf]
        %v593 = vld [vmem:[%s274 + $0x514] sm:$0xff]
        %v594 = vld [vmem:[%s274 + $0x51c] sm:$0xff]
        %v595 = vld [vmem:[%s274 + $0x524] sm:$0xff]
        %v596 = vld [vmem:[%s274 + $0x52c] sm:$0xff]
        %v597 = vld [vmem:[%s274 + $0x534] sm:$0xff]
        %v598 = vld [vmem:[%s274 + $0x53c] sm:$0xff]
        %v599 = vld [vmem:[%s274 + $0x544] sm:$0xff]
        %v600 = vld [vmem:[%s274 + $0x54c] sm:$0xff]
        %v601 = vld [vmem:[%s274 + $0x554] sm:$0xff]
        %v602 = vld [vmem:[%s274 + $0x55c] sm:$0xff]
        %v603 = vld [vmem:[%s274 + $0x564] sm:$0xff]
        %v604 = vld [vmem:[%s274 + $0x56c] sm:$0xff]
        %v605 = vld [vmem:[%s274 + $0x574] sm:$0xf]
        %v606 = vld [vmem:[%s274 + $0x578] sm:$0xff]
        %v607 = vld [vmem:[%s274 + $0x580] sm:$0xff]
        %v608 = vld [vmem:[%s274 + $0x588] sm:$0xff]
        %v609 = vld [vmem:[%s274 + $0x590] sm:$0xff]
        %v610 = vld [vmem:[%s274 + $0x598] sm:$0xff]
        %v611 = vld [vmem:[%s274 + $0x5a0] sm:$0xff]
        %v612 = vld [vmem:[%s274 + $0x5a8] sm:$0xff]
        %v613 = vld [vmem:[%s274 + $0x5b0] sm:$0xff]
        %v614 = vld [vmem:[%s274 + $0x5b8] sm:$0xff]
        %v615 = vld [vmem:[%s274 + $0x5c0] sm:$0xff]
        %v616 = vld [vmem:[%s274 + $0x5c8] sm:$0xff]
        %v617 = vld [vmem:[%s274 + $0x5d0] sm:$0xff]
        %v618 = vld [vmem:[%s274 + $0x5d8] sm:$0xf]
        %v619 = vld [vmem:[%s274 + $0x5dc] sm:$0xff]
        %v620 = vld [vmem:[%s274 + $0x5e4] sm:$0xff]
        %v621 = vld [vmem:[%s274 + $0x5ec] sm:$0xff]
        %v622 = vld [vmem:[%s274 + $0x5f4] sm:$0xff]
        %v623 = vld [vmem:[%s274 + $0x5fc] sm:$0xff]
        %v624 = vld [vmem:[%s274 + $0x604] sm:$0xff]
        %v625 = vld [vmem:[%s274 + $0x60c] sm:$0xff]
        %v626 = vld [vmem:[%s274 + $0x614] sm:$0xff]
        %v627 = vld [vmem:[%s274 + $0x61c] sm:$0xff]
        %v628 = vld [vmem:[%s274 + $0x624] sm:$0xff]
        %v629 = vld [vmem:[%s274 + $0x62c] sm:$0xff]
        %v630 = vld [vmem:[%s274 + $0x634] sm:$0xff]
        %v631 = vld [vmem:[%s274 + $0x63c] sm:$0xf]
        %v632 = vld [vmem:[%s274 + $0x640] sm:$0xff]
        %v633 = vld [vmem:[%s274 + $0x648] sm:$0xff]
        %v634 = vld [vmem:[%s274 + $0x650] sm:$0xff]
        %v635 = vld [vmem:[%s274 + $0x658] sm:$0xff]
        %v636 = vld [vmem:[%s274 + $0x660] sm:$0xff]
        %v637 = vld [vmem:[%s274 + $0x668] sm:$0xff]
        %v638 = vld [vmem:[%s274 + $0x670] sm:$0xff]
        %v639 = vld [vmem:[%s274 + $0x678] sm:$0xff]
        %v640 = vld [vmem:[%s274 + $0x680] sm:$0xff]
        %v641 = vld [vmem:[%s274 + $0x688] sm:$0xff]
        %v642 = vld [vmem:[%s274 + $0x690] sm:$0xff]
        %v643 = vld [vmem:[%s274 + $0x698] sm:$0xff]
        %v644 = vld [vmem:[%s274 + $0x6a0] sm:$0xf]
        %v645 = vld [vmem:[%s274 + $0x6a4] sm:$0xff]
        %v646 = vld [vmem:[%s274 + $0x6ac] sm:$0xff]
        %v647 = vld [vmem:[%s274 + $0x6b4] sm:$0xff]
        %v648 = vld [vmem:[%s274 + $0x6bc] sm:$0xff]
        %v649 = vld [vmem:[%s274 + $0x6c4] sm:$0xff]
        %v650 = vld [vmem:[%s274 + $0x6cc] sm:$0xff]
        %v651 = vld [vmem:[%s274 + $0x6d4] sm:$0xff]
        %v652 = vld [vmem:[%s274 + $0x6dc] sm:$0xff]
        %v653 = vld [vmem:[%s274 + $0x6e4] sm:$0xff]
        %v654 = vld [vmem:[%s274 + $0x6ec] sm:$0xff]
        %v655 = vld [vmem:[%s274 + $0x6f4] sm:$0xff]
        %v656 = vld [vmem:[%s274 + $0x6fc] sm:$0xff]
        %v657 = vld [vmem:[%s274 + $0x704] sm:$0xf]
        %v658 = vld [vmem:[%s274 + $0x708] sm:$0xff]
        %v659 = vld [vmem:[%s274 + $0x710] sm:$0xff]
        %v660 = vld [vmem:[%s274 + $0x718] sm:$0xff]
        %v661 = vld [vmem:[%s274 + $0x720] sm:$0xff]
        %v662 = vld [vmem:[%s274 + $0x728] sm:$0xff]
        %v663 = vld [vmem:[%s274 + $0x730] sm:$0xff]
        %v664 = vld [vmem:[%s274 + $0x738] sm:$0xff]
        %v665 = vld [vmem:[%s274 + $0x740] sm:$0xff]
        %v666 = vld [vmem:[%s274 + $0x748] sm:$0xff]
        %v667 = vld [vmem:[%s274 + $0x750] sm:$0xff]
        %v668 = vld [vmem:[%s274 + $0x758] sm:$0xff]
        %v669 = vld [vmem:[%s274 + $0x760] sm:$0xff]
        %v670 = vld [vmem:[%s274 + $0x768] sm:$0xf]
        %v671 = vld [vmem:[%s274 + $0x76c] sm:$0xff]
        %v672 = vld [vmem:[%s274 + $0x774] sm:$0xff]
        %v673 = vld [vmem:[%s274 + $0x77c] sm:$0xff]
        %v674 = vld [vmem:[%s274 + $0x784] sm:$0xff]
        %v675 = vld [vmem:[%s274 + $0x78c] sm:$0xff]
        %v676 = vld [vmem:[%s274 + $0x794] sm:$0xff]
        %v677 = vld [vmem:[%s274 + $0x79c] sm:$0xff]
        %v678 = vld [vmem:[%s274 + $0x7a4] sm:$0xff]
        %v679 = vld [vmem:[%s274 + $0x7ac] sm:$0xff]
        %v680 = vld [vmem:[%s274 + $0x7b4] sm:$0xff]
        %v681 = vld [vmem:[%s274 + $0x7bc] sm:$0xff]
        %v682 = vld [vmem:[%s274 + $0x7c4] sm:$0xff]
        %v683 = vld [vmem:[%s274 + $0x7cc] sm:$0xf]
        %v684 = vld [vmem:[%s274 + $0x7d0] sm:$0xff]
        %v685 = vld [vmem:[%s274 + $0x7d8] sm:$0xff]
        %v686 = vld [vmem:[%s274 + $0x7e0] sm:$0xff]
        %v687 = vld [vmem:[%s274 + $0x7e8] sm:$0xff]
        %v688 = vld [vmem:[%s274 + $0x7f0] sm:$0xff]
        %v689 = vld [vmem:[%s274 + $0x7f8] sm:$0xff]
        %v690 = vld [vmem:[%s274 + $0x800] sm:$0xff]
        %v691 = vld [vmem:[%s274 + $0x808] sm:$0xff]
        %v692 = vld [vmem:[%s274 + $0x810] sm:$0xff]
        %v693 = vld [vmem:[%s274 + $0x818] sm:$0xff]
        %v694 = vld [vmem:[%s274 + $0x820] sm:$0xff]
        %v695 = vld [vmem:[%s274 + $0x828] sm:$0xff]
        %v696 = vld [vmem:[%s274 + $0x830] sm:$0xf]
        %v697 = vld [vmem:[%s274 + $0x834] sm:$0xff]
        %v698 = vld [vmem:[%s274 + $0x83c] sm:$0xff]
        %v699 = vld [vmem:[%s274 + $0x844] sm:$0xff]
        %v700 = vld [vmem:[%s274 + $0x84c] sm:$0xff]
        %v701 = vld [vmem:[%s274 + $0x854] sm:$0xff]
        %v702 = vld [vmem:[%s274 + $0x85c] sm:$0xff]
        %v703 = vld [vmem:[%s274 + $0x864] sm:$0xff]
        %v704 = vld [vmem:[%s274 + $0x86c] sm:$0xff]
        %v705 = vld [vmem:[%s274 + $0x874] sm:$0xff]
        %v706 = vld [vmem:[%s274 + $0x87c] sm:$0xff]
        %v707 = vld [vmem:[%s274 + $0x884] sm:$0xff]
        %v708 = vld [vmem:[%s274 + $0x88c] sm:$0xff]
        %v709 = vld [vmem:[%s274 + $0x894] sm:$0xf]
        %v710 = vld [vmem:[%s274 + $0x898] sm:$0xff]
        %v711 = vld [vmem:[%s274 + $0x8a0] sm:$0xff]
        %v712 = vld [vmem:[%s274 + $0x8a8] sm:$0xff]
        %v713 = vld [vmem:[%s274 + $0x8b0] sm:$0xff]
        %v714 = vld [vmem:[%s274 + $0x8b8] sm:$0xff]
        %v715 = vld [vmem:[%s274 + $0x8c0] sm:$0xff]
        %v716 = vld [vmem:[%s274 + $0x8c8] sm:$0xff]
        %v717 = vld [vmem:[%s274 + $0x8d0] sm:$0xff]
        %v718 = vld [vmem:[%s274 + $0x8d8] sm:$0xff]
        %v719 = vld [vmem:[%s274 + $0x8e0] sm:$0xff]
        %v720 = vld [vmem:[%s274 + $0x8e8] sm:$0xff]
        %v721 = vld [vmem:[%s274 + $0x8f0] sm:$0xff]
        %v722 = vld [vmem:[%s274 + $0x8f8] sm:$0xf]
        %v723 = vld [vmem:[%s274 + $0x8fc] sm:$0xff]
        %v724 = vld [vmem:[%s274 + $0x904] sm:$0xff]
        %v725 = vld [vmem:[%s274 + $0x90c] sm:$0xff]
        %v726 = vld [vmem:[%s274 + $0x914] sm:$0xff]
        %v727 = vld [vmem:[%s274 + $0x91c] sm:$0xff]
        %v728 = vld [vmem:[%s274 + $0x924] sm:$0xff]
        %v729 = vld [vmem:[%s274 + $0x92c] sm:$0xff]
        %v730 = vld [vmem:[%s274 + $0x934] sm:$0xff]
        %v731 = vld [vmem:[%s274 + $0x93c] sm:$0xff]
        %v732 = vld [vmem:[%s274 + $0x944] sm:$0xff]
        %v733 = vld [vmem:[%s274 + $0x94c] sm:$0xff]
        %v734 = vld [vmem:[%s274 + $0x954] sm:$0xff]
        %v735 = vld [vmem:[%s274 + $0x95c] sm:$0xf]
        %v736 = vld [vmem:[%s274 + $0x960] sm:$0xff]
        %v737 = vld [vmem:[%s274 + $0x968] sm:$0xff]
        %v738 = vld [vmem:[%s274 + $0x970] sm:$0xff]
        %v739 = vld [vmem:[%s274 + $0x978] sm:$0xff]
        %v740 = vld [vmem:[%s274 + $0x980] sm:$0xff]
        %v741 = vld [vmem:[%s274 + $0x988] sm:$0xff]
        %v742 = vld [vmem:[%s274 + $0x990] sm:$0xff]
        %v743 = vld [vmem:[%s274 + $0x998] sm:$0xff]
        %v744 = vld [vmem:[%s274 + $0x9a0] sm:$0xff]
        %v745 = vld [vmem:[%s274 + $0x9a8] sm:$0xff]
        %v746 = vld [vmem:[%s274 + $0x9b0] sm:$0xff]
        %v747 = vld [vmem:[%s274 + $0x9b8] sm:$0xff]
        %v748 = vld [vmem:[%s274 + $0x9c0] sm:$0xf]
        %v749 = vld [vmem:[%s274 + $0x9c4] sm:$0xff]
        %v750 = vld [vmem:[%s274 + $0x9cc] sm:$0xff]
        %v751 = vld [vmem:[%s274 + $0x9d4] sm:$0xff]
        %v752 = vld [vmem:[%s274 + $0x9dc] sm:$0xff]
        %v753 = vld [vmem:[%s274 + $0x9e4] sm:$0xff]
        %v754 = vld [vmem:[%s274 + $0x9ec] sm:$0xff]
        %v755 = vld [vmem:[%s274 + $0x9f4] sm:$0xff]
        %v756 = vld [vmem:[%s274 + $0x9fc] sm:$0xff]
        %v757 = vld [vmem:[%s274 + $0xa04] sm:$0xff]
        %v758 = vld [vmem:[%s274 + $0xa0c] sm:$0xff]
        %v759 = vld [vmem:[%s274 + $0xa14] sm:$0xff]
        %v760 = vld [vmem:[%s274 + $0xa1c] sm:$0xff]
        %v761 = vld [vmem:[%s274 + $0xa24] sm:$0xf]
        %v762 = vld [vmem:[%s274 + $0xa28] sm:$0xff]
        %v763 = vld [vmem:[%s274 + $0xa30] sm:$0xff]
        %v764 = vld [vmem:[%s274 + $0xa38] sm:$0xff]
        %v765 = vld [vmem:[%s274 + $0xa40] sm:$0xff]
        %v766 = vld [vmem:[%s274 + $0xa48] sm:$0xff]
        %v767 = vld [vmem:[%s274 + $0xa50] sm:$0xff]
        %v768 = vld [vmem:[%s274 + $0xa58] sm:$0xff]
        %v769 = vld [vmem:[%s274 + $0xa60] sm:$0xff]
        %v770 = vld [vmem:[%s274 + $0xa68] sm:$0xff]
        %v771 = vld [vmem:[%s274 + $0xa70] sm:$0xff]
        %v772 = vld [vmem:[%s274 + $0xa78] sm:$0xff]
        %v773 = vld [vmem:[%s274 + $0xa80] sm:$0xff]
        %v774 = vld [vmem:[%s274 + $0xa88] sm:$0xf]
        %v775 = vld [vmem:[%s274 + $0xa8c] sm:$0xff]
        %v776 = vld [vmem:[%s274 + $0xa94] sm:$0xff]
        %v777 = vld [vmem:[%s274 + $0xa9c] sm:$0xff]
        %v778 = vld [vmem:[%s274 + $0xaa4] sm:$0xff]
        %v779 = vld [vmem:[%s274 + $0xaac] sm:$0xff]
        %v780 = vld [vmem:[%s274 + $0xab4] sm:$0xff]
        %v781 = vld [vmem:[%s274 + $0xabc] sm:$0xff]
        %v782 = vld [vmem:[%s274 + $0xac4] sm:$0xff]
        %v783 = vld [vmem:[%s274 + $0xacc] sm:$0xff]
        %v784 = vld [vmem:[%s274 + $0xad4] sm:$0xff]
        %v785 = vld [vmem:[%s274 + $0xadc] sm:$0xff]
        %v786 = vld [vmem:[%s274 + $0xae4] sm:$0xff]
        %v787 = vld [vmem:[%s274 + $0xaec] sm:$0xf]
        %v788 = vld [vmem:[%s274 + $0xaf0] sm:$0xff]
        %v789 = vld [vmem:[%s274 + $0xaf8] sm:$0xff]
        %v790 = vld [vmem:[%s274 + $0xb00] sm:$0xff]
        %v791 = vld [vmem:[%s274 + $0xb08] sm:$0xff]
        %v792 = vld [vmem:[%s274 + $0xb10] sm:$0xff]
        %v793 = vld [vmem:[%s274 + $0xb18] sm:$0xff]
        %v794 = vld [vmem:[%s274 + $0xb20] sm:$0xff]
        %v795 = vld [vmem:[%s274 + $0xb28] sm:$0xff]
        %v796 = vld [vmem:[%s274 + $0xb30] sm:$0xff]
        %v797 = vld [vmem:[%s274 + $0xb38] sm:$0xff]
        %v798 = vld [vmem:[%s274 + $0xb40] sm:$0xff]
        %v799 = vld [vmem:[%s274 + $0xb48] sm:$0xff]
        %v800 = vld [vmem:[%s274 + $0xb50] sm:$0xf]
        %v801 = vld [vmem:[%s274 + $0xb54] sm:$0xff]
        %v802 = vld [vmem:[%s274 + $0xb5c] sm:$0xff]
        %v803 = vld [vmem:[%s274 + $0xb64] sm:$0xff]
        %v804 = vld [vmem:[%s274 + $0xb6c] sm:$0xff]
        %v805 = vld [vmem:[%s274 + $0xb74] sm:$0xff]
        %v806 = vld [vmem:[%s274 + $0xb7c] sm:$0xff]
        %v807 = vld [vmem:[%s274 + $0xb84] sm:$0xff]
        %v808 = vld [vmem:[%s274 + $0xb8c] sm:$0xff]
        %v809 = vld [vmem:[%s274 + $0xb94] sm:$0xff]
        %v810 = vld [vmem:[%s274 + $0xb9c] sm:$0xff]
        %v811 = vld [vmem:[%s274 + $0xba4] sm:$0xff]
        %v812 = vld [vmem:[%s274 + $0xbac] sm:$0xff]
        %v813 = vld [vmem:[%s274 + $0xbb4] sm:$0xf]
        %v814 = vld [vmem:[%s274 + $0xbb8] sm:$0xff]
        %v815 = vld [vmem:[%s274 + $0xbc0] sm:$0xff]
        %v816 = vld [vmem:[%s274 + $0xbc8] sm:$0xff]
        %v817 = vld [vmem:[%s274 + $0xbd0] sm:$0xff]
        %v818 = vld [vmem:[%s274 + $0xbd8] sm:$0xff]
        %v819 = vld [vmem:[%s274 + $0xbe0] sm:$0xff]
        %v820 = vld [vmem:[%s274 + $0xbe8] sm:$0xff]
        %v821 = vld [vmem:[%s274 + $0xbf0] sm:$0xff]
        %v822 = vld [vmem:[%s274 + $0xbf8] sm:$0xff]
        %v823 = vld [vmem:[%s274 + $0xc00] sm:$0xff]
        %v824 = vld [vmem:[%s274 + $0xc08] sm:$0xff]
        %v825 = vld [vmem:[%s274 + $0xc10] sm:$0xff]
        %v826 = vld [vmem:[%s274 + $0xc18] sm:$0xf]
        %v827 = vld [vmem:[%s274 + $0xc1c] sm:$0xff]
        %v828 = vld [vmem:[%s274 + $0xc24] sm:$0xff]
        %v829 = vld [vmem:[%s274 + $0xc2c] sm:$0xff]
        %v830 = vld [vmem:[%s274 + $0xc34] sm:$0xff]
        %v831 = vld [vmem:[%s274 + $0xc3c] sm:$0xff]
        %v832 = vld [vmem:[%s274 + $0xc44] sm:$0xff]
        %v833 = vld [vmem:[%s274 + $0xc4c] sm:$0xff]
        %v834 = vld [vmem:[%s274 + $0xc54] sm:$0xff]
        %v835 = vld [vmem:[%s274 + $0xc5c] sm:$0xff]
        %v836 = vld [vmem:[%s274 + $0xc64] sm:$0xff]
        %v837 = vld [vmem:[%s274 + $0xc6c] sm:$0xff]
        %v838 = vld [vmem:[%s274 + $0xc74] sm:$0xff]
        %v839 = vld [vmem:[%s274 + $0xc7c] sm:$0xf]
        %v840 = vld [vmem:[%s283] sm:$0xff]
        %v841 = vld [vmem:[%s283 + $0x8] sm:$0xff]
        %v842 = vld [vmem:[%s283 + $0x10] sm:$0xff]
        %v843 = vld [vmem:[%s283 + $0x18] sm:$0x1]
        %v848 = vlaneseq
        %v849 = vshrl.u32 %v848, 7
        %v850 = vsub.s32 0, %v849
        %v851 = vrot.slane %v840, %v850
        %v852 = vlaneseq
        %v853 = vshrl.u32 %v852, 7
        %v854 = vsub.s32 1, %v853
        %v855 = vrot.slane %v840, %v854
        %v856 = vlaneseq
        %v857 = vshrl.u32 %v856, 7
        %v858 = vsub.s32 2, %v857
        %v859 = vrot.slane %v840, %v858
        %v860 = vlaneseq
        %v861 = vshrl.u32 %v860, 7
        %v862 = vsub.s32 3, %v861
        %v863 = vrot.slane %v840, %v862
        %v864 = vlaneseq
        %v865 = vshrl.u32 %v864, 7
        %v866 = vsub.s32 4, %v865
        %v867 = vrot.slane %v840, %v866
        %v868 = vlaneseq
        %v869 = vshrl.u32 %v868, 7
        %v870 = vsub.s32 5, %v869
        %v871 = vrot.slane %v840, %v870
        %v872 = vlaneseq
        %v873 = vshrl.u32 %v872, 7
        %v874 = vsub.s32 6, %v873
        %v875 = vrot.slane %v840, %v874
        %v876 = vlaneseq
        %v877 = vshrl.u32 %v876, 7
        %v878 = vsub.s32 7, %v877
        %v879 = vrot.slane %v840, %v878
        %v880 = vlaneseq
        %v881 = vshrl.u32 %v880, 7
        %v882 = vsub.s32 0, %v881
        %v883 = vrot.slane %v841, %v882
        %v884 = vlaneseq
        %v885 = vshrl.u32 %v884, 7
        %v886 = vsub.s32 1, %v885
        %v887 = vrot.slane %v841, %v886
        %v888 = vlaneseq
        %v889 = vshrl.u32 %v888, 7
        %v890 = vsub.s32 2, %v889
        %v891 = vrot.slane %v841, %v890
        %v892 = vlaneseq
        %v893 = vshrl.u32 %v892, 7
        %v894 = vsub.s32 3, %v893
        %v895 = vrot.slane %v841, %v894
        %v896 = vlaneseq
        %v897 = vshrl.u32 %v896, 7
        %v898 = vsub.s32 4, %v897
        %v899 = vrot.slane %v841, %v898
        %v900 = vlaneseq
        %v901 = vshrl.u32 %v900, 7
        %v902 = vsub.s32 5, %v901
        %v903 = vrot.slane %v841, %v902
        %v904 = vlaneseq
        %v905 = vshrl.u32 %v904, 7
        %v906 = vsub.s32 6, %v905
        %v907 = vrot.slane %v841, %v906
        %v908 = vlaneseq
        %v909 = vshrl.u32 %v908, 7
        %v910 = vsub.s32 7, %v909
        %v911 = vrot.slane %v841, %v910
        %v912 = vlaneseq
        %v913 = vshrl.u32 %v912, 7
        %v914 = vsub.s32 0, %v913
        %v915 = vrot.slane %v842, %v914
        %v916 = vlaneseq
        %v917 = vshrl.u32 %v916, 7
        %v918 = vsub.s32 1, %v917
        %v919 = vrot.slane %v842, %v918
        %v920 = vlaneseq
        %v921 = vshrl.u32 %v920, 7
        %v922 = vsub.s32 2, %v921
        %v923 = vrot.slane %v842, %v922
        %v924 = vlaneseq
        %v925 = vshrl.u32 %v924, 7
        %v926 = vsub.s32 3, %v925
        %v927 = vrot.slane %v842, %v926
        %v928 = vlaneseq
        %v929 = vshrl.u32 %v928, 7
        %v930 = vsub.s32 4, %v929
        %v931 = vrot.slane %v842, %v930
        %v932 = vlaneseq
        %v933 = vshrl.u32 %v932, 7
        %v934 = vsub.s32 5, %v933
        %v935 = vrot.slane %v842, %v934
        %v936 = vlaneseq
        %v937 = vshrl.u32 %v936, 7
        %v938 = vsub.s32 6, %v937
        %v939 = vrot.slane %v842, %v938
        %v940 = vlaneseq
        %v941 = vshrl.u32 %v940, 7
        %v942 = vsub.s32 7, %v941
        %v943 = vrot.slane %v842, %v942
        %v944 = vlaneseq
        %v945 = vshrl.u32 %v944, 7
        %v946 = vsub.s32 0, %v945
        %v947 = vrot.slane %v843, %v946
        %v1389 = vunpack.c.l.b16 %v424
        %v1390 = vunpack.c.h.b16 %v424
        %v1391 = vunpack.c.l.b16 %v425
        %v1392 = vunpack.c.h.b16 %v425
        %v1393 = vunpack.c.l.b16 %v426
        %v1394 = vunpack.c.h.b16 %v426
        %v1395 = vunpack.c.l.b16 %v427
        %v1396 = vunpack.c.h.b16 %v427
        %v1397 = vunpack.c.l.b16 %v428
        %v1398 = vunpack.c.h.b16 %v428
        %v1399 = vunpack.c.l.b16 %v429
        %v1400 = vunpack.c.h.b16 %v429
        %v1401 = vunpack.c.l.b16 %v430
        %v1402 = vunpack.c.h.b16 %v430
        %v1403 = vunpack.c.l.b16 %v431
        %v1404 = vunpack.c.h.b16 %v431
        %v1405 = vunpack.c.l.b16 %v432
        %v1406 = vunpack.c.h.b16 %v432
        %v1407 = vunpack.c.l.b16 %v433
        %v1408 = vunpack.c.h.b16 %v433
        %v1409 = vunpack.c.l.b16 %v434
        %v1410 = vunpack.c.h.b16 %v434
        %v1411 = vunpack.c.l.b16 %v435
        %v1412 = vunpack.c.h.b16 %v435
        %v1413 = vunpack.c.l.b16 %v436
        %v1414 = vunpack.c.l.b16 %v437
        %v1415 = vunpack.c.h.b16 %v437
        %v1416 = vunpack.c.l.b16 %v438
        %v1417 = vunpack.c.h.b16 %v438
        %v1418 = vunpack.c.l.b16 %v439
        %v1419 = vunpack.c.h.b16 %v439
        %v1420 = vunpack.c.l.b16 %v440
        %v1421 = vunpack.c.h.b16 %v440
        %v1422 = vunpack.c.l.b16 %v441
        %v1423 = vunpack.c.h.b16 %v441
        %v1424 = vunpack.c.l.b16 %v442
        %v1425 = vunpack.c.h.b16 %v442
        %v1426 = vunpack.c.l.b16 %v443
        %v1427 = vunpack.c.h.b16 %v443
        %v1428 = vunpack.c.l.b16 %v444
        %v1429 = vunpack.c.h.b16 %v444
        %v1430 = vunpack.c.l.b16 %v445
        %v1431 = vunpack.c.h.b16 %v445
        %v1432 = vunpack.c.l.b16 %v446
        %v1433 = vunpack.c.h.b16 %v446
        %v1434 = vunpack.c.l.b16 %v447
        %v1435 = vunpack.c.h.b16 %v447
        %v1436 = vunpack.c.l.b16 %v448
        %v1437 = vunpack.c.h.b16 %v448
        %v1438 = vunpack.c.l.b16 %v449
        %v1439 = vunpack.c.l.b16 %v450
        %v1440 = vunpack.c.h.b16 %v450
        %v1441 = vunpack.c.l.b16 %v451
        %v1442 = vunpack.c.h.b16 %v451
        %v1443 = vunpack.c.l.b16 %v452
        %v1444 = vunpack.c.h.b16 %v452
        %v1445 = vunpack.c.l.b16 %v453
        %v1446 = vunpack.c.h.b16 %v453
        %v1447 = vunpack.c.l.b16 %v454
        %v1448 = vunpack.c.h.b16 %v454
        %v1449 = vunpack.c.l.b16 %v455
        %v1450 = vunpack.c.h.b16 %v455
        %v1451 = vunpack.c.l.b16 %v456
        %v1452 = vunpack.c.h.b16 %v456
        %v1453 = vunpack.c.l.b16 %v457
        %v1454 = vunpack.c.h.b16 %v457
        %v1455 = vunpack.c.l.b16 %v458
        %v1456 = vunpack.c.h.b16 %v458
        %v1457 = vunpack.c.l.b16 %v459
        %v1458 = vunpack.c.h.b16 %v459
        %v1459 = vunpack.c.l.b16 %v460
        %v1460 = vunpack.c.h.b16 %v460
        %v1461 = vunpack.c.l.b16 %v461
        %v1462 = vunpack.c.h.b16 %v461
        %v1463 = vunpack.c.l.b16 %v462
        %v1464 = vunpack.c.l.b16 %v463
        %v1465 = vunpack.c.h.b16 %v463
        %v1466 = vunpack.c.l.b16 %v464
        %v1467 = vunpack.c.h.b16 %v464
        %v1468 = vunpack.c.l.b16 %v465
        %v1469 = vunpack.c.h.b16 %v465
        %v1470 = vunpack.c.l.b16 %v466
        %v1471 = vunpack.c.h.b16 %v466
        %v1472 = vunpack.c.l.b16 %v467
        %v1473 = vunpack.c.h.b16 %v467
        %v1474 = vunpack.c.l.b16 %v468
        %v1475 = vunpack.c.h.b16 %v468
        %v1476 = vunpack.c.l.b16 %v469
        %v1477 = vunpack.c.h.b16 %v469
        %v1478 = vunpack.c.l.b16 %v470
        %v1479 = vunpack.c.h.b16 %v470
        %v1480 = vunpack.c.l.b16 %v471
        %v1481 = vunpack.c.h.b16 %v471
        %v1482 = vunpack.c.l.b16 %v472
        %v1483 = vunpack.c.h.b16 %v472
        %v1484 = vunpack.c.l.b16 %v473
        %v1485 = vunpack.c.h.b16 %v473
        %v1486 = vunpack.c.l.b16 %v474
        %v1487 = vunpack.c.h.b16 %v474
        %v1488 = vunpack.c.l.b16 %v475
        %v1489 = vunpack.c.l.b16 %v476
        %v1490 = vunpack.c.h.b16 %v476
        %v1491 = vunpack.c.l.b16 %v477
        %v1492 = vunpack.c.h.b16 %v477
        %v1493 = vunpack.c.l.b16 %v478
        %v1494 = vunpack.c.h.b16 %v478
        %v1495 = vunpack.c.l.b16 %v479
        %v1496 = vunpack.c.h.b16 %v479
        %v1497 = vunpack.c.l.b16 %v480
        %v1498 = vunpack.c.h.b16 %v480
        %v1499 = vunpack.c.l.b16 %v481
        %v1500 = vunpack.c.h.b16 %v481
        %v1501 = vunpack.c.l.b16 %v482
        %v1502 = vunpack.c.h.b16 %v482
        %v1503 = vunpack.c.l.b16 %v483
        %v1504 = vunpack.c.h.b16 %v483
        %v1505 = vunpack.c.l.b16 %v484
        %v1506 = vunpack.c.h.b16 %v484
        %v1507 = vunpack.c.l.b16 %v485
        %v1508 = vunpack.c.h.b16 %v485
        %v1509 = vunpack.c.l.b16 %v486
        %v1510 = vunpack.c.h.b16 %v486
        %v1511 = vunpack.c.l.b16 %v487
        %v1512 = vunpack.c.h.b16 %v487
        %v1513 = vunpack.c.l.b16 %v488
        %v1514 = vunpack.c.l.b16 %v489
        %v1515 = vunpack.c.h.b16 %v489
        %v1516 = vunpack.c.l.b16 %v490
        %v1517 = vunpack.c.h.b16 %v490
        %v1518 = vunpack.c.l.b16 %v491
        %v1519 = vunpack.c.h.b16 %v491
        %v1520 = vunpack.c.l.b16 %v492
        %v1521 = vunpack.c.h.b16 %v492
        %v1522 = vunpack.c.l.b16 %v493
        %v1523 = vunpack.c.h.b16 %v493
        %v1524 = vunpack.c.l.b16 %v494
        %v1525 = vunpack.c.h.b16 %v494
        %v1526 = vunpack.c.l.b16 %v495
        %v1527 = vunpack.c.h.b16 %v495
        %v1528 = vunpack.c.l.b16 %v496
        %v1529 = vunpack.c.h.b16 %v496
        %v1530 = vunpack.c.l.b16 %v497
        %v1531 = vunpack.c.h.b16 %v497
        %v1532 = vunpack.c.l.b16 %v498
        %v1533 = vunpack.c.h.b16 %v498
        %v1534 = vunpack.c.l.b16 %v499
        %v1535 = vunpack.c.h.b16 %v499
        %v1536 = vunpack.c.l.b16 %v500
        %v1537 = vunpack.c.h.b16 %v500
        %v1538 = vunpack.c.l.b16 %v501
        %v1539 = vunpack.c.l.b16 %v502
        %v1540 = vunpack.c.h.b16 %v502
        %v1541 = vunpack.c.l.b16 %v503
        %v1542 = vunpack.c.h.b16 %v503
        %v1543 = vunpack.c.l.b16 %v504
        %v1544 = vunpack.c.h.b16 %v504
        %v1545 = vunpack.c.l.b16 %v505
        %v1546 = vunpack.c.h.b16 %v505
        %v1547 = vunpack.c.l.b16 %v506
        %v1548 = vunpack.c.h.b16 %v506
        %v1549 = vunpack.c.l.b16 %v507
        %v1550 = vunpack.c.h.b16 %v507
        %v1551 = vunpack.c.l.b16 %v508
        %v1552 = vunpack.c.h.b16 %v508
        %v1553 = vunpack.c.l.b16 %v509
        %v1554 = vunpack.c.h.b16 %v509
        %v1555 = vunpack.c.l.b16 %v510
        %v1556 = vunpack.c.h.b16 %v510
        %v1557 = vunpack.c.l.b16 %v511
        %v1558 = vunpack.c.h.b16 %v511
        %v1559 = vunpack.c.l.b16 %v512
        %v1560 = vunpack.c.h.b16 %v512
        %v1561 = vunpack.c.l.b16 %v513
        %v1562 = vunpack.c.h.b16 %v513
        %v1563 = vunpack.c.l.b16 %v514
        %v1564 = vunpack.c.l.b16 %v515
        %v1565 = vunpack.c.h.b16 %v515
        %v1566 = vunpack.c.l.b16 %v516
        %v1567 = vunpack.c.h.b16 %v516
        %v1568 = vunpack.c.l.b16 %v517
        %v1569 = vunpack.c.h.b16 %v517
        %v1570 = vunpack.c.l.b16 %v518
        %v1571 = vunpack.c.h.b16 %v518
        %v1572 = vunpack.c.l.b16 %v519
        %v1573 = vunpack.c.h.b16 %v519
        %v1574 = vunpack.c.l.b16 %v520
        %v1575 = vunpack.c.h.b16 %v520
        %v1576 = vunpack.c.l.b16 %v521
        %v1577 = vunpack.c.h.b16 %v521
        %v1578 = vunpack.c.l.b16 %v522
        %v1579 = vunpack.c.h.b16 %v522
        %v1580 = vunpack.c.l.b16 %v523
        %v1581 = vunpack.c.h.b16 %v523
        %v1582 = vunpack.c.l.b16 %v524
        %v1583 = vunpack.c.h.b16 %v524
        %v1584 = vunpack.c.l.b16 %v525
        %v1585 = vunpack.c.h.b16 %v525
        %v1586 = vunpack.c.l.b16 %v526
        %v1587 = vunpack.c.h.b16 %v526
        %v1588 = vunpack.c.l.b16 %v527
        %v1589 = vunpack.c.l.b16 %v528
        %v1590 = vunpack.c.h.b16 %v528
        %v1591 = vunpack.c.l.b16 %v529
        %v1592 = vunpack.c.h.b16 %v529
        %v1593 = vunpack.c.l.b16 %v530
        %v1594 = vunpack.c.h.b16 %v530
        %v1595 = vunpack.c.l.b16 %v531
        %v1596 = vunpack.c.h.b16 %v531
        %v1597 = vunpack.c.l.b16 %v532
        %v1598 = vunpack.c.h.b16 %v532
        %v1599 = vunpack.c.l.b16 %v533
        %v1600 = vunpack.c.h.b16 %v533
        %v1601 = vunpack.c.l.b16 %v534
        %v1602 = vunpack.c.h.b16 %v534
        %v1603 = vunpack.c.l.b16 %v535
        %v1604 = vunpack.c.h.b16 %v535
        %v1605 = vunpack.c.l.b16 %v536
        %v1606 = vunpack.c.h.b16 %v536
        %v1607 = vunpack.c.l.b16 %v537
        %v1608 = vunpack.c.h.b16 %v537
        %v1609 = vunpack.c.l.b16 %v538
        %v1610 = vunpack.c.h.b16 %v538
        %v1611 = vunpack.c.l.b16 %v539
        %v1612 = vunpack.c.h.b16 %v539
        %v1613 = vunpack.c.l.b16 %v540
        %v1614 = vunpack.c.l.b16 %v541
        %v1615 = vunpack.c.h.b16 %v541
        %v1616 = vunpack.c.l.b16 %v542
        %v1617 = vunpack.c.h.b16 %v542
        %v1618 = vunpack.c.l.b16 %v543
        %v1619 = vunpack.c.h.b16 %v543
        %v1620 = vunpack.c.l.b16 %v544
        %v1621 = vunpack.c.h.b16 %v544
        %v1622 = vunpack.c.l.b16 %v545
        %v1623 = vunpack.c.h.b16 %v545
        %v1624 = vunpack.c.l.b16 %v546
        %v1625 = vunpack.c.h.b16 %v546
        %v1626 = vunpack.c.l.b16 %v547
        %v1627 = vunpack.c.h.b16 %v547
        %v1628 = vunpack.c.l.b16 %v548
        %v1629 = vunpack.c.h.b16 %v548
        %v1630 = vunpack.c.l.b16 %v549
        %v1631 = vunpack.c.h.b16 %v549
        %v1632 = vunpack.c.l.b16 %v550
        %v1633 = vunpack.c.h.b16 %v550
        %v1634 = vunpack.c.l.b16 %v551
        %v1635 = vunpack.c.h.b16 %v551
        %v1636 = vunpack.c.l.b16 %v552
        %v1637 = vunpack.c.h.b16 %v552
        %v1638 = vunpack.c.l.b16 %v553
        %v1639 = vunpack.c.l.b16 %v554
        %v1640 = vunpack.c.h.b16 %v554
        %v1641 = vunpack.c.l.b16 %v555
        %v1642 = vunpack.c.h.b16 %v555
        %v1643 = vunpack.c.l.b16 %v556
        %v1644 = vunpack.c.h.b16 %v556
        %v1645 = vunpack.c.l.b16 %v557
        %v1646 = vunpack.c.h.b16 %v557
        %v1647 = vunpack.c.l.b16 %v558
        %v1648 = vunpack.c.h.b16 %v558
        %v1649 = vunpack.c.l.b16 %v559
        %v1650 = vunpack.c.h.b16 %v559
        %v1651 = vunpack.c.l.b16 %v560
        %v1652 = vunpack.c.h.b16 %v560
        %v1653 = vunpack.c.l.b16 %v561
        %v1654 = vunpack.c.h.b16 %v561
        %v1655 = vunpack.c.l.b16 %v562
        %v1656 = vunpack.c.h.b16 %v562
        %v1657 = vunpack.c.l.b16 %v563
        %v1658 = vunpack.c.h.b16 %v563
        %v1659 = vunpack.c.l.b16 %v564
        %v1660 = vunpack.c.h.b16 %v564
        %v1661 = vunpack.c.l.b16 %v565
        %v1662 = vunpack.c.h.b16 %v565
        %v1663 = vunpack.c.l.b16 %v566
        %v1664 = vunpack.c.l.b16 %v567
        %v1665 = vunpack.c.h.b16 %v567
        %v1666 = vunpack.c.l.b16 %v568
        %v1667 = vunpack.c.h.b16 %v568
        %v1668 = vunpack.c.l.b16 %v569
        %v1669 = vunpack.c.h.b16 %v569
        %v1670 = vunpack.c.l.b16 %v570
        %v1671 = vunpack.c.h.b16 %v570
        %v1672 = vunpack.c.l.b16 %v571
        %v1673 = vunpack.c.h.b16 %v571
        %v1674 = vunpack.c.l.b16 %v572
        %v1675 = vunpack.c.h.b16 %v572
        %v1676 = vunpack.c.l.b16 %v573
        %v1677 = vunpack.c.h.b16 %v573
        %v1678 = vunpack.c.l.b16 %v574
        %v1679 = vunpack.c.h.b16 %v574
        %v1680 = vunpack.c.l.b16 %v575
        %v1681 = vunpack.c.h.b16 %v575
        %v1682 = vunpack.c.l.b16 %v576
        %v1683 = vunpack.c.h.b16 %v576
        %v1684 = vunpack.c.l.b16 %v577
        %v1685 = vunpack.c.h.b16 %v577
        %v1686 = vunpack.c.l.b16 %v578
        %v1687 = vunpack.c.h.b16 %v578
        %v1688 = vunpack.c.l.b16 %v579
        %v1689 = vunpack.c.l.b16 %v580
        %v1690 = vunpack.c.h.b16 %v580
        %v1691 = vunpack.c.l.b16 %v581
        %v1692 = vunpack.c.h.b16 %v581
        %v1693 = vunpack.c.l.b16 %v582
        %v1694 = vunpack.c.h.b16 %v582
        %v1695 = vunpack.c.l.b16 %v583
        %v1696 = vunpack.c.h.b16 %v583
        %v1697 = vunpack.c.l.b16 %v584
        %v1698 = vunpack.c.h.b16 %v584
        %v1699 = vunpack.c.l.b16 %v585
        %v1700 = vunpack.c.h.b16 %v585
        %v1701 = vunpack.c.l.b16 %v586
        %v1702 = vunpack.c.h.b16 %v586
        %v1703 = vunpack.c.l.b16 %v587
        %v1704 = vunpack.c.h.b16 %v587
        %v1705 = vunpack.c.l.b16 %v588
        %v1706 = vunpack.c.h.b16 %v588
        %v1707 = vunpack.c.l.b16 %v589
        %v1708 = vunpack.c.h.b16 %v589
        %v1709 = vunpack.c.l.b16 %v590
        %v1710 = vunpack.c.h.b16 %v590
        %v1711 = vunpack.c.l.b16 %v591
        %v1712 = vunpack.c.h.b16 %v591
        %v1713 = vunpack.c.l.b16 %v592
        %v1714 = vunpack.c.l.b16 %v593
        %v1715 = vunpack.c.h.b16 %v593
        %v1716 = vunpack.c.l.b16 %v594
        %v1717 = vunpack.c.h.b16 %v594
        %v1718 = vunpack.c.l.b16 %v595
        %v1719 = vunpack.c.h.b16 %v595
        %v1720 = vunpack.c.l.b16 %v596
        %v1721 = vunpack.c.h.b16 %v596
        %v1722 = vunpack.c.l.b16 %v597
        %v1723 = vunpack.c.h.b16 %v597
        %v1724 = vunpack.c.l.b16 %v598
        %v1725 = vunpack.c.h.b16 %v598
        %v1726 = vunpack.c.l.b16 %v599
        %v1727 = vunpack.c.h.b16 %v599
        %v1728 = vunpack.c.l.b16 %v600
        %v1729 = vunpack.c.h.b16 %v600
        %v1730 = vunpack.c.l.b16 %v601
        %v1731 = vunpack.c.h.b16 %v601
        %v1732 = vunpack.c.l.b16 %v602
        %v1733 = vunpack.c.h.b16 %v602
        %v1734 = vunpack.c.l.b16 %v603
        %v1735 = vunpack.c.h.b16 %v603
        %v1736 = vunpack.c.l.b16 %v604
        %v1737 = vunpack.c.h.b16 %v604
        %v1738 = vunpack.c.l.b16 %v605
        %v1739 = vunpack.c.l.b16 %v606
        %v1740 = vunpack.c.h.b16 %v606
        %v1741 = vunpack.c.l.b16 %v607
        %v1742 = vunpack.c.h.b16 %v607
        %v1743 = vunpack.c.l.b16 %v608
        %v1744 = vunpack.c.h.b16 %v608
        %v1745 = vunpack.c.l.b16 %v609
        %v1746 = vunpack.c.h.b16 %v609
        %v1747 = vunpack.c.l.b16 %v610
        %v1748 = vunpack.c.h.b16 %v610
        %v1749 = vunpack.c.l.b16 %v611
        %v1750 = vunpack.c.h.b16 %v611
        %v1751 = vunpack.c.l.b16 %v612
        %v1752 = vunpack.c.h.b16 %v612
        %v1753 = vunpack.c.l.b16 %v613
        %v1754 = vunpack.c.h.b16 %v613
        %v1755 = vunpack.c.l.b16 %v614
        %v1756 = vunpack.c.h.b16 %v614
        %v1757 = vunpack.c.l.b16 %v615
        %v1758 = vunpack.c.h.b16 %v615
        %v1759 = vunpack.c.l.b16 %v616
        %v1760 = vunpack.c.h.b16 %v616
        %v1761 = vunpack.c.l.b16 %v617
        %v1762 = vunpack.c.h.b16 %v617
        %v1763 = vunpack.c.l.b16 %v618
        %v1764 = vunpack.c.l.b16 %v619
        %v1765 = vunpack.c.h.b16 %v619
        %v1766 = vunpack.c.l.b16 %v620
        %v1767 = vunpack.c.h.b16 %v620
        %v1768 = vunpack.c.l.b16 %v621
        %v1769 = vunpack.c.h.b16 %v621
        %v1770 = vunpack.c.l.b16 %v622
        %v1771 = vunpack.c.h.b16 %v622
        %v1772 = vunpack.c.l.b16 %v623
        %v1773 = vunpack.c.h.b16 %v623
        %v1774 = vunpack.c.l.b16 %v624
        %v1775 = vunpack.c.h.b16 %v624
        %v1776 = vunpack.c.l.b16 %v625
        %v1777 = vunpack.c.h.b16 %v625
        %v1778 = vunpack.c.l.b16 %v626
        %v1779 = vunpack.c.h.b16 %v626
        %v1780 = vunpack.c.l.b16 %v627
        %v1781 = vunpack.c.h.b16 %v627
        %v1782 = vunpack.c.l.b16 %v628
        %v1783 = vunpack.c.h.b16 %v628
        %v1784 = vunpack.c.l.b16 %v629
        %v1785 = vunpack.c.h.b16 %v629
        %v1786 = vunpack.c.l.b16 %v630
        %v1787 = vunpack.c.h.b16 %v630
        %v1788 = vunpack.c.l.b16 %v631
        %v1789 = vunpack.c.l.b16 %v632
        %v1790 = vunpack.c.h.b16 %v632
        %v1791 = vunpack.c.l.b16 %v633
        %v1792 = vunpack.c.h.b16 %v633
        %v1793 = vunpack.c.l.b16 %v634
        %v1794 = vunpack.c.h.b16 %v634
        %v1795 = vunpack.c.l.b16 %v635
        %v1796 = vunpack.c.h.b16 %v635
        %v1797 = vunpack.c.l.b16 %v636
        %v1798 = vunpack.c.h.b16 %v636
        %v1799 = vunpack.c.l.b16 %v637
        %v1800 = vunpack.c.h.b16 %v637
        %v1801 = vunpack.c.l.b16 %v638
        %v1802 = vunpack.c.h.b16 %v638
        %v1803 = vunpack.c.l.b16 %v639
        %v1804 = vunpack.c.h.b16 %v639
        %v1805 = vunpack.c.l.b16 %v640
        %v1806 = vunpack.c.h.b16 %v640
        %v1807 = vunpack.c.l.b16 %v641
        %v1808 = vunpack.c.h.b16 %v641
        %v1809 = vunpack.c.l.b16 %v642
        %v1810 = vunpack.c.h.b16 %v642
        %v1811 = vunpack.c.l.b16 %v643
        %v1812 = vunpack.c.h.b16 %v643
        %v1813 = vunpack.c.l.b16 %v644
        %v1814 = vunpack.c.l.b16 %v645
        %v1815 = vunpack.c.h.b16 %v645
        %v1816 = vunpack.c.l.b16 %v646
        %v1817 = vunpack.c.h.b16 %v646
        %v1818 = vunpack.c.l.b16 %v647
        %v1819 = vunpack.c.h.b16 %v647
        %v1820 = vunpack.c.l.b16 %v648
        %v1821 = vunpack.c.h.b16 %v648
        %v1822 = vunpack.c.l.b16 %v649
        %v1823 = vunpack.c.h.b16 %v649
        %v1824 = vunpack.c.l.b16 %v650
        %v1825 = vunpack.c.h.b16 %v650
        %v1826 = vunpack.c.l.b16 %v651
        %v1827 = vunpack.c.h.b16 %v651
        %v1828 = vunpack.c.l.b16 %v652
        %v1829 = vunpack.c.h.b16 %v652
        %v1830 = vunpack.c.l.b16 %v653
        %v1831 = vunpack.c.h.b16 %v653
        %v1832 = vunpack.c.l.b16 %v654
        %v1833 = vunpack.c.h.b16 %v654
        %v1834 = vunpack.c.l.b16 %v655
        %v1835 = vunpack.c.h.b16 %v655
        %v1836 = vunpack.c.l.b16 %v656
        %v1837 = vunpack.c.h.b16 %v656
        %v1838 = vunpack.c.l.b16 %v657
        %v1839 = vunpack.c.l.b16 %v658
        %v1840 = vunpack.c.h.b16 %v658
        %v1841 = vunpack.c.l.b16 %v659
        %v1842 = vunpack.c.h.b16 %v659
        %v1843 = vunpack.c.l.b16 %v660
        %v1844 = vunpack.c.h.b16 %v660
        %v1845 = vunpack.c.l.b16 %v661
        %v1846 = vunpack.c.h.b16 %v661
        %v1847 = vunpack.c.l.b16 %v662
        %v1848 = vunpack.c.h.b16 %v662
        %v1849 = vunpack.c.l.b16 %v663
        %v1850 = vunpack.c.h.b16 %v663
        %v1851 = vunpack.c.l.b16 %v664
        %v1852 = vunpack.c.h.b16 %v664
        %v1853 = vunpack.c.l.b16 %v665
        %v1854 = vunpack.c.h.b16 %v665
        %v1855 = vunpack.c.l.b16 %v666
        %v1856 = vunpack.c.h.b16 %v666
        %v1857 = vunpack.c.l.b16 %v667
        %v1858 = vunpack.c.h.b16 %v667
        %v1859 = vunpack.c.l.b16 %v668
        %v1860 = vunpack.c.h.b16 %v668
        %v1861 = vunpack.c.l.b16 %v669
        %v1862 = vunpack.c.h.b16 %v669
        %v1863 = vunpack.c.l.b16 %v670
        %v1864 = vunpack.c.l.b16 %v671
        %v1865 = vunpack.c.h.b16 %v671
        %v1866 = vunpack.c.l.b16 %v672
        %v1867 = vunpack.c.h.b16 %v672
        %v1868 = vunpack.c.l.b16 %v673
        %v1869 = vunpack.c.h.b16 %v673
        %v1870 = vunpack.c.l.b16 %v674
        %v1871 = vunpack.c.h.b16 %v674
        %v1872 = vunpack.c.l.b16 %v675
        %v1873 = vunpack.c.h.b16 %v675
        %v1874 = vunpack.c.l.b16 %v676
        %v1875 = vunpack.c.h.b16 %v676
        %v1876 = vunpack.c.l.b16 %v677
        %v1877 = vunpack.c.h.b16 %v677
        %v1878 = vunpack.c.l.b16 %v678
        %v1879 = vunpack.c.h.b16 %v678
        %v1880 = vunpack.c.l.b16 %v679
        %v1881 = vunpack.c.h.b16 %v679
        %v1882 = vunpack.c.l.b16 %v680
        %v1883 = vunpack.c.h.b16 %v680
        %v1884 = vunpack.c.l.b16 %v681
        %v1885 = vunpack.c.h.b16 %v681
        %v1886 = vunpack.c.l.b16 %v682
        %v1887 = vunpack.c.h.b16 %v682
        %v1888 = vunpack.c.l.b16 %v683
        %v1889 = vunpack.c.l.b16 %v684
        %v1890 = vunpack.c.h.b16 %v684
        %v1891 = vunpack.c.l.b16 %v685
        %v1892 = vunpack.c.h.b16 %v685
        %v1893 = vunpack.c.l.b16 %v686
        %v1894 = vunpack.c.h.b16 %v686
        %v1895 = vunpack.c.l.b16 %v687
        %v1896 = vunpack.c.h.b16 %v687
        %v1897 = vunpack.c.l.b16 %v688
        %v1898 = vunpack.c.h.b16 %v688
        %v1899 = vunpack.c.l.b16 %v689
        %v1900 = vunpack.c.h.b16 %v689
        %v1901 = vunpack.c.l.b16 %v690
        %v1902 = vunpack.c.h.b16 %v690
        %v1903 = vunpack.c.l.b16 %v691
        %v1904 = vunpack.c.h.b16 %v691
        %v1905 = vunpack.c.l.b16 %v692
        %v1906 = vunpack.c.h.b16 %v692
        %v1907 = vunpack.c.l.b16 %v693
        %v1908 = vunpack.c.h.b16 %v693
        %v1909 = vunpack.c.l.b16 %v694
        %v1910 = vunpack.c.h.b16 %v694
        %v1911 = vunpack.c.l.b16 %v695
        %v1912 = vunpack.c.h.b16 %v695
        %v1913 = vunpack.c.l.b16 %v696
        %v1914 = vunpack.c.l.b16 %v697
        %v1915 = vunpack.c.h.b16 %v697
        %v1916 = vunpack.c.l.b16 %v698
        %v1917 = vunpack.c.h.b16 %v698
        %v1918 = vunpack.c.l.b16 %v699
        %v1919 = vunpack.c.h.b16 %v699
        %v1920 = vunpack.c.l.b16 %v700
        %v1921 = vunpack.c.h.b16 %v700
        %v1922 = vunpack.c.l.b16 %v701
        %v1923 = vunpack.c.h.b16 %v701
        %v1924 = vunpack.c.l.b16 %v702
        %v1925 = vunpack.c.h.b16 %v702
        %v1926 = vunpack.c.l.b16 %v703
        %v1927 = vunpack.c.h.b16 %v703
        %v1928 = vunpack.c.l.b16 %v704
        %v1929 = vunpack.c.h.b16 %v704
        %v1930 = vunpack.c.l.b16 %v705
        %v1931 = vunpack.c.h.b16 %v705
        %v1932 = vunpack.c.l.b16 %v706
        %v1933 = vunpack.c.h.b16 %v706
        %v1934 = vunpack.c.l.b16 %v707
        %v1935 = vunpack.c.h.b16 %v707
        %v1936 = vunpack.c.l.b16 %v708
        %v1937 = vunpack.c.h.b16 %v708
        %v1938 = vunpack.c.l.b16 %v709
        %v1939 = vunpack.c.l.b16 %v710
        %v1940 = vunpack.c.h.b16 %v710
        %v1941 = vunpack.c.l.b16 %v711
        %v1942 = vunpack.c.h.b16 %v711
        %v1943 = vunpack.c.l.b16 %v712
        %v1944 = vunpack.c.h.b16 %v712
        %v1945 = vunpack.c.l.b16 %v713
        %v1946 = vunpack.c.h.b16 %v713
        %v1947 = vunpack.c.l.b16 %v714
        %v1948 = vunpack.c.h.b16 %v714
        %v1949 = vunpack.c.l.b16 %v715
        %v1950 = vunpack.c.h.b16 %v715
        %v1951 = vunpack.c.l.b16 %v716
        %v1952 = vunpack.c.h.b16 %v716
        %v1953 = vunpack.c.l.b16 %v717
        %v1954 = vunpack.c.h.b16 %v717
        %v1955 = vunpack.c.l.b16 %v718
        %v1956 = vunpack.c.h.b16 %v718
        %v1957 = vunpack.c.l.b16 %v719
        %v1958 = vunpack.c.h.b16 %v719
        %v1959 = vunpack.c.l.b16 %v720
        %v1960 = vunpack.c.h.b16 %v720
        %v1961 = vunpack.c.l.b16 %v721
        %v1962 = vunpack.c.h.b16 %v721
        %v1963 = vunpack.c.l.b16 %v722
        %v1964 = vunpack.c.l.b16 %v723
        %v1965 = vunpack.c.h.b16 %v723
        %v1966 = vunpack.c.l.b16 %v724
        %v1967 = vunpack.c.h.b16 %v724
        %v1968 = vunpack.c.l.b16 %v725
        %v1969 = vunpack.c.h.b16 %v725
        %v1970 = vunpack.c.l.b16 %v726
        %v1971 = vunpack.c.h.b16 %v726
        %v1972 = vunpack.c.l.b16 %v727
        %v1973 = vunpack.c.h.b16 %v727
        %v1974 = vunpack.c.l.b16 %v728
        %v1975 = vunpack.c.h.b16 %v728
        %v1976 = vunpack.c.l.b16 %v729
        %v1977 = vunpack.c.h.b16 %v729
        %v1978 = vunpack.c.l.b16 %v730
        %v1979 = vunpack.c.h.b16 %v730
        %v1980 = vunpack.c.l.b16 %v731
        %v1981 = vunpack.c.h.b16 %v731
        %v1982 = vunpack.c.l.b16 %v732
        %v1983 = vunpack.c.h.b16 %v732
        %v1984 = vunpack.c.l.b16 %v733
        %v1985 = vunpack.c.h.b16 %v733
        %v1986 = vunpack.c.l.b16 %v734
        %v1987 = vunpack.c.h.b16 %v734
        %v1988 = vunpack.c.l.b16 %v735
        %v1989 = vunpack.c.l.b16 %v736
        %v1990 = vunpack.c.h.b16 %v736
        %v1991 = vunpack.c.l.b16 %v737
        %v1992 = vunpack.c.h.b16 %v737
        %v1993 = vunpack.c.l.b16 %v738
        %v1994 = vunpack.c.h.b16 %v738
        %v1995 = vunpack.c.l.b16 %v739
        %v1996 = vunpack.c.h.b16 %v739
        %v1997 = vunpack.c.l.b16 %v740
        %v1998 = vunpack.c.h.b16 %v740
        %v1999 = vunpack.c.l.b16 %v741
        %v2000 = vunpack.c.h.b16 %v741
        %v2001 = vunpack.c.l.b16 %v742
        %v2002 = vunpack.c.h.b16 %v742
        %v2003 = vunpack.c.l.b16 %v743
        %v2004 = vunpack.c.h.b16 %v743
        %v2005 = vunpack.c.l.b16 %v744
        %v2006 = vunpack.c.h.b16 %v744
        %v2007 = vunpack.c.l.b16 %v745
        %v2008 = vunpack.c.h.b16 %v745
        %v2009 = vunpack.c.l.b16 %v746
        %v2010 = vunpack.c.h.b16 %v746
        %v2011 = vunpack.c.l.b16 %v747
        %v2012 = vunpack.c.h.b16 %v747
        %v2013 = vunpack.c.l.b16 %v748
        %v2014 = vunpack.c.l.b16 %v749
        %v2015 = vunpack.c.h.b16 %v749
        %v2016 = vunpack.c.l.b16 %v750
        %v2017 = vunpack.c.h.b16 %v750
        %v2018 = vunpack.c.l.b16 %v751
        %v2019 = vunpack.c.h.b16 %v751
        %v2020 = vunpack.c.l.b16 %v752
        %v2021 = vunpack.c.h.b16 %v752
        %v2022 = vunpack.c.l.b16 %v753
        %v2023 = vunpack.c.h.b16 %v753
        %v2024 = vunpack.c.l.b16 %v754
        %v2025 = vunpack.c.h.b16 %v754
        %v2026 = vunpack.c.l.b16 %v755
        %v2027 = vunpack.c.h.b16 %v755
        %v2028 = vunpack.c.l.b16 %v756
        %v2029 = vunpack.c.h.b16 %v756
        %v2030 = vunpack.c.l.b16 %v757
        %v2031 = vunpack.c.h.b16 %v757
        %v2032 = vunpack.c.l.b16 %v758
        %v2033 = vunpack.c.h.b16 %v758
        %v2034 = vunpack.c.l.b16 %v759
        %v2035 = vunpack.c.h.b16 %v759
        %v2036 = vunpack.c.l.b16 %v760
        %v2037 = vunpack.c.h.b16 %v760
        %v2038 = vunpack.c.l.b16 %v761
        %v2039 = vunpack.c.l.b16 %v762
        %v2040 = vunpack.c.h.b16 %v762
        %v2041 = vunpack.c.l.b16 %v763
        %v2042 = vunpack.c.h.b16 %v763
        %v2043 = vunpack.c.l.b16 %v764
        %v2044 = vunpack.c.h.b16 %v764
        %v2045 = vunpack.c.l.b16 %v765
        %v2046 = vunpack.c.h.b16 %v765
        %v2047 = vunpack.c.l.b16 %v766
        %v2048 = vunpack.c.h.b16 %v766
        %v2049 = vunpack.c.l.b16 %v767
        %v2050 = vunpack.c.h.b16 %v767
        %v2051 = vunpack.c.l.b16 %v768
        %v2052 = vunpack.c.h.b16 %v768
        %v2053 = vunpack.c.l.b16 %v769
        %v2054 = vunpack.c.h.b16 %v769
        %v2055 = vunpack.c.l.b16 %v770
        %v2056 = vunpack.c.h.b16 %v770
        %v2057 = vunpack.c.l.b16 %v771
        %v2058 = vunpack.c.h.b16 %v771
        %v2059 = vunpack.c.l.b16 %v772
        %v2060 = vunpack.c.h.b16 %v772
        %v2061 = vunpack.c.l.b16 %v773
        %v2062 = vunpack.c.h.b16 %v773
        %v2063 = vunpack.c.l.b16 %v774
        %v2064 = vunpack.c.l.b16 %v775
        %v2065 = vunpack.c.h.b16 %v775
        %v2066 = vunpack.c.l.b16 %v776
        %v2067 = vunpack.c.h.b16 %v776
        %v2068 = vunpack.c.l.b16 %v777
        %v2069 = vunpack.c.h.b16 %v777
        %v2070 = vunpack.c.l.b16 %v778
        %v2071 = vunpack.c.h.b16 %v778
        %v2072 = vunpack.c.l.b16 %v779
        %v2073 = vunpack.c.h.b16 %v779
        %v2074 = vunpack.c.l.b16 %v780
        %v2075 = vunpack.c.h.b16 %v780
        %v2076 = vunpack.c.l.b16 %v781
        %v2077 = vunpack.c.h.b16 %v781
        %v2078 = vunpack.c.l.b16 %v782
        %v2079 = vunpack.c.h.b16 %v782
        %v2080 = vunpack.c.l.b16 %v783
        %v2081 = vunpack.c.h.b16 %v783
        %v2082 = vunpack.c.l.b16 %v784
        %v2083 = vunpack.c.h.b16 %v784
        %v2084 = vunpack.c.l.b16 %v785
        %v2085 = vunpack.c.h.b16 %v785
        %v2086 = vunpack.c.l.b16 %v786
        %v2087 = vunpack.c.h.b16 %v786
        %v2088 = vunpack.c.l.b16 %v787
        %v2089 = vunpack.c.l.b16 %v788
        %v2090 = vunpack.c.h.b16 %v788
        %v2091 = vunpack.c.l.b16 %v789
        %v2092 = vunpack.c.h.b16 %v789
        %v2093 = vunpack.c.l.b16 %v790
        %v2094 = vunpack.c.h.b16 %v790
        %v2095 = vunpack.c.l.b16 %v791
        %v2096 = vunpack.c.h.b16 %v791
        %v2097 = vunpack.c.l.b16 %v792
        %v2098 = vunpack.c.h.b16 %v792
        %v2099 = vunpack.c.l.b16 %v793
        %v2100 = vunpack.c.h.b16 %v793
        %v2101 = vunpack.c.l.b16 %v794
        %v2102 = vunpack.c.h.b16 %v794
        %v2103 = vunpack.c.l.b16 %v795
        %v2104 = vunpack.c.h.b16 %v795
        %v2105 = vunpack.c.l.b16 %v796
        %v2106 = vunpack.c.h.b16 %v796
        %v2107 = vunpack.c.l.b16 %v797
        %v2108 = vunpack.c.h.b16 %v797
        %v2109 = vunpack.c.l.b16 %v798
        %v2110 = vunpack.c.h.b16 %v798
        %v2111 = vunpack.c.l.b16 %v799
        %v2112 = vunpack.c.h.b16 %v799
        %v2113 = vunpack.c.l.b16 %v800
        %v2114 = vunpack.c.l.b16 %v801
        %v2115 = vunpack.c.h.b16 %v801
        %v2116 = vunpack.c.l.b16 %v802
        %v2117 = vunpack.c.h.b16 %v802
        %v2118 = vunpack.c.l.b16 %v803
        %v2119 = vunpack.c.h.b16 %v803
        %v2120 = vunpack.c.l.b16 %v804
        %v2121 = vunpack.c.h.b16 %v804
        %v2122 = vunpack.c.l.b16 %v805
        %v2123 = vunpack.c.h.b16 %v805
        %v2124 = vunpack.c.l.b16 %v806
        %v2125 = vunpack.c.h.b16 %v806
        %v2126 = vunpack.c.l.b16 %v807
        %v2127 = vunpack.c.h.b16 %v807
        %v2128 = vunpack.c.l.b16 %v808
        %v2129 = vunpack.c.h.b16 %v808
        %v2130 = vunpack.c.l.b16 %v809
        %v2131 = vunpack.c.h.b16 %v809
        %v2132 = vunpack.c.l.b16 %v810
        %v2133 = vunpack.c.h.b16 %v810
        %v2134 = vunpack.c.l.b16 %v811
        %v2135 = vunpack.c.h.b16 %v811
        %v2136 = vunpack.c.l.b16 %v812
        %v2137 = vunpack.c.h.b16 %v812
        %v2138 = vunpack.c.l.b16 %v813
        %v2139 = vunpack.c.l.b16 %v814
        %v2140 = vunpack.c.h.b16 %v814
        %v2141 = vunpack.c.l.b16 %v815
        %v2142 = vunpack.c.h.b16 %v815
        %v2143 = vunpack.c.l.b16 %v816
        %v2144 = vunpack.c.h.b16 %v816
        %v2145 = vunpack.c.l.b16 %v817
        %v2146 = vunpack.c.h.b16 %v817
        %v2147 = vunpack.c.l.b16 %v818
        %v2148 = vunpack.c.h.b16 %v818
        %v2149 = vunpack.c.l.b16 %v819
        %v2150 = vunpack.c.h.b16 %v819
        %v2151 = vunpack.c.l.b16 %v820
        %v2152 = vunpack.c.h.b16 %v820
        %v2153 = vunpack.c.l.b16 %v821
        %v2154 = vunpack.c.h.b16 %v821
        %v2155 = vunpack.c.l.b16 %v822
        %v2156 = vunpack.c.h.b16 %v822
        %v2157 = vunpack.c.l.b16 %v823
        %v2158 = vunpack.c.h.b16 %v823
        %v2159 = vunpack.c.l.b16 %v824
        %v2160 = vunpack.c.h.b16 %v824
        %v2161 = vunpack.c.l.b16 %v825
        %v2162 = vunpack.c.h.b16 %v825
        %v2163 = vunpack.c.l.b16 %v826
        %v2164 = vunpack.c.l.b16 %v827
        %v2165 = vunpack.c.h.b16 %v827
        %v2166 = vunpack.c.l.b16 %v828
        %v2167 = vunpack.c.h.b16 %v828
        %v2168 = vunpack.c.l.b16 %v829
        %v2169 = vunpack.c.h.b16 %v829
        %v2170 = vunpack.c.l.b16 %v830
        %v2171 = vunpack.c.h.b16 %v830
        %v2172 = vunpack.c.l.b16 %v831
        %v2173 = vunpack.c.h.b16 %v831
        %v2174 = vunpack.c.l.b16 %v832
        %v2175 = vunpack.c.h.b16 %v832
        %v2176 = vunpack.c.l.b16 %v833
        %v2177 = vunpack.c.h.b16 %v833
        %v2178 = vunpack.c.l.b16 %v834
        %v2179 = vunpack.c.h.b16 %v834
        %v2180 = vunpack.c.l.b16 %v835
        %v2181 = vunpack.c.h.b16 %v835
        %v2182 = vunpack.c.l.b16 %v836
        %v2183 = vunpack.c.h.b16 %v836
        %v2184 = vunpack.c.l.b16 %v837
        %v2185 = vunpack.c.h.b16 %v837
        %v2186 = vunpack.c.l.b16 %v838
        %v2187 = vunpack.c.h.b16 %v838
        %v2188 = vunpack.c.l.b16 %v839
        %v2189 = vpack.c.b16 %v1414, %v1389
        %v2190 = vpack.c.b16 %v1415, %v1390
        %v2191 = vpack.c.b16 %v1416, %v1391
        %v2192 = vpack.c.b16 %v1417, %v1392
        %v2193 = vpack.c.b16 %v1418, %v1393
        %v2194 = vpack.c.b16 %v1419, %v1394
        %v2195 = vpack.c.b16 %v1420, %v1395
        %v2196 = vpack.c.b16 %v1421, %v1396
        %v2197 = vpack.c.b16 %v1422, %v1397
        %v2198 = vpack.c.b16 %v1423, %v1398
        %v2199 = vpack.c.b16 %v1424, %v1399
        %v2200 = vpack.c.b16 %v1425, %v1400
        %v2201 = vpack.c.b16 %v1426, %v1401
        %v2202 = vpack.c.b16 %v1427, %v1402
        %v2203 = vpack.c.b16 %v1428, %v1403
        %v2204 = vpack.c.b16 %v1429, %v1404
        %v2205 = vpack.c.b16 %v1430, %v1405
        %v2206 = vpack.c.b16 %v1431, %v1406
        %v2207 = vpack.c.b16 %v1432, %v1407
        %v2208 = vpack.c.b16 %v1433, %v1408
        %v2209 = vpack.c.b16 %v1434, %v1409
        %v2210 = vpack.c.b16 %v1435, %v1410
        %v2211 = vpack.c.b16 %v1436, %v1411
        %v2212 = vpack.c.b16 %v1437, %v1412
        %v2213 = vpack.c.b16 %v1438, %v1413
        %v2214 = vpack.c.b16 %v1464, %v1439
        %v2215 = vpack.c.b16 %v1465, %v1440
        %v2216 = vpack.c.b16 %v1466, %v1441
        %v2217 = vpack.c.b16 %v1467, %v1442
        %v2218 = vpack.c.b16 %v1468, %v1443
        %v2219 = vpack.c.b16 %v1469, %v1444
        %v2220 = vpack.c.b16 %v1470, %v1445
        %v2221 = vpack.c.b16 %v1471, %v1446
        %v2222 = vpack.c.b16 %v1472, %v1447
        %v2223 = vpack.c.b16 %v1473, %v1448
        %v2224 = vpack.c.b16 %v1474, %v1449
        %v2225 = vpack.c.b16 %v1475, %v1450
        %v2226 = vpack.c.b16 %v1476, %v1451
        %v2227 = vpack.c.b16 %v1477, %v1452
        %v2228 = vpack.c.b16 %v1478, %v1453
        %v2229 = vpack.c.b16 %v1479, %v1454
        %v2230 = vpack.c.b16 %v1480, %v1455
        %v2231 = vpack.c.b16 %v1481, %v1456
        %v2232 = vpack.c.b16 %v1482, %v1457
        %v2233 = vpack.c.b16 %v1483, %v1458
        %v2234 = vpack.c.b16 %v1484, %v1459
        %v2235 = vpack.c.b16 %v1485, %v1460
        %v2236 = vpack.c.b16 %v1486, %v1461
        %v2237 = vpack.c.b16 %v1487, %v1462
        %v2238 = vpack.c.b16 %v1488, %v1463
        %v2239 = vpack.c.b16 %v1514, %v1489
        %v2240 = vpack.c.b16 %v1515, %v1490
        %v2241 = vpack.c.b16 %v1516, %v1491
        %v2242 = vpack.c.b16 %v1517, %v1492
        %v2243 = vpack.c.b16 %v1518, %v1493
        %v2244 = vpack.c.b16 %v1519, %v1494
        %v2245 = vpack.c.b16 %v1520, %v1495
        %v2246 = vpack.c.b16 %v1521, %v1496
        %v2247 = vpack.c.b16 %v1522, %v1497
        %v2248 = vpack.c.b16 %v1523, %v1498
        %v2249 = vpack.c.b16 %v1524, %v1499
        %v2250 = vpack.c.b16 %v1525, %v1500
        %v2251 = vpack.c.b16 %v1526, %v1501
        %v2252 = vpack.c.b16 %v1527, %v1502
        %v2253 = vpack.c.b16 %v1528, %v1503
        %v2254 = vpack.c.b16 %v1529, %v1504
        %v2255 = vpack.c.b16 %v1530, %v1505
        %v2256 = vpack.c.b16 %v1531, %v1506
        %v2257 = vpack.c.b16 %v1532, %v1507
        %v2258 = vpack.c.b16 %v1533, %v1508
        %v2259 = vpack.c.b16 %v1534, %v1509
        %v2260 = vpack.c.b16 %v1535, %v1510
        %v2261 = vpack.c.b16 %v1536, %v1511
        %v2262 = vpack.c.b16 %v1537, %v1512
        %v2263 = vpack.c.b16 %v1538, %v1513
        %v2264 = vpack.c.b16 %v1564, %v1539
        %v2265 = vpack.c.b16 %v1565, %v1540
        %v2266 = vpack.c.b16 %v1566, %v1541
        %v2267 = vpack.c.b16 %v1567, %v1542
        %v2268 = vpack.c.b16 %v1568, %v1543
        %v2269 = vpack.c.b16 %v1569, %v1544
        %v2270 = vpack.c.b16 %v1570, %v1545
        %v2271 = vpack.c.b16 %v1571, %v1546
        %v2272 = vpack.c.b16 %v1572, %v1547
        %v2273 = vpack.c.b16 %v1573, %v1548
        %v2274 = vpack.c.b16 %v1574, %v1549
        %v2275 = vpack.c.b16 %v1575, %v1550
        %v2276 = vpack.c.b16 %v1576, %v1551
        %v2277 = vpack.c.b16 %v1577, %v1552
        %v2278 = vpack.c.b16 %v1578, %v1553
        %v2279 = vpack.c.b16 %v1579, %v1554
        %v2280 = vpack.c.b16 %v1580, %v1555
        %v2281 = vpack.c.b16 %v1581, %v1556
        %v2282 = vpack.c.b16 %v1582, %v1557
        %v2283 = vpack.c.b16 %v1583, %v1558
        %v2284 = vpack.c.b16 %v1584, %v1559
        %v2285 = vpack.c.b16 %v1585, %v1560
        %v2286 = vpack.c.b16 %v1586, %v1561
        %v2287 = vpack.c.b16 %v1587, %v1562
        %v2288 = vpack.c.b16 %v1588, %v1563
        %v2289 = vpack.c.b16 %v1614, %v1589
        %v2290 = vpack.c.b16 %v1615, %v1590
        %v2291 = vpack.c.b16 %v1616, %v1591
        %v2292 = vpack.c.b16 %v1617, %v1592
        %v2293 = vpack.c.b16 %v1618, %v1593
        %v2294 = vpack.c.b16 %v1619, %v1594
        %v2295 = vpack.c.b16 %v1620, %v1595
        %v2296 = vpack.c.b16 %v1621, %v1596
        %v2297 = vpack.c.b16 %v1622, %v1597
        %v2298 = vpack.c.b16 %v1623, %v1598
        %v2299 = vpack.c.b16 %v1624, %v1599
        %v2300 = vpack.c.b16 %v1625, %v1600
        %v2301 = vpack.c.b16 %v1626, %v1601
        %v2302 = vpack.c.b16 %v1627, %v1602
        %v2303 = vpack.c.b16 %v1628, %v1603
        %v2304 = vpack.c.b16 %v1629, %v1604
        %v2305 = vpack.c.b16 %v1630, %v1605
        %v2306 = vpack.c.b16 %v1631, %v1606
        %v2307 = vpack.c.b16 %v1632, %v1607
        %v2308 = vpack.c.b16 %v1633, %v1608
        %v2309 = vpack.c.b16 %v1634, %v1609
        %v2310 = vpack.c.b16 %v1635, %v1610
        %v2311 = vpack.c.b16 %v1636, %v1611
        %v2312 = vpack.c.b16 %v1637, %v1612
        %v2313 = vpack.c.b16 %v1638, %v1613
        %v2314 = vpack.c.b16 %v1664, %v1639
        %v2315 = vpack.c.b16 %v1665, %v1640
        %v2316 = vpack.c.b16 %v1666, %v1641
        %v2317 = vpack.c.b16 %v1667, %v1642
        %v2318 = vpack.c.b16 %v1668, %v1643
        %v2319 = vpack.c.b16 %v1669, %v1644
        %v2320 = vpack.c.b16 %v1670, %v1645
        %v2321 = vpack.c.b16 %v1671, %v1646
        %v2322 = vpack.c.b16 %v1672, %v1647
        %v2323 = vpack.c.b16 %v1673, %v1648
        %v2324 = vpack.c.b16 %v1674, %v1649
        %v2325 = vpack.c.b16 %v1675, %v1650
        %v2326 = vpack.c.b16 %v1676, %v1651
        %v2327 = vpack.c.b16 %v1677, %v1652
        %v2328 = vpack.c.b16 %v1678, %v1653
        %v2329 = vpack.c.b16 %v1679, %v1654
        %v2330 = vpack.c.b16 %v1680, %v1655
        %v2331 = vpack.c.b16 %v1681, %v1656
        %v2332 = vpack.c.b16 %v1682, %v1657
        %v2333 = vpack.c.b16 %v1683, %v1658
        %v2334 = vpack.c.b16 %v1684, %v1659
        %v2335 = vpack.c.b16 %v1685, %v1660
        %v2336 = vpack.c.b16 %v1686, %v1661
        %v2337 = vpack.c.b16 %v1687, %v1662
        %v2338 = vpack.c.b16 %v1688, %v1663
        %v2339 = vpack.c.b16 %v1714, %v1689
        %v2340 = vpack.c.b16 %v1715, %v1690
        %v2341 = vpack.c.b16 %v1716, %v1691
        %v2342 = vpack.c.b16 %v1717, %v1692
        %v2343 = vpack.c.b16 %v1718, %v1693
        %v2344 = vpack.c.b16 %v1719, %v1694
        %v2345 = vpack.c.b16 %v1720, %v1695
        %v2346 = vpack.c.b16 %v1721, %v1696
        %v2347 = vpack.c.b16 %v1722, %v1697
        %v2348 = vpack.c.b16 %v1723, %v1698
        %v2349 = vpack.c.b16 %v1724, %v1699
        %v2350 = vpack.c.b16 %v1725, %v1700
        %v2351 = vpack.c.b16 %v1726, %v1701
        %v2352 = vpack.c.b16 %v1727, %v1702
        %v2353 = vpack.c.b16 %v1728, %v1703
        %v2354 = vpack.c.b16 %v1729, %v1704
        %v2355 = vpack.c.b16 %v1730, %v1705
        %v2356 = vpack.c.b16 %v1731, %v1706
        %v2357 = vpack.c.b16 %v1732, %v1707
        %v2358 = vpack.c.b16 %v1733, %v1708
        %v2359 = vpack.c.b16 %v1734, %v1709
        %v2360 = vpack.c.b16 %v1735, %v1710
        %v2361 = vpack.c.b16 %v1736, %v1711
        %v2362 = vpack.c.b16 %v1737, %v1712
        %v2363 = vpack.c.b16 %v1738, %v1713
        %v2364 = vpack.c.b16 %v1764, %v1739
        %v2365 = vpack.c.b16 %v1765, %v1740
        %v2366 = vpack.c.b16 %v1766, %v1741
        %v2367 = vpack.c.b16 %v1767, %v1742
        %v2368 = vpack.c.b16 %v1768, %v1743
        %v2369 = vpack.c.b16 %v1769, %v1744
        %v2370 = vpack.c.b16 %v1770, %v1745
        %v2371 = vpack.c.b16 %v1771, %v1746
        %v2372 = vpack.c.b16 %v1772, %v1747
        %v2373 = vpack.c.b16 %v1773, %v1748
        %v2374 = vpack.c.b16 %v1774, %v1749
        %v2375 = vpack.c.b16 %v1775, %v1750
        %v2376 = vpack.c.b16 %v1776, %v1751
        %v2377 = vpack.c.b16 %v1777, %v1752
        %v2378 = vpack.c.b16 %v1778, %v1753
        %v2379 = vpack.c.b16 %v1779, %v1754
        %v2380 = vpack.c.b16 %v1780, %v1755
        %v2381 = vpack.c.b16 %v1781, %v1756
        %v2382 = vpack.c.b16 %v1782, %v1757
        %v2383 = vpack.c.b16 %v1783, %v1758
        %v2384 = vpack.c.b16 %v1784, %v1759
        %v2385 = vpack.c.b16 %v1785, %v1760
        %v2386 = vpack.c.b16 %v1786, %v1761
        %v2387 = vpack.c.b16 %v1787, %v1762
        %v2388 = vpack.c.b16 %v1788, %v1763
        %v2389 = vpack.c.b16 %v1814, %v1789
        %v2390 = vpack.c.b16 %v1815, %v1790
        %v2391 = vpack.c.b16 %v1816, %v1791
        %v2392 = vpack.c.b16 %v1817, %v1792
        %v2393 = vpack.c.b16 %v1818, %v1793
        %v2394 = vpack.c.b16 %v1819, %v1794
        %v2395 = vpack.c.b16 %v1820, %v1795
        %v2396 = vpack.c.b16 %v1821, %v1796
        %v2397 = vpack.c.b16 %v1822, %v1797
        %v2398 = vpack.c.b16 %v1823, %v1798
        %v2399 = vpack.c.b16 %v1824, %v1799
        %v2400 = vpack.c.b16 %v1825, %v1800
        %v2401 = vpack.c.b16 %v1826, %v1801
        %v2402 = vpack.c.b16 %v1827, %v1802
        %v2403 = vpack.c.b16 %v1828, %v1803
        %v2404 = vpack.c.b16 %v1829, %v1804
        %v2405 = vpack.c.b16 %v1830, %v1805
        %v2406 = vpack.c.b16 %v1831, %v1806
        %v2407 = vpack.c.b16 %v1832, %v1807
        %v2408 = vpack.c.b16 %v1833, %v1808
        %v2409 = vpack.c.b16 %v1834, %v1809
        %v2410 = vpack.c.b16 %v1835, %v1810
        %v2411 = vpack.c.b16 %v1836, %v1811
        %v2412 = vpack.c.b16 %v1837, %v1812
        %v2413 = vpack.c.b16 %v1838, %v1813
        %v2414 = vpack.c.b16 %v1864, %v1839
        %v2415 = vpack.c.b16 %v1865, %v1840
        %v2416 = vpack.c.b16 %v1866, %v1841
        %v2417 = vpack.c.b16 %v1867, %v1842
        %v2418 = vpack.c.b16 %v1868, %v1843
        %v2419 = vpack.c.b16 %v1869, %v1844
        %v2420 = vpack.c.b16 %v1870, %v1845
        %v2421 = vpack.c.b16 %v1871, %v1846
        %v2422 = vpack.c.b16 %v1872, %v1847
        %v2423 = vpack.c.b16 %v1873, %v1848
        %v2424 = vpack.c.b16 %v1874, %v1849
        %v2425 = vpack.c.b16 %v1875, %v1850
        %v2426 = vpack.c.b16 %v1876, %v1851
        %v2427 = vpack.c.b16 %v1877, %v1852
        %v2428 = vpack.c.b16 %v1878, %v1853
        %v2429 = vpack.c.b16 %v1879, %v1854
        %v2430 = vpack.c.b16 %v1880, %v1855
        %v2431 = vpack.c.b16 %v1881, %v1856
        %v2432 = vpack.c.b16 %v1882, %v1857
        %v2433 = vpack.c.b16 %v1883, %v1858
        %v2434 = vpack.c.b16 %v1884, %v1859
        %v2435 = vpack.c.b16 %v1885, %v1860
        %v2436 = vpack.c.b16 %v1886, %v1861
        %v2437 = vpack.c.b16 %v1887, %v1862
        %v2438 = vpack.c.b16 %v1888, %v1863
        %v2439 = vpack.c.b16 %v1914, %v1889
        %v2440 = vpack.c.b16 %v1915, %v1890
        %v2441 = vpack.c.b16 %v1916, %v1891
        %v2442 = vpack.c.b16 %v1917, %v1892
        %v2443 = vpack.c.b16 %v1918, %v1893
        %v2444 = vpack.c.b16 %v1919, %v1894
        %v2445 = vpack.c.b16 %v1920, %v1895
        %v2446 = vpack.c.b16 %v1921, %v1896
        %v2447 = vpack.c.b16 %v1922, %v1897
        %v2448 = vpack.c.b16 %v1923, %v1898
        %v2449 = vpack.c.b16 %v1924, %v1899
        %v2450 = vpack.c.b16 %v1925, %v1900
        %v2451 = vpack.c.b16 %v1926, %v1901
        %v2452 = vpack.c.b16 %v1927, %v1902
        %v2453 = vpack.c.b16 %v1928, %v1903
        %v2454 = vpack.c.b16 %v1929, %v1904
        %v2455 = vpack.c.b16 %v1930, %v1905
        %v2456 = vpack.c.b16 %v1931, %v1906
        %v2457 = vpack.c.b16 %v1932, %v1907
        %v2458 = vpack.c.b16 %v1933, %v1908
        %v2459 = vpack.c.b16 %v1934, %v1909
        %v2460 = vpack.c.b16 %v1935, %v1910
        %v2461 = vpack.c.b16 %v1936, %v1911
        %v2462 = vpack.c.b16 %v1937, %v1912
        %v2463 = vpack.c.b16 %v1938, %v1913
        %v2464 = vpack.c.b16 %v1964, %v1939
        %v2465 = vpack.c.b16 %v1965, %v1940
        %v2466 = vpack.c.b16 %v1966, %v1941
        %v2467 = vpack.c.b16 %v1967, %v1942
        %v2468 = vpack.c.b16 %v1968, %v1943
        %v2469 = vpack.c.b16 %v1969, %v1944
        %v2470 = vpack.c.b16 %v1970, %v1945
        %v2471 = vpack.c.b16 %v1971, %v1946
        %v2472 = vpack.c.b16 %v1972, %v1947
        %v2473 = vpack.c.b16 %v1973, %v1948
        %v2474 = vpack.c.b16 %v1974, %v1949
        %v2475 = vpack.c.b16 %v1975, %v1950
        %v2476 = vpack.c.b16 %v1976, %v1951
        %v2477 = vpack.c.b16 %v1977, %v1952
        %v2478 = vpack.c.b16 %v1978, %v1953
        %v2479 = vpack.c.b16 %v1979, %v1954
        %v2480 = vpack.c.b16 %v1980, %v1955
        %v2481 = vpack.c.b16 %v1981, %v1956
        %v2482 = vpack.c.b16 %v1982, %v1957
        %v2483 = vpack.c.b16 %v1983, %v1958
        %v2484 = vpack.c.b16 %v1984, %v1959
        %v2485 = vpack.c.b16 %v1985, %v1960
        %v2486 = vpack.c.b16 %v1986, %v1961
        %v2487 = vpack.c.b16 %v1987, %v1962
        %v2488 = vpack.c.b16 %v1988, %v1963
        %v2489 = vpack.c.b16 %v2014, %v1989
        %v2490 = vpack.c.b16 %v2015, %v1990
        %v2491 = vpack.c.b16 %v2016, %v1991
        %v2492 = vpack.c.b16 %v2017, %v1992
        %v2493 = vpack.c.b16 %v2018, %v1993
        %v2494 = vpack.c.b16 %v2019, %v1994
        %v2495 = vpack.c.b16 %v2020, %v1995
        %v2496 = vpack.c.b16 %v2021, %v1996
        %v2497 = vpack.c.b16 %v2022, %v1997
        %v2498 = vpack.c.b16 %v2023, %v1998
        %v2499 = vpack.c.b16 %v2024, %v1999
        %v2500 = vpack.c.b16 %v2025, %v2000
        %v2501 = vpack.c.b16 %v2026, %v2001
        %v2502 = vpack.c.b16 %v2027, %v2002
        %v2503 = vpack.c.b16 %v2028, %v2003
        %v2504 = vpack.c.b16 %v2029, %v2004
        %v2505 = vpack.c.b16 %v2030, %v2005
        %v2506 = vpack.c.b16 %v2031, %v2006
        %v2507 = vpack.c.b16 %v2032, %v2007
        %v2508 = vpack.c.b16 %v2033, %v2008
        %v2509 = vpack.c.b16 %v2034, %v2009
        %v2510 = vpack.c.b16 %v2035, %v2010
        %v2511 = vpack.c.b16 %v2036, %v2011
        %v2512 = vpack.c.b16 %v2037, %v2012
        %v2513 = vpack.c.b16 %v2038, %v2013
        %v2514 = vpack.c.b16 %v2064, %v2039
        %v2515 = vpack.c.b16 %v2065, %v2040
        %v2516 = vpack.c.b16 %v2066, %v2041
        %v2517 = vpack.c.b16 %v2067, %v2042
        %v2518 = vpack.c.b16 %v2068, %v2043
        %v2519 = vpack.c.b16 %v2069, %v2044
        %v2520 = vpack.c.b16 %v2070, %v2045
        %v2521 = vpack.c.b16 %v2071, %v2046
        %v2522 = vpack.c.b16 %v2072, %v2047
        %v2523 = vpack.c.b16 %v2073, %v2048
        %v2524 = vpack.c.b16 %v2074, %v2049
        %v2525 = vpack.c.b16 %v2075, %v2050
        %v2526 = vpack.c.b16 %v2076, %v2051
        %v2527 = vpack.c.b16 %v2077, %v2052
        %v2528 = vpack.c.b16 %v2078, %v2053
        %v2529 = vpack.c.b16 %v2079, %v2054
        %v2530 = vpack.c.b16 %v2080, %v2055
        %v2531 = vpack.c.b16 %v2081, %v2056
        %v2532 = vpack.c.b16 %v2082, %v2057
        %v2533 = vpack.c.b16 %v2083, %v2058
        %v2534 = vpack.c.b16 %v2084, %v2059
        %v2535 = vpack.c.b16 %v2085, %v2060
        %v2536 = vpack.c.b16 %v2086, %v2061
        %v2537 = vpack.c.b16 %v2087, %v2062
        %v2538 = vpack.c.b16 %v2088, %v2063
        %v2539 = vpack.c.b16 %v2114, %v2089
        %v2540 = vpack.c.b16 %v2115, %v2090
        %v2541 = vpack.c.b16 %v2116, %v2091
        %v2542 = vpack.c.b16 %v2117, %v2092
        %v2543 = vpack.c.b16 %v2118, %v2093
        %v2544 = vpack.c.b16 %v2119, %v2094
        %v2545 = vpack.c.b16 %v2120, %v2095
        %v2546 = vpack.c.b16 %v2121, %v2096
        %v2547 = vpack.c.b16 %v2122, %v2097
        %v2548 = vpack.c.b16 %v2123, %v2098
        %v2549 = vpack.c.b16 %v2124, %v2099
        %v2550 = vpack.c.b16 %v2125, %v2100
        %v2551 = vpack.c.b16 %v2126, %v2101
        %v2552 = vpack.c.b16 %v2127, %v2102
        %v2553 = vpack.c.b16 %v2128, %v2103
        %v2554 = vpack.c.b16 %v2129, %v2104
        %v2555 = vpack.c.b16 %v2130, %v2105
        %v2556 = vpack.c.b16 %v2131, %v2106
        %v2557 = vpack.c.b16 %v2132, %v2107
        %v2558 = vpack.c.b16 %v2133, %v2108
        %v2559 = vpack.c.b16 %v2134, %v2109
        %v2560 = vpack.c.b16 %v2135, %v2110
        %v2561 = vpack.c.b16 %v2136, %v2111
        %v2562 = vpack.c.b16 %v2137, %v2112
        %v2563 = vpack.c.b16 %v2138, %v2113
        %v2564 = vpack.c.b16 %v2164, %v2139
        %v2565 = vpack.c.b16 %v2165, %v2140
        %v2566 = vpack.c.b16 %v2166, %v2141
        %v2567 = vpack.c.b16 %v2167, %v2142
        %v2568 = vpack.c.b16 %v2168, %v2143
        %v2569 = vpack.c.b16 %v2169, %v2144
        %v2570 = vpack.c.b16 %v2170, %v2145
        %v2571 = vpack.c.b16 %v2171, %v2146
        %v2572 = vpack.c.b16 %v2172, %v2147
        %v2573 = vpack.c.b16 %v2173, %v2148
        %v2574 = vpack.c.b16 %v2174, %v2149
        %v2575 = vpack.c.b16 %v2175, %v2150
        %v2576 = vpack.c.b16 %v2176, %v2151
        %v2577 = vpack.c.b16 %v2177, %v2152
        %v2578 = vpack.c.b16 %v2178, %v2153
        %v2579 = vpack.c.b16 %v2179, %v2154
        %v2580 = vpack.c.b16 %v2180, %v2155
        %v2581 = vpack.c.b16 %v2181, %v2156
        %v2582 = vpack.c.b16 %v2182, %v2157
        %v2583 = vpack.c.b16 %v2183, %v2158
        %v2584 = vpack.c.b16 %v2184, %v2159
        %v2585 = vpack.c.b16 %v2185, %v2160
        %v2586 = vpack.c.b16 %v2186, %v2161
        %v2587 = vpack.c.b16 %v2187, %v2162
        %v2588 = vpack.c.b16 %v2188, %v2163
        %2989 = vmatprep.subr.bf16.mxu0 %v2190
        %2990 = vmatpush1.bf16.msra.mxu0 %v2189
        %2991 = vmatprep.subr.bf16.mxu0 %v2215
        %2992 = vmatpush1.bf16.msra.mxu0 %v2214
        %2993 = vmatprep.subr.bf16.mxu0 %v2240
        %2994 = vmatpush1.bf16.msra.mxu0 %v2239
        %2995 = vmatprep.subr.bf16.mxu0 %v2265
        %2996 = vmatpush1.bf16.msra.mxu0 %v2264
        %2997 = vmatprep.subr.bf16.mxu0 %v2290
        %2998 = vmatpush1.bf16.msra.mxu0 %v2289
        %2999 = vmatprep.subr.bf16.mxu0 %v2315
        %3000 = vmatpush1.bf16.msra.mxu0 %v2314
        %3001 = vmatprep.subr.bf16.mxu0 %v2340
        %3002 = vmatpush1.bf16.msra.mxu0 %v2339
        %3003 = vmatprep.subr.bf16.mxu0 %v2365
        %3004 = vmatpush1.bf16.msra.mxu0 %v2364
        %3005 = vmatprep.subr.bf16.mxu0 %v2390
        %3006 = vmatpush1.bf16.msra.mxu0 %v2389
        %3007 = vmatprep.subr.bf16.mxu0 %v2415
        %3008 = vmatpush1.bf16.msra.mxu0 %v2414
        %3009 = vmatprep.subr.bf16.mxu0 %v2440
        %3010 = vmatpush1.bf16.msra.mxu0 %v2439
        %3011 = vmatprep.subr.bf16.mxu0 %v2465
        %3012 = vmatpush1.bf16.msra.mxu0 %v2464
        %3013 = vmatprep.subr.bf16.mxu0 %v2490
        %3014 = vmatpush1.bf16.msra.mxu0 %v2489
        %3015 = vmatprep.subr.bf16.mxu0 %v2515
        %3016 = vmatpush1.bf16.msra.mxu0 %v2514
        %3017 = vmatprep.subr.bf16.mxu0 %v2540
        %3018 = vmatpush1.bf16.msra.mxu0 %v2539
        %3019 = vmatprep.subr.bf16.mxu0 %v2565
        %3020 = vmatpush1.bf16.msra.mxu0 %v2564
        %3021 = vmatprep.mubr.bf16.mxu0 %v423
        %3022 = vmatmul.mubr.bf16.gmra.mrb[0].mxu0 %v422
        %v3023 = vpop.f32.mrb[0].mxu0
        %v3024 = vadd.f32 %v851, %v3023
        %v3025 = vpop.f32.mrb[0].mxu0
        %v3026 = vadd.f32 %v855, %v3025
        %v3027 = vpop.f32.mrb[0].mxu0
        %v3028 = vpop.f32.mrb[0].mxu0
        %3029 = vdwg.mxu0
        %3030 = vmatprep.subr.bf16.mxu0 %v2192
        %3031 = vmatpush1.bf16.msra.mxu0 %v2191
        %3032 = vmatprep.subr.bf16.mxu0 %v2217
        %3033 = vmatpush1.bf16.msra.mxu0 %v2216
        %3034 = vmatprep.subr.bf16.mxu0 %v2242
        %3035 = vmatpush1.bf16.msra.mxu0 %v2241
        %3036 = vmatprep.subr.bf16.mxu0 %v2267
        %3037 = vmatpush1.bf16.msra.mxu0 %v2266
        %3038 = vmatprep.subr.bf16.mxu0 %v2292
        %3039 = vmatpush1.bf16.msra.mxu0 %v2291
        %3040 = vmatprep.subr.bf16.mxu0 %v2317
        %3041 = vmatpush1.bf16.msra.mxu0 %v2316
        %3042 = vmatprep.subr.bf16.mxu0 %v2342
        %3043 = vmatpush1.bf16.msra.mxu0 %v2341
        %3044 = vmatprep.subr.bf16.mxu0 %v2367
        %3045 = vmatpush1.bf16.msra.mxu0 %v2366
        %3046 = vmatprep.subr.bf16.mxu0 %v2392
        %3047 = vmatpush1.bf16.msra.mxu0 %v2391
        %3048 = vmatprep.subr.bf16.mxu0 %v2417
        %3049 = vmatpush1.bf16.msra.mxu0 %v2416
        %3050 = vmatprep.subr.bf16.mxu0 %v2442
        %3051 = vmatpush1.bf16.msra.mxu0 %v2441
        %3052 = vmatprep.subr.bf16.mxu0 %v2467
        %3053 = vmatpush1.bf16.msra.mxu0 %v2466
        %3054 = vmatprep.subr.bf16.mxu0 %v2492
        %3055 = vmatpush1.bf16.msra.mxu0 %v2491
        %3056 = vmatprep.subr.bf16.mxu0 %v2517
        %3057 = vmatpush1.bf16.msra.mxu0 %v2516
        %3058 = vmatprep.subr.bf16.mxu0 %v2542
        %3059 = vmatpush1.bf16.msra.mxu0 %v2541
        %3060 = vmatprep.subr.bf16.mxu0 %v2567
        %3061 = vmatpush1.bf16.msra.mxu0 %v2566
        %3062 = vmatprep.mubr.bf16.mxu0 %v423
        %3063 = vmatmul.mubr.bf16.gmra.mrb[0].mxu0 %v422
        %v3064 = vpop.f32.mrb[0].mxu0
        %v3065 = vadd.f32 %v859, %v3064
        %v3066 = vpop.f32.mrb[0].mxu0
        %v3067 = vadd.f32 %v863, %v3066
        %v3068 = vpop.f32.mrb[0].mxu0
        %v3069 = vpop.f32.mrb[0].mxu0
        %3070 = vdwg.mxu0
        %3071 = vmatprep.subr.bf16.mxu0 %v2194
        %3072 = vmatpush1.bf16.msra.mxu0 %v2193
        %3073 = vmatprep.subr.bf16.mxu0 %v2219
        %3074 = vmatpush1.bf16.msra.mxu0 %v2218
        %3075 = vmatprep.subr.bf16.mxu0 %v2244
        %3076 = vmatpush1.bf16.msra.mxu0 %v2243
        %3077 = vmatprep.subr.bf16.mxu0 %v2269
        %3078 = vmatpush1.bf16.msra.mxu0 %v2268
        %3079 = vmatprep.subr.bf16.mxu0 %v2294
        %3080 = vmatpush1.bf16.msra.mxu0 %v2293
        %3081 = vmatprep.subr.bf16.mxu0 %v2319
        %3082 = vmatpush1.bf16.msra.mxu0 %v2318
        %3083 = vmatprep.subr.bf16.mxu0 %v2344
        %3084 = vmatpush1.bf16.msra.mxu0 %v2343
        %3085 = vmatprep.subr.bf16.mxu0 %v2369
        %3086 = vmatpush1.bf16.msra.mxu0 %v2368
        %3087 = vmatprep.subr.bf16.mxu0 %v2394
        %3088 = vmatpush1.bf16.msra.mxu0 %v2393
        %3089 = vmatprep.subr.bf16.mxu0 %v2419
        %3090 = vmatpush1.bf16.msra.mxu0 %v2418
        %3091 = vmatprep.subr.bf16.mxu0 %v2444
        %3092 = vmatpush1.bf16.msra.mxu0 %v2443
        %3093 = vmatprep.subr.bf16.mxu0 %v2469
        %3094 = vmatpush1.bf16.msra.mxu0 %v2468
        %3095 = vmatprep.subr.bf16.mxu0 %v2494
        %3096 = vmatpush1.bf16.msra.mxu0 %v2493
        %3097 = vmatprep.subr.bf16.mxu0 %v2519
        %3098 = vmatpush1.bf16.msra.mxu0 %v2518
        %3099 = vmatprep.subr.bf16.mxu0 %v2544
        %3100 = vmatpush1.bf16.msra.mxu0 %v2543
        %3101 = vmatprep.subr.bf16.mxu0 %v2569
        %3102 = vmatpush1.bf16.msra.mxu0 %v2568
        %3103 = vmatprep.mubr.bf16.mxu0 %v423
        %3104 = vmatmul.mubr.bf16.gmra.mrb[0].mxu0 %v422
        %v3105 = vpop.f32.mrb[0].mxu0
        %v3106 = vadd.f32 %v867, %v3105
        %v3107 = vpop.f32.mrb[0].mxu0
        %v3108 = vadd.f32 %v871, %v3107
        %v3109 = vpop.f32.mrb[0].mxu0
        %v3110 = vpop.f32.mrb[0].mxu0
        %3111 = vdwg.mxu0
        %3112 = vmatprep.subr.bf16.mxu0 %v2196
        %3113 = vmatpush1.bf16.msra.mxu0 %v2195
        %3114 = vmatprep.subr.bf16.mxu0 %v2221
        %3115 = vmatpush1.bf16.msra.mxu0 %v2220
        %3116 = vmatprep.subr.bf16.mxu0 %v2246
        %3117 = vmatpush1.bf16.msra.mxu0 %v2245
        %3118 = vmatprep.subr.bf16.mxu0 %v2271
        %3119 = vmatpush1.bf16.msra.mxu0 %v2270
        %3120 = vmatprep.subr.bf16.mxu0 %v2296
        %3121 = vmatpush1.bf16.msra.mxu0 %v2295
        %3122 = vmatprep.subr.bf16.mxu0 %v2321
        %3123 = vmatpush1.bf16.msra.mxu0 %v2320
        %3124 = vmatprep.subr.bf16.mxu0 %v2346
        %3125 = vmatpush1.bf16.msra.mxu0 %v2345
        %3126 = vmatprep.subr.bf16.mxu0 %v2371
        %3127 = vmatpush1.bf16.msra.mxu0 %v2370
        %3128 = vmatprep.subr.bf16.mxu0 %v2396
        %3129 = vmatpush1.bf16.msra.mxu0 %v2395
        %3130 = vmatprep.subr.bf16.mxu0 %v2421
        %3131 = vmatpush1.bf16.msra.mxu0 %v2420
        %3132 = vmatprep.subr.bf16.mxu0 %v2446
        %3133 = vmatpush1.bf16.msra.mxu0 %v2445
        %3134 = vmatprep.subr.bf16.mxu0 %v2471
        %3135 = vmatpush1.bf16.msra.mxu0 %v2470
        %3136 = vmatprep.subr.bf16.mxu0 %v2496
        %3137 = vmatpush1.bf16.msra.mxu0 %v2495
        %3138 = vmatprep.subr.bf16.mxu0 %v2521
        %3139 = vmatpush1.bf16.msra.mxu0 %v2520
        %3140 = vmatprep.subr.bf16.mxu0 %v2546
        %3141 = vmatpush1.bf16.msra.mxu0 %v2545
        %3142 = vmatprep.subr.bf16.mxu0 %v2571
        %3143 = vmatpush1.bf16.msra.mxu0 %v2570
        %3144 = vmatprep.mubr.bf16.mxu0 %v423
        %3145 = vmatmul.mubr.bf16.gmra.mrb[0].mxu0 %v422
        %v3146 = vpop.f32.mrb[0].mxu0
        %v3147 = vadd.f32 %v875, %v3146
        %v3148 = vpop.f32.mrb[0].mxu0
        %v3149 = vadd.f32 %v879, %v3148
        %v3150 = vpop.f32.mrb[0].mxu0
        %v3151 = vpop.f32.mrb[0].mxu0
        %3152 = vdwg.mxu0
        %3153 = vmatprep.subr.bf16.mxu0 %v2198
        %3154 = vmatpush1.bf16.msra.mxu0 %v2197
        %3155 = vmatprep.subr.bf16.mxu0 %v2223
        %3156 = vmatpush1.bf16.msra.mxu0 %v2222
        %3157 = vmatprep.subr.bf16.mxu0 %v2248
        %3158 = vmatpush1.bf16.msra.mxu0 %v2247
        %3159 = vmatprep.subr.bf16.mxu0 %v2273
        %3160 = vmatpush1.bf16.msra.mxu0 %v2272
        %3161 = vmatprep.subr.bf16.mxu0 %v2298
        %3162 = vmatpush1.bf16.msra.mxu0 %v2297
        %3163 = vmatprep.subr.bf16.mxu0 %v2323
        %3164 = vmatpush1.bf16.msra.mxu0 %v2322
        %3165 = vmatprep.subr.bf16.mxu0 %v2348
        %3166 = vmatpush1.bf16.msra.mxu0 %v2347
        %3167 = vmatprep.subr.bf16.mxu0 %v2373
        %3168 = vmatpush1.bf16.msra.mxu0 %v2372
        %3169 = vmatprep.subr.bf16.mxu0 %v2398
        %3170 = vmatpush1.bf16.msra.mxu0 %v2397
        %3171 = vmatprep.subr.bf16.mxu0 %v2423
        %3172 = vmatpush1.bf16.msra.mxu0 %v2422
        %3173 = vmatprep.subr.bf16.mxu0 %v2448
        %3174 = vmatpush1.bf16.msra.mxu0 %v2447
        %3175 = vmatprep.subr.bf16.mxu0 %v2473
        %3176 = vmatpush1.bf16.msra.mxu0 %v2472
        %3177 = vmatprep.subr.bf16.mxu0 %v2498
        %3178 = vmatpush1.bf16.msra.mxu0 %v2497
        %3179 = vmatprep.subr.bf16.mxu0 %v2523
        %3180 = vmatpush1.bf16.msra.mxu0 %v2522
        %3181 = vmatprep.subr.bf16.mxu0 %v2548
        %3182 = vmatpush1.bf16.msra.mxu0 %v2547
        %3183 = vmatprep.subr.bf16.mxu0 %v2573
        %3184 = vmatpush1.bf16.msra.mxu0 %v2572
        %3185 = vmatprep.mubr.bf16.mxu0 %v423
        %3186 = vmatmul.mubr.bf16.gmra.mrb[0].mxu0 %v422
        %v3187 = vpop.f32.mrb[0].mxu0
        %v3188 = vadd.f32 %v883, %v3187
        %v3189 = vpop.f32.mrb[0].mxu0
        %v3190 = vadd.f32 %v887, %v3189
        %v3191 = vpop.f32.mrb[0].mxu0
        %v3192 = vpop.f32.mrb[0].mxu0
        %3193 = vdwg.mxu0
        %3194 = vmatprep.subr.bf16.mxu0 %v2200
        %3195 = vmatpush1.bf16.msra.mxu0 %v2199
        %3196 = vmatprep.subr.bf16.mxu0 %v2225
        %3197 = vmatpush1.bf16.msra.mxu0 %v2224
        %3198 = vmatprep.subr.bf16.mxu0 %v2250
        %3199 = vmatpush1.bf16.msra.mxu0 %v2249
        %3200 = vmatprep.subr.bf16.mxu0 %v2275
        %3201 = vmatpush1.bf16.msra.mxu0 %v2274
        %3202 = vmatprep.subr.bf16.mxu0 %v2300
        %3203 = vmatpush1.bf16.msra.mxu0 %v2299
        %3204 = vmatprep.subr.bf16.mxu0 %v2325
        %3205 = vmatpush1.bf16.msra.mxu0 %v2324
        %3206 = vmatprep.subr.bf16.mxu0 %v2350
        %3207 = vmatpush1.bf16.msra.mxu0 %v2349
        %3208 = vmatprep.subr.bf16.mxu0 %v2375
        %3209 = vmatpush1.bf16.msra.mxu0 %v2374
        %3210 = vmatprep.subr.bf16.mxu0 %v2400
        %3211 = vmatpush1.bf16.msra.mxu0 %v2399
        %3212 = vmatprep.subr.bf16.mxu0 %v2425
        %3213 = vmatpush1.bf16.msra.mxu0 %v2424
        %3214 = vmatprep.subr.bf16.mxu0 %v2450
        %3215 = vmatpush1.bf16.msra.mxu0 %v2449
        %3216 = vmatprep.subr.bf16.mxu0 %v2475
        %3217 = vmatpush1.bf16.msra.mxu0 %v2474
        %3218 = vmatprep.subr.bf16.mxu0 %v2500
        %3219 = vmatpush1.bf16.msra.mxu0 %v2499
        %3220 = vmatprep.subr.bf16.mxu0 %v2525
        %3221 = vmatpush1.bf16.msra.mxu0 %v2524
        %3222 = vmatprep.subr.bf16.mxu0 %v2550
        %3223 = vmatpush1.bf16.msra.mxu0 %v2549
        %3224 = vmatprep.subr.bf16.mxu0 %v2575
        %3225 = vmatpush1.bf16.msra.mxu0 %v2574
        %3226 = vmatprep.mubr.bf16.mxu0 %v423
        %3227 = vmatmul.mubr.bf16.gmra.mrb[0].mxu0 %v422
        %v3228 = vpop.f32.mrb[0].mxu0
        %v3229 = vadd.f32 %v891, %v3228
        %v3230 = vpop.f32.mrb[0].mxu0
        %v3231 = vadd.f32 %v895, %v3230
        %v3232 = vpop.f32.mrb[0].mxu0
        %v3233 = vpop.f32.mrb[0].mxu0
        %3234 = vdwg.mxu0
        %3235 = vmatprep.subr.bf16.mxu0 %v2202
        %3236 = vmatpush1.bf16.msra.mxu0 %v2201
        %3237 = vmatprep.subr.bf16.mxu0 %v2227
        %3238 = vmatpush1.bf16.msra.mxu0 %v2226
        %3239 = vmatprep.subr.bf16.mxu0 %v2252
        %3240 = vmatpush1.bf16.msra.mxu0 %v2251
        %3241 = vmatprep.subr.bf16.mxu0 %v2277
        %3242 = vmatpush1.bf16.msra.mxu0 %v2276
        %3243 = vmatprep.subr.bf16.mxu0 %v2302
        %3244 = vmatpush1.bf16.msra.mxu0 %v2301
        %3245 = vmatprep.subr.bf16.mxu0 %v2327
        %3246 = vmatpush1.bf16.msra.mxu0 %v2326
        %3247 = vmatprep.subr.bf16.mxu0 %v2352
        %3248 = vmatpush1.bf16.msra.mxu0 %v2351
        %3249 = vmatprep.subr.bf16.mxu0 %v2377
        %3250 = vmatpush1.bf16.msra.mxu0 %v2376
        %3251 = vmatprep.subr.bf16.mxu0 %v2402
        %3252 = vmatpush1.bf16.msra.mxu0 %v2401
        %3253 = vmatprep.subr.bf16.mxu0 %v2427
        %3254 = vmatpush1.bf16.msra.mxu0 %v2426
        %3255 = vmatprep.subr.bf16.mxu0 %v2452
        %3256 = vmatpush1.bf16.msra.mxu0 %v2451
        %3257 = vmatprep.subr.bf16.mxu0 %v2477
        %3258 = vmatpush1.bf16.msra.mxu0 %v2476
        %3259 = vmatprep.subr.bf16.mxu0 %v2502
        %3260 = vmatpush1.bf16.msra.mxu0 %v2501
        %3261 = vmatprep.subr.bf16.mxu0 %v2527
        %3262 = vmatpush1.bf16.msra.mxu0 %v2526
        %3263 = vmatprep.subr.bf16.mxu0 %v2552
        %3264 = vmatpush1.bf16.msra.mxu0 %v2551
        %3265 = vmatprep.subr.bf16.mxu0 %v2577
        %3266 = vmatpush1.bf16.msra.mxu0 %v2576
        %3267 = vmatprep.mubr.bf16.mxu0 %v423
        %3268 = vmatmul.mubr.bf16.gmra.mrb[0].mxu0 %v422
        %v3269 = vpop.f32.mrb[0].mxu0
        %v3270 = vadd.f32 %v899, %v3269
        %v3271 = vpop.f32.mrb[0].mxu0
        %v3272 = vadd.f32 %v903, %v3271
        %v3273 = vpop.f32.mrb[0].mxu0
        %v3274 = vpop.f32.mrb[0].mxu0
        %3275 = vdwg.mxu0
        %3276 = vmatprep.subr.bf16.mxu0 %v2204
        %3277 = vmatpush1.bf16.msra.mxu0 %v2203
        %3278 = vmatprep.subr.bf16.mxu0 %v2229
        %3279 = vmatpush1.bf16.msra.mxu0 %v2228
        %3280 = vmatprep.subr.bf16.mxu0 %v2254
        %3281 = vmatpush1.bf16.msra.mxu0 %v2253
        %3282 = vmatprep.subr.bf16.mxu0 %v2279
        %3283 = vmatpush1.bf16.msra.mxu0 %v2278
        %3284 = vmatprep.subr.bf16.mxu0 %v2304
        %3285 = vmatpush1.bf16.msra.mxu0 %v2303
        %3286 = vmatprep.subr.bf16.mxu0 %v2329
        %3287 = vmatpush1.bf16.msra.mxu0 %v2328
        %3288 = vmatprep.subr.bf16.mxu0 %v2354
        %3289 = vmatpush1.bf16.msra.mxu0 %v2353
        %3290 = vmatprep.subr.bf16.mxu0 %v2379
        %3291 = vmatpush1.bf16.msra.mxu0 %v2378
        %3292 = vmatprep.subr.bf16.mxu0 %v2404
        %3293 = vmatpush1.bf16.msra.mxu0 %v2403
        %3294 = vmatprep.subr.bf16.mxu0 %v2429
        %3295 = vmatpush1.bf16.msra.mxu0 %v2428
        %3296 = vmatprep.subr.bf16.mxu0 %v2454
        %3297 = vmatpush1.bf16.msra.mxu0 %v2453
        %3298 = vmatprep.subr.bf16.mxu0 %v2479
        %3299 = vmatpush1.bf16.msra.mxu0 %v2478
        %3300 = vmatprep.subr.bf16.mxu0 %v2504
        %3301 = vmatpush1.bf16.msra.mxu0 %v2503
        %3302 = vmatprep.subr.bf16.mxu0 %v2529
        %3303 = vmatpush1.bf16.msra.mxu0 %v2528
        %3304 = vmatprep.subr.bf16.mxu0 %v2554
        %3305 = vmatpush1.bf16.msra.mxu0 %v2553
        %3306 = vmatprep.subr.bf16.mxu0 %v2579
        %3307 = vmatpush1.bf16.msra.mxu0 %v2578
        %3308 = vmatprep.mubr.bf16.mxu0 %v423
        %3309 = vmatmul.mubr.bf16.gmra.mrb[0].mxu0 %v422
        %v3310 = vpop.f32.mrb[0].mxu0
        %v3311 = vadd.f32 %v907, %v3310
        %v3312 = vpop.f32.mrb[0].mxu0
        %v3313 = vadd.f32 %v911, %v3312
        %v3314 = vpop.f32.mrb[0].mxu0
        %v3315 = vpop.f32.mrb[0].mxu0
        %3316 = vdwg.mxu0
        %3317 = vmatprep.subr.bf16.mxu0 %v2206
        %3318 = vmatpush1.bf16.msra.mxu0 %v2205
        %3319 = vmatprep.subr.bf16.mxu0 %v2231
        %3320 = vmatpush1.bf16.msra.mxu0 %v2230
        %3321 = vmatprep.subr.bf16.mxu0 %v2256
        %3322 = vmatpush1.bf16.msra.mxu0 %v2255
        %3323 = vmatprep.subr.bf16.mxu0 %v2281
        %3324 = vmatpush1.bf16.msra.mxu0 %v2280
        %3325 = vmatprep.subr.bf16.mxu0 %v2306
        %3326 = vmatpush1.bf16.msra.mxu0 %v2305
        %3327 = vmatprep.subr.bf16.mxu0 %v2331
        %3328 = vmatpush1.bf16.msra.mxu0 %v2330
        %3329 = vmatprep.subr.bf16.mxu0 %v2356
        %3330 = vmatpush1.bf16.msra.mxu0 %v2355
        %3331 = vmatprep.subr.bf16.mxu0 %v2381
        %3332 = vmatpush1.bf16.msra.mxu0 %v2380
        %3333 = vmatprep.subr.bf16.mxu0 %v2406
        %3334 = vmatpush1.bf16.msra.mxu0 %v2405
        %3335 = vmatprep.subr.bf16.mxu0 %v2431
        %3336 = vmatpush1.bf16.msra.mxu0 %v2430
        %3337 = vmatprep.subr.bf16.mxu0 %v2456
        %3338 = vmatpush1.bf16.msra.mxu0 %v2455
        %3339 = vmatprep.subr.bf16.mxu0 %v2481
        %3340 = vmatpush1.bf16.msra.mxu0 %v2480
        %3341 = vmatprep.subr.bf16.mxu0 %v2506
        %3342 = vmatpush1.bf16.msra.mxu0 %v2505
        %3343 = vmatprep.subr.bf16.mxu0 %v2531
        %3344 = vmatpush1.bf16.msra.mxu0 %v2530
        %3345 = vmatprep.subr.bf16.mxu0 %v2556
        %3346 = vmatpush1.bf16.msra.mxu0 %v2555
        %3347 = vmatprep.subr.bf16.mxu0 %v2581
        %3348 = vmatpush1.bf16.msra.mxu0 %v2580
        %3349 = vmatprep.mubr.bf16.mxu0 %v423
        %3350 = vmatmul.mubr.bf16.gmra.mrb[0].mxu0 %v422
        %v3351 = vpop.f32.mrb[0].mxu0
        %v3352 = vadd.f32 %v915, %v3351
        %v3353 = vpop.f32.mrb[0].mxu0
        %v3354 = vadd.f32 %v919, %v3353
        %v3355 = vpop.f32.mrb[0].mxu0
        %v3356 = vpop.f32.mrb[0].mxu0
        %3357 = vdwg.mxu0
        %3358 = vmatprep.subr.bf16.mxu0 %v2208
        %3359 = vmatpush1.bf16.msra.mxu0 %v2207
        %3360 = vmatprep.subr.bf16.mxu0 %v2233
        %3361 = vmatpush1.bf16.msra.mxu0 %v2232
        %3362 = vmatprep.subr.bf16.mxu0 %v2258
        %3363 = vmatpush1.bf16.msra.mxu0 %v2257
        %3364 = vmatprep.subr.bf16.mxu0 %v2283
        %3365 = vmatpush1.bf16.msra.mxu0 %v2282
        %3366 = vmatprep.subr.bf16.mxu0 %v2308
        %3367 = vmatpush1.bf16.msra.mxu0 %v2307
        %3368 = vmatprep.subr.bf16.mxu0 %v2333
        %3369 = vmatpush1.bf16.msra.mxu0 %v2332
        %3370 = vmatprep.subr.bf16.mxu0 %v2358
        %3371 = vmatpush1.bf16.msra.mxu0 %v2357
        %3372 = vmatprep.subr.bf16.mxu0 %v2383
        %3373 = vmatpush1.bf16.msra.mxu0 %v2382
        %3374 = vmatprep.subr.bf16.mxu0 %v2408
        %3375 = vmatpush1.bf16.msra.mxu0 %v2407
        %3376 = vmatprep.subr.bf16.mxu0 %v2433
        %3377 = vmatpush1.bf16.msra.mxu0 %v2432
        %3378 = vmatprep.subr.bf16.mxu0 %v2458
        %3379 = vmatpush1.bf16.msra.mxu0 %v2457
        %3380 = vmatprep.subr.bf16.mxu0 %v2483
        %3381 = vmatpush1.bf16.msra.mxu0 %v2482
        %3382 = vmatprep.subr.bf16.mxu0 %v2508
        %3383 = vmatpush1.bf16.msra.mxu0 %v2507
        %3384 = vmatprep.subr.bf16.mxu0 %v2533
        %3385 = vmatpush1.bf16.msra.mxu0 %v2532
        %3386 = vmatprep.subr.bf16.mxu0 %v2558
        %3387 = vmatpush1.bf16.msra.mxu0 %v2557
        %3388 = vmatprep.subr.bf16.mxu0 %v2583
        %3389 = vmatpush1.bf16.msra.mxu0 %v2582
        %3390 = vmatprep.mubr.bf16.mxu0 %v423
        %3391 = vmatmul.mubr.bf16.gmra.mrb[0].mxu0 %v422
        %v3392 = vpop.f32.mrb[0].mxu0
        %v3393 = vadd.f32 %v923, %v3392
        %v3394 = vpop.f32.mrb[0].mxu0
        %v3395 = vadd.f32 %v927, %v3394
        %v3396 = vpop.f32.mrb[0].mxu0
        %v3397 = vpop.f32.mrb[0].mxu0
        %3398 = vdwg.mxu0
        %3399 = vmatprep.subr.bf16.mxu0 %v2210
        %3400 = vmatpush1.bf16.msra.mxu0 %v2209
        %3401 = vmatprep.subr.bf16.mxu0 %v2235
        %3402 = vmatpush1.bf16.msra.mxu0 %v2234
        %3403 = vmatprep.subr.bf16.mxu0 %v2260
        %3404 = vmatpush1.bf16.msra.mxu0 %v2259
        %3405 = vmatprep.subr.bf16.mxu0 %v2285
        %3406 = vmatpush1.bf16.msra.mxu0 %v2284
        %3407 = vmatprep.subr.bf16.mxu0 %v2310
        %3408 = vmatpush1.bf16.msra.mxu0 %v2309
        %3409 = vmatprep.subr.bf16.mxu0 %v2335
        %3410 = vmatpush1.bf16.msra.mxu0 %v2334
        %3411 = vmatprep.subr.bf16.mxu0 %v2360
        %3412 = vmatpush1.bf16.msra.mxu0 %v2359
        %3413 = vmatprep.subr.bf16.mxu0 %v2385
        %3414 = vmatpush1.bf16.msra.mxu0 %v2384
        %3415 = vmatprep.subr.bf16.mxu0 %v2410
        %3416 = vmatpush1.bf16.msra.mxu0 %v2409
        %3417 = vmatprep.subr.bf16.mxu0 %v2435
        %3418 = vmatpush1.bf16.msra.mxu0 %v2434
        %3419 = vmatprep.subr.bf16.mxu0 %v2460
        %3420 = vmatpush1.bf16.msra.mxu0 %v2459
        %3421 = vmatprep.subr.bf16.mxu0 %v2485
        %3422 = vmatpush1.bf16.msra.mxu0 %v2484
        %3423 = vmatprep.subr.bf16.mxu0 %v2510
        %3424 = vmatpush1.bf16.msra.mxu0 %v2509
        %3425 = vmatprep.subr.bf16.mxu0 %v2535
        %3426 = vmatpush1.bf16.msra.mxu0 %v2534
        %3427 = vmatprep.subr.bf16.mxu0 %v2560
        %3428 = vmatpush1.bf16.msra.mxu0 %v2559
        %3429 = vmatprep.subr.bf16.mxu0 %v2585
        %3430 = vmatpush1.bf16.msra.mxu0 %v2584
        %3431 = vmatprep.mubr.bf16.mxu0 %v423
        %3432 = vmatmul.mubr.bf16.gmra.mrb[0].mxu0 %v422
        %v3433 = vpop.f32.mrb[0].mxu0
        %v3434 = vadd.f32 %v931, %v3433
        %v3435 = vpop.f32.mrb[0].mxu0
        %v3436 = vadd.f32 %v935, %v3435
        %v3437 = vpop.f32.mrb[0].mxu0
        %v3438 = vpop.f32.mrb[0].mxu0
        %3439 = vdwg.mxu0
        %3440 = vmatprep.subr.bf16.mxu0 %v2212
        %3441 = vmatpush1.bf16.msra.mxu0 %v2211
        %3442 = vmatprep.subr.bf16.mxu0 %v2237
        %3443 = vmatpush1.bf16.msra.mxu0 %v2236
        %3444 = vmatprep.subr.bf16.mxu0 %v2262
        %3445 = vmatpush1.bf16.msra.mxu0 %v2261
        %3446 = vmatprep.subr.bf16.mxu0 %v2287
        %3447 = vmatpush1.bf16.msra.mxu0 %v2286
        %3448 = vmatprep.subr.bf16.mxu0 %v2312
        %3449 = vmatpush1.bf16.msra.mxu0 %v2311
        %3450 = vmatprep.subr.bf16.mxu0 %v2337
        %3451 = vmatpush1.bf16.msra.mxu0 %v2336
        %3452 = vmatprep.subr.bf16.mxu0 %v2362
        %3453 = vmatpush1.bf16.msra.mxu0 %v2361
        %3454 = vmatprep.subr.bf16.mxu0 %v2387
        %3455 = vmatpush1.bf16.msra.mxu0 %v2386
        %3456 = vmatprep.subr.bf16.mxu0 %v2412
        %3457 = vmatpush1.bf16.msra.mxu0 %v2411
        %3458 = vmatprep.subr.bf16.mxu0 %v2437
        %3459 = vmatpush1.bf16.msra.mxu0 %v2436
        %3460 = vmatprep.subr.bf16.mxu0 %v2462
        %3461 = vmatpush1.bf16.msra.mxu0 %v2461
        %3462 = vmatprep.subr.bf16.mxu0 %v2487
        %3463 = vmatpush1.bf16.msra.mxu0 %v2486
        %3464 = vmatprep.subr.bf16.mxu0 %v2512
        %3465 = vmatpush1.bf16.msra.mxu0 %v2511
        %3466 = vmatprep.subr.bf16.mxu0 %v2537
        %3467 = vmatpush1.bf16.msra.mxu0 %v2536
        %3468 = vmatprep.subr.bf16.mxu0 %v2562
        %3469 = vmatpush1.bf16.msra.mxu0 %v2561
        %3470 = vmatprep.subr.bf16.mxu0 %v2587
        %3471 = vmatpush1.bf16.msra.mxu0 %v2586
        %3472 = vmatprep.mubr.bf16.mxu0 %v423
        %3473 = vmatmul.mubr.bf16.gmra.mrb[0].mxu0 %v422
        %v3474 = vpop.f32.mrb[0].mxu0
        %v3475 = vadd.f32 %v939, %v3474
        %v3476 = vpop.f32.mrb[0].mxu0
        %v3477 = vadd.f32 %v943, %v3476
        %v3478 = vpop.f32.mrb[0].mxu0
        %v3479 = vpop.f32.mrb[0].mxu0
        %3480 = vdwg.mxu0
        %3481 = vmatprep.subr.bf16.mxu0 0
        %3482 = vmatpush1.bf16.msra.mxu0 %v2213
        %3483 = vmatprep.subr.bf16.mxu0 0
        %3484 = vmatpush1.bf16.msra.mxu0 %v2238
        %3485 = vmatprep.subr.bf16.mxu0 0
        %3486 = vmatpush1.bf16.msra.mxu0 %v2263
        %3487 = vmatprep.subr.bf16.mxu0 0
        %3488 = vmatpush1.bf16.msra.mxu0 %v2288
        %3489 = vmatprep.subr.bf16.mxu0 0
        %3490 = vmatpush1.bf16.msra.mxu0 %v2313
        %3491 = vmatprep.subr.bf16.mxu0 0
        %3492 = vmatpush1.bf16.msra.mxu0 %v2338
        %3493 = vmatprep.subr.bf16.mxu0 0
        %3494 = vmatpush1.bf16.msra.mxu0 %v2363
        %3495 = vmatprep.subr.bf16.mxu0 0
        %3496 = vmatpush1.bf16.msra.mxu0 %v2388
        %3497 = vmatprep.subr.bf16.mxu0 0
        %3498 = vmatpush1.bf16.msra.mxu0 %v2413
        %3499 = vmatprep.subr.bf16.mxu0 0
        %3500 = vmatpush1.bf16.msra.mxu0 %v2438
        %3501 = vmatprep.subr.bf16.mxu0 0
        %3502 = vmatpush1.bf16.msra.mxu0 %v2463
        %3503 = vmatprep.subr.bf16.mxu0 0
        %3504 = vmatpush1.bf16.msra.mxu0 %v2488
        %3505 = vmatprep.subr.bf16.mxu0 0
        %3506 = vmatpush1.bf16.msra.mxu0 %v2513
        %3507 = vmatprep.subr.bf16.mxu0 0
        %3508 = vmatpush1.bf16.msra.mxu0 %v2538
        %3509 = vmatprep.subr.bf16.mxu0 0
        %3510 = vmatpush1.bf16.msra.mxu0 %v2563
        %3511 = vmatprep.subr.bf16.mxu0 0
        %3512 = vmatpush1.bf16.msra.mxu0 %v2588
        %3513 = vmatprep.mubr.bf16.mxu0 %v423
        %3514 = vmatmul.mubr.bf16.gmra.mrb[0].mxu0 %v422
        %v3515 = vpop.f32.mrb[0].mxu0
        %v3516 = vadd.f32 %v947, %v3515
        %v3517 = vpop.f32.mrb[0].mxu0
        %v3518 = vpop.f32.mrb[0].mxu0
        %v3519 = vpop.f32.mrb[0].mxu0
        %3520 = vdwg.mxu0
        %v3521 = vmax.f32 %v3024, 0.0
        %v3522 = vmax.f32 %v3026, 0.0
        %v3523 = vmax.f32 %v3065, 0.0
        %v3524 = vmax.f32 %v3067, 0.0
        %v3525 = vmax.f32 %v3106, 0.0
        %v3526 = vmax.f32 %v3108, 0.0
        %v3527 = vmax.f32 %v3147, 0.0
        %v3528 = vmax.f32 %v3149, 0.0
        %v3529 = vmax.f32 %v3188, 0.0
        %v3530 = vmax.f32 %v3190, 0.0
        %v3531 = vmax.f32 %v3229, 0.0
        %v3532 = vmax.f32 %v3231, 0.0
        %v3533 = vmax.f32 %v3270, 0.0
        %v3534 = vmax.f32 %v3272, 0.0
        %v3535 = vmax.f32 %v3311, 0.0
        %v3536 = vmax.f32 %v3313, 0.0
        %v3537 = vmax.f32 %v3352, 0.0
        %v3538 = vmax.f32 %v3354, 0.0
        %v3539 = vmax.f32 %v3393, 0.0
        %v3540 = vmax.f32 %v3395, 0.0
        %v3541 = vmax.f32 %v3434, 0.0
        %v3542 = vmax.f32 %v3436, 0.0
        %v3543 = vmax.f32 %v3475, 0.0
        %v3544 = vmax.f32 %v3477, 0.0
        %v3545 = vmax.f32 %v3516, 0.0
        %v3571 = vcombine.low %v3521, %v3522
        %v3572 = vcombine.low %v3523, %v3524
        %v3574 = vunpack.c.l.s4 1983009808
        %v3575 = vunpack.c.0.s8 %v3574
        %v3576 = vlaneseq
        %v3577 = vshrl.u32 %v3576, 7
        %v3578 = vsub.s32 %v3575, %v3577
        %v3579 = vrot.slane %v3571, %v3578
        %v3581 = vunpack.c.l.s4 1983009808
        %v3582 = vunpack.c.0.s8 %v3581
        %v3583 = vlaneseq
        %v3584 = vshrl.u32 %v3583, 7
        %v3585 = vsub.s32 %v3582, %v3584
        %v3586 = vrot.slane %v3572, %v3585
        %v3587 = vcombine.low %v3579, %v3586
        %v3588 = vcombine.low %v3525, %v3526
        %v3589 = vcombine.low %v3527, %v3528
        %v3591 = vunpack.c.l.s4 1983009808
        %v3592 = vunpack.c.0.s8 %v3591
        %v3593 = vlaneseq
        %v3594 = vshrl.u32 %v3593, 7
        %v3595 = vsub.s32 %v3592, %v3594
        %v3596 = vrot.slane %v3588, %v3595
        %v3598 = vunpack.c.l.s4 1983009808
        %v3599 = vunpack.c.0.s8 %v3598
        %v3600 = vlaneseq
        %v3601 = vshrl.u32 %v3600, 7
        %v3602 = vsub.s32 %v3599, %v3601
        %v3603 = vrot.slane %v3589, %v3602
        %v3604 = vcombine.low %v3596, %v3603
        %v3605 = vcombine.low %v3529, %v3530
        %v3606 = vcombine.low %v3531, %v3532
        %v3608 = vunpack.c.l.s4 1983009808
        %v3609 = vunpack.c.0.s8 %v3608
        %v3610 = vlaneseq
        %v3611 = vshrl.u32 %v3610, 7
        %v3612 = vsub.s32 %v3609, %v3611
        %v3613 = vrot.slane %v3605, %v3612
        %v3615 = vunpack.c.l.s4 1983009808
        %v3616 = vunpack.c.0.s8 %v3615
        %v3617 = vlaneseq
        %v3618 = vshrl.u32 %v3617, 7
        %v3619 = vsub.s32 %v3616, %v3618
        %v3620 = vrot.slane %v3606, %v3619
        %v3621 = vcombine.low %v3613, %v3620
        %v3622 = vcombine.low %v3533, %v3534
        %v3623 = vcombine.low %v3535, %v3536
        %v3625 = vunpack.c.l.s4 1983009808
        %v3626 = vunpack.c.0.s8 %v3625
        %v3627 = vlaneseq
        %v3628 = vshrl.u32 %v3627, 7
        %v3629 = vsub.s32 %v3626, %v3628
        %v3630 = vrot.slane %v3622, %v3629
        %v3632 = vunpack.c.l.s4 1983009808
        %v3633 = vunpack.c.0.s8 %v3632
        %v3634 = vlaneseq
        %v3635 = vshrl.u32 %v3634, 7
        %v3636 = vsub.s32 %v3633, %v3635
        %v3637 = vrot.slane %v3623, %v3636
        %v3638 = vcombine.low %v3630, %v3637
        %v3639 = vcombine.low %v3537, %v3538
        %v3640 = vcombine.low %v3539, %v3540
        %v3642 = vunpack.c.l.s4 1983009808
        %v3643 = vunpack.c.0.s8 %v3642
        %v3644 = vlaneseq
        %v3645 = vshrl.u32 %v3644, 7
        %v3646 = vsub.s32 %v3643, %v3645
        %v3647 = vrot.slane %v3639, %v3646
        %v3649 = vunpack.c.l.s4 1983009808
        %v3650 = vunpack.c.0.s8 %v3649
        %v3651 = vlaneseq
        %v3652 = vshrl.u32 %v3651, 7
        %v3653 = vsub.s32 %v3650, %v3652
        %v3654 = vrot.slane %v3640, %v3653
        %v3655 = vcombine.low %v3647, %v3654
        %v3656 = vcombine.low %v3541, %v3542
        %v3657 = vcombine.low %v3543, %v3544
        %v3659 = vunpack.c.l.s4 1983009808
        %v3660 = vunpack.c.0.s8 %v3659
        %v3661 = vlaneseq
        %v3662 = vshrl.u32 %v3661, 7
        %v3663 = vsub.s32 %v3660, %v3662
        %v3664 = vrot.slane %v3656, %v3663
        %v3666 = vunpack.c.l.s4 1983009808
        %v3667 = vunpack.c.0.s8 %v3666
        %v3668 = vlaneseq
        %v3669 = vshrl.u32 %v3668, 7
        %v3670 = vsub.s32 %v3667, %v3669
        %v3671 = vrot.slane %v3657, %v3670
        %v3672 = vcombine.low %v3664, %v3671
        %v3674 = vunpack.c.l.s4 1983009808
        %v3675 = vunpack.c.0.s8 %v3674
        %v3676 = vlaneseq
        %v3677 = vshrl.u32 %v3676, 7
        %v3678 = vsub.s32 %v3675, %v3677
        %v3679 = vrot.slane %v3545, %v3678
        %3687 = vst [vmem:[%s321] sm:$0xff] %v3587
        %3688 = vst [vmem:[%s321 + $0x8] sm:$0xff] %v3604
        %3689 = vst [vmem:[%s321 + $0x10] sm:$0xff] %v3621
        %3690 = vst [vmem:[%s321 + $0x18] sm:$0xff] %v3638
        %3691 = vst [vmem:[%s321 + $0x20] sm:$0xff] %v3655
        %3692 = vst [vmem:[%s321 + $0x28] sm:$0xff] %v3672
        %3693 = vst [vmem:[%s321 + $0x30] sm:$0x3] %v3679
        %s3694 = smul.u32 25, %s21
        %p3695 = scmp.lt.s32.totalorder %s3694, 99
        %s3696 = scalar_select %p3695, %s3694, 99
        %s3697 = smul.addr %s3696, 2
        %s3698 = scalar_lea.vmem %s5, %s3697
        // Predicated region
        $region61: #{decoder_forward.4} parent=39 // pred_check
          %p3699 = pneg %p154
        $region62: #{decoder_forward.4} parent=39 // pred_check_branch
          %3701 = sbr.rel (%p3699) target = $region64
        $region63: #{decoder_forward.4} parent=39 // pred_region
          %s3702 = smul.u32 25, %s21
        $region64: #{decoder_forward.4} parent=39 // pred_fallthru
          _
      $region40: #{decoder_forward.4} parent=5 // pred_fallthru
        _
      %p3703 = scmp.le.s32.totalorder 2, %s16
      // Predicated region
      $region65: #{decoder_forward.4} parent=5 // pred_check
        %p3704 = pneg %p3703
      $region66: #{decoder_forward.4} parent=5 // pred_check_branch
        %3706 = sbr.rel (%p3704) target = $region68
      $region67: #{decoder_forward.4} parent=5 // pred_region
        %s3707 = ssub.s32 %s16, 2
        // Predicated region
        $region69: #{decoder_forward.4} parent=67 // pred_check
          %p3708 = pneg %p160
        $region70: #{decoder_forward.4} parent=67 // pred_check_branch
          %3710 = sbr.rel (%p3708) target = $region72
        $region71: #{decoder_forward.4} parent=67 // pred_region
          %s3711 = smul.u32 25, %s22
          %p3712 = scmp.lt.s32.totalorder %s3711, 99
          %s3713 = scalar_select %p3712, %s3711, 99
          %s3714 = smul.addr %s3713, 2
          %s3715 = scalar_lea.vmem %s5, %s3714
        $region72: #{decoder_forward.4} parent=67 // pred_fallthru
          _
      $region68: #{decoder_forward.4} parent=5 // pred_fallthru
        _
    $region6: #{decoder_forward.4} parent=1 // loop_footer
      %s20 = sadd.s32 1, %s16
    $region7: #{decoder_forward.4} parent=1 // loop_footer_branch
      %15 = sbr.rel target = $region3
    $region8: #{decoder_forward.4} parent=1 // loop_exit
      _
    %3716 = vsyncpa [#allocation3], 1
    %s3717 = scalar_lea.sflag [#allocation3], 1
    %3718 = vsyncpa %s3717, 1
    %3719 = vsyncpa [#allocation5], 1
    %3720 = vsyncpa [#allocation8], 1
    %s3721 = scalar_lea.sflag [#allocation8], 1
    %3722 = vsyncpa %s3721, 1

// kernel: decoder_forward.5
$region0: #{decoder_forward.5}
  #allocation0 [shape = 'u32[]', space=smem, size = 0x4, offset = 0x4, fixed_abs, tag = 'smem constant byte address 0x4 - core index']
  #allocation1 [shape = 'u32[144,128]{1,0:T(1,128)}', space=vmem, size = 0x12000, scoped, tag = 'internal scratch']
  %s0 = inlined_call_operand.vmem [shape: bf16[200,1152], index: 0, kind: input, shape index: {}]
  %s1 = inlined_call_operand.vmem [shape: bf16[1152,256], index: 1, kind: input, shape index: {}]
  %s2 = inlined_call_operand.vmem [shape: f32[1,256], index: 2, kind: input, shape index: {}]
  %s3 = inlined_call_operand.vmem [shape: f32[200,256], index: 3, kind: output, shape index: {}]
  %s4 = sld [smem:[#allocation0]]
  $region22: #{decoder_forward.5} parent=0
    _
  %s6 = ssub.s32 1, %s4
  %s7 = scalar_select 0, %s6, %s4
  // Predicated region
  $region2: #{decoder_forward.5} parent=0 // pred_check
    _
  $region3: #{decoder_forward.5} parent=0 // pred_check_branch
    %9 = sbr.rel (0) target = $region5
  $region4: #{decoder_forward.5} parent=0 // pred_region
    _
  $region5: #{decoder_forward.5} parent=0 // pred_fallthru
    _
  // Predicated region
  $region6: #{decoder_forward.5} parent=0 // pred_check
    _
  $region7: #{decoder_forward.5} parent=0 // pred_check_branch
    %11 = sbr.rel (0) target = $region9
  $region8: #{decoder_forward.5} parent=0 // pred_region
    _
  $region9: #{decoder_forward.5} parent=0 // pred_fallthru
    _
  // Predicated region
  $region10: #{decoder_forward.5} parent=0 // pred_check
    _
  $region11: #{decoder_forward.5} parent=0 // pred_check_branch
    %13 = sbr.rel (0) target = $region13
  $region12: #{decoder_forward.5} parent=0 // pred_region
    _
  $region13: #{decoder_forward.5} parent=0 // pred_fallthru
    _
  %v15 = vld [vmem:[%s0] sm:$0xff]
  %v16 = vld [vmem:[%s0 + $0x8] sm:$0xff]
  %v17 = vld [vmem:[%s0 + $0x10] sm:$0xff]
  %v18 = vld [vmem:[%s0 + $0x18] sm:$0xff]
  %v19 = vld [vmem:[%s0 + $0x20] sm:$0xf]
  %v20 = vld [vmem:[%s0 + $0x24] sm:$0xff]
  %v21 = vld [vmem:[%s0 + $0x2c] sm:$0xff]
  %v22 = vld [vmem:[%s0 + $0x34] sm:$0xff]
  %v23 = vld [vmem:[%s0 + $0x3c] sm:$0xff]
  %v24 = vld [vmem:[%s0 + $0x44] sm:$0xf]
  %v25 = vld [vmem:[%s0 + $0x48] sm:$0xff]
  %v26 = vld [vmem:[%s0 + $0x50] sm:$0xff]
  %v27 = vld [vmem:[%s0 + $0x58] sm:$0xff]
  %v28 = vld [vmem:[%s0 + $0x60] sm:$0xff]
  %v29 = vld [vmem:[%s0 + $0x68] sm:$0xf]
  %v30 = vld [vmem:[%s0 + $0x6c] sm:$0xff]
  %v31 = vld [vmem:[%s0 + $0x74] sm:$0xff]
  %v32 = vld [vmem:[%s0 + $0x7c] sm:$0xff]
  %v33 = vld [vmem:[%s0 + $0x84] sm:$0xff]
  %v34 = vld [vmem:[%s0 + $0x8c] sm:$0xf]
  %v35 = vld [vmem:[%s0 + $0x90] sm:$0xff]
  %v36 = vld [vmem:[%s0 + $0x98] sm:$0xff]
  %v37 = vld [vmem:[%s0 + $0xa0] sm:$0xff]
  %v38 = vld [vmem:[%s0 + $0xa8] sm:$0xff]
  %v39 = vld [vmem:[%s0 + $0xb0] sm:$0xf]
  %v40 = vld [vmem:[%s0 + $0xb4] sm:$0xff]
  %v41 = vld [vmem:[%s0 + $0xbc] sm:$0xff]
  %v42 = vld [vmem:[%s0 + $0xc4] sm:$0xff]
  %v43 = vld [vmem:[%s0 + $0xcc] sm:$0xff]
  %v44 = vld [vmem:[%s0 + $0xd4] sm:$0xf]
  %v45 = vld [vmem:[%s0 + $0xd8] sm:$0xff]
  %v46 = vld [vmem:[%s0 + $0xe0] sm:$0xff]
  %v47 = vld [vmem:[%s0 + $0xe8] sm:$0xff]
  %v48 = vld [vmem:[%s0 + $0xf0] sm:$0xff]
  %v49 = vld [vmem:[%s0 + $0xf8] sm:$0xf]
  %v50 = vld [vmem:[%s0 + $0xfc] sm:$0xff]
  %v51 = vld [vmem:[%s0 + $0x104] sm:$0xff]
  %v52 = vld [vmem:[%s0 + $0x10c] sm:$0xff]
  %v53 = vld [vmem:[%s0 + $0x114] sm:$0xff]
  %v54 = vld [vmem:[%s0 + $0x11c] sm:$0xf]
  %v55 = vld [vmem:[%s0 + $0x120] sm:$0xff]
  %v56 = vld [vmem:[%s0 + $0x128] sm:$0xff]
  %v57 = vld [vmem:[%s0 + $0x130] sm:$0xff]
  %v58 = vld [vmem:[%s0 + $0x138] sm:$0xff]
  %v59 = vld [vmem:[%s0 + $0x140] sm:$0xf]
  %v60 = vld [vmem:[%s0 + $0x144] sm:$0xff]
  %v61 = vld [vmem:[%s0 + $0x14c] sm:$0xff]
  %v62 = vld [vmem:[%s0 + $0x154] sm:$0xff]
  %v63 = vld [vmem:[%s0 + $0x15c] sm:$0xff]
  %v64 = vld [vmem:[%s0 + $0x164] sm:$0xf]
  %v65 = vld [vmem:[%s0 + $0x168] sm:$0xff]
  %v66 = vld [vmem:[%s0 + $0x170] sm:$0xff]
  %v67 = vld [vmem:[%s0 + $0x178] sm:$0xff]
  %v68 = vld [vmem:[%s0 + $0x180] sm:$0xff]
  %v69 = vld [vmem:[%s0 + $0x188] sm:$0xf]
  %v70 = vld [vmem:[%s0 + $0x18c] sm:$0xff]
  %v71 = vld [vmem:[%s0 + $0x194] sm:$0xff]
  %v72 = vld [vmem:[%s0 + $0x19c] sm:$0xff]
  %v73 = vld [vmem:[%s0 + $0x1a4] sm:$0xff]
  %v74 = vld [vmem:[%s0 + $0x1ac] sm:$0xf]
  %v75 = vld [vmem:[%s0 + $0x1b0] sm:$0xff]
  %v76 = vld [vmem:[%s0 + $0x1b8] sm:$0xff]
  %v77 = vld [vmem:[%s0 + $0x1c0] sm:$0xff]
  %v78 = vld [vmem:[%s0 + $0x1c8] sm:$0xff]
  %v79 = vld [vmem:[%s0 + $0x1d0] sm:$0xf]
  %v80 = vld [vmem:[%s0 + $0x1d4] sm:$0xff]
  %v81 = vld [vmem:[%s0 + $0x1dc] sm:$0xff]
  %v82 = vld [vmem:[%s0 + $0x1e4] sm:$0xff]
  %v83 = vld [vmem:[%s0 + $0x1ec] sm:$0xff]
  %v84 = vld [vmem:[%s0 + $0x1f4] sm:$0xf]
  %v85 = vld [vmem:[%s0 + $0x1f8] sm:$0xff]
  %v86 = vld [vmem:[%s0 + $0x200] sm:$0xff]
  %v87 = vld [vmem:[%s0 + $0x208] sm:$0xff]
  %v88 = vld [vmem:[%s0 + $0x210] sm:$0xff]
  %v89 = vld [vmem:[%s0 + $0x218] sm:$0xf]
  %v90 = vld [vmem:[%s0 + $0x21c] sm:$0xff]
  %v91 = vld [vmem:[%s0 + $0x224] sm:$0xff]
  %v92 = vld [vmem:[%s0 + $0x22c] sm:$0xff]
  %v93 = vld [vmem:[%s0 + $0x234] sm:$0xff]
  %v94 = vld [vmem:[%s0 + $0x23c] sm:$0xf]
  %v95 = vld [vmem:[%s0 + $0x240] sm:$0xff]
  %v96 = vld [vmem:[%s0 + $0x248] sm:$0xff]
  %v97 = vld [vmem:[%s0 + $0x250] sm:$0xff]
  %v98 = vld [vmem:[%s0 + $0x258] sm:$0xff]
  %v99 = vld [vmem:[%s0 + $0x260] sm:$0xf]
  %v100 = vld [vmem:[%s0 + $0x264] sm:$0xff]
  %v101 = vld [vmem:[%s0 + $0x26c] sm:$0xff]
  %v102 = vld [vmem:[%s0 + $0x274] sm:$0xff]
  %v103 = vld [vmem:[%s0 + $0x27c] sm:$0xff]
  %v104 = vld [vmem:[%s0 + $0x284] sm:$0xf]
  %v105 = vld [vmem:[%s0 + $0x288] sm:$0xff]
  %v106 = vld [vmem:[%s0 + $0x290] sm:$0xff]
  %v107 = vld [vmem:[%s0 + $0x298] sm:$0xff]
  %v108 = vld [vmem:[%s0 + $0x2a0] sm:$0xff]
  %v109 = vld [vmem:[%s0 + $0x2a8] sm:$0xf]
  %v110 = vld [vmem:[%s0 + $0x2ac] sm:$0xff]
  %v111 = vld [vmem:[%s0 + $0x2b4] sm:$0xff]
  %v112 = vld [vmem:[%s0 + $0x2bc] sm:$0xff]
  %v113 = vld [vmem:[%s0 + $0x2c4] sm:$0xff]
  %v114 = vld [vmem:[%s0 + $0x2cc] sm:$0xf]
  %v115 = vld [vmem:[%s0 + $0x2d0] sm:$0xff]
  %v116 = vld [vmem:[%s0 + $0x2d8] sm:$0xff]
  %v117 = vld [vmem:[%s0 + $0x2e0] sm:$0xff]
  %v118 = vld [vmem:[%s0 + $0x2e8] sm:$0xff]
  %v119 = vld [vmem:[%s0 + $0x2f0] sm:$0xf]
  %v120 = vld [vmem:[%s0 + $0x2f4] sm:$0xff]
  %v121 = vld [vmem:[%s0 + $0x2fc] sm:$0xff]
  %v122 = vld [vmem:[%s0 + $0x304] sm:$0xff]
  %v123 = vld [vmem:[%s0 + $0x30c] sm:$0xff]
  %v124 = vld [vmem:[%s0 + $0x314] sm:$0xf]
  %v125 = vld [vmem:[%s0 + $0x318] sm:$0xff]
  %v126 = vld [vmem:[%s0 + $0x320] sm:$0xff]
  %v127 = vld [vmem:[%s0 + $0x328] sm:$0xff]
  %v128 = vld [vmem:[%s0 + $0x330] sm:$0xff]
  %v129 = vld [vmem:[%s0 + $0x338] sm:$0xf]
  %v130 = vld [vmem:[%s0 + $0x33c] sm:$0xff]
  %v131 = vld [vmem:[%s0 + $0x344] sm:$0xff]
  %v132 = vld [vmem:[%s0 + $0x34c] sm:$0xff]
  %v133 = vld [vmem:[%s0 + $0x354] sm:$0xff]
  %v134 = vld [vmem:[%s0 + $0x35c] sm:$0xf]
  %v135 = vld [vmem:[%s0 + $0x360] sm:$0xff]
  %v136 = vld [vmem:[%s0 + $0x368] sm:$0xff]
  %v137 = vld [vmem:[%s0 + $0x370] sm:$0xff]
  %v138 = vld [vmem:[%s0 + $0x378] sm:$0xff]
  %v139 = vld [vmem:[%s0 + $0x380] sm:$0xf]
  %v140 = vld [vmem:[%s1] sm:$0xff]
  %v141 = vld [vmem:[%s1 + $0x8] sm:$0xff]
  %v142 = vld [vmem:[%s1 + $0x10] sm:$0xff]
  %v143 = vld [vmem:[%s1 + $0x18] sm:$0xff]
  %v144 = vld [vmem:[%s1 + $0x20] sm:$0xff]
  %v145 = vld [vmem:[%s1 + $0x28] sm:$0xff]
  %v146 = vld [vmem:[%s1 + $0x30] sm:$0xff]
  %v147 = vld [vmem:[%s1 + $0x38] sm:$0xff]
  %v148 = vld [vmem:[%s1 + $0x40] sm:$0xff]
  %v149 = vld [vmem:[%s1 + $0x48] sm:$0xff]
  %v150 = vld [vmem:[%s1 + $0x50] sm:$0xff]
  %v151 = vld [vmem:[%s1 + $0x58] sm:$0xff]
  %v152 = vld [vmem:[%s1 + $0x60] sm:$0xff]
  %v153 = vld [vmem:[%s1 + $0x68] sm:$0xff]
  %v154 = vld [vmem:[%s1 + $0x70] sm:$0xff]
  %v155 = vld [vmem:[%s1 + $0x78] sm:$0xff]
  %v156 = vld [vmem:[%s1 + $0x80] sm:$0xff]
  %v157 = vld [vmem:[%s1 + $0x88] sm:$0xff]
  %v158 = vld [vmem:[%s1 + $0x90] sm:$0xff]
  %v159 = vld [vmem:[%s1 + $0x98] sm:$0xff]
  %v160 = vld [vmem:[%s1 + $0xa0] sm:$0xff]
  %v161 = vld [vmem:[%s1 + $0xa8] sm:$0xff]
  %v162 = vld [vmem:[%s1 + $0xb0] sm:$0xff]
  %v163 = vld [vmem:[%s1 + $0xb8] sm:$0xff]
  %v164 = vld [vmem:[%s1 + $0xc0] sm:$0xff]
  %v165 = vld [vmem:[%s1 + $0xc8] sm:$0xff]
  %v166 = vld [vmem:[%s1 + $0xd0] sm:$0xff]
  %v167 = vld [vmem:[%s1 + $0xd8] sm:$0xff]
  %v168 = vld [vmem:[%s1 + $0xe0] sm:$0xff]
  %v169 = vld [vmem:[%s1 + $0xe8] sm:$0xff]
  %v170 = vld [vmem:[%s1 + $0xf0] sm:$0xff]
  %v171 = vld [vmem:[%s1 + $0xf8] sm:$0xff]
  %v172 = vld [vmem:[%s1 + $0x100] sm:$0xff]
  %v173 = vld [vmem:[%s1 + $0x108] sm:$0xff]
  %v174 = vld [vmem:[%s1 + $0x110] sm:$0xff]
  %v175 = vld [vmem:[%s1 + $0x118] sm:$0xff]
  %v176 = vld [vmem:[%s1 + $0x120] sm:$0xff]
  %v177 = vld [vmem:[%s1 + $0x128] sm:$0xff]
  %v178 = vld [vmem:[%s1 + $0x130] sm:$0xff]
  %v179 = vld [vmem:[%s1 + $0x138] sm:$0xff]
  %v180 = vld [vmem:[%s1 + $0x140] sm:$0xff]
  %v181 = vld [vmem:[%s1 + $0x148] sm:$0xff]
  %v182 = vld [vmem:[%s1 + $0x150] sm:$0xff]
  %v183 = vld [vmem:[%s1 + $0x158] sm:$0xff]
  %v184 = vld [vmem:[%s1 + $0x160] sm:$0xff]
  %v185 = vld [vmem:[%s1 + $0x168] sm:$0xff]
  %v186 = vld [vmem:[%s1 + $0x170] sm:$0xff]
  %v187 = vld [vmem:[%s1 + $0x178] sm:$0xff]
  %v188 = vld [vmem:[%s1 + $0x180] sm:$0xff]
  %v189 = vld [vmem:[%s1 + $0x188] sm:$0xff]
  %v190 = vld [vmem:[%s1 + $0x190] sm:$0xff]
  %v191 = vld [vmem:[%s1 + $0x198] sm:$0xff]
  %v192 = vld [vmem:[%s1 + $0x1a0] sm:$0xff]
  %v193 = vld [vmem:[%s1 + $0x1a8] sm:$0xff]
  %v194 = vld [vmem:[%s1 + $0x1b0] sm:$0xff]
  %v195 = vld [vmem:[%s1 + $0x1b8] sm:$0xff]
  %v196 = vld [vmem:[%s1 + $0x1c0] sm:$0xff]
  %v197 = vld [vmem:[%s1 + $0x1c8] sm:$0xff]
  %v198 = vld [vmem:[%s1 + $0x1d0] sm:$0xff]
  %v199 = vld [vmem:[%s1 + $0x1d8] sm:$0xff]
  %v200 = vld [vmem:[%s1 + $0x1e0] sm:$0xff]
  %v201 = vld [vmem:[%s1 + $0x1e8] sm:$0xff]
  %v202 = vld [vmem:[%s1 + $0x1f0] sm:$0xff]
  %v203 = vld [vmem:[%s1 + $0x1f8] sm:$0xff]
  %v204 = vld [vmem:[%s1 + $0x200] sm:$0xff]
  %v205 = vld [vmem:[%s1 + $0x208] sm:$0xff]
  %v206 = vld [vmem:[%s1 + $0x210] sm:$0xff]
  %v207 = vld [vmem:[%s1 + $0x218] sm:$0xff]
  %v208 = vld [vmem:[%s1 + $0x220] sm:$0xff]
  %v209 = vld [vmem:[%s1 + $0x228] sm:$0xff]
  %v210 = vld [vmem:[%s1 + $0x230] sm:$0xff]
  %v211 = vld [vmem:[%s1 + $0x238] sm:$0xff]
  %v212 = vld [vmem:[%s1 + $0x240] sm:$0xff]
  %v213 = vld [vmem:[%s1 + $0x248] sm:$0xff]
  %v214 = vld [vmem:[%s1 + $0x250] sm:$0xff]
  %v215 = vld [vmem:[%s1 + $0x258] sm:$0xff]
  %v216 = vld [vmem:[%s1 + $0x260] sm:$0xff]
  %v217 = vld [vmem:[%s1 + $0x268] sm:$0xff]
  %v218 = vld [vmem:[%s1 + $0x270] sm:$0xff]
  %v219 = vld [vmem:[%s1 + $0x278] sm:$0xff]
  %v220 = vld [vmem:[%s1 + $0x280] sm:$0xff]
  %v221 = vld [vmem:[%s1 + $0x288] sm:$0xff]
  %v222 = vld [vmem:[%s1 + $0x290] sm:$0xff]
  %v223 = vld [vmem:[%s1 + $0x298] sm:$0xff]
  %v224 = vld [vmem:[%s1 + $0x2a0] sm:$0xff]
  %v225 = vld [vmem:[%s1 + $0x2a8] sm:$0xff]
  %v226 = vld [vmem:[%s1 + $0x2b0] sm:$0xff]
  %v227 = vld [vmem:[%s1 + $0x2b8] sm:$0xff]
  %v228 = vld [vmem:[%s1 + $0x2c0] sm:$0xff]
  %v229 = vld [vmem:[%s1 + $0x2c8] sm:$0xff]
  %v230 = vld [vmem:[%s1 + $0x2d0] sm:$0xff]
  %v231 = vld [vmem:[%s1 + $0x2d8] sm:$0xff]
  %v232 = vld [vmem:[%s1 + $0x2e0] sm:$0xff]
  %v233 = vld [vmem:[%s1 + $0x2e8] sm:$0xff]
  %v234 = vld [vmem:[%s1 + $0x2f0] sm:$0xff]
  %v235 = vld [vmem:[%s1 + $0x2f8] sm:$0xff]
  %v236 = vld [vmem:[%s1 + $0x300] sm:$0xff]
  %v237 = vld [vmem:[%s1 + $0x308] sm:$0xff]
  %v238 = vld [vmem:[%s1 + $0x310] sm:$0xff]
  %v239 = vld [vmem:[%s1 + $0x318] sm:$0xff]
  %v240 = vld [vmem:[%s1 + $0x320] sm:$0xff]
  %v241 = vld [vmem:[%s1 + $0x328] sm:$0xff]
  %v242 = vld [vmem:[%s1 + $0x330] sm:$0xff]
  %v243 = vld [vmem:[%s1 + $0x338] sm:$0xff]
  %v244 = vld [vmem:[%s1 + $0x340] sm:$0xff]
  %v245 = vld [vmem:[%s1 + $0x348] sm:$0xff]
  %v246 = vld [vmem:[%s1 + $0x350] sm:$0xff]
  %v247 = vld [vmem:[%s1 + $0x358] sm:$0xff]
  %v248 = vld [vmem:[%s1 + $0x360] sm:$0xff]
  %v249 = vld [vmem:[%s1 + $0x368] sm:$0xff]
  %v250 = vld [vmem:[%s1 + $0x370] sm:$0xff]
  %v251 = vld [vmem:[%s1 + $0x378] sm:$0xff]
  %v252 = vld [vmem:[%s1 + $0x380] sm:$0xff]
  %v253 = vld [vmem:[%s1 + $0x388] sm:$0xff]
  %v254 = vld [vmem:[%s1 + $0x390] sm:$0xff]
  %v255 = vld [vmem:[%s1 + $0x398] sm:$0xff]
  %v256 = vld [vmem:[%s1 + $0x3a0] sm:$0xff]
  %v257 = vld [vmem:[%s1 + $0x3a8] sm:$0xff]
  %v258 = vld [vmem:[%s1 + $0x3b0] sm:$0xff]
  %v259 = vld [vmem:[%s1 + $0x3b8] sm:$0xff]
  %v260 = vld [vmem:[%s1 + $0x3c0] sm:$0xff]
  %v261 = vld [vmem:[%s1 + $0x3c8] sm:$0xff]
  %v262 = vld [vmem:[%s1 + $0x3d0] sm:$0xff]
  %v263 = vld [vmem:[%s1 + $0x3d8] sm:$0xff]
  %v264 = vld [vmem:[%s1 + $0x3e0] sm:$0xff]
  %v265 = vld [vmem:[%s1 + $0x3e8] sm:$0xff]
  %v266 = vld [vmem:[%s1 + $0x3f0] sm:$0xff]
  %v267 = vld [vmem:[%s1 + $0x3f8] sm:$0xff]
  %v268 = vld [vmem:[%s1 + $0x400] sm:$0xff]
  %v269 = vld [vmem:[%s1 + $0x408] sm:$0xff]
  %v270 = vld [vmem:[%s1 + $0x410] sm:$0xff]
  %v271 = vld [vmem:[%s1 + $0x418] sm:$0xff]
  %v272 = vld [vmem:[%s1 + $0x420] sm:$0xff]
  %v273 = vld [vmem:[%s1 + $0x428] sm:$0xff]
  %v274 = vld [vmem:[%s1 + $0x430] sm:$0xff]
  %v275 = vld [vmem:[%s1 + $0x438] sm:$0xff]
  %v276 = vld [vmem:[%s1 + $0x440] sm:$0xff]
  %v277 = vld [vmem:[%s1 + $0x448] sm:$0xff]
  %v278 = vld [vmem:[%s1 + $0x450] sm:$0xff]
  %v279 = vld [vmem:[%s1 + $0x458] sm:$0xff]
  %v280 = vld [vmem:[%s1 + $0x460] sm:$0xff]
  %v281 = vld [vmem:[%s1 + $0x468] sm:$0xff]
  %v282 = vld [vmem:[%s1 + $0x470] sm:$0xff]
  %v283 = vld [vmem:[%s1 + $0x478] sm:$0xff]
  %v284 = vld [vmem:[%s2] sm:$0x3]
  %v286 = vlaneseq
  %v287 = vshrl.u32 %v286, 7
  %v288 = vsub.s32 0, %v287
  %v289 = vrot.slane %v284, %v288
  %v290 = vlaneseq
  %v291 = vshrl.u32 %v290, 7
  %v292 = vsub.s32 1, %v291
  %v293 = vrot.slane %v284, %v292
  %v421 = vunpack.c.l.b16 %v15
  %v422 = vunpack.c.h.b16 %v15
  %v423 = vunpack.c.l.b16 %v16
  %v424 = vunpack.c.h.b16 %v16
  %v425 = vunpack.c.l.b16 %v17
  %v426 = vunpack.c.h.b16 %v17
  %v427 = vunpack.c.l.b16 %v18
  %v428 = vunpack.c.h.b16 %v18
  %v429 = vunpack.c.l.b16 %v19
  %v430 = vunpack.c.l.b16 %v20
  %v431 = vunpack.c.h.b16 %v20
  %v432 = vunpack.c.l.b16 %v21
  %v433 = vunpack.c.h.b16 %v21
  %v434 = vunpack.c.l.b16 %v22
  %v435 = vunpack.c.h.b16 %v22
  %v436 = vunpack.c.l.b16 %v23
  %v437 = vunpack.c.h.b16 %v23
  %v438 = vunpack.c.l.b16 %v24
  %v439 = vunpack.c.l.b16 %v25
  %v440 = vunpack.c.h.b16 %v25
  %v441 = vunpack.c.l.b16 %v26
  %v442 = vunpack.c.h.b16 %v26
  %v443 = vunpack.c.l.b16 %v27
  %v444 = vunpack.c.h.b16 %v27
  %v445 = vunpack.c.l.b16 %v28
  %v446 = vunpack.c.h.b16 %v28
  %v447 = vunpack.c.l.b16 %v29
  %v448 = vunpack.c.l.b16 %v30
  %v449 = vunpack.c.h.b16 %v30
  %v450 = vunpack.c.l.b16 %v31
  %v451 = vunpack.c.h.b16 %v31
  %v452 = vunpack.c.l.b16 %v32
  %v453 = vunpack.c.h.b16 %v32
  %v454 = vunpack.c.l.b16 %v33
  %v455 = vunpack.c.h.b16 %v33
  %v456 = vunpack.c.l.b16 %v34
  %v457 = vunpack.c.l.b16 %v35
  %v458 = vunpack.c.h.b16 %v35
  %v459 = vunpack.c.l.b16 %v36
  %v460 = vunpack.c.h.b16 %v36
  %v461 = vunpack.c.l.b16 %v37
  %v462 = vunpack.c.h.b16 %v37
  %v463 = vunpack.c.l.b16 %v38
  %v464 = vunpack.c.h.b16 %v38
  %v465 = vunpack.c.l.b16 %v39
  %v466 = vunpack.c.l.b16 %v40
  %v467 = vunpack.c.h.b16 %v40
  %v468 = vunpack.c.l.b16 %v41
  %v469 = vunpack.c.h.b16 %v41
  %v470 = vunpack.c.l.b16 %v42
  %v471 = vunpack.c.h.b16 %v42
  %v472 = vunpack.c.l.b16 %v43
  %v473 = vunpack.c.h.b16 %v43
  %v474 = vunpack.c.l.b16 %v44
  %v475 = vunpack.c.l.b16 %v45
  %v476 = vunpack.c.h.b16 %v45
  %v477 = vunpack.c.l.b16 %v46
  %v478 = vunpack.c.h.b16 %v46
  %v479 = vunpack.c.l.b16 %v47
  %v480 = vunpack.c.h.b16 %v47
  %v481 = vunpack.c.l.b16 %v48
  %v482 = vunpack.c.h.b16 %v48
  %v483 = vunpack.c.l.b16 %v49
  %v484 = vunpack.c.l.b16 %v50
  %v485 = vunpack.c.h.b16 %v50
  %v486 = vunpack.c.l.b16 %v51
  %v487 = vunpack.c.h.b16 %v51
  %v488 = vunpack.c.l.b16 %v52
  %v489 = vunpack.c.h.b16 %v52
  %v490 = vunpack.c.l.b16 %v53
  %v491 = vunpack.c.h.b16 %v53
  %v492 = vunpack.c.l.b16 %v54
  %v493 = vunpack.c.l.b16 %v55
  %v494 = vunpack.c.h.b16 %v55
  %v495 = vunpack.c.l.b16 %v56
  %v496 = vunpack.c.h.b16 %v56
  %v497 = vunpack.c.l.b16 %v57
  %v498 = vunpack.c.h.b16 %v57
  %v499 = vunpack.c.l.b16 %v58
  %v500 = vunpack.c.h.b16 %v58
  %v501 = vunpack.c.l.b16 %v59
  %v502 = vunpack.c.l.b16 %v60
  %v503 = vunpack.c.h.b16 %v60
  %v504 = vunpack.c.l.b16 %v61
  %v505 = vunpack.c.h.b16 %v61
  %v506 = vunpack.c.l.b16 %v62
  %v507 = vunpack.c.h.b16 %v62
  %v508 = vunpack.c.l.b16 %v63
  %v509 = vunpack.c.h.b16 %v63
  %v510 = vunpack.c.l.b16 %v64
  %v511 = vunpack.c.l.b16 %v65
  %v512 = vunpack.c.h.b16 %v65
  %v513 = vunpack.c.l.b16 %v66
  %v514 = vunpack.c.h.b16 %v66
  %v515 = vunpack.c.l.b16 %v67
  %v516 = vunpack.c.h.b16 %v67
  %v517 = vunpack.c.l.b16 %v68
  %v518 = vunpack.c.h.b16 %v68
  %v519 = vunpack.c.l.b16 %v69
  %v520 = vunpack.c.l.b16 %v70
  %v521 = vunpack.c.h.b16 %v70
  %v522 = vunpack.c.l.b16 %v71
  %v523 = vunpack.c.h.b16 %v71
  %v524 = vunpack.c.l.b16 %v72
  %v525 = vunpack.c.h.b16 %v72
  %v526 = vunpack.c.l.b16 %v73
  %v527 = vunpack.c.h.b16 %v73
  %v528 = vunpack.c.l.b16 %v74
  %v529 = vunpack.c.l.b16 %v75
  %v530 = vunpack.c.h.b16 %v75
  %v531 = vunpack.c.l.b16 %v76
  %v532 = vunpack.c.h.b16 %v76
  %v533 = vunpack.c.l.b16 %v77
  %v534 = vunpack.c.h.b16 %v77
  %v535 = vunpack.c.l.b16 %v78
  %v536 = vunpack.c.h.b16 %v78
  %v537 = vunpack.c.l.b16 %v79
  %v538 = vunpack.c.l.b16 %v80
  %v539 = vunpack.c.h.b16 %v80
  %v540 = vunpack.c.l.b16 %v81
  %v541 = vunpack.c.h.b16 %v81
  %v542 = vunpack.c.l.b16 %v82
  %v543 = vunpack.c.h.b16 %v82
  %v544 = vunpack.c.l.b16 %v83
  %v545 = vunpack.c.h.b16 %v83
  %v546 = vunpack.c.l.b16 %v84
  %v547 = vunpack.c.l.b16 %v85
  %v548 = vunpack.c.h.b16 %v85
  %v549 = vunpack.c.l.b16 %v86
  %v550 = vunpack.c.h.b16 %v86
  %v551 = vunpack.c.l.b16 %v87
  %v552 = vunpack.c.h.b16 %v87
  %v553 = vunpack.c.l.b16 %v88
  %v554 = vunpack.c.h.b16 %v88
  %v555 = vunpack.c.l.b16 %v89
  %v556 = vunpack.c.l.b16 %v90
  %v557 = vunpack.c.h.b16 %v90
  %v558 = vunpack.c.l.b16 %v91
  %v559 = vunpack.c.h.b16 %v91
  %v560 = vunpack.c.l.b16 %v92
  %v561 = vunpack.c.h.b16 %v92
  %v562 = vunpack.c.l.b16 %v93
  %v563 = vunpack.c.h.b16 %v93
  %v564 = vunpack.c.l.b16 %v94
  %v565 = vunpack.c.l.b16 %v95
  %v566 = vunpack.c.h.b16 %v95
  %v567 = vunpack.c.l.b16 %v96
  %v568 = vunpack.c.h.b16 %v96
  %v569 = vunpack.c.l.b16 %v97
  %v570 = vunpack.c.h.b16 %v97
  %v571 = vunpack.c.l.b16 %v98
  %v572 = vunpack.c.h.b16 %v98
  %v573 = vunpack.c.l.b16 %v99
  %v574 = vunpack.c.l.b16 %v100
  %v575 = vunpack.c.h.b16 %v100
  %v576 = vunpack.c.l.b16 %v101
  %v577 = vunpack.c.h.b16 %v101
  %v578 = vunpack.c.l.b16 %v102
  %v579 = vunpack.c.h.b16 %v102
  %v580 = vunpack.c.l.b16 %v103
  %v581 = vunpack.c.h.b16 %v103
  %v582 = vunpack.c.l.b16 %v104
  %v583 = vunpack.c.l.b16 %v105
  %v584 = vunpack.c.h.b16 %v105
  %v585 = vunpack.c.l.b16 %v106
  %v586 = vunpack.c.h.b16 %v106
  %v587 = vunpack.c.l.b16 %v107
  %v588 = vunpack.c.h.b16 %v107
  %v589 = vunpack.c.l.b16 %v108
  %v590 = vunpack.c.h.b16 %v108
  %v591 = vunpack.c.l.b16 %v109
  %v592 = vunpack.c.l.b16 %v110
  %v593 = vunpack.c.h.b16 %v110
  %v594 = vunpack.c.l.b16 %v111
  %v595 = vunpack.c.h.b16 %v111
  %v596 = vunpack.c.l.b16 %v112
  %v597 = vunpack.c.h.b16 %v112
  %v598 = vunpack.c.l.b16 %v113
  %v599 = vunpack.c.h.b16 %v113
  %v600 = vunpack.c.l.b16 %v114
  %v601 = vunpack.c.l.b16 %v115
  %v602 = vunpack.c.h.b16 %v115
  %v603 = vunpack.c.l.b16 %v116
  %v604 = vunpack.c.h.b16 %v116
  %v605 = vunpack.c.l.b16 %v117
  %v606 = vunpack.c.h.b16 %v117
  %v607 = vunpack.c.l.b16 %v118
  %v608 = vunpack.c.h.b16 %v118
  %v609 = vunpack.c.l.b16 %v119
  %v610 = vunpack.c.l.b16 %v120
  %v611 = vunpack.c.h.b16 %v120
  %v612 = vunpack.c.l.b16 %v121
  %v613 = vunpack.c.h.b16 %v121
  %v614 = vunpack.c.l.b16 %v122
  %v615 = vunpack.c.h.b16 %v122
  %v616 = vunpack.c.l.b16 %v123
  %v617 = vunpack.c.h.b16 %v123
  %v618 = vunpack.c.l.b16 %v124
  %v619 = vunpack.c.l.b16 %v125
  %v620 = vunpack.c.h.b16 %v125
  %v621 = vunpack.c.l.b16 %v126
  %v622 = vunpack.c.h.b16 %v126
  %v623 = vunpack.c.l.b16 %v127
  %v624 = vunpack.c.h.b16 %v127
  %v625 = vunpack.c.l.b16 %v128
  %v626 = vunpack.c.h.b16 %v128
  %v627 = vunpack.c.l.b16 %v129
  %v628 = vunpack.c.l.b16 %v130
  %v629 = vunpack.c.h.b16 %v130
  %v630 = vunpack.c.l.b16 %v131
  %v631 = vunpack.c.h.b16 %v131
  %v632 = vunpack.c.l.b16 %v132
  %v633 = vunpack.c.h.b16 %v132
  %v634 = vunpack.c.l.b16 %v133
  %v635 = vunpack.c.h.b16 %v133
  %v636 = vunpack.c.l.b16 %v134
  %v637 = vunpack.c.l.b16 %v135
  %v638 = vunpack.c.h.b16 %v135
  %v639 = vunpack.c.l.b16 %v136
  %v640 = vunpack.c.h.b16 %v136
  %v641 = vunpack.c.l.b16 %v137
  %v642 = vunpack.c.h.b16 %v137
  %v643 = vunpack.c.l.b16 %v138
  %v644 = vunpack.c.h.b16 %v138
  %v645 = vunpack.c.l.b16 %v139
  %v646 = vpack.c.b16 %v430, %v421
  %v647 = vpack.c.b16 %v431, %v422
  %v648 = vpack.c.b16 %v432, %v423
  %v649 = vpack.c.b16 %v433, %v424
  %v650 = vpack.c.b16 %v434, %v425
  %v651 = vpack.c.b16 %v435, %v426
  %v652 = vpack.c.b16 %v436, %v427
  %v653 = vpack.c.b16 %v437, %v428
  %v654 = vpack.c.b16 %v438, %v429
  %v655 = vpack.c.b16 %v448, %v439
  %v656 = vpack.c.b16 %v449, %v440
  %v657 = vpack.c.b16 %v450, %v441
  %v658 = vpack.c.b16 %v451, %v442
  %v659 = vpack.c.b16 %v452, %v443
  %v660 = vpack.c.b16 %v453, %v444
  %v661 = vpack.c.b16 %v454, %v445
  %v662 = vpack.c.b16 %v455, %v446
  %v663 = vpack.c.b16 %v456, %v447
  %v664 = vpack.c.b16 %v466, %v457
  %v665 = vpack.c.b16 %v467, %v458
  %v666 = vpack.c.b16 %v468, %v459
  %v667 = vpack.c.b16 %v469, %v460
  %v668 = vpack.c.b16 %v470, %v461
  %v669 = vpack.c.b16 %v471, %v462
  %v670 = vpack.c.b16 %v472, %v463
  %v671 = vpack.c.b16 %v473, %v464
  %v672 = vpack.c.b16 %v474, %v465
  %v673 = vpack.c.b16 %v484, %v475
  %v674 = vpack.c.b16 %v485, %v476
  %v675 = vpack.c.b16 %v486, %v477
  %v676 = vpack.c.b16 %v487, %v478
  %v677 = vpack.c.b16 %v488, %v479
  %v678 = vpack.c.b16 %v489, %v480
  %v679 = vpack.c.b16 %v490, %v481
  %v680 = vpack.c.b16 %v491, %v482
  %v681 = vpack.c.b16 %v492, %v483
  %v682 = vpack.c.b16 %v502, %v493
  %v683 = vpack.c.b16 %v503, %v494
  %v684 = vpack.c.b16 %v504, %v495
  %v685 = vpack.c.b16 %v505, %v496
  %v686 = vpack.c.b16 %v506, %v497
  %v687 = vpack.c.b16 %v507, %v498
  %v688 = vpack.c.b16 %v508, %v499
  %v689 = vpack.c.b16 %v509, %v500
  %v690 = vpack.c.b16 %v510, %v501
  %v691 = vpack.c.b16 %v520, %v511
  %v692 = vpack.c.b16 %v521, %v512
  %v693 = vpack.c.b16 %v522, %v513
  %v694 = vpack.c.b16 %v523, %v514
  %v695 = vpack.c.b16 %v524, %v515
  %v696 = vpack.c.b16 %v525, %v516
  %v697 = vpack.c.b16 %v526, %v517
  %v698 = vpack.c.b16 %v527, %v518
  %v699 = vpack.c.b16 %v528, %v519
  %v700 = vpack.c.b16 %v538, %v529
  %v701 = vpack.c.b16 %v539, %v530
  %v702 = vpack.c.b16 %v540, %v531
  %v703 = vpack.c.b16 %v541, %v532
  %v704 = vpack.c.b16 %v542, %v533
  %v705 = vpack.c.b16 %v543, %v534
  %v706 = vpack.c.b16 %v544, %v535
  %v707 = vpack.c.b16 %v545, %v536
  %v708 = vpack.c.b16 %v546, %v537
  %v709 = vpack.c.b16 %v556, %v547
  %v710 = vpack.c.b16 %v557, %v548
  %v711 = vpack.c.b16 %v558, %v549
  %v712 = vpack.c.b16 %v559, %v550
  %v713 = vpack.c.b16 %v560, %v551
  %v714 = vpack.c.b16 %v561, %v552
  %v715 = vpack.c.b16 %v562, %v553
  %v716 = vpack.c.b16 %v563, %v554
  %v717 = vpack.c.b16 %v564, %v555
  %v718 = vpack.c.b16 %v574, %v565
  %v719 = vpack.c.b16 %v575, %v566
  %v720 = vpack.c.b16 %v576, %v567
  %v721 = vpack.c.b16 %v577, %v568
  %v722 = vpack.c.b16 %v578, %v569
  %v723 = vpack.c.b16 %v579, %v570
  %v724 = vpack.c.b16 %v580, %v571
  %v725 = vpack.c.b16 %v581, %v572
  %v726 = vpack.c.b16 %v582, %v573
  %v727 = vpack.c.b16 %v592, %v583
  %v728 = vpack.c.b16 %v593, %v584
  %v729 = vpack.c.b16 %v594, %v585
  %v730 = vpack.c.b16 %v595, %v586
  %v731 = vpack.c.b16 %v596, %v587
  %v732 = vpack.c.b16 %v597, %v588
  %v733 = vpack.c.b16 %v598, %v589
  %v734 = vpack.c.b16 %v599, %v590
  %v735 = vpack.c.b16 %v600, %v591
  %v736 = vpack.c.b16 %v610, %v601
  %v737 = vpack.c.b16 %v611, %v602
  %v738 = vpack.c.b16 %v612, %v603
  %v739 = vpack.c.b16 %v613, %v604
  %v740 = vpack.c.b16 %v614, %v605
  %v741 = vpack.c.b16 %v615, %v606
  %v742 = vpack.c.b16 %v616, %v607
  %v743 = vpack.c.b16 %v617, %v608
  %v744 = vpack.c.b16 %v618, %v609
  %v745 = vpack.c.b16 %v628, %v619
  %v746 = vpack.c.b16 %v629, %v620
  %v747 = vpack.c.b16 %v630, %v621
  %v748 = vpack.c.b16 %v631, %v622
  %v749 = vpack.c.b16 %v632, %v623
  %v750 = vpack.c.b16 %v633, %v624
  %v751 = vpack.c.b16 %v634, %v625
  %v752 = vpack.c.b16 %v635, %v626
  %v753 = vpack.c.b16 %v636, %v627
  %v754 = vpack.c.b16 %v637, %v637
  %v755 = vpack.c.b16 %v638, %v638
  %v756 = vpack.c.b16 %v639, %v639
  %v757 = vpack.c.b16 %v640, %v640
  %v758 = vpack.c.b16 %v641, %v641
  %v759 = vpack.c.b16 %v642, %v642
  %v760 = vpack.c.b16 %v643, %v643
  %v761 = vpack.c.b16 %v644, %v644
  %v762 = vpack.c.b16 %v645, %v645
  %v1024 = vunpack.c.l.b16 %v140
  %v1025 = vunpack.c.h.b16 %v140
  %v1026 = vunpack.c.l.b16 %v141
  %v1027 = vunpack.c.h.b16 %v141
  %v1028 = vunpack.c.l.b16 %v142
  %v1029 = vunpack.c.h.b16 %v142
  %v1030 = vunpack.c.l.b16 %v143
  %v1031 = vunpack.c.h.b16 %v143
  %v1032 = vunpack.c.l.b16 %v144
  %v1033 = vunpack.c.h.b16 %v144
  %v1034 = vunpack.c.l.b16 %v145
  %v1035 = vunpack.c.h.b16 %v145
  %v1036 = vunpack.c.l.b16 %v146
  %v1037 = vunpack.c.h.b16 %v146
  %v1038 = vunpack.c.l.b16 %v147
  %v1039 = vunpack.c.h.b16 %v147
  %v1040 = vunpack.c.l.b16 %v148
  %v1041 = vunpack.c.h.b16 %v148
  %v1042 = vunpack.c.l.b16 %v149
  %v1043 = vunpack.c.h.b16 %v149
  %v1044 = vunpack.c.l.b16 %v150
  %v1045 = vunpack.c.h.b16 %v150
  %v1046 = vunpack.c.l.b16 %v151
  %v1047 = vunpack.c.h.b16 %v151
  %v1048 = vunpack.c.l.b16 %v152
  %v1049 = vunpack.c.h.b16 %v152
  %v1050 = vunpack.c.l.b16 %v153
  %v1051 = vunpack.c.h.b16 %v153
  %v1052 = vunpack.c.l.b16 %v154
  %v1053 = vunpack.c.h.b16 %v154
  %v1054 = vunpack.c.l.b16 %v155
  %v1055 = vunpack.c.h.b16 %v155
  %v1056 = vunpack.c.l.b16 %v156
  %v1057 = vunpack.c.h.b16 %v156
  %v1058 = vunpack.c.l.b16 %v157
  %v1059 = vunpack.c.h.b16 %v157
  %v1060 = vunpack.c.l.b16 %v158
  %v1061 = vunpack.c.h.b16 %v158
  %v1062 = vunpack.c.l.b16 %v159
  %v1063 = vunpack.c.h.b16 %v159
  %v1064 = vunpack.c.l.b16 %v160
  %v1065 = vunpack.c.h.b16 %v160
  %v1066 = vunpack.c.l.b16 %v161
  %v1067 = vunpack.c.h.b16 %v161
  %v1068 = vunpack.c.l.b16 %v162
  %v1069 = vunpack.c.h.b16 %v162
  %v1070 = vunpack.c.l.b16 %v163
  %v1071 = vunpack.c.h.b16 %v163
  %v1072 = vunpack.c.l.b16 %v164
  %v1073 = vunpack.c.h.b16 %v164
  %v1074 = vunpack.c.l.b16 %v165
  %v1075 = vunpack.c.h.b16 %v165
  %v1076 = vunpack.c.l.b16 %v166
  %v1077 = vunpack.c.h.b16 %v166
  %v1078 = vunpack.c.l.b16 %v167
  %v1079 = vunpack.c.h.b16 %v167
  %v1080 = vunpack.c.l.b16 %v168
  %v1081 = vunpack.c.h.b16 %v168
  %v1082 = vunpack.c.l.b16 %v169
  %v1083 = vunpack.c.h.b16 %v169
  %v1084 = vunpack.c.l.b16 %v170
  %v1085 = vunpack.c.h.b16 %v170
  %v1086 = vunpack.c.l.b16 %v171
  %v1087 = vunpack.c.h.b16 %v171
  %v1088 = vunpack.c.l.b16 %v172
  %v1089 = vunpack.c.h.b16 %v172
  %v1090 = vunpack.c.l.b16 %v173
  %v1091 = vunpack.c.h.b16 %v173
  %v1092 = vunpack.c.l.b16 %v174
  %v1093 = vunpack.c.h.b16 %v174
  %v1094 = vunpack.c.l.b16 %v175
  %v1095 = vunpack.c.h.b16 %v175
  %v1096 = vunpack.c.l.b16 %v176
  %v1097 = vunpack.c.h.b16 %v176
  %v1098 = vunpack.c.l.b16 %v177
  %v1099 = vunpack.c.h.b16 %v177
  %v1100 = vunpack.c.l.b16 %v178
  %v1101 = vunpack.c.h.b16 %v178
  %v1102 = vunpack.c.l.b16 %v179
  %v1103 = vunpack.c.h.b16 %v179
  %v1104 = vunpack.c.l.b16 %v180
  %v1105 = vunpack.c.h.b16 %v180
  %v1106 = vunpack.c.l.b16 %v181
  %v1107 = vunpack.c.h.b16 %v181
  %v1108 = vunpack.c.l.b16 %v182
  %v1109 = vunpack.c.h.b16 %v182
  %v1110 = vunpack.c.l.b16 %v183
  %v1111 = vunpack.c.h.b16 %v183
  %v1112 = vunpack.c.l.b16 %v184
  %v1113 = vunpack.c.h.b16 %v184
  %v1114 = vunpack.c.l.b16 %v185
  %v1115 = vunpack.c.h.b16 %v185
  %v1116 = vunpack.c.l.b16 %v186
  %v1117 = vunpack.c.h.b16 %v186
  %v1118 = vunpack.c.l.b16 %v187
  %v1119 = vunpack.c.h.b16 %v187
  %v1120 = vunpack.c.l.b16 %v188
  %v1121 = vunpack.c.h.b16 %v188
  %v1122 = vunpack.c.l.b16 %v189
  %v1123 = vunpack.c.h.b16 %v189
  %v1124 = vunpack.c.l.b16 %v190
  %v1125 = vunpack.c.h.b16 %v190
  %v1126 = vunpack.c.l.b16 %v191
  %v1127 = vunpack.c.h.b16 %v191
  %v1128 = vunpack.c.l.b16 %v192
  %v1129 = vunpack.c.h.b16 %v192
  %v1130 = vunpack.c.l.b16 %v193
  %v1131 = vunpack.c.h.b16 %v193
  %v1132 = vunpack.c.l.b16 %v194
  %v1133 = vunpack.c.h.b16 %v194
  %v1134 = vunpack.c.l.b16 %v195
  %v1135 = vunpack.c.h.b16 %v195
  %v1136 = vunpack.c.l.b16 %v196
  %v1137 = vunpack.c.h.b16 %v196
  %v1138 = vunpack.c.l.b16 %v197
  %v1139 = vunpack.c.h.b16 %v197
  %v1140 = vunpack.c.l.b16 %v198
  %v1141 = vunpack.c.h.b16 %v198
  %v1142 = vunpack.c.l.b16 %v199
  %v1143 = vunpack.c.h.b16 %v199
  %v1144 = vunpack.c.l.b16 %v200
  %v1145 = vunpack.c.h.b16 %v200
  %v1146 = vunpack.c.l.b16 %v201
  %v1147 = vunpack.c.h.b16 %v201
  %v1148 = vunpack.c.l.b16 %v202
  %v1149 = vunpack.c.h.b16 %v202
  %v1150 = vunpack.c.l.b16 %v203
  %v1151 = vunpack.c.h.b16 %v203
  %v1152 = vunpack.c.l.b16 %v204
  %v1153 = vunpack.c.h.b16 %v204
  %v1154 = vunpack.c.l.b16 %v205
  %v1155 = vunpack.c.h.b16 %v205
  %v1156 = vunpack.c.l.b16 %v206
  %v1157 = vunpack.c.h.b16 %v206
  %v1158 = vunpack.c.l.b16 %v207
  %v1159 = vunpack.c.h.b16 %v207
  %v1160 = vunpack.c.l.b16 %v208
  %v1161 = vunpack.c.h.b16 %v208
  %v1162 = vunpack.c.l.b16 %v209
  %v1163 = vunpack.c.h.b16 %v209
  %v1164 = vunpack.c.l.b16 %v210
  %v1165 = vunpack.c.h.b16 %v210
  %v1166 = vunpack.c.l.b16 %v211
  %v1167 = vunpack.c.h.b16 %v211
  %v1168 = vunpack.c.l.b16 %v212
  %v1169 = vunpack.c.h.b16 %v212
  %v1170 = vunpack.c.l.b16 %v213
  %v1171 = vunpack.c.h.b16 %v213
  %v1172 = vunpack.c.l.b16 %v214
  %v1173 = vunpack.c.h.b16 %v214
  %v1174 = vunpack.c.l.b16 %v215
  %v1175 = vunpack.c.h.b16 %v215
  %v1176 = vunpack.c.l.b16 %v216
  %v1177 = vunpack.c.h.b16 %v216
  %v1178 = vunpack.c.l.b16 %v217
  %v1179 = vunpack.c.h.b16 %v217
  %v1180 = vunpack.c.l.b16 %v218
  %v1181 = vunpack.c.h.b16 %v218
  %v1182 = vunpack.c.l.b16 %v219
  %v1183 = vunpack.c.h.b16 %v219
  %v1184 = vunpack.c.l.b16 %v220
  %v1185 = vunpack.c.h.b16 %v220
  %v1186 = vunpack.c.l.b16 %v221
  %v1187 = vunpack.c.h.b16 %v221
  %v1188 = vunpack.c.l.b16 %v222
  %v1189 = vunpack.c.h.b16 %v222
  %v1190 = vunpack.c.l.b16 %v223
  %v1191 = vunpack.c.h.b16 %v223
  %v1192 = vunpack.c.l.b16 %v224
  %v1193 = vunpack.c.h.b16 %v224
  %v1194 = vunpack.c.l.b16 %v225
  %v1195 = vunpack.c.h.b16 %v225
  %v1196 = vunpack.c.l.b16 %v226
  %v1197 = vunpack.c.h.b16 %v226
  %v1198 = vunpack.c.l.b16 %v227
  %v1199 = vunpack.c.h.b16 %v227
  %v1200 = vunpack.c.l.b16 %v228
  %v1201 = vunpack.c.h.b16 %v228
  %v1202 = vunpack.c.l.b16 %v229
  %v1203 = vunpack.c.h.b16 %v229
  %v1204 = vunpack.c.l.b16 %v230
  %v1205 = vunpack.c.h.b16 %v230
  %v1206 = vunpack.c.l.b16 %v231
  %v1207 = vunpack.c.h.b16 %v231
  %v1208 = vunpack.c.l.b16 %v232
  %v1209 = vunpack.c.h.b16 %v232
  %v1210 = vunpack.c.l.b16 %v233
  %v1211 = vunpack.c.h.b16 %v233
  %v1212 = vunpack.c.l.b16 %v234
  %v1213 = vunpack.c.h.b16 %v234
  %v1214 = vunpack.c.l.b16 %v235
  %v1215 = vunpack.c.h.b16 %v235
  %v1216 = vunpack.c.l.b16 %v236
  %v1217 = vunpack.c.h.b16 %v236
  %v1218 = vunpack.c.l.b16 %v237
  %v1219 = vunpack.c.h.b16 %v237
  %v1220 = vunpack.c.l.b16 %v238
  %v1221 = vunpack.c.h.b16 %v238
  %v1222 = vunpack.c.l.b16 %v239
  %v1223 = vunpack.c.h.b16 %v239
  %v1224 = vunpack.c.l.b16 %v240
  %v1225 = vunpack.c.h.b16 %v240
  %v1226 = vunpack.c.l.b16 %v241
  %v1227 = vunpack.c.h.b16 %v241
  %v1228 = vunpack.c.l.b16 %v242
  %v1229 = vunpack.c.h.b16 %v242
  %v1230 = vunpack.c.l.b16 %v243
  %v1231 = vunpack.c.h.b16 %v243
  %v1232 = vunpack.c.l.b16 %v244
  %v1233 = vunpack.c.h.b16 %v244
  %v1234 = vunpack.c.l.b16 %v245
  %v1235 = vunpack.c.h.b16 %v245
  %v1236 = vunpack.c.l.b16 %v246
  %v1237 = vunpack.c.h.b16 %v246
  %v1238 = vunpack.c.l.b16 %v247
  %v1239 = vunpack.c.h.b16 %v247
  %v1240 = vunpack.c.l.b16 %v248
  %v1241 = vunpack.c.h.b16 %v248
  %v1242 = vunpack.c.l.b16 %v249
  %v1243 = vunpack.c.h.b16 %v249
  %v1244 = vunpack.c.l.b16 %v250
  %v1245 = vunpack.c.h.b16 %v250
  %v1246 = vunpack.c.l.b16 %v251
  %v1247 = vunpack.c.h.b16 %v251
  %v1248 = vunpack.c.l.b16 %v252
  %v1249 = vunpack.c.h.b16 %v252
  %v1250 = vunpack.c.l.b16 %v253
  %v1251 = vunpack.c.h.b16 %v253
  %v1252 = vunpack.c.l.b16 %v254
  %v1253 = vunpack.c.h.b16 %v254
  %v1254 = vunpack.c.l.b16 %v255
  %v1255 = vunpack.c.h.b16 %v255
  %v1256 = vunpack.c.l.b16 %v256
  %v1257 = vunpack.c.h.b16 %v256
  %v1258 = vunpack.c.l.b16 %v257
  %v1259 = vunpack.c.h.b16 %v257
  %v1260 = vunpack.c.l.b16 %v258
  %v1261 = vunpack.c.h.b16 %v258
  %v1262 = vunpack.c.l.b16 %v259
  %v1263 = vunpack.c.h.b16 %v259
  %v1264 = vunpack.c.l.b16 %v260
  %v1265 = vunpack.c.h.b16 %v260
  %v1266 = vunpack.c.l.b16 %v261
  %v1267 = vunpack.c.h.b16 %v261
  %v1268 = vunpack.c.l.b16 %v262
  %v1269 = vunpack.c.h.b16 %v262
  %v1270 = vunpack.c.l.b16 %v263
  %v1271 = vunpack.c.h.b16 %v263
  %v1272 = vunpack.c.l.b16 %v264
  %v1273 = vunpack.c.h.b16 %v264
  %v1274 = vunpack.c.l.b16 %v265
  %v1275 = vunpack.c.h.b16 %v265
  %v1276 = vunpack.c.l.b16 %v266
  %v1277 = vunpack.c.h.b16 %v266
  %v1278 = vunpack.c.l.b16 %v267
  %v1279 = vunpack.c.h.b16 %v267
  %v1280 = vunpack.c.l.b16 %v268
  %v1281 = vunpack.c.h.b16 %v268
  %v1282 = vunpack.c.l.b16 %v269
  %v1283 = vunpack.c.h.b16 %v269
  %v1284 = vunpack.c.l.b16 %v270
  %v1285 = vunpack.c.h.b16 %v270
  %v1286 = vunpack.c.l.b16 %v271
  %v1287 = vunpack.c.h.b16 %v271
  %v1288 = vunpack.c.l.b16 %v272
  %v1289 = vunpack.c.h.b16 %v272
  %v1290 = vunpack.c.l.b16 %v273
  %v1291 = vunpack.c.h.b16 %v273
  %v1292 = vunpack.c.l.b16 %v274
  %v1293 = vunpack.c.h.b16 %v274
  %v1294 = vunpack.c.l.b16 %v275
  %v1295 = vunpack.c.h.b16 %v275
  %v1296 = vunpack.c.l.b16 %v276
  %v1297 = vunpack.c.h.b16 %v276
  %v1298 = vunpack.c.l.b16 %v277
  %v1299 = vunpack.c.h.b16 %v277
  %v1300 = vunpack.c.l.b16 %v278
  %v1301 = vunpack.c.h.b16 %v278
  %v1302 = vunpack.c.l.b16 %v279
  %v1303 = vunpack.c.h.b16 %v279
  %v1304 = vunpack.c.l.b16 %v280
  %v1305 = vunpack.c.h.b16 %v280
  %v1306 = vunpack.c.l.b16 %v281
  %v1307 = vunpack.c.h.b16 %v281
  %v1308 = vunpack.c.l.b16 %v282
  %v1309 = vunpack.c.h.b16 %v282
  %v1310 = vunpack.c.l.b16 %v283
  %v1311 = vunpack.c.h.b16 %v283
  %v1312 = vpack.c.b16 %v1026, %v1024
  %v1313 = vpack.c.b16 %v1027, %v1025
  %v1314 = vpack.c.b16 %v1030, %v1028
  %v1315 = vpack.c.b16 %v1031, %v1029
  %v1316 = vpack.c.b16 %v1034, %v1032
  %v1317 = vpack.c.b16 %v1035, %v1033
  %v1318 = vpack.c.b16 %v1038, %v1036
  %v1319 = vpack.c.b16 %v1039, %v1037
  %v1320 = vpack.c.b16 %v1042, %v1040
  %v1321 = vpack.c.b16 %v1043, %v1041
  %v1322 = vpack.c.b16 %v1046, %v1044
  %v1323 = vpack.c.b16 %v1047, %v1045
  %v1324 = vpack.c.b16 %v1050, %v1048
  %v1325 = vpack.c.b16 %v1051, %v1049
  %v1326 = vpack.c.b16 %v1054, %v1052
  %v1327 = vpack.c.b16 %v1055, %v1053
  %v1328 = vpack.c.b16 %v1058, %v1056
  %v1329 = vpack.c.b16 %v1059, %v1057
  %v1330 = vpack.c.b16 %v1062, %v1060
  %v1331 = vpack.c.b16 %v1063, %v1061
  %v1332 = vpack.c.b16 %v1066, %v1064
  %v1333 = vpack.c.b16 %v1067, %v1065
  %v1334 = vpack.c.b16 %v1070, %v1068
  %v1335 = vpack.c.b16 %v1071, %v1069
  %v1336 = vpack.c.b16 %v1074, %v1072
  %v1337 = vpack.c.b16 %v1075, %v1073
  %v1338 = vpack.c.b16 %v1078, %v1076
  %v1339 = vpack.c.b16 %v1079, %v1077
  %v1340 = vpack.c.b16 %v1082, %v1080
  %v1341 = vpack.c.b16 %v1083, %v1081
  %v1342 = vpack.c.b16 %v1086, %v1084
  %v1343 = vpack.c.b16 %v1087, %v1085
  %v1344 = vpack.c.b16 %v1090, %v1088
  %v1345 = vpack.c.b16 %v1091, %v1089
  %v1346 = vpack.c.b16 %v1094, %v1092
  %v1347 = vpack.c.b16 %v1095, %v1093
  %v1348 = vpack.c.b16 %v1098, %v1096
  %v1349 = vpack.c.b16 %v1099, %v1097
  %v1350 = vpack.c.b16 %v1102, %v1100
  %v1351 = vpack.c.b16 %v1103, %v1101
  %v1352 = vpack.c.b16 %v1106, %v1104
  %v1353 = vpack.c.b16 %v1107, %v1105
  %v1354 = vpack.c.b16 %v1110, %v1108
  %v1355 = vpack.c.b16 %v1111, %v1109
  %v1356 = vpack.c.b16 %v1114, %v1112
  %v1357 = vpack.c.b16 %v1115, %v1113
  %v1358 = vpack.c.b16 %v1118, %v1116
  %v1359 = vpack.c.b16 %v1119, %v1117
  %v1360 = vpack.c.b16 %v1122, %v1120
  %v1361 = vpack.c.b16 %v1123, %v1121
  %v1362 = vpack.c.b16 %v1126, %v1124
  %v1363 = vpack.c.b16 %v1127, %v1125
  %v1364 = vpack.c.b16 %v1130, %v1128
  %v1365 = vpack.c.b16 %v1131, %v1129
  %v1366 = vpack.c.b16 %v1134, %v1132
  %v1367 = vpack.c.b16 %v1135, %v1133
  %v1368 = vpack.c.b16 %v1138, %v1136
  %v1369 = vpack.c.b16 %v1139, %v1137
  %v1370 = vpack.c.b16 %v1142, %v1140
  %v1371 = vpack.c.b16 %v1143, %v1141
  %v1372 = vpack.c.b16 %v1146, %v1144
  %v1373 = vpack.c.b16 %v1147, %v1145
  %v1374 = vpack.c.b16 %v1150, %v1148
  %v1375 = vpack.c.b16 %v1151, %v1149
  %v1376 = vpack.c.b16 %v1154, %v1152
  %v1377 = vpack.c.b16 %v1155, %v1153
  %v1378 = vpack.c.b16 %v1158, %v1156
  %v1379 = vpack.c.b16 %v1159, %v1157
  %v1380 = vpack.c.b16 %v1162, %v1160
  %v1381 = vpack.c.b16 %v1163, %v1161
  %v1382 = vpack.c.b16 %v1166, %v1164
  %v1383 = vpack.c.b16 %v1167, %v1165
  %v1384 = vpack.c.b16 %v1170, %v1168
  %v1385 = vpack.c.b16 %v1171, %v1169
  %v1386 = vpack.c.b16 %v1174, %v1172
  %v1387 = vpack.c.b16 %v1175, %v1173
  %v1388 = vpack.c.b16 %v1178, %v1176
  %v1389 = vpack.c.b16 %v1179, %v1177
  %v1390 = vpack.c.b16 %v1182, %v1180
  %v1391 = vpack.c.b16 %v1183, %v1181
  %v1392 = vpack.c.b16 %v1186, %v1184
  %v1393 = vpack.c.b16 %v1187, %v1185
  %v1394 = vpack.c.b16 %v1190, %v1188
  %v1395 = vpack.c.b16 %v1191, %v1189
  %v1396 = vpack.c.b16 %v1194, %v1192
  %v1397 = vpack.c.b16 %v1195, %v1193
  %v1398 = vpack.c.b16 %v1198, %v1196
  %v1399 = vpack.c.b16 %v1199, %v1197
  %v1400 = vpack.c.b16 %v1202, %v1200
  %v1401 = vpack.c.b16 %v1203, %v1201
  %v1402 = vpack.c.b16 %v1206, %v1204
  %v1403 = vpack.c.b16 %v1207, %v1205
  %v1404 = vpack.c.b16 %v1210, %v1208
  %v1405 = vpack.c.b16 %v1211, %v1209
  %v1406 = vpack.c.b16 %v1214, %v1212
  %v1407 = vpack.c.b16 %v1215, %v1213
  %v1408 = vpack.c.b16 %v1218, %v1216
  %v1409 = vpack.c.b16 %v1219, %v1217
  %v1410 = vpack.c.b16 %v1222, %v1220
  %v1411 = vpack.c.b16 %v1223, %v1221
  %v1412 = vpack.c.b16 %v1226, %v1224
  %v1413 = vpack.c.b16 %v1227, %v1225
  %v1414 = vpack.c.b16 %v1230, %v1228
  %v1415 = vpack.c.b16 %v1231, %v1229
  %v1416 = vpack.c.b16 %v1234, %v1232
  %v1417 = vpack.c.b16 %v1235, %v1233
  %v1418 = vpack.c.b16 %v1238, %v1236
  %v1419 = vpack.c.b16 %v1239, %v1237
  %v1420 = vpack.c.b16 %v1242, %v1240
  %v1421 = vpack.c.b16 %v1243, %v1241
  %v1422 = vpack.c.b16 %v1246, %v1244
  %v1423 = vpack.c.b16 %v1247, %v1245
  %v1424 = vpack.c.b16 %v1250, %v1248
  %v1425 = vpack.c.b16 %v1251, %v1249
  %v1426 = vpack.c.b16 %v1254, %v1252
  %v1427 = vpack.c.b16 %v1255, %v1253
  %v1428 = vpack.c.b16 %v1258, %v1256
  %v1429 = vpack.c.b16 %v1259, %v1257
  %v1430 = vpack.c.b16 %v1262, %v1260
  %v1431 = vpack.c.b16 %v1263, %v1261
  %v1432 = vpack.c.b16 %v1266, %v1264
  %v1433 = vpack.c.b16 %v1267, %v1265
  %v1434 = vpack.c.b16 %v1270, %v1268
  %v1435 = vpack.c.b16 %v1271, %v1269
  %v1436 = vpack.c.b16 %v1274, %v1272
  %v1437 = vpack.c.b16 %v1275, %v1273
  %v1438 = vpack.c.b16 %v1278, %v1276
  %v1439 = vpack.c.b16 %v1279, %v1277
  %v1440 = vpack.c.b16 %v1282, %v1280
  %v1441 = vpack.c.b16 %v1283, %v1281
  %v1442 = vpack.c.b16 %v1286, %v1284
  %v1443 = vpack.c.b16 %v1287, %v1285
  %v1444 = vpack.c.b16 %v1290, %v1288
  %v1445 = vpack.c.b16 %v1291, %v1289
  %v1446 = vpack.c.b16 %v1294, %v1292
  %v1447 = vpack.c.b16 %v1295, %v1293
  %v1448 = vpack.c.b16 %v1298, %v1296
  %v1449 = vpack.c.b16 %v1299, %v1297
  %v1450 = vpack.c.b16 %v1302, %v1300
  %v1451 = vpack.c.b16 %v1303, %v1301
  %v1452 = vpack.c.b16 %v1306, %v1304
  %v1453 = vpack.c.b16 %v1307, %v1305
  %v1454 = vpack.c.b16 %v1310, %v1308
  %v1455 = vpack.c.b16 %v1311, %v1309
  %1600 = vmatprep.subr.bf16.mxu0 %v1313
  %1601 = vmatpush1.bf16.msra.mxu0 %v1312
  %1602 = vmatprep.subr.bf16.mxu0 %v1315
  %1603 = vmatpush1.bf16.msra.mxu0 %v1314
  %1604 = vmatprep.subr.bf16.mxu0 %v1317
  %1605 = vmatpush1.bf16.msra.mxu0 %v1316
  %1606 = vmatprep.subr.bf16.mxu0 %v1319
  %1607 = vmatpush1.bf16.msra.mxu0 %v1318
  %1608 = vmatprep.subr.bf16.mxu0 %v1321
  %1609 = vmatpush1.bf16.msra.mxu0 %v1320
  %1610 = vmatprep.subr.bf16.mxu0 %v1323
  %1611 = vmatpush1.bf16.msra.mxu0 %v1322
  %1612 = vmatprep.subr.bf16.mxu0 %v1325
  %1613 = vmatpush1.bf16.msra.mxu0 %v1324
  %1614 = vmatprep.subr.bf16.mxu0 %v1327
  %1615 = vmatpush1.bf16.msra.mxu0 %v1326
  %1616 = vmatprep.subr.bf16.mxu0 %v1329
  %1617 = vmatpush1.bf16.msra.mxu0 %v1328
  %1618 = vmatprep.subr.bf16.mxu0 %v1331
  %1619 = vmatpush1.bf16.msra.mxu0 %v1330
  %1620 = vmatprep.subr.bf16.mxu0 %v1333
  %1621 = vmatpush1.bf16.msra.mxu0 %v1332
  %1622 = vmatprep.subr.bf16.mxu0 %v1335
  %1623 = vmatpush1.bf16.msra.mxu0 %v1334
  %1624 = vmatprep.subr.bf16.mxu0 %v1337
  %1625 = vmatpush1.bf16.msra.mxu0 %v1336
  %1626 = vmatprep.subr.bf16.mxu0 %v1339
  %1627 = vmatpush1.bf16.msra.mxu0 %v1338
  %1628 = vmatprep.subr.bf16.mxu0 %v1341
  %1629 = vmatpush1.bf16.msra.mxu0 %v1340
  %1630 = vmatprep.subr.bf16.mxu0 %v1343
  %1631 = vmatpush1.bf16.msra.mxu0 %v1342
  %1632 = vmatprep.mubr.bf16.mxu0 %v647
  %1633 = vmatmul.mubr.bf16.gmra.mrb[0].mxu0 %v646
  %v1634 = vpop.f32.mrb[0].mxu0
  %v1635 = vadd.f32 %v289, %v1634
  %v1636 = vpop.f32.mrb[0].mxu0
  %v1637 = vadd.f32 %v293, %v1636
  %v1638 = vpop.f32.mrb[0].mxu0
  %v1639 = vadd.f32 %v289, %v1638
  %v1640 = vpop.f32.mrb[0].mxu0
  %v1641 = vadd.f32 %v293, %v1640
  %1642 = vmatprep.mubr.bf16.mxu0 %v656
  %1643 = vmatmul.mubr.bf16.gmra.mrb[0].mxu0 %v655
  %v1644 = vpop.f32.mrb[0].mxu0
  %v1645 = vadd.f32 %v289, %v1644
  %v1646 = vpop.f32.mrb[0].mxu0
  %v1647 = vadd.f32 %v293, %v1646
  %v1648 = vpop.f32.mrb[0].mxu0
  %v1649 = vadd.f32 %v289, %v1648
  %v1650 = vpop.f32.mrb[0].mxu0
  %v1651 = vadd.f32 %v293, %v1650
  %1652 = vmatprep.mubr.bf16.mxu0 %v665
  %1653 = vmatmul.mubr.bf16.gmra.mrb[0].mxu0 %v664
  %v1654 = vpop.f32.mrb[0].mxu0
  %v1655 = vadd.f32 %v289, %v1654
  %v1656 = vpop.f32.mrb[0].mxu0
  %v1657 = vadd.f32 %v293, %v1656
  %v1658 = vpop.f32.mrb[0].mxu0
  %v1659 = vadd.f32 %v289, %v1658
  %v1660 = vpop.f32.mrb[0].mxu0
  %v1661 = vadd.f32 %v293, %v1660
  %1662 = vmatprep.mubr.bf16.mxu0 %v674
  %1663 = vmatmul.mubr.bf16.gmra.mrb[0].mxu0 %v673
  %v1664 = vpop.f32.mrb[0].mxu0
  %v1665 = vadd.f32 %v289, %v1664
  %v1666 = vpop.f32.mrb[0].mxu0
  %v1667 = vadd.f32 %v293, %v1666
  %v1668 = vpop.f32.mrb[0].mxu0
  %v1669 = vadd.f32 %v289, %v1668
  %v1670 = vpop.f32.mrb[0].mxu0
  %v1671 = vadd.f32 %v293, %v1670
  %1672 = vmatprep.mubr.bf16.mxu0 %v683
  %1673 = vmatmul.mubr.bf16.gmra.mrb[0].mxu0 %v682
  %v1674 = vpop.f32.mrb[0].mxu0
  %v1675 = vadd.f32 %v289, %v1674
  %v1676 = vpop.f32.mrb[0].mxu0
  %v1677 = vadd.f32 %v293, %v1676
  %v1678 = vpop.f32.mrb[0].mxu0
  %v1679 = vadd.f32 %v289, %v1678
  %v1680 = vpop.f32.mrb[0].mxu0
  %v1681 = vadd.f32 %v293, %v1680
  %1682 = vmatprep.mubr.bf16.mxu0 %v692
  %1683 = vmatmul.mubr.bf16.gmra.mrb[0].mxu0 %v691
  %v1684 = vpop.f32.mrb[0].mxu0
  %v1685 = vadd.f32 %v289, %v1684
  %v1686 = vpop.f32.mrb[0].mxu0
  %v1687 = vadd.f32 %v293, %v1686
  %v1688 = vpop.f32.mrb[0].mxu0
  %v1689 = vadd.f32 %v289, %v1688
  %v1690 = vpop.f32.mrb[0].mxu0
  %v1691 = vadd.f32 %v293, %v1690
  %1692 = vmatprep.mubr.bf16.mxu0 %v701
  %1693 = vmatmul.mubr.bf16.gmra.mrb[0].mxu0 %v700
  %v1694 = vpop.f32.mrb[0].mxu0
  %v1695 = vadd.f32 %v289, %v1694
  %v1696 = vpop.f32.mrb[0].mxu0
  %v1697 = vadd.f32 %v293, %v1696
  %v1698 = vpop.f32.mrb[0].mxu0
  %v1699 = vadd.f32 %v289, %v1698
  %v1700 = vpop.f32.mrb[0].mxu0
  %v1701 = vadd.f32 %v293, %v1700
  %1702 = vmatprep.mubr.bf16.mxu0 %v710
  %1703 = vmatmul.mubr.bf16.gmra.mrb[0].mxu0 %v709
  %v1704 = vpop.f32.mrb[0].mxu0
  %v1705 = vadd.f32 %v289, %v1704
  %v1706 = vpop.f32.mrb[0].mxu0
  %v1707 = vadd.f32 %v293, %v1706
  %v1708 = vpop.f32.mrb[0].mxu0
  %v1709 = vadd.f32 %v289, %v1708
  %v1710 = vpop.f32.mrb[0].mxu0
  %v1711 = vadd.f32 %v293, %v1710
  %1712 = vmatprep.mubr.bf16.mxu0 %v719
  %1713 = vmatmul.mubr.bf16.gmra.mrb[0].mxu0 %v718
  %v1714 = vpop.f32.mrb[0].mxu0
  %v1715 = vadd.f32 %v289, %v1714
  %v1716 = vpop.f32.mrb[0].mxu0
  %v1717 = vadd.f32 %v293, %v1716
  %v1718 = vpop.f32.mrb[0].mxu0
  %v1719 = vadd.f32 %v289, %v1718
  %v1720 = vpop.f32.mrb[0].mxu0
  %v1721 = vadd.f32 %v293, %v1720
  %1722 = vmatprep.mubr.bf16.mxu0 %v728
  %1723 = vmatmul.mubr.bf16.gmra.mrb[0].mxu0 %v727
  %v1724 = vpop.f32.mrb[0].mxu0
  %v1725 = vadd.f32 %v289, %v1724
  %v1726 = vpop.f32.mrb[0].mxu0
  %v1727 = vadd.f32 %v293, %v1726
  %v1728 = vpop.f32.mrb[0].mxu0
  %v1729 = vadd.f32 %v289, %v1728
  %v1730 = vpop.f32.mrb[0].mxu0
  %v1731 = vadd.f32 %v293, %v1730
  %1732 = vmatprep.mubr.bf16.mxu0 %v737
  %1733 = vmatmul.mubr.bf16.gmra.mrb[0].mxu0 %v736
  %v1734 = vpop.f32.mrb[0].mxu0
  %v1735 = vadd.f32 %v289, %v1734
  %v1736 = vpop.f32.mrb[0].mxu0
  %v1737 = vadd.f32 %v293, %v1736
  %v1738 = vpop.f32.mrb[0].mxu0
  %v1739 = vadd.f32 %v289, %v1738
  %v1740 = vpop.f32.mrb[0].mxu0
  %v1741 = vadd.f32 %v293, %v1740
  %1742 = vmatprep.mubr.bf16.mxu0 %v746
  %1743 = vmatmul.mubr.bf16.gmra.mrb[0].mxu0 %v745
  %v1744 = vpop.f32.mrb[0].mxu0
  %v1745 = vadd.f32 %v289, %v1744
  %v1746 = vpop.f32.mrb[0].mxu0
  %v1747 = vadd.f32 %v293, %v1746
  %v1748 = vpop.f32.mrb[0].mxu0
  %v1749 = vadd.f32 %v289, %v1748
  %v1750 = vpop.f32.mrb[0].mxu0
  %v1751 = vadd.f32 %v293, %v1750
  %1752 = vmatprep.mubr.bf16.mxu0 %v755
  %1753 = vmatmul.mubr.bf16.gmra.mrb[0].mxu0 %v754
  %v1754 = vpop.f32.mrb[0].mxu0
  %v1755 = vadd.f32 %v289, %v1754
  %v1756 = vpop.f32.mrb[0].mxu0
  %v1757 = vadd.f32 %v293, %v1756
  %v1758 = vpop.f32.mrb[0].mxu0
  %v1759 = vpop.f32.mrb[0].mxu0
  %1760 = vdwg.mxu0
  %1761 = vmatprep.subr.bf16.mxu0 %v1345
  %1762 = vmatpush1.bf16.msra.mxu0 %v1344
  %1763 = vmatprep.subr.bf16.mxu0 %v1347
  %1764 = vmatpush1.bf16.msra.mxu0 %v1346
  %1765 = vmatprep.subr.bf16.mxu0 %v1349
  %1766 = vmatpush1.bf16.msra.mxu0 %v1348
  %1767 = vmatprep.subr.bf16.mxu0 %v1351
  %1768 = vmatpush1.bf16.msra.mxu0 %v1350
  %1769 = vmatprep.subr.bf16.mxu0 %v1353
  %1770 = vmatpush1.bf16.msra.mxu0 %v1352
  %1771 = vmatprep.subr.bf16.mxu0 %v1355
  %1772 = vmatpush1.bf16.msra.mxu0 %v1354
  %1773 = vmatprep.subr.bf16.mxu0 %v1357
  %1774 = vmatpush1.bf16.msra.mxu0 %v1356
  %1775 = vmatprep.subr.bf16.mxu0 %v1359
  %1776 = vmatpush1.bf16.msra.mxu0 %v1358
  %1777 = vmatprep.subr.bf16.mxu0 %v1361
  %1778 = vmatpush1.bf16.msra.mxu0 %v1360
  %1779 = vmatprep.subr.bf16.mxu0 %v1363
  %1780 = vmatpush1.bf16.msra.mxu0 %v1362
  %1781 = vmatprep.subr.bf16.mxu0 %v1365
  %1782 = vmatpush1.bf16.msra.mxu0 %v1364
  %1783 = vmatprep.subr.bf16.mxu0 %v1367
  %1784 = vmatpush1.bf16.msra.mxu0 %v1366
  %1785 = vmatprep.subr.bf16.mxu0 %v1369
  %1786 = vmatpush1.bf16.msra.mxu0 %v1368
  %1787 = vmatprep.subr.bf16.mxu0 %v1371
  %1788 = vmatpush1.bf16.msra.mxu0 %v1370
  %1789 = vmatprep.subr.bf16.mxu0 %v1373
  %1790 = vmatpush1.bf16.msra.mxu0 %v1372
  %1791 = vmatprep.subr.bf16.mxu0 %v1375
  %1792 = vmatpush1.bf16.msra.mxu0 %v1374
  %1793 = vmatprep.mubr.bf16.mxu0 %v649
  %1794 = vmatmul.mubr.bf16.gmra.mrb[0].mxu0 %v648
  %v1795 = vpop.f32.mrb[0].mxu0
  %v1796 = vadd.f32 %v1635, %v1795
  %v1797 = vpop.f32.mrb[0].mxu0
  %v1798 = vadd.f32 %v1637, %v1797
  %v1799 = vpop.f32.mrb[0].mxu0
  %v1800 = vadd.f32 %v1639, %v1799
  %v1801 = vpop.f32.mrb[0].mxu0
  %v1802 = vadd.f32 %v1641, %v1801
  %1803 = vmatprep.mubr.bf16.mxu0 %v658
  %1804 = vmatmul.mubr.bf16.gmra.mrb[0].mxu0 %v657
  %v1805 = vpop.f32.mrb[0].mxu0
  %v1806 = vadd.f32 %v1645, %v1805
  %v1807 = vpop.f32.mrb[0].mxu0
  %v1808 = vadd.f32 %v1647, %v1807
  %v1809 = vpop.f32.mrb[0].mxu0
  %v1810 = vadd.f32 %v1649, %v1809
  %v1811 = vpop.f32.mrb[0].mxu0
  %v1812 = vadd.f32 %v1651, %v1811
  %1813 = vmatprep.mubr.bf16.mxu0 %v667
  %1814 = vmatmul.mubr.bf16.gmra.mrb[0].mxu0 %v666
  %v1815 = vpop.f32.mrb[0].mxu0
  %v1816 = vadd.f32 %v1655, %v1815
  %v1817 = vpop.f32.mrb[0].mxu0
  %v1818 = vadd.f32 %v1657, %v1817
  %v1819 = vpop.f32.mrb[0].mxu0
  %v1820 = vadd.f32 %v1659, %v1819
  %v1821 = vpop.f32.mrb[0].mxu0
  %v1822 = vadd.f32 %v1661, %v1821
  %1823 = vmatprep.mubr.bf16.mxu0 %v676
  %1824 = vmatmul.mubr.bf16.gmra.mrb[0].mxu0 %v675
  %v1825 = vpop.f32.mrb[0].mxu0
  %v1826 = vadd.f32 %v1665, %v1825
  %v1827 = vpop.f32.mrb[0].mxu0
  %v1828 = vadd.f32 %v1667, %v1827
  %v1829 = vpop.f32.mrb[0].mxu0
  %v1830 = vadd.f32 %v1669, %v1829
  %v1831 = vpop.f32.mrb[0].mxu0
  %v1832 = vadd.f32 %v1671, %v1831
  %1833 = vmatprep.mubr.bf16.mxu0 %v685
  %1834 = vmatmul.mubr.bf16.gmra.mrb[0].mxu0 %v684
  %v1835 = vpop.f32.mrb[0].mxu0
  %v1836 = vadd.f32 %v1675, %v1835
  %v1837 = vpop.f32.mrb[0].mxu0
  %v1838 = vadd.f32 %v1677, %v1837
  %v1839 = vpop.f32.mrb[0].mxu0
  %v1840 = vadd.f32 %v1679, %v1839
  %v1841 = vpop.f32.mrb[0].mxu0
  %v1842 = vadd.f32 %v1681, %v1841
  %1843 = vmatprep.mubr.bf16.mxu0 %v694
  %1844 = vmatmul.mubr.bf16.gmra.mrb[0].mxu0 %v693
  %v1845 = vpop.f32.mrb[0].mxu0
  %v1846 = vadd.f32 %v1685, %v1845
  %v1847 = vpop.f32.mrb[0].mxu0
  %v1848 = vadd.f32 %v1687, %v1847
  %v1849 = vpop.f32.mrb[0].mxu0
  %v1850 = vadd.f32 %v1689, %v1849
  %v1851 = vpop.f32.mrb[0].mxu0
  %v1852 = vadd.f32 %v1691, %v1851
  %1853 = vmatprep.mubr.bf16.mxu0 %v703
  %1854 = vmatmul.mubr.bf16.gmra.mrb[0].mxu0 %v702
  %v1855 = vpop.f32.mrb[0].mxu0
  %v1856 = vadd.f32 %v1695, %v1855
  %v1857 = vpop.f32.mrb[0].mxu0
  %v1858 = vadd.f32 %v1697, %v1857
  %v1859 = vpop.f32.mrb[0].mxu0
  %v1860 = vadd.f32 %v1699, %v1859
  %v1861 = vpop.f32.mrb[0].mxu0
  %v1862 = vadd.f32 %v1701, %v1861
  %1863 = vmatprep.mubr.bf16.mxu0 %v712
  %1864 = vmatmul.mubr.bf16.gmra.mrb[0].mxu0 %v711
  %v1865 = vpop.f32.mrb[0].mxu0
  %v1866 = vadd.f32 %v1705, %v1865
  %v1867 = vpop.f32.mrb[0].mxu0
  %v1868 = vadd.f32 %v1707, %v1867
  %v1869 = vpop.f32.mrb[0].mxu0
  %v1870 = vadd.f32 %v1709, %v1869
  %v1871 = vpop.f32.mrb[0].mxu0
  %v1872 = vadd.f32 %v1711, %v1871
  %1873 = vmatprep.mubr.bf16.mxu0 %v721
  %1874 = vmatmul.mubr.bf16.gmra.mrb[0].mxu0 %v720
  %v1875 = vpop.f32.mrb[0].mxu0
  %v1876 = vadd.f32 %v1715, %v1875
  %v1877 = vpop.f32.mrb[0].mxu0
  %v1878 = vadd.f32 %v1717, %v1877
  %v1879 = vpop.f32.mrb[0].mxu0
  %v1880 = vadd.f32 %v1719, %v1879
  %v1881 = vpop.f32.mrb[0].mxu0
  %v1882 = vadd.f32 %v1721, %v1881
  %1883 = vmatprep.mubr.bf16.mxu0 %v730
  %1884 = vmatmul.mubr.bf16.gmra.mrb[0].mxu0 %v729
  %v1885 = vpop.f32.mrb[0].mxu0
  %v1886 = vadd.f32 %v1725, %v1885
  %v1887 = vpop.f32.mrb[0].mxu0
  %v1888 = vadd.f32 %v1727, %v1887
  %v1889 = vpop.f32.mrb[0].mxu0
  %v1890 = vadd.f32 %v1729, %v1889
  %v1891 = vpop.f32.mrb[0].mxu0
  %v1892 = vadd.f32 %v1731, %v1891
  %1893 = vmatprep.mubr.bf16.mxu0 %v739
  %1894 = vmatmul.mubr.bf16.gmra.mrb[0].mxu0 %v738
  %v1895 = vpop.f32.mrb[0].mxu0
  %v1896 = vadd.f32 %v1735, %v1895
  %v1897 = vpop.f32.mrb[0].mxu0
  %v1898 = vadd.f32 %v1737, %v1897
  %v1899 = vpop.f32.mrb[0].mxu0
  %v1900 = vadd.f32 %v1739, %v1899
  %v1901 = vpop.f32.mrb[0].mxu0
  %v1902 = vadd.f32 %v1741, %v1901
  %1903 = vmatprep.mubr.bf16.mxu0 %v748
  %1904 = vmatmul.mubr.bf16.gmra.mrb[0].mxu0 %v747
  %v1905 = vpop.f32.mrb[0].mxu0
  %v1906 = vadd.f32 %v1745, %v1905
  %v1907 = vpop.f32.mrb[0].mxu0
  %v1908 = vadd.f32 %v1747, %v1907
  %v1909 = vpop.f32.mrb[0].mxu0
  %v1910 = vadd.f32 %v1749, %v1909
  %v1911 = vpop.f32.mrb[0].mxu0
  %v1912 = vadd.f32 %v1751, %v1911
  %1913 = vmatprep.mubr.bf16.mxu0 %v757
  %1914 = vmatmul.mubr.bf16.gmra.mrb[0].mxu0 %v756
  %v1915 = vpop.f32.mrb[0].mxu0
  %v1916 = vadd.f32 %v1755, %v1915
  %v1917 = vpop.f32.mrb[0].mxu0
  %v1918 = vadd.f32 %v1757, %v1917
  %v1919 = vpop.f32.mrb[0].mxu0
  %v1920 = vpop.f32.mrb[0].mxu0
  %1921 = vdwg.mxu0
  %1922 = vmatprep.subr.bf16.mxu0 %v1377
  %1923 = vmatpush1.bf16.msra.mxu0 %v1376
  %1924 = vmatprep.subr.bf16.mxu0 %v1379
  %1925 = vmatpush1.bf16.msra.mxu0 %v1378
  %1926 = vmatprep.subr.bf16.mxu0 %v1381
  %1927 = vmatpush1.bf16.msra.mxu0 %v1380
  %1928 = vmatprep.subr.bf16.mxu0 %v1383
  %1929 = vmatpush1.bf16.msra.mxu0 %v1382
  %1930 = vmatprep.subr.bf16.mxu0 %v1385
  %1931 = vmatpush1.bf16.msra.mxu0 %v1384
  %1932 = vmatprep.subr.bf16.mxu0 %v1387
  %1933 = vmatpush1.bf16.msra.mxu0 %v1386
  %1934 = vmatprep.subr.bf16.mxu0 %v1389
  %1935 = vmatpush1.bf16.msra.mxu0 %v1388
  %1936 = vmatprep.subr.bf16.mxu0 %v1391
  %1937 = vmatpush1.bf16.msra.mxu0 %v1390
  %1938 = vmatprep.subr.bf16.mxu0 %v1393
  %1939 = vmatpush1.bf16.msra.mxu0 %v1392
  %1940 = vmatprep.subr.bf16.mxu0 %v1395
  %1941 = vmatpush1.bf16.msra.mxu0 %v1394
  %1942 = vmatprep.subr.bf16.mxu0 %v1397
  %1943 = vmatpush1.bf16.msra.mxu0 %v1396
  %1944 = vmatprep.subr.bf16.mxu0 %v1399
  %1945 = vmatpush1.bf16.msra.mxu0 %v1398
  %1946 = vmatprep.subr.bf16.mxu0 %v1401
  %1947 = vmatpush1.bf16.msra.mxu0 %v1400
  %1948 = vmatprep.subr.bf16.mxu0 %v1403
  %1949 = vmatpush1.bf16.msra.mxu0 %v1402
  %1950 = vmatprep.subr.bf16.mxu0 %v1405
  %1951 = vmatpush1.bf16.msra.mxu0 %v1404
  %1952 = vmatprep.subr.bf16.mxu0 %v1407
  %1953 = vmatpush1.bf16.msra.mxu0 %v1406
  %1954 = vmatprep.mubr.bf16.mxu0 %v651
  %1955 = vmatmul.mubr.bf16.gmra.mrb[0].mxu0 %v650
  %v1956 = vpop.f32.mrb[0].mxu0
  %v1957 = vadd.f32 %v1796, %v1956
  %v1958 = vpop.f32.mrb[0].mxu0
  %v1959 = vadd.f32 %v1798, %v1958
  %v1960 = vpop.f32.mrb[0].mxu0
  %v1961 = vadd.f32 %v1800, %v1960
  %v1962 = vpop.f32.mrb[0].mxu0
  %v1963 = vadd.f32 %v1802, %v1962
  %1964 = vmatprep.mubr.bf16.mxu0 %v660
  %1965 = vmatmul.mubr.bf16.gmra.mrb[0].mxu0 %v659
  %v1966 = vpop.f32.mrb[0].mxu0
  %v1967 = vadd.f32 %v1806, %v1966
  %v1968 = vpop.f32.mrb[0].mxu0
  %v1969 = vadd.f32 %v1808, %v1968
  %v1970 = vpop.f32.mrb[0].mxu0
  %v1971 = vadd.f32 %v1810, %v1970
  %v1972 = vpop.f32.mrb[0].mxu0
  %v1973 = vadd.f32 %v1812, %v1972
  %1974 = vmatprep.mubr.bf16.mxu0 %v669
  %1975 = vmatmul.mubr.bf16.gmra.mrb[0].mxu0 %v668
  %v1976 = vpop.f32.mrb[0].mxu0
  %v1977 = vadd.f32 %v1816, %v1976
  %v1978 = vpop.f32.mrb[0].mxu0
  %v1979 = vadd.f32 %v1818, %v1978
  %v1980 = vpop.f32.mrb[0].mxu0
  %v1981 = vadd.f32 %v1820, %v1980
  %v1982 = vpop.f32.mrb[0].mxu0
  %v1983 = vadd.f32 %v1822, %v1982
  %1984 = vmatprep.mubr.bf16.mxu0 %v678
  %1985 = vmatmul.mubr.bf16.gmra.mrb[0].mxu0 %v677
  %v1986 = vpop.f32.mrb[0].mxu0
  %v1987 = vadd.f32 %v1826, %v1986
  %v1988 = vpop.f32.mrb[0].mxu0
  %v1989 = vadd.f32 %v1828, %v1988
  %v1990 = vpop.f32.mrb[0].mxu0
  %v1991 = vadd.f32 %v1830, %v1990
  %v1992 = vpop.f32.mrb[0].mxu0
  %v1993 = vadd.f32 %v1832, %v1992
  %1994 = vmatprep.mubr.bf16.mxu0 %v687
  %1995 = vmatmul.mubr.bf16.gmra.mrb[0].mxu0 %v686
  %v1996 = vpop.f32.mrb[0].mxu0
  %v1997 = vadd.f32 %v1836, %v1996
  %v1998 = vpop.f32.mrb[0].mxu0
  %v1999 = vadd.f32 %v1838, %v1998
  %v2000 = vpop.f32.mrb[0].mxu0
  %v2001 = vadd.f32 %v1840, %v2000
  %v2002 = vpop.f32.mrb[0].mxu0
  %v2003 = vadd.f32 %v1842, %v2002
  %2004 = vmatprep.mubr.bf16.mxu0 %v696
  %2005 = vmatmul.mubr.bf16.gmra.mrb[0].mxu0 %v695
  %v2006 = vpop.f32.mrb[0].mxu0
  %v2007 = vadd.f32 %v1846, %v2006
  %v2008 = vpop.f32.mrb[0].mxu0
  %v2009 = vadd.f32 %v1848, %v2008
  %v2010 = vpop.f32.mrb[0].mxu0
  %v2011 = vadd.f32 %v1850, %v2010
  %v2012 = vpop.f32.mrb[0].mxu0
  %v2013 = vadd.f32 %v1852, %v2012
  %2014 = vmatprep.mubr.bf16.mxu0 %v705
  %2015 = vmatmul.mubr.bf16.gmra.mrb[0].mxu0 %v704
  %v2016 = vpop.f32.mrb[0].mxu0
  %v2017 = vadd.f32 %v1856, %v2016
  %v2018 = vpop.f32.mrb[0].mxu0
  %v2019 = vadd.f32 %v1858, %v2018
  %v2020 = vpop.f32.mrb[0].mxu0
  %v2021 = vadd.f32 %v1860, %v2020
  %v2022 = vpop.f32.mrb[0].mxu0
  %v2023 = vadd.f32 %v1862, %v2022
  %2024 = vmatprep.mubr.bf16.mxu0 %v714
  %2025 = vmatmul.mubr.bf16.gmra.mrb[0].mxu0 %v713
  %v2026 = vpop.f32.mrb[0].mxu0
  %v2027 = vadd.f32 %v1866, %v2026
  %v2028 = vpop.f32.mrb[0].mxu0
  %v2029 = vadd.f32 %v1868, %v2028
  %v2030 = vpop.f32.mrb[0].mxu0
  %v2031 = vadd.f32 %v1870, %v2030
  %v2032 = vpop.f32.mrb[0].mxu0
  %v2033 = vadd.f32 %v1872, %v2032
  %2034 = vmatprep.mubr.bf16.mxu0 %v723
  %2035 = vmatmul.mubr.bf16.gmra.mrb[0].mxu0 %v722
  %v2036 = vpop.f32.mrb[0].mxu0
  %v2037 = vadd.f32 %v1876, %v2036
  %v2038 = vpop.f32.mrb[0].mxu0
  %v2039 = vadd.f32 %v1878, %v2038
  %v2040 = vpop.f32.mrb[0].mxu0
  %v2041 = vadd.f32 %v1880, %v2040
  %v2042 = vpop.f32.mrb[0].mxu0
  %v2043 = vadd.f32 %v1882, %v2042
  %2044 = vmatprep.mubr.bf16.mxu0 %v732
  %2045 = vmatmul.mubr.bf16.gmra.mrb[0].mxu0 %v731
  %v2046 = vpop.f32.mrb[0].mxu0
  %v2047 = vadd.f32 %v1886, %v2046
  %v2048 = vpop.f32.mrb[0].mxu0
  %v2049 = vadd.f32 %v1888, %v2048
  %v2050 = vpop.f32.mrb[0].mxu0
  %v2051 = vadd.f32 %v1890, %v2050
  %v2052 = vpop.f32.mrb[0].mxu0
  %v2053 = vadd.f32 %v1892, %v2052
  %2054 = vmatprep.mubr.bf16.mxu0 %v741
  %2055 = vmatmul.mubr.bf16.gmra.mrb[0].mxu0 %v740
  %v2056 = vpop.f32.mrb[0].mxu0
  %v2057 = vadd.f32 %v1896, %v2056
  %v2058 = vpop.f32.mrb[0].mxu0
  %v2059 = vadd.f32 %v1898, %v2058
  %v2060 = vpop.f32.mrb[0].mxu0
  %v2061 = vadd.f32 %v1900, %v2060
  %v2062 = vpop.f32.mrb[0].mxu0
  %v2063 = vadd.f32 %v1902, %v2062
  %2064 = vmatprep.mubr.bf16.mxu0 %v750
  %2065 = vmatmul.mubr.bf16.gmra.mrb[0].mxu0 %v749
  %v2066 = vpop.f32.mrb[0].mxu0
  %v2067 = vadd.f32 %v1906, %v2066
  %v2068 = vpop.f32.mrb[0].mxu0
  %v2069 = vadd.f32 %v1908, %v2068
  %v2070 = vpop.f32.mrb[0].mxu0
  %v2071 = vadd.f32 %v1910, %v2070
  %v2072 = vpop.f32.mrb[0].mxu0
  %v2073 = vadd.f32 %v1912, %v2072
  %2074 = vmatprep.mubr.bf16.mxu0 %v759
  %2075 = vmatmul.mubr.bf16.gmra.mrb[0].mxu0 %v758
  %v2076 = vpop.f32.mrb[0].mxu0
  %v2077 = vadd.f32 %v1916, %v2076
  %v2078 = vpop.f32.mrb[0].mxu0
  %v2079 = vadd.f32 %v1918, %v2078
  %v2080 = vpop.f32.mrb[0].mxu0
  %v2081 = vpop.f32.mrb[0].mxu0
  %2082 = vdwg.mxu0
  %2083 = vmatprep.subr.bf16.mxu0 %v1409
  %2084 = vmatpush1.bf16.msra.mxu0 %v1408
  %2085 = vmatprep.subr.bf16.mxu0 %v1411
  %2086 = vmatpush1.bf16.msra.mxu0 %v1410
  %2087 = vmatprep.subr.bf16.mxu0 %v1413
  %2088 = vmatpush1.bf16.msra.mxu0 %v1412
  %2089 = vmatprep.subr.bf16.mxu0 %v1415
  %2090 = vmatpush1.bf16.msra.mxu0 %v1414
  %2091 = vmatprep.subr.bf16.mxu0 %v1417
  %2092 = vmatpush1.bf16.msra.mxu0 %v1416
  %2093 = vmatprep.subr.bf16.mxu0 %v1419
  %2094 = vmatpush1.bf16.msra.mxu0 %v1418
  %2095 = vmatprep.subr.bf16.mxu0 %v1421
  %2096 = vmatpush1.bf16.msra.mxu0 %v1420
  %2097 = vmatprep.subr.bf16.mxu0 %v1423
  %2098 = vmatpush1.bf16.msra.mxu0 %v1422
  %2099 = vmatprep.subr.bf16.mxu0 %v1425
  %2100 = vmatpush1.bf16.msra.mxu0 %v1424
  %2101 = vmatprep.subr.bf16.mxu0 %v1427
  %2102 = vmatpush1.bf16.msra.mxu0 %v1426
  %2103 = vmatprep.subr.bf16.mxu0 %v1429
  %2104 = vmatpush1.bf16.msra.mxu0 %v1428
  %2105 = vmatprep.subr.bf16.mxu0 %v1431
  %2106 = vmatpush1.bf16.msra.mxu0 %v1430
  %2107 = vmatprep.subr.bf16.mxu0 %v1433
  %2108 = vmatpush1.bf16.msra.mxu0 %v1432
  %2109 = vmatprep.subr.bf16.mxu0 %v1435
  %2110 = vmatpush1.bf16.msra.mxu0 %v1434
  %2111 = vmatprep.subr.bf16.mxu0 %v1437
  %2112 = vmatpush1.bf16.msra.mxu0 %v1436
  %2113 = vmatprep.subr.bf16.mxu0 %v1439
  %2114 = vmatpush1.bf16.msra.mxu0 %v1438
  %2115 = vmatprep.mubr.bf16.mxu0 %v653
  %2116 = vmatmul.mubr.bf16.gmra.mrb[0].mxu0 %v652
  %v2117 = vpop.f32.mrb[0].mxu0
  %v2118 = vadd.f32 %v1957, %v2117
  %v2119 = vpop.f32.mrb[0].mxu0
  %v2120 = vadd.f32 %v1959, %v2119
  %v2121 = vpop.f32.mrb[0].mxu0
  %v2122 = vadd.f32 %v1961, %v2121
  %v2123 = vpop.f32.mrb[0].mxu0
  %v2124 = vadd.f32 %v1963, %v2123
  %2125 = vmatprep.mubr.bf16.mxu0 %v662
  %2126 = vmatmul.mubr.bf16.gmra.mrb[0].mxu0 %v661
  %v2127 = vpop.f32.mrb[0].mxu0
  %v2128 = vadd.f32 %v1967, %v2127
  %v2129 = vpop.f32.mrb[0].mxu0
  %v2130 = vadd.f32 %v1969, %v2129
  %v2131 = vpop.f32.mrb[0].mxu0
  %v2132 = vadd.f32 %v1971, %v2131
  %v2133 = vpop.f32.mrb[0].mxu0
  %v2134 = vadd.f32 %v1973, %v2133
  %2135 = vmatprep.mubr.bf16.mxu0 %v671
  %2136 = vmatmul.mubr.bf16.gmra.mrb[0].mxu0 %v670
  %v2137 = vpop.f32.mrb[0].mxu0
  %v2138 = vadd.f32 %v1977, %v2137
  %v2139 = vpop.f32.mrb[0].mxu0
  %v2140 = vadd.f32 %v1979, %v2139
  %v2141 = vpop.f32.mrb[0].mxu0
  %v2142 = vadd.f32 %v1981, %v2141
  %v2143 = vpop.f32.mrb[0].mxu0
  %v2144 = vadd.f32 %v1983, %v2143
  %2145 = vmatprep.mubr.bf16.mxu0 %v680
  %2146 = vmatmul.mubr.bf16.gmra.mrb[0].mxu0 %v679
  %v2147 = vpop.f32.mrb[0].mxu0
  %v2148 = vadd.f32 %v1987, %v2147
  %v2149 = vpop.f32.mrb[0].mxu0
  %v2150 = vadd.f32 %v1989, %v2149
  %v2151 = vpop.f32.mrb[0].mxu0
  %v2152 = vadd.f32 %v1991, %v2151
  %v2153 = vpop.f32.mrb[0].mxu0
  %v2154 = vadd.f32 %v1993, %v2153
  %2155 = vmatprep.mubr.bf16.mxu0 %v689
  %2156 = vmatmul.mubr.bf16.gmra.mrb[0].mxu0 %v688
  %v2157 = vpop.f32.mrb[0].mxu0
  %v2158 = vadd.f32 %v1997, %v2157
  %v2159 = vpop.f32.mrb[0].mxu0
  %v2160 = vadd.f32 %v1999, %v2159
  %v2161 = vpop.f32.mrb[0].mxu0
  %v2162 = vadd.f32 %v2001, %v2161
  %v2163 = vpop.f32.mrb[0].mxu0
  %v2164 = vadd.f32 %v2003, %v2163
  %2165 = vmatprep.mubr.bf16.mxu0 %v698
  %2166 = vmatmul.mubr.bf16.gmra.mrb[0].mxu0 %v697
  %v2167 = vpop.f32.mrb[0].mxu0
  %v2168 = vadd.f32 %v2007, %v2167
  %v2169 = vpop.f32.mrb[0].mxu0
  %v2170 = vadd.f32 %v2009, %v2169
  %v2171 = vpop.f32.mrb[0].mxu0
  %v2172 = vadd.f32 %v2011, %v2171
  %v2173 = vpop.f32.mrb[0].mxu0
  %v2174 = vadd.f32 %v2013, %v2173
  %2175 = vmatprep.mubr.bf16.mxu0 %v707
  %2176 = vmatmul.mubr.bf16.gmra.mrb[0].mxu0 %v706
  %v2177 = vpop.f32.mrb[0].mxu0
  %v2178 = vadd.f32 %v2017, %v2177
  %v2179 = vpop.f32.mrb[0].mxu0
  %v2180 = vadd.f32 %v2019, %v2179
  %v2181 = vpop.f32.mrb[0].mxu0
  %v2182 = vadd.f32 %v2021, %v2181
  %v2183 = vpop.f32.mrb[0].mxu0
  %v2184 = vadd.f32 %v2023, %v2183
  %2185 = vmatprep.mubr.bf16.mxu0 %v716
  %2186 = vmatmul.mubr.bf16.gmra.mrb[0].mxu0 %v715
  %v2187 = vpop.f32.mrb[0].mxu0
  %v2188 = vadd.f32 %v2027, %v2187
  %v2189 = vpop.f32.mrb[0].mxu0
  %v2190 = vadd.f32 %v2029, %v2189
  %v2191 = vpop.f32.mrb[0].mxu0
  %v2192 = vadd.f32 %v2031, %v2191
  %v2193 = vpop.f32.mrb[0].mxu0
  %v2194 = vadd.f32 %v2033, %v2193
  %2195 = vmatprep.mubr.bf16.mxu0 %v725
  %2196 = vmatmul.mubr.bf16.gmra.mrb[0].mxu0 %v724
  %v2197 = vpop.f32.mrb[0].mxu0
  %v2198 = vadd.f32 %v2037, %v2197
  %v2199 = vpop.f32.mrb[0].mxu0
  %v2200 = vadd.f32 %v2039, %v2199
  %v2201 = vpop.f32.mrb[0].mxu0
  %v2202 = vadd.f32 %v2041, %v2201
  %v2203 = vpop.f32.mrb[0].mxu0
  %v2204 = vadd.f32 %v2043, %v2203
  %2205 = vmatprep.mubr.bf16.mxu0 %v734
  %2206 = vmatmul.mubr.bf16.gmra.mrb[0].mxu0 %v733
  %v2207 = vpop.f32.mrb[0].mxu0
  %v2208 = vadd.f32 %v2047, %v2207
  %v2209 = vpop.f32.mrb[0].mxu0
  %v2210 = vadd.f32 %v2049, %v2209
  %v2211 = vpop.f32.mrb[0].mxu0
  %v2212 = vadd.f32 %v2051, %v2211
  %v2213 = vpop.f32.mrb[0].mxu0
  %v2214 = vadd.f32 %v2053, %v2213
  %2215 = vmatprep.mubr.bf16.mxu0 %v743
  %2216 = vmatmul.mubr.bf16.gmra.mrb[0].mxu0 %v742
  %v2217 = vpop.f32.mrb[0].mxu0
  %v2218 = vadd.f32 %v2057, %v2217
  %v2219 = vpop.f32.mrb[0].mxu0
  %v2220 = vadd.f32 %v2059, %v2219
  %v2221 = vpop.f32.mrb[0].mxu0
  %v2222 = vadd.f32 %v2061, %v2221
  %v2223 = vpop.f32.mrb[0].mxu0
  %v2224 = vadd.f32 %v2063, %v2223
  %2225 = vmatprep.mubr.bf16.mxu0 %v752
  %2226 = vmatmul.mubr.bf16.gmra.mrb[0].mxu0 %v751
  %v2227 = vpop.f32.mrb[0].mxu0
  %v2228 = vadd.f32 %v2067, %v2227
  %v2229 = vpop.f32.mrb[0].mxu0
  %v2230 = vadd.f32 %v2069, %v2229
  %v2231 = vpop.f32.mrb[0].mxu0
  %v2232 = vadd.f32 %v2071, %v2231
  %v2233 = vpop.f32.mrb[0].mxu0
  %v2234 = vadd.f32 %v2073, %v2233
  %2235 = vmatprep.mubr.bf16.mxu0 %v761
  %2236 = vmatmul.mubr.bf16.gmra.mrb[0].mxu0 %v760
  %v2237 = vpop.f32.mrb[0].mxu0
  %v2238 = vadd.f32 %v2077, %v2237
  %v2239 = vpop.f32.mrb[0].mxu0
  %v2240 = vadd.f32 %v2079, %v2239
  %v2241 = vpop.f32.mrb[0].mxu0
  %v2242 = vpop.f32.mrb[0].mxu0
  %2243 = vdwg.mxu0
  %2244 = vmatprep.subr.bf16.mxu0 %v1441
  %2245 = vmatpush1.bf16.msra.mxu0 %v1440
  %2246 = vmatprep.subr.bf16.mxu0 %v1443
  %2247 = vmatpush1.bf16.msra.mxu0 %v1442
  %2248 = vmatprep.subr.bf16.mxu0 %v1445
  %2249 = vmatpush1.bf16.msra.mxu0 %v1444
  %2250 = vmatprep.subr.bf16.mxu0 %v1447
  %2251 = vmatpush1.bf16.msra.mxu0 %v1446
  %2252 = vmatprep.subr.bf16.mxu0 %v1449
  %2253 = vmatpush1.bf16.msra.mxu0 %v1448
  %2254 = vmatprep.subr.bf16.mxu0 %v1451
  %2255 = vmatpush1.bf16.msra.mxu0 %v1450
  %2256 = vmatprep.subr.bf16.mxu0 %v1453
  %2257 = vmatpush1.bf16.msra.mxu0 %v1452
  %2258 = vmatprep.subr.bf16.mxu0 %v1455
  %2259 = vmatpush1.bf16.msra.mxu0 %v1454
  %2260 = vmatprep.subr.bf16.mxu0 0
  %2261 = vmatpush1.bf16.msra.mxu0 0
  %2262 = vmatprep.subr.bf16.mxu0 0
  %2263 = vmatpush1.bf16.msra.mxu0 0
  %2264 = vmatprep.subr.bf16.mxu0 0
  %2265 = vmatpush1.bf16.msra.mxu0 0
  %2266 = vmatprep.subr.bf16.mxu0 0
  %2267 = vmatpush1.bf16.msra.mxu0 0
  %2268 = vmatprep.subr.bf16.mxu0 0
  %2269 = vmatpush1.bf16.msra.mxu0 0
  %2270 = vmatprep.subr.bf16.mxu0 0
  %2271 = vmatpush1.bf16.msra.mxu0 0
  %2272 = vmatprep.subr.bf16.mxu0 0
  %2273 = vmatpush1.bf16.msra.mxu0 0
  %2274 = vmatprep.subr.bf16.mxu0 0
  %2275 = vmatpush1.bf16.msra.mxu0 0
  %2276 = vmatprep.mubr.bf16.mxu0 0
  %2277 = vmatmul.mubr.bf16.gmra.mrb[0].mxu0 %v654
  %v2278 = vpop.f32.mrb[0].mxu0
  %v2279 = vadd.f32 %v2118, %v2278
  %v2280 = vpop.f32.mrb[0].mxu0
  %v2281 = vadd.f32 %v2120, %v2280
  %v2282 = vpop.f32.mrb[0].mxu0
  %v2283 = vadd.f32 %v2122, %v2282
  %v2284 = vpop.f32.mrb[0].mxu0
  %v2285 = vadd.f32 %v2124, %v2284
  %2286 = vmatprep.mubr.bf16.mxu0 0
  %2287 = vmatmul.mubr.bf16.gmra.mrb[0].mxu0 %v663
  %v2288 = vpop.f32.mrb[0].mxu0
  %v2289 = vadd.f32 %v2128, %v2288
  %v2290 = vpop.f32.mrb[0].mxu0
  %v2291 = vadd.f32 %v2130, %v2290
  %v2292 = vpop.f32.mrb[0].mxu0
  %v2293 = vadd.f32 %v2132, %v2292
  %v2294 = vpop.f32.mrb[0].mxu0
  %v2295 = vadd.f32 %v2134, %v2294
  %2296 = vmatprep.mubr.bf16.mxu0 0
  %2297 = vmatmul.mubr.bf16.gmra.mrb[0].mxu0 %v672
  %v2298 = vpop.f32.mrb[0].mxu0
  %v2299 = vadd.f32 %v2138, %v2298
  %v2300 = vpop.f32.mrb[0].mxu0
  %v2301 = vadd.f32 %v2140, %v2300
  %v2302 = vpop.f32.mrb[0].mxu0
  %v2303 = vadd.f32 %v2142, %v2302
  %v2304 = vpop.f32.mrb[0].mxu0
  %v2305 = vadd.f32 %v2144, %v2304
  %2306 = vmatprep.mubr.bf16.mxu0 0
  %2307 = vmatmul.mubr.bf16.gmra.mrb[0].mxu0 %v681
  %v2308 = vpop.f32.mrb[0].mxu0
  %v2309 = vadd.f32 %v2148, %v2308
  %v2310 = vpop.f32.mrb[0].mxu0
  %v2311 = vadd.f32 %v2150, %v2310
  %v2312 = vpop.f32.mrb[0].mxu0
  %v2313 = vadd.f32 %v2152, %v2312
  %v2314 = vpop.f32.mrb[0].mxu0
  %v2315 = vadd.f32 %v2154, %v2314
  %2316 = vmatprep.mubr.bf16.mxu0 0
  %2317 = vmatmul.mubr.bf16.gmra.mrb[0].mxu0 %v690
  %v2318 = vpop.f32.mrb[0].mxu0
  %v2319 = vadd.f32 %v2158, %v2318
  %v2320 = vpop.f32.mrb[0].mxu0
  %v2321 = vadd.f32 %v2160, %v2320
  %v2322 = vpop.f32.mrb[0].mxu0
  %v2323 = vadd.f32 %v2162, %v2322
  %v2324 = vpop.f32.mrb[0].mxu0
  %v2325 = vadd.f32 %v2164, %v2324
  %2326 = vmatprep.mubr.bf16.mxu0 0
  %2327 = vmatmul.mubr.bf16.gmra.mrb[0].mxu0 %v699
  %v2328 = vpop.f32.mrb[0].mxu0
  %v2329 = vadd.f32 %v2168, %v2328
  %v2330 = vpop.f32.mrb[0].mxu0
  %v2331 = vadd.f32 %v2170, %v2330
  %v2332 = vpop.f32.mrb[0].mxu0
  %v2333 = vadd.f32 %v2172, %v2332
  %v2334 = vpop.f32.mrb[0].mxu0
  %v2335 = vadd.f32 %v2174, %v2334
  %2336 = vmatprep.mubr.bf16.mxu0 0
  %2337 = vmatmul.mubr.bf16.gmra.mrb[0].mxu0 %v708
  %v2338 = vpop.f32.mrb[0].mxu0
  %v2339 = vadd.f32 %v2178, %v2338
  %v2340 = vpop.f32.mrb[0].mxu0
  %v2341 = vadd.f32 %v2180, %v2340
  %v2342 = vpop.f32.mrb[0].mxu0
  %v2343 = vadd.f32 %v2182, %v2342
  %v2344 = vpop.f32.mrb[0].mxu0
  %v2345 = vadd.f32 %v2184, %v2344
  %2346 = vmatprep.mubr.bf16.mxu0 0
  %2347 = vmatmul.mubr.bf16.gmra.mrb[0].mxu0 %v717
  %v2348 = vpop.f32.mrb[0].mxu0
  %v2349 = vadd.f32 %v2188, %v2348
  %v2350 = vpop.f32.mrb[0].mxu0
  %v2351 = vadd.f32 %v2190, %v2350
  %v2352 = vpop.f32.mrb[0].mxu0
  %v2353 = vadd.f32 %v2192, %v2352
  %v2354 = vpop.f32.mrb[0].mxu0
  %v2355 = vadd.f32 %v2194, %v2354
  %2356 = vmatprep.mubr.bf16.mxu0 0
  %2357 = vmatmul.mubr.bf16.gmra.mrb[0].mxu0 %v726
  %v2358 = vpop.f32.mrb[0].mxu0
  %v2359 = vadd.f32 %v2198, %v2358
  %v2360 = vpop.f32.mrb[0].mxu0
  %v2361 = vadd.f32 %v2200, %v2360
  %v2362 = vpop.f32.mrb[0].mxu0
  %v2363 = vadd.f32 %v2202, %v2362
  %v2364 = vpop.f32.mrb[0].mxu0
  %v2365 = vadd.f32 %v2204, %v2364
  %2366 = vmatprep.mubr.bf16.mxu0 0
  %2367 = vmatmul.mubr.bf16.gmra.mrb[0].mxu0 %v735
  %v2368 = vpop.f32.mrb[0].mxu0
  %v2369 = vadd.f32 %v2208, %v2368
  %v2370 = vpop.f32.mrb[0].mxu0
  %v2371 = vadd.f32 %v2210, %v2370
  %v2372 = vpop.f32.mrb[0].mxu0
  %v2373 = vadd.f32 %v2212, %v2372
  %v2374 = vpop.f32.mrb[0].mxu0
  %v2375 = vadd.f32 %v2214, %v2374
  %2376 = vmatprep.mubr.bf16.mxu0 0
  %2377 = vmatmul.mubr.bf16.gmra.mrb[0].mxu0 %v744
  %v2378 = vpop.f32.mrb[0].mxu0
  %v2379 = vadd.f32 %v2218, %v2378
  %v2380 = vpop.f32.mrb[0].mxu0
  %v2381 = vadd.f32 %v2220, %v2380
  %v2382 = vpop.f32.mrb[0].mxu0
  %v2383 = vadd.f32 %v2222, %v2382
  %v2384 = vpop.f32.mrb[0].mxu0
  %v2385 = vadd.f32 %v2224, %v2384
  %2386 = vmatprep.mubr.bf16.mxu0 0
  %2387 = vmatmul.mubr.bf16.gmra.mrb[0].mxu0 %v753
  %v2388 = vpop.f32.mrb[0].mxu0
  %v2389 = vadd.f32 %v2228, %v2388
  %v2390 = vpop.f32.mrb[0].mxu0
  %v2391 = vadd.f32 %v2230, %v2390
  %v2392 = vpop.f32.mrb[0].mxu0
  %v2393 = vadd.f32 %v2232, %v2392
  %v2394 = vpop.f32.mrb[0].mxu0
  %v2395 = vadd.f32 %v2234, %v2394
  %2396 = vmatprep.mubr.bf16.mxu0 0
  %2397 = vmatmul.mubr.bf16.gmra.mrb[0].mxu0 %v762
  %v2398 = vpop.f32.mrb[0].mxu0
  %v2399 = vadd.f32 %v2238, %v2398
  %v2400 = vpop.f32.mrb[0].mxu0
  %v2401 = vadd.f32 %v2240, %v2400
  %v2402 = vpop.f32.mrb[0].mxu0
  %v2403 = vpop.f32.mrb[0].mxu0
  %2404 = vdwg.mxu0
  %v2405 = vmax.f32 %v2279, 0.0
  %v2406 = vmax.f32 %v2281, 0.0
  %v2407 = vmax.f32 %v2283, 0.0
  %v2408 = vmax.f32 %v2285, 0.0
  %v2409 = vmax.f32 %v2289, 0.0
  %v2410 = vmax.f32 %v2291, 0.0
  %v2411 = vmax.f32 %v2293, 0.0
  %v2412 = vmax.f32 %v2295, 0.0
  %v2413 = vmax.f32 %v2299, 0.0
  %v2414 = vmax.f32 %v2301, 0.0
  %v2415 = vmax.f32 %v2303, 0.0
  %v2416 = vmax.f32 %v2305, 0.0
  %v2417 = vmax.f32 %v2309, 0.0
  %v2418 = vmax.f32 %v2311, 0.0
  %v2419 = vmax.f32 %v2313, 0.0
  %v2420 = vmax.f32 %v2315, 0.0
  %v2421 = vmax.f32 %v2319, 0.0
  %v2422 = vmax.f32 %v2321, 0.0
  %v2423 = vmax.f32 %v2323, 0.0
  %v2424 = vmax.f32 %v2325, 0.0
  %v2425 = vmax.f32 %v2329, 0.0
  %v2426 = vmax.f32 %v2331, 0.0
  %v2427 = vmax.f32 %v2333, 0.0
  %v2428 = vmax.f32 %v2335, 0.0
  %v2429 = vmax.f32 %v2339, 0.0
  %v2430 = vmax.f32 %v2341, 0.0
  %v2431 = vmax.f32 %v2343, 0.0
  %v2432 = vmax.f32 %v2345, 0.0
  %v2433 = vmax.f32 %v2349, 0.0
  %v2434 = vmax.f32 %v2351, 0.0
  %v2435 = vmax.f32 %v2353, 0.0
  %v2436 = vmax.f32 %v2355, 0.0
  %v2437 = vmax.f32 %v2359, 0.0
  %v2438 = vmax.f32 %v2361, 0.0
  %v2439 = vmax.f32 %v2363, 0.0
  %v2440 = vmax.f32 %v2365, 0.0
  %v2441 = vmax.f32 %v2369, 0.0
  %v2442 = vmax.f32 %v2371, 0.0
  %v2443 = vmax.f32 %v2373, 0.0
  %v2444 = vmax.f32 %v2375, 0.0
  %v2445 = vmax.f32 %v2379, 0.0
  %v2446 = vmax.f32 %v2381, 0.0
  %v2447 = vmax.f32 %v2383, 0.0
  %v2448 = vmax.f32 %v2385, 0.0
  %v2449 = vmax.f32 %v2389, 0.0
  %v2450 = vmax.f32 %v2391, 0.0
  %v2451 = vmax.f32 %v2393, 0.0
  %v2452 = vmax.f32 %v2395, 0.0
  %v2453 = vmax.f32 %v2399, 0.0
  %v2454 = vmax.f32 %v2401, 0.0
  %2455 = vst [vmem:[%s3] sm:$0xff] %v2405
  %2456 = vst [vmem:[%s3 + $0x8] sm:$0xff] %v2406
  %2457 = vst [vmem:[%s3 + $0x10] sm:$0xff] %v2407
  %2458 = vst [vmem:[%s3 + $0x18] sm:$0xff] %v2408
  %2459 = vst [vmem:[%s3 + $0x20] sm:$0xff] %v2409
  %2460 = vst [vmem:[%s3 + $0x28] sm:$0xff] %v2410
  %2461 = vst [vmem:[%s3 + $0x30] sm:$0xff] %v2411
  %2462 = vst [vmem:[%s3 + $0x38] sm:$0xff] %v2412
  %2463 = vst [vmem:[%s3 + $0x40] sm:$0xff] %v2413
  %2464 = vst [vmem:[%s3 + $0x48] sm:$0xff] %v2414
  %2465 = vst [vmem:[%s3 + $0x50] sm:$0xff] %v2415
  %2466 = vst [vmem:[%s3 + $0x58] sm:$0xff] %v2416
  %2467 = vst [vmem:[%s3 + $0x60] sm:$0xff] %v2417
  %2468 = vst [vmem:[%s3 + $0x68] sm:$0xff] %v2418
  %2469 = vst [vmem:[%s3 + $0x70] sm:$0xff] %v2419
  %2470 = vst [vmem:[%s3 + $0x78] sm:$0xff] %v2420
  %2471 = vst [vmem:[%s3 + $0x80] sm:$0xff] %v2421
  %2472 = vst [vmem:[%s3 + $0x88] sm:$0xff] %v2422
  %2473 = vst [vmem:[%s3 + $0x90] sm:$0xff] %v2423
  %2474 = vst [vmem:[%s3 + $0x98] sm:$0xff] %v2424
  %2475 = vst [vmem:[%s3 + $0xa0] sm:$0xff] %v2425
  %2476 = vst [vmem:[%s3 + $0xa8] sm:$0xff] %v2426
  %2477 = vst [vmem:[%s3 + $0xb0] sm:$0xff] %v2427
  %2478 = vst [vmem:[%s3 + $0xb8] sm:$0xff] %v2428
  %2479 = vst [vmem:[%s3 + $0xc0] sm:$0xff] %v2429
  %2480 = vst [vmem:[%s3 + $0xc8] sm:$0xff] %v2430
  %2481 = vst [vmem:[%s3 + $0xd0] sm:$0xff] %v2431
  %2482 = vst [vmem:[%s3 + $0xd8] sm:$0xff] %v2432
  %2483 = vst [vmem:[%s3 + $0xe0] sm:$0xff] %v2433
  %2484 = vst [vmem:[%s3 + $0xe8] sm:$0xff] %v2434
  %2485 = vst [vmem:[%s3 + $0xf0] sm:$0xff] %v2435
  %2486 = vst [vmem:[%s3 + $0xf8] sm:$0xff] %v2436
  %2487 = vst [vmem:[%s3 + $0x100] sm:$0xff] %v2437
  %2488 = vst [vmem:[%s3 + $0x108] sm:$0xff] %v2438
  %2489 = vst [vmem:[%s3 + $0x110] sm:$0xff] %v2439
  %2490 = vst [vmem:[%s3 + $0x118] sm:$0xff] %v2440
  %2491 = vst [vmem:[%s3 + $0x120] sm:$0xff] %v2441
  %2492 = vst [vmem:[%s3 + $0x128] sm:$0xff] %v2442
  %2493 = vst [vmem:[%s3 + $0x130] sm:$0xff] %v2443
  %2494 = vst [vmem:[%s3 + $0x138] sm:$0xff] %v2444
  %2495 = vst [vmem:[%s3 + $0x140] sm:$0xff] %v2445
  %2496 = vst [vmem:[%s3 + $0x148] sm:$0xff] %v2446
  %2497 = vst [vmem:[%s3 + $0x150] sm:$0xff] %v2447
  %2498 = vst [vmem:[%s3 + $0x158] sm:$0xff] %v2448
  %2499 = vst [vmem:[%s3 + $0x160] sm:$0xff] %v2449
  %2500 = vst [vmem:[%s3 + $0x168] sm:$0xff] %v2450
  %2501 = vst [vmem:[%s3 + $0x170] sm:$0xff] %v2451
  %2502 = vst [vmem:[%s3 + $0x178] sm:$0xff] %v2452
  %2503 = vst [vmem:[%s3 + $0x180] sm:$0xff] %v2453
  %2504 = vst [vmem:[%s3 + $0x188] sm:$0xff] %v2454
  // Predicated region
  $region14: #{decoder_forward.5} parent=0 // pred_check
    _
  $region15: #{decoder_forward.5} parent=0 // pred_check_branch
    %2506 = sbr.rel (0) target = $region17
  $region16: #{decoder_forward.5} parent=0 // pred_region
    _
  $region17: #{decoder_forward.5} parent=0 // pred_fallthru
    _
  // Predicated region
  $region18: #{decoder_forward.5} parent=0 // pred_check
    _
  $region19: #{decoder_forward.5} parent=0 // pred_check_branch
    %2508 = sbr.rel (0) target = $region21
  $region20: #{decoder_forward.5} parent=0 // pred_region
    _
  $region21: #{decoder_forward.5} parent=0 // pred_fallthru
    _

// kernel: decoder_forward.6
$region0: #{decoder_forward.6}
  #allocation0 [shape = 'u32[]', space=smem, size = 0x4, offset = 0x4, fixed_abs, tag = 'smem constant byte address 0x4 - core index']
  #allocation1 [shape = 'u32[144,128]{1,0:T(1,128)}', space=vmem, size = 0x12000, scoped, tag = 'internal scratch']
  %s0 = inlined_call_operand.vmem [shape: bf16[800,576], index: 0, kind: input, shape index: {}]
  %s1 = inlined_call_operand.vmem [shape: bf16[576,128], index: 1, kind: input, shape index: {}]
  %s2 = inlined_call_operand.vmem [shape: f32[1,128], index: 2, kind: input, shape index: {}]
  %s3 = inlined_call_operand.vmem [shape: f32[800,128], index: 3, kind: output, shape index: {}]
  %s4 = sld [smem:[#allocation0]]
  $region22: #{decoder_forward.6} parent=0
    _
  %s6 = ssub.s32 1, %s4
  %s7 = scalar_select 0, %s6, %s4
  // Predicated region
  $region2: #{decoder_forward.6} parent=0 // pred_check
    _
  $region3: #{decoder_forward.6} parent=0 // pred_check_branch
    %9 = sbr.rel (0) target = $region5
  $region4: #{decoder_forward.6} parent=0 // pred_region
    _
  $region5: #{decoder_forward.6} parent=0 // pred_fallthru
    _
  // Predicated region
  $region6: #{decoder_forward.6} parent=0 // pred_check
    _
  $region7: #{decoder_forward.6} parent=0 // pred_check_branch
    %11 = sbr.rel (0) target = $region9
  $region8: #{decoder_forward.6} parent=0 // pred_region
    _
  $region9: #{decoder_forward.6} parent=0 // pred_fallthru
    _
  // Predicated region
  $region10: #{decoder_forward.6} parent=0 // pred_check
    _
  $region11: #{decoder_forward.6} parent=0 // pred_check_branch
    %13 = sbr.rel (0) target = $region13
  $region12: #{decoder_forward.6} parent=0 // pred_region
    _
  $region13: #{decoder_forward.6} parent=0 // pred_fallthru
    _
  %v15 = vld [vmem:[%s0] sm:$0xff]
  %v16 = vld [vmem:[%s0 + $0x8] sm:$0xff]
  %v17 = vld [vmem:[%s0 + $0x10] sm:$0xf]
  %v18 = vld [vmem:[%s0 + $0x14] sm:$0xff]
  %v19 = vld [vmem:[%s0 + $0x1c] sm:$0xff]
  %v20 = vld [vmem:[%s0 + $0x24] sm:$0xf]
  %v21 = vld [vmem:[%s0 + $0x28] sm:$0xff]
  %v22 = vld [vmem:[%s0 + $0x30] sm:$0xff]
  %v23 = vld [vmem:[%s0 + $0x38] sm:$0xf]
  %v24 = vld [vmem:[%s0 + $0x3c] sm:$0xff]
  %v25 = vld [vmem:[%s0 + $0x44] sm:$0xff]
  %v26 = vld [vmem:[%s0 + $0x4c] sm:$0xf]
  %v27 = vld [vmem:[%s0 + $0x50] sm:$0xff]
  %v28 = vld [vmem:[%s0 + $0x58] sm:$0xff]
  %v29 = vld [vmem:[%s0 + $0x60] sm:$0xf]
  %v30 = vld [vmem:[%s0 + $0x64] sm:$0xff]
  %v31 = vld [vmem:[%s0 + $0x6c] sm:$0xff]
  %v32 = vld [vmem:[%s0 + $0x74] sm:$0xf]
  %v33 = vld [vmem:[%s0 + $0x78] sm:$0xff]
  %v34 = vld [vmem:[%s0 + $0x80] sm:$0xff]
  %v35 = vld [vmem:[%s0 + $0x88] sm:$0xf]
  %v36 = vld [vmem:[%s0 + $0x8c] sm:$0xff]
  %v37 = vld [vmem:[%s0 + $0x94] sm:$0xff]
  %v38 = vld [vmem:[%s0 + $0x9c] sm:$0xf]
  %v39 = vld [vmem:[%s0 + $0xa0] sm:$0xff]
  %v40 = vld [vmem:[%s0 + $0xa8] sm:$0xff]
  %v41 = vld [vmem:[%s0 + $0xb0] sm:$0xf]
  %v42 = vld [vmem:[%s0 + $0xb4] sm:$0xff]
  %v43 = vld [vmem:[%s0 + $0xbc] sm:$0xff]
  %v44 = vld [vmem:[%s0 + $0xc4] sm:$0xf]
  %v45 = vld [vmem:[%s0 + $0xc8] sm:$0xff]
  %v46 = vld [vmem:[%s0 + $0xd0] sm:$0xff]
  %v47 = vld [vmem:[%s0 + $0xd8] sm:$0xf]
  %v48 = vld [vmem:[%s0 + $0xdc] sm:$0xff]
  %v49 = vld [vmem:[%s0 + $0xe4] sm:$0xff]
  %v50 = vld [vmem:[%s0 + $0xec] sm:$0xf]
  %v51 = vld [vmem:[%s0 + $0xf0] sm:$0xff]
  %v52 = vld [vmem:[%s0 + $0xf8] sm:$0xff]
  %v53 = vld [vmem:[%s0 + $0x100] sm:$0xf]
  %v54 = vld [vmem:[%s0 + $0x104] sm:$0xff]
  %v55 = vld [vmem:[%s0 + $0x10c] sm:$0xff]
  %v56 = vld [vmem:[%s0 + $0x114] sm:$0xf]
  %v57 = vld [vmem:[%s0 + $0x118] sm:$0xff]
  %v58 = vld [vmem:[%s0 + $0x120] sm:$0xff]
  %v59 = vld [vmem:[%s0 + $0x128] sm:$0xf]
  %v60 = vld [vmem:[%s0 + $0x12c] sm:$0xff]
  %v61 = vld [vmem:[%s0 + $0x134] sm:$0xff]
  %v62 = vld [vmem:[%s0 + $0x13c] sm:$0xf]
  %v63 = vld [vmem:[%s0 + $0x140] sm:$0xff]
  %v64 = vld [vmem:[%s0 + $0x148] sm:$0xff]
  %v65 = vld [vmem:[%s0 + $0x150] sm:$0xf]
  %v66 = vld [vmem:[%s0 + $0x154] sm:$0xff]
  %v67 = vld [vmem:[%s0 + $0x15c] sm:$0xff]
  %v68 = vld [vmem:[%s0 + $0x164] sm:$0xf]
  %v69 = vld [vmem:[%s0 + $0x168] sm:$0xff]
  %v70 = vld [vmem:[%s0 + $0x170] sm:$0xff]
  %v71 = vld [vmem:[%s0 + $0x178] sm:$0xf]
  %v72 = vld [vmem:[%s0 + $0x17c] sm:$0xff]
  %v73 = vld [vmem:[%s0 + $0x184] sm:$0xff]
  %v74 = vld [vmem:[%s0 + $0x18c] sm:$0xf]
  %v75 = vld [vmem:[%s0 + $0x190] sm:$0xff]
  %v76 = vld [vmem:[%s0 + $0x198] sm:$0xff]
  %v77 = vld [vmem:[%s0 + $0x1a0] sm:$0xf]
  %v78 = vld [vmem:[%s0 + $0x1a4] sm:$0xff]
  %v79 = vld [vmem:[%s0 + $0x1ac] sm:$0xff]
  %v80 = vld [vmem:[%s0 + $0x1b4] sm:$0xf]
  %v81 = vld [vmem:[%s0 + $0x1b8] sm:$0xff]
  %v82 = vld [vmem:[%s0 + $0x1c0] sm:$0xff]
  %v83 = vld [vmem:[%s0 + $0x1c8] sm:$0xf]
  %v84 = vld [vmem:[%s0 + $0x1cc] sm:$0xff]
  %v85 = vld [vmem:[%s0 + $0x1d4] sm:$0xff]
  %v86 = vld [vmem:[%s0 + $0x1dc] sm:$0xf]
  %v87 = vld [vmem:[%s0 + $0x1e0] sm:$0xff]
  %v88 = vld [vmem:[%s0 + $0x1e8] sm:$0xff]
  %v89 = vld [vmem:[%s0 + $0x1f0] sm:$0xf]
  %v90 = vld [vmem:[%s0 + $0x1f4] sm:$0xff]
  %v91 = vld [vmem:[%s0 + $0x1fc] sm:$0xff]
  %v92 = vld [vmem:[%s0 + $0x204] sm:$0xf]
  %v93 = vld [vmem:[%s0 + $0x208] sm:$0xff]
  %v94 = vld [vmem:[%s0 + $0x210] sm:$0xff]
  %v95 = vld [vmem:[%s0 + $0x218] sm:$0xf]
  %v96 = vld [vmem:[%s0 + $0x21c] sm:$0xff]
  %v97 = vld [vmem:[%s0 + $0x224] sm:$0xff]
  %v98 = vld [vmem:[%s0 + $0x22c] sm:$0xf]
  %v99 = vld [vmem:[%s0 + $0x230] sm:$0xff]
  %v100 = vld [vmem:[%s0 + $0x238] sm:$0xff]
  %v101 = vld [vmem:[%s0 + $0x240] sm:$0xf]
  %v102 = vld [vmem:[%s0 + $0x244] sm:$0xff]
  %v103 = vld [vmem:[%s0 + $0x24c] sm:$0xff]
  %v104 = vld [vmem:[%s0 + $0x254] sm:$0xf]
  %v105 = vld [vmem:[%s0 + $0x258] sm:$0xff]
  %v106 = vld [vmem:[%s0 + $0x260] sm:$0xff]
  %v107 = vld [vmem:[%s0 + $0x268] sm:$0xf]
  %v108 = vld [vmem:[%s0 + $0x26c] sm:$0xff]
  %v109 = vld [vmem:[%s0 + $0x274] sm:$0xff]
  %v110 = vld [vmem:[%s0 + $0x27c] sm:$0xf]
  %v111 = vld [vmem:[%s0 + $0x280] sm:$0xff]
  %v112 = vld [vmem:[%s0 + $0x288] sm:$0xff]
  %v113 = vld [vmem:[%s0 + $0x290] sm:$0xf]
  %v114 = vld [vmem:[%s0 + $0x294] sm:$0xff]
  %v115 = vld [vmem:[%s0 + $0x29c] sm:$0xff]
  %v116 = vld [vmem:[%s0 + $0x2a4] sm:$0xf]
  %v117 = vld [vmem:[%s0 + $0x2a8] sm:$0xff]
  %v118 = vld [vmem:[%s0 + $0x2b0] sm:$0xff]
  %v119 = vld [vmem:[%s0 + $0x2b8] sm:$0xf]
  %v120 = vld [vmem:[%s0 + $0x2bc] sm:$0xff]
  %v121 = vld [vmem:[%s0 + $0x2c4] sm:$0xff]
  %v122 = vld [vmem:[%s0 + $0x2cc] sm:$0xf]
  %v123 = vld [vmem:[%s0 + $0x2d0] sm:$0xff]
  %v124 = vld [vmem:[%s0 + $0x2d8] sm:$0xff]
  %v125 = vld [vmem:[%s0 + $0x2e0] sm:$0xf]
  %v126 = vld [vmem:[%s0 + $0x2e4] sm:$0xff]
  %v127 = vld [vmem:[%s0 + $0x2ec] sm:$0xff]
  %v128 = vld [vmem:[%s0 + $0x2f4] sm:$0xf]
  %v129 = vld [vmem:[%s0 + $0x2f8] sm:$0xff]
  %v130 = vld [vmem:[%s0 + $0x300] sm:$0xff]
  %v131 = vld [vmem:[%s0 + $0x308] sm:$0xf]
  %v132 = vld [vmem:[%s0 + $0x30c] sm:$0xff]
  %v133 = vld [vmem:[%s0 + $0x314] sm:$0xff]
  %v134 = vld [vmem:[%s0 + $0x31c] sm:$0xf]
  %v135 = vld [vmem:[%s0 + $0x320] sm:$0xff]
  %v136 = vld [vmem:[%s0 + $0x328] sm:$0xff]
  %v137 = vld [vmem:[%s0 + $0x330] sm:$0xf]
  %v138 = vld [vmem:[%s0 + $0x334] sm:$0xff]
  %v139 = vld [vmem:[%s0 + $0x33c] sm:$0xff]
  %v140 = vld [vmem:[%s0 + $0x344] sm:$0xf]
  %v141 = vld [vmem:[%s0 + $0x348] sm:$0xff]
  %v142 = vld [vmem:[%s0 + $0x350] sm:$0xff]
  %v143 = vld [vmem:[%s0 + $0x358] sm:$0xf]
  %v144 = vld [vmem:[%s0 + $0x35c] sm:$0xff]
  %v145 = vld [vmem:[%s0 + $0x364] sm:$0xff]
  %v146 = vld [vmem:[%s0 + $0x36c] sm:$0xf]
  %v147 = vld [vmem:[%s0 + $0x370] sm:$0xff]
  %v148 = vld [vmem:[%s0 + $0x378] sm:$0xff]
  %v149 = vld [vmem:[%s0 + $0x380] sm:$0xf]
  %v150 = vld [vmem:[%s0 + $0x384] sm:$0xff]
  %v151 = vld [vmem:[%s0 + $0x38c] sm:$0xff]
  %v152 = vld [vmem:[%s0 + $0x394] sm:$0xf]
  %v153 = vld [vmem:[%s0 + $0x398] sm:$0xff]
  %v154 = vld [vmem:[%s0 + $0x3a0] sm:$0xff]
  %v155 = vld [vmem:[%s0 + $0x3a8] sm:$0xf]
  %v156 = vld [vmem:[%s0 + $0x3ac] sm:$0xff]
  %v157 = vld [vmem:[%s0 + $0x3b4] sm:$0xff]
  %v158 = vld [vmem:[%s0 + $0x3bc] sm:$0xf]
  %v159 = vld [vmem:[%s0 + $0x3c0] sm:$0xff]
  %v160 = vld [vmem:[%s0 + $0x3c8] sm:$0xff]
  %v161 = vld [vmem:[%s0 + $0x3d0] sm:$0xf]
  %v162 = vld [vmem:[%s0 + $0x3d4] sm:$0xff]
  %v163 = vld [vmem:[%s0 + $0x3dc] sm:$0xff]
  %v164 = vld [vmem:[%s0 + $0x3e4] sm:$0xf]
  %v165 = vld [vmem:[%s0 + $0x3e8] sm:$0xff]
  %v166 = vld [vmem:[%s0 + $0x3f0] sm:$0xff]
  %v167 = vld [vmem:[%s0 + $0x3f8] sm:$0xf]
  %v168 = vld [vmem:[%s0 + $0x3fc] sm:$0xff]
  %v169 = vld [vmem:[%s0 + $0x404] sm:$0xff]
  %v170 = vld [vmem:[%s0 + $0x40c] sm:$0xf]
  %v171 = vld [vmem:[%s0 + $0x410] sm:$0xff]
  %v172 = vld [vmem:[%s0 + $0x418] sm:$0xff]
  %v173 = vld [vmem:[%s0 + $0x420] sm:$0xf]
  %v174 = vld [vmem:[%s0 + $0x424] sm:$0xff]
  %v175 = vld [vmem:[%s0 + $0x42c] sm:$0xff]
  %v176 = vld [vmem:[%s0 + $0x434] sm:$0xf]
  %v177 = vld [vmem:[%s0 + $0x438] sm:$0xff]
  %v178 = vld [vmem:[%s0 + $0x440] sm:$0xff]
  %v179 = vld [vmem:[%s0 + $0x448] sm:$0xf]
  %v180 = vld [vmem:[%s0 + $0x44c] sm:$0xff]
  %v181 = vld [vmem:[%s0 + $0x454] sm:$0xff]
  %v182 = vld [vmem:[%s0 + $0x45c] sm:$0xf]
  %v183 = vld [vmem:[%s0 + $0x460] sm:$0xff]
  %v184 = vld [vmem:[%s0 + $0x468] sm:$0xff]
  %v185 = vld [vmem:[%s0 + $0x470] sm:$0xf]
  %v186 = vld [vmem:[%s0 + $0x474] sm:$0xff]
  %v187 = vld [vmem:[%s0 + $0x47c] sm:$0xff]
  %v188 = vld [vmem:[%s0 + $0x484] sm:$0xf]
  %v189 = vld [vmem:[%s0 + $0x488] sm:$0xff]
  %v190 = vld [vmem:[%s0 + $0x490] sm:$0xff]
  %v191 = vld [vmem:[%s0 + $0x498] sm:$0xf]
  %v192 = vld [vmem:[%s0 + $0x49c] sm:$0xff]
  %v193 = vld [vmem:[%s0 + $0x4a4] sm:$0xff]
  %v194 = vld [vmem:[%s0 + $0x4ac] sm:$0xf]
  %v195 = vld [vmem:[%s0 + $0x4b0] sm:$0xff]
  %v196 = vld [vmem:[%s0 + $0x4b8] sm:$0xff]
  %v197 = vld [vmem:[%s0 + $0x4c0] sm:$0xf]
  %v198 = vld [vmem:[%s0 + $0x4c4] sm:$0xff]
  %v199 = vld [vmem:[%s0 + $0x4cc] sm:$0xff]
  %v200 = vld [vmem:[%s0 + $0x4d4] sm:$0xf]
  %v201 = vld [vmem:[%s0 + $0x4d8] sm:$0xff]
  %v202 = vld [vmem:[%s0 + $0x4e0] sm:$0xff]
  %v203 = vld [vmem:[%s0 + $0x4e8] sm:$0xf]
  %v204 = vld [vmem:[%s0 + $0x4ec] sm:$0xff]
  %v205 = vld [vmem:[%s0 + $0x4f4] sm:$0xff]
  %v206 = vld [vmem:[%s0 + $0x4fc] sm:$0xf]
  %v207 = vld [vmem:[%s0 + $0x500] sm:$0xff]
  %v208 = vld [vmem:[%s0 + $0x508] sm:$0xff]
  %v209 = vld [vmem:[%s0 + $0x510] sm:$0xf]
  %v210 = vld [vmem:[%s0 + $0x514] sm:$0xff]
  %v211 = vld [vmem:[%s0 + $0x51c] sm:$0xff]
  %v212 = vld [vmem:[%s0 + $0x524] sm:$0xf]
  %v213 = vld [vmem:[%s0 + $0x528] sm:$0xff]
  %v214 = vld [vmem:[%s0 + $0x530] sm:$0xff]
  %v215 = vld [vmem:[%s0 + $0x538] sm:$0xf]
  %v216 = vld [vmem:[%s0 + $0x53c] sm:$0xff]
  %v217 = vld [vmem:[%s0 + $0x544] sm:$0xff]
  %v218 = vld [vmem:[%s0 + $0x54c] sm:$0xf]
  %v219 = vld [vmem:[%s0 + $0x550] sm:$0xff]
  %v220 = vld [vmem:[%s0 + $0x558] sm:$0xff]
  %v221 = vld [vmem:[%s0 + $0x560] sm:$0xf]
  %v222 = vld [vmem:[%s0 + $0x564] sm:$0xff]
  %v223 = vld [vmem:[%s0 + $0x56c] sm:$0xff]
  %v224 = vld [vmem:[%s0 + $0x574] sm:$0xf]
  %v225 = vld [vmem:[%s0 + $0x578] sm:$0xff]
  %v226 = vld [vmem:[%s0 + $0x580] sm:$0xff]
  %v227 = vld [vmem:[%s0 + $0x588] sm:$0xf]
  %v228 = vld [vmem:[%s0 + $0x58c] sm:$0xff]
  %v229 = vld [vmem:[%s0 + $0x594] sm:$0xff]
  %v230 = vld [vmem:[%s0 + $0x59c] sm:$0xf]
  %v231 = vld [vmem:[%s0 + $0x5a0] sm:$0xff]
  %v232 = vld [vmem:[%s0 + $0x5a8] sm:$0xff]
  %v233 = vld [vmem:[%s0 + $0x5b0] sm:$0xf]
  %v234 = vld [vmem:[%s0 + $0x5b4] sm:$0xff]
  %v235 = vld [vmem:[%s0 + $0x5bc] sm:$0xff]
  %v236 = vld [vmem:[%s0 + $0x5c4] sm:$0xf]
  %v237 = vld [vmem:[%s0 + $0x5c8] sm:$0xff]
  %v238 = vld [vmem:[%s0 + $0x5d0] sm:$0xff]
  %v239 = vld [vmem:[%s0 + $0x5d8] sm:$0xf]
  %v240 = vld [vmem:[%s0 + $0x5dc] sm:$0xff]
  %v241 = vld [vmem:[%s0 + $0x5e4] sm:$0xff]
  %v242 = vld [vmem:[%s0 + $0x5ec] sm:$0xf]
  %v243 = vld [vmem:[%s0 + $0x5f0] sm:$0xff]
  %v244 = vld [vmem:[%s0 + $0x5f8] sm:$0xff]
  %v245 = vld [vmem:[%s0 + $0x600] sm:$0xf]
  %v246 = vld [vmem:[%s0 + $0x604] sm:$0xff]
  %v247 = vld [vmem:[%s0 + $0x60c] sm:$0xff]
  %v248 = vld [vmem:[%s0 + $0x614] sm:$0xf]
  %v249 = vld [vmem:[%s0 + $0x618] sm:$0xff]
  %v250 = vld [vmem:[%s0 + $0x620] sm:$0xff]
  %v251 = vld [vmem:[%s0 + $0x628] sm:$0xf]
  %v252 = vld [vmem:[%s0 + $0x62c] sm:$0xff]
  %v253 = vld [vmem:[%s0 + $0x634] sm:$0xff]
  %v254 = vld [vmem:[%s0 + $0x63c] sm:$0xf]
  %v255 = vld [vmem:[%s0 + $0x640] sm:$0xff]
  %v256 = vld [vmem:[%s0 + $0x648] sm:$0xff]
  %v257 = vld [vmem:[%s0 + $0x650] sm:$0xf]
  %v258 = vld [vmem:[%s0 + $0x654] sm:$0xff]
  %v259 = vld [vmem:[%s0 + $0x65c] sm:$0xff]
  %v260 = vld [vmem:[%s0 + $0x664] sm:$0xf]
  %v261 = vld [vmem:[%s0 + $0x668] sm:$0xff]
  %v262 = vld [vmem:[%s0 + $0x670] sm:$0xff]
  %v263 = vld [vmem:[%s0 + $0x678] sm:$0xf]
  %v264 = vld [vmem:[%s0 + $0x67c] sm:$0xff]
  %v265 = vld [vmem:[%s0 + $0x684] sm:$0xff]
  %v266 = vld [vmem:[%s0 + $0x68c] sm:$0xf]
  %v267 = vld [vmem:[%s0 + $0x690] sm:$0xff]
  %v268 = vld [vmem:[%s0 + $0x698] sm:$0xff]
  %v269 = vld [vmem:[%s0 + $0x6a0] sm:$0xf]
  %v270 = vld [vmem:[%s0 + $0x6a4] sm:$0xff]
  %v271 = vld [vmem:[%s0 + $0x6ac] sm:$0xff]
  %v272 = vld [vmem:[%s0 + $0x6b4] sm:$0xf]
  %v273 = vld [vmem:[%s0 + $0x6b8] sm:$0xff]
  %v274 = vld [vmem:[%s0 + $0x6c0] sm:$0xff]
  %v275 = vld [vmem:[%s0 + $0x6c8] sm:$0xf]
  %v276 = vld [vmem:[%s0 + $0x6cc] sm:$0xff]
  %v277 = vld [vmem:[%s0 + $0x6d4] sm:$0xff]
  %v278 = vld [vmem:[%s0 + $0x6dc] sm:$0xf]
  %v279 = vld [vmem:[%s0 + $0x6e0] sm:$0xff]
  %v280 = vld [vmem:[%s0 + $0x6e8] sm:$0xff]
  %v281 = vld [vmem:[%s0 + $0x6f0] sm:$0xf]
  %v282 = vld [vmem:[%s0 + $0x6f4] sm:$0xff]
  %v283 = vld [vmem:[%s0 + $0x6fc] sm:$0xff]
  %v284 = vld [vmem:[%s0 + $0x704] sm:$0xf]
  %v285 = vld [vmem:[%s0 + $0x708] sm:$0xff]
  %v286 = vld [vmem:[%s0 + $0x710] sm:$0xff]
  %v287 = vld [vmem:[%s0 + $0x718] sm:$0xf]
  %v288 = vld [vmem:[%s0 + $0x71c] sm:$0xff]
  %v289 = vld [vmem:[%s0 + $0x724] sm:$0xff]
  %v290 = vld [vmem:[%s0 + $0x72c] sm:$0xf]
  %v291 = vld [vmem:[%s0 + $0x730] sm:$0xff]
  %v292 = vld [vmem:[%s0 + $0x738] sm:$0xff]
  %v293 = vld [vmem:[%s0 + $0x740] sm:$0xf]
  %v294 = vld [vmem:[%s0 + $0x744] sm:$0xff]
  %v295 = vld [vmem:[%s0 + $0x74c] sm:$0xff]
  %v296 = vld [vmem:[%s0 + $0x754] sm:$0xf]
  %v297 = vld [vmem:[%s0 + $0x758] sm:$0xff]
  %v298 = vld [vmem:[%s0 + $0x760] sm:$0xff]
  %v299 = vld [vmem:[%s0 + $0x768] sm:$0xf]
  %v300 = vld [vmem:[%s0 + $0x76c] sm:$0xff]
  %v301 = vld [vmem:[%s0 + $0x774] sm:$0xff]
  %v302 = vld [vmem:[%s0 + $0x77c] sm:$0xf]
  %v303 = vld [vmem:[%s0 + $0x780] sm:$0xff]
  %v304 = vld [vmem:[%s0 + $0x788] sm:$0xff]
  %v305 = vld [vmem:[%s0 + $0x790] sm:$0xf]
  %v306 = vld [vmem:[%s0 + $0x794] sm:$0xff]
  %v307 = vld [vmem:[%s0 + $0x79c] sm:$0xff]
  %v308 = vld [vmem:[%s0 + $0x7a4] sm:$0xf]
  %v309 = vld [vmem:[%s0 + $0x7a8] sm:$0xff]
  %v310 = vld [vmem:[%s0 + $0x7b0] sm:$0xff]
  %v311 = vld [vmem:[%s0 + $0x7b8] sm:$0xf]
  %v312 = vld [vmem:[%s0 + $0x7bc] sm:$0xff]
  %v313 = vld [vmem:[%s0 + $0x7c4] sm:$0xff]
  %v314 = vld [vmem:[%s0 + $0x7cc] sm:$0xf]
  %v315 = vld [vmem:[%s1] sm:$0xf]
  %v316 = vld [vmem:[%s1 + $0x4] sm:$0xf]
  %v317 = vld [vmem:[%s1 + $0x8] sm:$0xf]
  %v318 = vld [vmem:[%s1 + $0xc] sm:$0xf]
  %v319 = vld [vmem:[%s1 + $0x10] sm:$0xf]
  %v320 = vld [vmem:[%s1 + $0x14] sm:$0xf]
  %v321 = vld [vmem:[%s1 + $0x18] sm:$0xf]
  %v322 = vld [vmem:[%s1 + $0x1c] sm:$0xf]
  %v323 = vld [vmem:[%s1 + $0x20] sm:$0xf]
  %v324 = vld [vmem:[%s1 + $0x24] sm:$0xf]
  %v325 = vld [vmem:[%s1 + $0x28] sm:$0xf]
  %v326 = vld [vmem:[%s1 + $0x2c] sm:$0xf]
  %v327 = vld [vmem:[%s1 + $0x30] sm:$0xf]
  %v328 = vld [vmem:[%s1 + $0x34] sm:$0xf]
  %v329 = vld [vmem:[%s1 + $0x38] sm:$0xf]
  %v330 = vld [vmem:[%s1 + $0x3c] sm:$0xf]
  %v331 = vld [vmem:[%s1 + $0x40] sm:$0xf]
  %v332 = vld [vmem:[%s1 + $0x44] sm:$0xf]
  %v333 = vld [vmem:[%s1 + $0x48] sm:$0xf]
  %v334 = vld [vmem:[%s1 + $0x4c] sm:$0xf]
  %v335 = vld [vmem:[%s1 + $0x50] sm:$0xf]
  %v336 = vld [vmem:[%s1 + $0x54] sm:$0xf]
  %v337 = vld [vmem:[%s1 + $0x58] sm:$0xf]
  %v338 = vld [vmem:[%s1 + $0x5c] sm:$0xf]
  %v339 = vld [vmem:[%s1 + $0x60] sm:$0xf]
  %v340 = vld [vmem:[%s1 + $0x64] sm:$0xf]
  %v341 = vld [vmem:[%s1 + $0x68] sm:$0xf]
  %v342 = vld [vmem:[%s1 + $0x6c] sm:$0xf]
  %v343 = vld [vmem:[%s1 + $0x70] sm:$0xf]
  %v344 = vld [vmem:[%s1 + $0x74] sm:$0xf]
  %v345 = vld [vmem:[%s1 + $0x78] sm:$0xf]
  %v346 = vld [vmem:[%s1 + $0x7c] sm:$0xf]
  %v347 = vld [vmem:[%s1 + $0x80] sm:$0xf]
  %v348 = vld [vmem:[%s1 + $0x84] sm:$0xf]
  %v349 = vld [vmem:[%s1 + $0x88] sm:$0xf]
  %v350 = vld [vmem:[%s1 + $0x8c] sm:$0xf]
  %v351 = vld [vmem:[%s1 + $0x90] sm:$0xf]
  %v352 = vld [vmem:[%s1 + $0x94] sm:$0xf]
  %v353 = vld [vmem:[%s1 + $0x98] sm:$0xf]
  %v354 = vld [vmem:[%s1 + $0x9c] sm:$0xf]
  %v355 = vld [vmem:[%s1 + $0xa0] sm:$0xf]
  %v356 = vld [vmem:[%s1 + $0xa4] sm:$0xf]
  %v357 = vld [vmem:[%s1 + $0xa8] sm:$0xf]
  %v358 = vld [vmem:[%s1 + $0xac] sm:$0xf]
  %v359 = vld [vmem:[%s1 + $0xb0] sm:$0xf]
  %v360 = vld [vmem:[%s1 + $0xb4] sm:$0xf]
  %v361 = vld [vmem:[%s1 + $0xb8] sm:$0xf]
  %v362 = vld [vmem:[%s1 + $0xbc] sm:$0xf]
  %v363 = vld [vmem:[%s1 + $0xc0] sm:$0xf]
  %v364 = vld [vmem:[%s1 + $0xc4] sm:$0xf]
  %v365 = vld [vmem:[%s1 + $0xc8] sm:$0xf]
  %v366 = vld [vmem:[%s1 + $0xcc] sm:$0xf]
  %v367 = vld [vmem:[%s1 + $0xd0] sm:$0xf]
  %v368 = vld [vmem:[%s1 + $0xd4] sm:$0xf]
  %v369 = vld [vmem:[%s1 + $0xd8] sm:$0xf]
  %v370 = vld [vmem:[%s1 + $0xdc] sm:$0xf]
  %v371 = vld [vmem:[%s1 + $0xe0] sm:$0xf]
  %v372 = vld [vmem:[%s1 + $0xe4] sm:$0xf]
  %v373 = vld [vmem:[%s1 + $0xe8] sm:$0xf]
  %v374 = vld [vmem:[%s1 + $0xec] sm:$0xf]
  %v375 = vld [vmem:[%s1 + $0xf0] sm:$0xf]
  %v376 = vld [vmem:[%s1 + $0xf4] sm:$0xf]
  %v377 = vld [vmem:[%s1 + $0xf8] sm:$0xf]
  %v378 = vld [vmem:[%s1 + $0xfc] sm:$0xf]
  %v379 = vld [vmem:[%s1 + $0x100] sm:$0xf]
  %v380 = vld [vmem:[%s1 + $0x104] sm:$0xf]
  %v381 = vld [vmem:[%s1 + $0x108] sm:$0xf]
  %v382 = vld [vmem:[%s1 + $0x10c] sm:$0xf]
  %v383 = vld [vmem:[%s1 + $0x110] sm:$0xf]
  %v384 = vld [vmem:[%s1 + $0x114] sm:$0xf]
  %v385 = vld [vmem:[%s1 + $0x118] sm:$0xf]
  %v386 = vld [vmem:[%s1 + $0x11c] sm:$0xf]
  %v387 = vld [vmem:[%s2] sm:$0x1]
  %v389 = vlaneseq
  %v390 = vshrl.u32 %v389, 7
  %v391 = vsub.s32 0, %v390
  %v392 = vrot.slane %v387, %v391
  %v694 = vunpack.c.l.b16 %v15
  %v695 = vunpack.c.h.b16 %v15
  %v696 = vunpack.c.l.b16 %v16
  %v697 = vunpack.c.h.b16 %v16
  %v698 = vunpack.c.l.b16 %v17
  %v699 = vunpack.c.l.b16 %v18
  %v700 = vunpack.c.h.b16 %v18
  %v701 = vunpack.c.l.b16 %v19
  %v702 = vunpack.c.h.b16 %v19
  %v703 = vunpack.c.l.b16 %v20
  %v704 = vunpack.c.l.b16 %v21
  %v705 = vunpack.c.h.b16 %v21
  %v706 = vunpack.c.l.b16 %v22
  %v707 = vunpack.c.h.b16 %v22
  %v708 = vunpack.c.l.b16 %v23
  %v709 = vunpack.c.l.b16 %v24
  %v710 = vunpack.c.h.b16 %v24
  %v711 = vunpack.c.l.b16 %v25
  %v712 = vunpack.c.h.b16 %v25
  %v713 = vunpack.c.l.b16 %v26
  %v714 = vunpack.c.l.b16 %v27
  %v715 = vunpack.c.h.b16 %v27
  %v716 = vunpack.c.l.b16 %v28
  %v717 = vunpack.c.h.b16 %v28
  %v718 = vunpack.c.l.b16 %v29
  %v719 = vunpack.c.l.b16 %v30
  %v720 = vunpack.c.h.b16 %v30
  %v721 = vunpack.c.l.b16 %v31
  %v722 = vunpack.c.h.b16 %v31
  %v723 = vunpack.c.l.b16 %v32
  %v724 = vunpack.c.l.b16 %v33
  %v725 = vunpack.c.h.b16 %v33
  %v726 = vunpack.c.l.b16 %v34
  %v727 = vunpack.c.h.b16 %v34
  %v728 = vunpack.c.l.b16 %v35
  %v729 = vunpack.c.l.b16 %v36
  %v730 = vunpack.c.h.b16 %v36
  %v731 = vunpack.c.l.b16 %v37
  %v732 = vunpack.c.h.b16 %v37
  %v733 = vunpack.c.l.b16 %v38
  %v734 = vunpack.c.l.b16 %v39
  %v735 = vunpack.c.h.b16 %v39
  %v736 = vunpack.c.l.b16 %v40
  %v737 = vunpack.c.h.b16 %v40
  %v738 = vunpack.c.l.b16 %v41
  %v739 = vunpack.c.l.b16 %v42
  %v740 = vunpack.c.h.b16 %v42
  %v741 = vunpack.c.l.b16 %v43
  %v742 = vunpack.c.h.b16 %v43
  %v743 = vunpack.c.l.b16 %v44
  %v744 = vunpack.c.l.b16 %v45
  %v745 = vunpack.c.h.b16 %v45
  %v746 = vunpack.c.l.b16 %v46
  %v747 = vunpack.c.h.b16 %v46
  %v748 = vunpack.c.l.b16 %v47
  %v749 = vunpack.c.l.b16 %v48
  %v750 = vunpack.c.h.b16 %v48
  %v751 = vunpack.c.l.b16 %v49
  %v752 = vunpack.c.h.b16 %v49
  %v753 = vunpack.c.l.b16 %v50
  %v754 = vunpack.c.l.b16 %v51
  %v755 = vunpack.c.h.b16 %v51
  %v756 = vunpack.c.l.b16 %v52
  %v757 = vunpack.c.h.b16 %v52
  %v758 = vunpack.c.l.b16 %v53
  %v759 = vunpack.c.l.b16 %v54
  %v760 = vunpack.c.h.b16 %v54
  %v761 = vunpack.c.l.b16 %v55
  %v762 = vunpack.c.h.b16 %v55
  %v763 = vunpack.c.l.b16 %v56
  %v764 = vunpack.c.l.b16 %v57
  %v765 = vunpack.c.h.b16 %v57
  %v766 = vunpack.c.l.b16 %v58
  %v767 = vunpack.c.h.b16 %v58
  %v768 = vunpack.c.l.b16 %v59
  %v769 = vunpack.c.l.b16 %v60
  %v770 = vunpack.c.h.b16 %v60
  %v771 = vunpack.c.l.b16 %v61
  %v772 = vunpack.c.h.b16 %v61
  %v773 = vunpack.c.l.b16 %v62
  %v774 = vunpack.c.l.b16 %v63
  %v775 = vunpack.c.h.b16 %v63
  %v776 = vunpack.c.l.b16 %v64
  %v777 = vunpack.c.h.b16 %v64
  %v778 = vunpack.c.l.b16 %v65
  %v779 = vunpack.c.l.b16 %v66
  %v780 = vunpack.c.h.b16 %v66
  %v781 = vunpack.c.l.b16 %v67
  %v782 = vunpack.c.h.b16 %v67
  %v783 = vunpack.c.l.b16 %v68
  %v784 = vunpack.c.l.b16 %v69
  %v785 = vunpack.c.h.b16 %v69
  %v786 = vunpack.c.l.b16 %v70
  %v787 = vunpack.c.h.b16 %v70
  %v788 = vunpack.c.l.b16 %v71
  %v789 = vunpack.c.l.b16 %v72
  %v790 = vunpack.c.h.b16 %v72
  %v791 = vunpack.c.l.b16 %v73
  %v792 = vunpack.c.h.b16 %v73
  %v793 = vunpack.c.l.b16 %v74
  %v794 = vunpack.c.l.b16 %v75
  %v795 = vunpack.c.h.b16 %v75
  %v796 = vunpack.c.l.b16 %v76
  %v797 = vunpack.c.h.b16 %v76
  %v798 = vunpack.c.l.b16 %v77
  %v799 = vunpack.c.l.b16 %v78
  %v800 = vunpack.c.h.b16 %v78
  %v801 = vunpack.c.l.b16 %v79
  %v802 = vunpack.c.h.b16 %v79
  %v803 = vunpack.c.l.b16 %v80
  %v804 = vunpack.c.l.b16 %v81
  %v805 = vunpack.c.h.b16 %v81
  %v806 = vunpack.c.l.b16 %v82
  %v807 = vunpack.c.h.b16 %v82
  %v808 = vunpack.c.l.b16 %v83
  %v809 = vunpack.c.l.b16 %v84
  %v810 = vunpack.c.h.b16 %v84
  %v811 = vunpack.c.l.b16 %v85
  %v812 = vunpack.c.h.b16 %v85
  %v813 = vunpack.c.l.b16 %v86
  %v814 = vunpack.c.l.b16 %v87
  %v815 = vunpack.c.h.b16 %v87
  %v816 = vunpack.c.l.b16 %v88
  %v817 = vunpack.c.h.b16 %v88
  %v818 = vunpack.c.l.b16 %v89
  %v819 = vunpack.c.l.b16 %v90
  %v820 = vunpack.c.h.b16 %v90
  %v821 = vunpack.c.l.b16 %v91
  %v822 = vunpack.c.h.b16 %v91
  %v823 = vunpack.c.l.b16 %v92
  %v824 = vunpack.c.l.b16 %v93
  %v825 = vunpack.c.h.b16 %v93
  %v826 = vunpack.c.l.b16 %v94
  %v827 = vunpack.c.h.b16 %v94
  %v828 = vunpack.c.l.b16 %v95
  %v829 = vunpack.c.l.b16 %v96
  %v830 = vunpack.c.h.b16 %v96
  %v831 = vunpack.c.l.b16 %v97
  %v832 = vunpack.c.h.b16 %v97
  %v833 = vunpack.c.l.b16 %v98
  %v834 = vunpack.c.l.b16 %v99
  %v835 = vunpack.c.h.b16 %v99
  %v836 = vunpack.c.l.b16 %v100
  %v837 = vunpack.c.h.b16 %v100
  %v838 = vunpack.c.l.b16 %v101
  %v839 = vunpack.c.l.b16 %v102
  %v840 = vunpack.c.h.b16 %v102
  %v841 = vunpack.c.l.b16 %v103
  %v842 = vunpack.c.h.b16 %v103
  %v843 = vunpack.c.l.b16 %v104
  %v844 = vunpack.c.l.b16 %v105
  %v845 = vunpack.c.h.b16 %v105
  %v846 = vunpack.c.l.b16 %v106
  %v847 = vunpack.c.h.b16 %v106
  %v848 = vunpack.c.l.b16 %v107
  %v849 = vunpack.c.l.b16 %v108
  %v850 = vunpack.c.h.b16 %v108
  %v851 = vunpack.c.l.b16 %v109
  %v852 = vunpack.c.h.b16 %v109
  %v853 = vunpack.c.l.b16 %v110
  %v854 = vunpack.c.l.b16 %v111
  %v855 = vunpack.c.h.b16 %v111
  %v856 = vunpack.c.l.b16 %v112
  %v857 = vunpack.c.h.b16 %v112
  %v858 = vunpack.c.l.b16 %v113
  %v859 = vunpack.c.l.b16 %v114
  %v860 = vunpack.c.h.b16 %v114
  %v861 = vunpack.c.l.b16 %v115
  %v862 = vunpack.c.h.b16 %v115
  %v863 = vunpack.c.l.b16 %v116
  %v864 = vunpack.c.l.b16 %v117
  %v865 = vunpack.c.h.b16 %v117
  %v866 = vunpack.c.l.b16 %v118
  %v867 = vunpack.c.h.b16 %v118
  %v868 = vunpack.c.l.b16 %v119
  %v869 = vunpack.c.l.b16 %v120
  %v870 = vunpack.c.h.b16 %v120
  %v871 = vunpack.c.l.b16 %v121
  %v872 = vunpack.c.h.b16 %v121
  %v873 = vunpack.c.l.b16 %v122
  %v874 = vunpack.c.l.b16 %v123
  %v875 = vunpack.c.h.b16 %v123
  %v876 = vunpack.c.l.b16 %v124
  %v877 = vunpack.c.h.b16 %v124
  %v878 = vunpack.c.l.b16 %v125
  %v879 = vunpack.c.l.b16 %v126
  %v880 = vunpack.c.h.b16 %v126
  %v881 = vunpack.c.l.b16 %v127
  %v882 = vunpack.c.h.b16 %v127
  %v883 = vunpack.c.l.b16 %v128
  %v884 = vunpack.c.l.b16 %v129
  %v885 = vunpack.c.h.b16 %v129
  %v886 = vunpack.c.l.b16 %v130
  %v887 = vunpack.c.h.b16 %v130
  %v888 = vunpack.c.l.b16 %v131
  %v889 = vunpack.c.l.b16 %v132
  %v890 = vunpack.c.h.b16 %v132
  %v891 = vunpack.c.l.b16 %v133
  %v892 = vunpack.c.h.b16 %v133
  %v893 = vunpack.c.l.b16 %v134
  %v894 = vunpack.c.l.b16 %v135
  %v895 = vunpack.c.h.b16 %v135
  %v896 = vunpack.c.l.b16 %v136
  %v897 = vunpack.c.h.b16 %v136
  %v898 = vunpack.c.l.b16 %v137
  %v899 = vunpack.c.l.b16 %v138
  %v900 = vunpack.c.h.b16 %v138
  %v901 = vunpack.c.l.b16 %v139
  %v902 = vunpack.c.h.b16 %v139
  %v903 = vunpack.c.l.b16 %v140
  %v904 = vunpack.c.l.b16 %v141
  %v905 = vunpack.c.h.b16 %v141
  %v906 = vunpack.c.l.b16 %v142
  %v907 = vunpack.c.h.b16 %v142
  %v908 = vunpack.c.l.b16 %v143
  %v909 = vunpack.c.l.b16 %v144
  %v910 = vunpack.c.h.b16 %v144
  %v911 = vunpack.c.l.b16 %v145
  %v912 = vunpack.c.h.b16 %v145
  %v913 = vunpack.c.l.b16 %v146
  %v914 = vunpack.c.l.b16 %v147
  %v915 = vunpack.c.h.b16 %v147
  %v916 = vunpack.c.l.b16 %v148
  %v917 = vunpack.c.h.b16 %v148
  %v918 = vunpack.c.l.b16 %v149
  %v919 = vunpack.c.l.b16 %v150
  %v920 = vunpack.c.h.b16 %v150
  %v921 = vunpack.c.l.b16 %v151
  %v922 = vunpack.c.h.b16 %v151
  %v923 = vunpack.c.l.b16 %v152
  %v924 = vunpack.c.l.b16 %v153
  %v925 = vunpack.c.h.b16 %v153
  %v926 = vunpack.c.l.b16 %v154
  %v927 = vunpack.c.h.b16 %v154
  %v928 = vunpack.c.l.b16 %v155
  %v929 = vunpack.c.l.b16 %v156
  %v930 = vunpack.c.h.b16 %v156
  %v931 = vunpack.c.l.b16 %v157
  %v932 = vunpack.c.h.b16 %v157
  %v933 = vunpack.c.l.b16 %v158
  %v934 = vunpack.c.l.b16 %v159
  %v935 = vunpack.c.h.b16 %v159
  %v936 = vunpack.c.l.b16 %v160
  %v937 = vunpack.c.h.b16 %v160
  %v938 = vunpack.c.l.b16 %v161
  %v939 = vunpack.c.l.b16 %v162
  %v940 = vunpack.c.h.b16 %v162
  %v941 = vunpack.c.l.b16 %v163
  %v942 = vunpack.c.h.b16 %v163
  %v943 = vunpack.c.l.b16 %v164
  %v944 = vunpack.c.l.b16 %v165
  %v945 = vunpack.c.h.b16 %v165
  %v946 = vunpack.c.l.b16 %v166
  %v947 = vunpack.c.h.b16 %v166
  %v948 = vunpack.c.l.b16 %v167
  %v949 = vunpack.c.l.b16 %v168
  %v950 = vunpack.c.h.b16 %v168
  %v951 = vunpack.c.l.b16 %v169
  %v952 = vunpack.c.h.b16 %v169
  %v953 = vunpack.c.l.b16 %v170
  %v954 = vunpack.c.l.b16 %v171
  %v955 = vunpack.c.h.b16 %v171
  %v956 = vunpack.c.l.b16 %v172
  %v957 = vunpack.c.h.b16 %v172
  %v958 = vunpack.c.l.b16 %v173
  %v959 = vunpack.c.l.b16 %v174
  %v960 = vunpack.c.h.b16 %v174
  %v961 = vunpack.c.l.b16 %v175
  %v962 = vunpack.c.h.b16 %v175
  %v963 = vunpack.c.l.b16 %v176
  %v964 = vunpack.c.l.b16 %v177
  %v965 = vunpack.c.h.b16 %v177
  %v966 = vunpack.c.l.b16 %v178
  %v967 = vunpack.c.h.b16 %v178
  %v968 = vunpack.c.l.b16 %v179
  %v969 = vunpack.c.l.b16 %v180
  %v970 = vunpack.c.h.b16 %v180
  %v971 = vunpack.c.l.b16 %v181
  %v972 = vunpack.c.h.b16 %v181
  %v973 = vunpack.c.l.b16 %v182
  %v974 = vunpack.c.l.b16 %v183
  %v975 = vunpack.c.h.b16 %v183
  %v976 = vunpack.c.l.b16 %v184
  %v977 = vunpack.c.h.b16 %v184
  %v978 = vunpack.c.l.b16 %v185
  %v979 = vunpack.c.l.b16 %v186
  %v980 = vunpack.c.h.b16 %v186
  %v981 = vunpack.c.l.b16 %v187
  %v982 = vunpack.c.h.b16 %v187
  %v983 = vunpack.c.l.b16 %v188
  %v984 = vunpack.c.l.b16 %v189
  %v985 = vunpack.c.h.b16 %v189
  %v986 = vunpack.c.l.b16 %v190
  %v987 = vunpack.c.h.b16 %v190
  %v988 = vunpack.c.l.b16 %v191
  %v989 = vunpack.c.l.b16 %v192
  %v990 = vunpack.c.h.b16 %v192
  %v991 = vunpack.c.l.b16 %v193
  %v992 = vunpack.c.h.b16 %v193
  %v993 = vunpack.c.l.b16 %v194
  %v994 = vunpack.c.l.b16 %v195
  %v995 = vunpack.c.h.b16 %v195
  %v996 = vunpack.c.l.b16 %v196
  %v997 = vunpack.c.h.b16 %v196
  %v998 = vunpack.c.l.b16 %v197
  %v999 = vunpack.c.l.b16 %v198
  %v1000 = vunpack.c.h.b16 %v198
  %v1001 = vunpack.c.l.b16 %v199
  %v1002 = vunpack.c.h.b16 %v199
  %v1003 = vunpack.c.l.b16 %v200
  %v1004 = vunpack.c.l.b16 %v201
  %v1005 = vunpack.c.h.b16 %v201
  %v1006 = vunpack.c.l.b16 %v202
  %v1007 = vunpack.c.h.b16 %v202
  %v1008 = vunpack.c.l.b16 %v203
  %v1009 = vunpack.c.l.b16 %v204
  %v1010 = vunpack.c.h.b16 %v204
  %v1011 = vunpack.c.l.b16 %v205
  %v1012 = vunpack.c.h.b16 %v205
  %v1013 = vunpack.c.l.b16 %v206
  %v1014 = vunpack.c.l.b16 %v207
  %v1015 = vunpack.c.h.b16 %v207
  %v1016 = vunpack.c.l.b16 %v208
  %v1017 = vunpack.c.h.b16 %v208
  %v1018 = vunpack.c.l.b16 %v209
  %v1019 = vunpack.c.l.b16 %v210
  %v1020 = vunpack.c.h.b16 %v210
  %v1021 = vunpack.c.l.b16 %v211
  %v1022 = vunpack.c.h.b16 %v211
  %v1023 = vunpack.c.l.b16 %v212
  %v1024 = vunpack.c.l.b16 %v213
  %v1025 = vunpack.c.h.b16 %v213
  %v1026 = vunpack.c.l.b16 %v214
  %v1027 = vunpack.c.h.b16 %v214
  %v1028 = vunpack.c.l.b16 %v215
  %v1029 = vunpack.c.l.b16 %v216
  %v1030 = vunpack.c.h.b16 %v216
  %v1031 = vunpack.c.l.b16 %v217
  %v1032 = vunpack.c.h.b16 %v217
  %v1033 = vunpack.c.l.b16 %v218
  %v1034 = vunpack.c.l.b16 %v219
  %v1035 = vunpack.c.h.b16 %v219
  %v1036 = vunpack.c.l.b16 %v220
  %v1037 = vunpack.c.h.b16 %v220
  %v1038 = vunpack.c.l.b16 %v221
  %v1039 = vunpack.c.l.b16 %v222
  %v1040 = vunpack.c.h.b16 %v222
  %v1041 = vunpack.c.l.b16 %v223
  %v1042 = vunpack.c.h.b16 %v223
  %v1043 = vunpack.c.l.b16 %v224
  %v1044 = vunpack.c.l.b16 %v225
  %v1045 = vunpack.c.h.b16 %v225
  %v1046 = vunpack.c.l.b16 %v226
  %v1047 = vunpack.c.h.b16 %v226
  %v1048 = vunpack.c.l.b16 %v227
  %v1049 = vunpack.c.l.b16 %v228
  %v1050 = vunpack.c.h.b16 %v228
  %v1051 = vunpack.c.l.b16 %v229
  %v1052 = vunpack.c.h.b16 %v229
  %v1053 = vunpack.c.l.b16 %v230
  %v1054 = vunpack.c.l.b16 %v231
  %v1055 = vunpack.c.h.b16 %v231
  %v1056 = vunpack.c.l.b16 %v232
  %v1057 = vunpack.c.h.b16 %v232
  %v1058 = vunpack.c.l.b16 %v233
  %v1059 = vunpack.c.l.b16 %v234
  %v1060 = vunpack.c.h.b16 %v234
  %v1061 = vunpack.c.l.b16 %v235
  %v1062 = vunpack.c.h.b16 %v235
  %v1063 = vunpack.c.l.b16 %v236
  %v1064 = vunpack.c.l.b16 %v237
  %v1065 = vunpack.c.h.b16 %v237
  %v1066 = vunpack.c.l.b16 %v238
  %v1067 = vunpack.c.h.b16 %v238
  %v1068 = vunpack.c.l.b16 %v239
  %v1069 = vunpack.c.l.b16 %v240
  %v1070 = vunpack.c.h.b16 %v240
  %v1071 = vunpack.c.l.b16 %v241
  %v1072 = vunpack.c.h.b16 %v241
  %v1073 = vunpack.c.l.b16 %v242
  %v1074 = vunpack.c.l.b16 %v243
  %v1075 = vunpack.c.h.b16 %v243
  %v1076 = vunpack.c.l.b16 %v244
  %v1077 = vunpack.c.h.b16 %v244
  %v1078 = vunpack.c.l.b16 %v245
  %v1079 = vunpack.c.l.b16 %v246
  %v1080 = vunpack.c.h.b16 %v246
  %v1081 = vunpack.c.l.b16 %v247
  %v1082 = vunpack.c.h.b16 %v247
  %v1083 = vunpack.c.l.b16 %v248
  %v1084 = vunpack.c.l.b16 %v249
  %v1085 = vunpack.c.h.b16 %v249
  %v1086 = vunpack.c.l.b16 %v250
  %v1087 = vunpack.c.h.b16 %v250
  %v1088 = vunpack.c.l.b16 %v251
  %v1089 = vunpack.c.l.b16 %v252
  %v1090 = vunpack.c.h.b16 %v252
  %v1091 = vunpack.c.l.b16 %v253
  %v1092 = vunpack.c.h.b16 %v253
  %v1093 = vunpack.c.l.b16 %v254
  %v1094 = vunpack.c.l.b16 %v255
  %v1095 = vunpack.c.h.b16 %v255
  %v1096 = vunpack.c.l.b16 %v256
  %v1097 = vunpack.c.h.b16 %v256
  %v1098 = vunpack.c.l.b16 %v257
  %v1099 = vunpack.c.l.b16 %v258
  %v1100 = vunpack.c.h.b16 %v258
  %v1101 = vunpack.c.l.b16 %v259
  %v1102 = vunpack.c.h.b16 %v259
  %v1103 = vunpack.c.l.b16 %v260
  %v1104 = vunpack.c.l.b16 %v261
  %v1105 = vunpack.c.h.b16 %v261
  %v1106 = vunpack.c.l.b16 %v262
  %v1107 = vunpack.c.h.b16 %v262
  %v1108 = vunpack.c.l.b16 %v263
  %v1109 = vunpack.c.l.b16 %v264
  %v1110 = vunpack.c.h.b16 %v264
  %v1111 = vunpack.c.l.b16 %v265
  %v1112 = vunpack.c.h.b16 %v265
  %v1113 = vunpack.c.l.b16 %v266
  %v1114 = vunpack.c.l.b16 %v267
  %v1115 = vunpack.c.h.b16 %v267
  %v1116 = vunpack.c.l.b16 %v268
  %v1117 = vunpack.c.h.b16 %v268
  %v1118 = vunpack.c.l.b16 %v269
  %v1119 = vunpack.c.l.b16 %v270
  %v1120 = vunpack.c.h.b16 %v270
  %v1121 = vunpack.c.l.b16 %v271
  %v1122 = vunpack.c.h.b16 %v271
  %v1123 = vunpack.c.l.b16 %v272
  %v1124 = vunpack.c.l.b16 %v273
  %v1125 = vunpack.c.h.b16 %v273
  %v1126 = vunpack.c.l.b16 %v274
  %v1127 = vunpack.c.h.b16 %v274
  %v1128 = vunpack.c.l.b16 %v275
  %v1129 = vunpack.c.l.b16 %v276
  %v1130 = vunpack.c.h.b16 %v276
  %v1131 = vunpack.c.l.b16 %v277
  %v1132 = vunpack.c.h.b16 %v277
  %v1133 = vunpack.c.l.b16 %v278
  %v1134 = vunpack.c.l.b16 %v279
  %v1135 = vunpack.c.h.b16 %v279
  %v1136 = vunpack.c.l.b16 %v280
  %v1137 = vunpack.c.h.b16 %v280
  %v1138 = vunpack.c.l.b16 %v281
  %v1139 = vunpack.c.l.b16 %v282
  %v1140 = vunpack.c.h.b16 %v282
  %v1141 = vunpack.c.l.b16 %v283
  %v1142 = vunpack.c.h.b16 %v283
  %v1143 = vunpack.c.l.b16 %v284
  %v1144 = vunpack.c.l.b16 %v285
  %v1145 = vunpack.c.h.b16 %v285
  %v1146 = vunpack.c.l.b16 %v286
  %v1147 = vunpack.c.h.b16 %v286
  %v1148 = vunpack.c.l.b16 %v287
  %v1149 = vunpack.c.l.b16 %v288
  %v1150 = vunpack.c.h.b16 %v288
  %v1151 = vunpack.c.l.b16 %v289
  %v1152 = vunpack.c.h.b16 %v289
  %v1153 = vunpack.c.l.b16 %v290
  %v1154 = vunpack.c.l.b16 %v291
  %v1155 = vunpack.c.h.b16 %v291
  %v1156 = vunpack.c.l.b16 %v292
  %v1157 = vunpack.c.h.b16 %v292
  %v1158 = vunpack.c.l.b16 %v293
  %v1159 = vunpack.c.l.b16 %v294
  %v1160 = vunpack.c.h.b16 %v294
  %v1161 = vunpack.c.l.b16 %v295
  %v1162 = vunpack.c.h.b16 %v295
  %v1163 = vunpack.c.l.b16 %v296
  %v1164 = vunpack.c.l.b16 %v297
  %v1165 = vunpack.c.h.b16 %v297
  %v1166 = vunpack.c.l.b16 %v298
  %v1167 = vunpack.c.h.b16 %v298
  %v1168 = vunpack.c.l.b16 %v299
  %v1169 = vunpack.c.l.b16 %v300
  %v1170 = vunpack.c.h.b16 %v300
  %v1171 = vunpack.c.l.b16 %v301
  %v1172 = vunpack.c.h.b16 %v301
  %v1173 = vunpack.c.l.b16 %v302
  %v1174 = vunpack.c.l.b16 %v303
  %v1175 = vunpack.c.h.b16 %v303
  %v1176 = vunpack.c.l.b16 %v304
  %v1177 = vunpack.c.h.b16 %v304
  %v1178 = vunpack.c.l.b16 %v305
  %v1179 = vunpack.c.l.b16 %v306
  %v1180 = vunpack.c.h.b16 %v306
  %v1181 = vunpack.c.l.b16 %v307
  %v1182 = vunpack.c.h.b16 %v307
  %v1183 = vunpack.c.l.b16 %v308
  %v1184 = vunpack.c.l.b16 %v309
  %v1185 = vunpack.c.h.b16 %v309
  %v1186 = vunpack.c.l.b16 %v310
  %v1187 = vunpack.c.h.b16 %v310
  %v1188 = vunpack.c.l.b16 %v311
  %v1189 = vunpack.c.l.b16 %v312
  %v1190 = vunpack.c.h.b16 %v312
  %v1191 = vunpack.c.l.b16 %v313
  %v1192 = vunpack.c.h.b16 %v313
  %v1193 = vunpack.c.l.b16 %v314
  %v1194 = vpack.c.b16 %v699, %v694
  %v1195 = vpack.c.b16 %v700, %v695
  %v1196 = vpack.c.b16 %v701, %v696
  %v1197 = vpack.c.b16 %v702, %v697
  %v1198 = vpack.c.b16 %v703, %v698
  %v1199 = vpack.c.b16 %v709, %v704
  %v1200 = vpack.c.b16 %v710, %v705
  %v1201 = vpack.c.b16 %v711, %v706
  %v1202 = vpack.c.b16 %v712, %v707
  %v1203 = vpack.c.b16 %v713, %v708
  %v1204 = vpack.c.b16 %v719, %v714
  %v1205 = vpack.c.b16 %v720, %v715
  %v1206 = vpack.c.b16 %v721, %v716
  %v1207 = vpack.c.b16 %v722, %v717
  %v1208 = vpack.c.b16 %v723, %v718
  %v1209 = vpack.c.b16 %v729, %v724
  %v1210 = vpack.c.b16 %v730, %v725
  %v1211 = vpack.c.b16 %v731, %v726
  %v1212 = vpack.c.b16 %v732, %v727
  %v1213 = vpack.c.b16 %v733, %v728
  %v1214 = vpack.c.b16 %v739, %v734
  %v1215 = vpack.c.b16 %v740, %v735
  %v1216 = vpack.c.b16 %v741, %v736
  %v1217 = vpack.c.b16 %v742, %v737
  %v1218 = vpack.c.b16 %v743, %v738
  %v1219 = vpack.c.b16 %v749, %v744
  %v1220 = vpack.c.b16 %v750, %v745
  %v1221 = vpack.c.b16 %v751, %v746
  %v1222 = vpack.c.b16 %v752, %v747
  %v1223 = vpack.c.b16 %v753, %v748
  %v1224 = vpack.c.b16 %v759, %v754
  %v1225 = vpack.c.b16 %v760, %v755
  %v1226 = vpack.c.b16 %v761, %v756
  %v1227 = vpack.c.b16 %v762, %v757
  %v1228 = vpack.c.b16 %v763, %v758
  %v1229 = vpack.c.b16 %v769, %v764
  %v1230 = vpack.c.b16 %v770, %v765
  %v1231 = vpack.c.b16 %v771, %v766
  %v1232 = vpack.c.b16 %v772, %v767
  %v1233 = vpack.c.b16 %v773, %v768
  %v1234 = vpack.c.b16 %v779, %v774
  %v1235 = vpack.c.b16 %v780, %v775
  %v1236 = vpack.c.b16 %v781, %v776
  %v1237 = vpack.c.b16 %v782, %v777
  %v1238 = vpack.c.b16 %v783, %v778
  %v1239 = vpack.c.b16 %v789, %v784
  %v1240 = vpack.c.b16 %v790, %v785
  %v1241 = vpack.c.b16 %v791, %v786
  %v1242 = vpack.c.b16 %v792, %v787
  %v1243 = vpack.c.b16 %v793, %v788
  %v1244 = vpack.c.b16 %v799, %v794
  %v1245 = vpack.c.b16 %v800, %v795
  %v1246 = vpack.c.b16 %v801, %v796
  %v1247 = vpack.c.b16 %v802, %v797
  %v1248 = vpack.c.b16 %v803, %v798
  %v1249 = vpack.c.b16 %v809, %v804
  %v1250 = vpack.c.b16 %v810, %v805
  %v1251 = vpack.c.b16 %v811, %v806
  %v1252 = vpack.c.b16 %v812, %v807
  %v1253 = vpack.c.b16 %v813, %v808
  %v1254 = vpack.c.b16 %v819, %v814
  %v1255 = vpack.c.b16 %v820, %v815
  %v1256 = vpack.c.b16 %v821, %v816
  %v1257 = vpack.c.b16 %v822, %v817
  %v1258 = vpack.c.b16 %v823, %v818
  %v1259 = vpack.c.b16 %v829, %v824
  %v1260 = vpack.c.b16 %v830, %v825
  %v1261 = vpack.c.b16 %v831, %v826
  %v1262 = vpack.c.b16 %v832, %v827
  %v1263 = vpack.c.b16 %v833, %v828
  %v1264 = vpack.c.b16 %v839, %v834
  %v1265 = vpack.c.b16 %v840, %v835
  %v1266 = vpack.c.b16 %v841, %v836
  %v1267 = vpack.c.b16 %v842, %v837
  %v1268 = vpack.c.b16 %v843, %v838
  %v1269 = vpack.c.b16 %v849, %v844
  %v1270 = vpack.c.b16 %v850, %v845
  %v1271 = vpack.c.b16 %v851, %v846
  %v1272 = vpack.c.b16 %v852, %v847
  %v1273 = vpack.c.b16 %v853, %v848
  %v1274 = vpack.c.b16 %v859, %v854
  %v1275 = vpack.c.b16 %v860, %v855
  %v1276 = vpack.c.b16 %v861, %v856
  %v1277 = vpack.c.b16 %v862, %v857
  %v1278 = vpack.c.b16 %v863, %v858
  %v1279 = vpack.c.b16 %v869, %v864
  %v1280 = vpack.c.b16 %v870, %v865
  %v1281 = vpack.c.b16 %v871, %v866
  %v1282 = vpack.c.b16 %v872, %v867
  %v1283 = vpack.c.b16 %v873, %v868
  %v1284 = vpack.c.b16 %v879, %v874
  %v1285 = vpack.c.b16 %v880, %v875
  %v1286 = vpack.c.b16 %v881, %v876
  %v1287 = vpack.c.b16 %v882, %v877
  %v1288 = vpack.c.b16 %v883, %v878
  %v1289 = vpack.c.b16 %v889, %v884
  %v1290 = vpack.c.b16 %v890, %v885
  %v1291 = vpack.c.b16 %v891, %v886
  %v1292 = vpack.c.b16 %v892, %v887
  %v1293 = vpack.c.b16 %v893, %v888
  %v1294 = vpack.c.b16 %v899, %v894
  %v1295 = vpack.c.b16 %v900, %v895
  %v1296 = vpack.c.b16 %v901, %v896
  %v1297 = vpack.c.b16 %v902, %v897
  %v1298 = vpack.c.b16 %v903, %v898
  %v1299 = vpack.c.b16 %v909, %v904
  %v1300 = vpack.c.b16 %v910, %v905
  %v1301 = vpack.c.b16 %v911, %v906
  %v1302 = vpack.c.b16 %v912, %v907
  %v1303 = vpack.c.b16 %v913, %v908
  %v1304 = vpack.c.b16 %v919, %v914
  %v1305 = vpack.c.b16 %v920, %v915
  %v1306 = vpack.c.b16 %v921, %v916
  %v1307 = vpack.c.b16 %v922, %v917
  %v1308 = vpack.c.b16 %v923, %v918
  %v1309 = vpack.c.b16 %v929, %v924
  %v1310 = vpack.c.b16 %v930, %v925
  %v1311 = vpack.c.b16 %v931, %v926
  %v1312 = vpack.c.b16 %v932, %v927
  %v1313 = vpack.c.b16 %v933, %v928
  %v1314 = vpack.c.b16 %v939, %v934
  %v1315 = vpack.c.b16 %v940, %v935
  %v1316 = vpack.c.b16 %v941, %v936
  %v1317 = vpack.c.b16 %v942, %v937
  %v1318 = vpack.c.b16 %v943, %v938
  %v1319 = vpack.c.b16 %v949, %v944
  %v1320 = vpack.c.b16 %v950, %v945
  %v1321 = vpack.c.b16 %v951, %v946
  %v1322 = vpack.c.b16 %v952, %v947
  %v1323 = vpack.c.b16 %v953, %v948
  %v1324 = vpack.c.b16 %v959, %v954
  %v1325 = vpack.c.b16 %v960, %v955
  %v1326 = vpack.c.b16 %v961, %v956
  %v1327 = vpack.c.b16 %v962, %v957
  %v1328 = vpack.c.b16 %v963, %v958
  %v1329 = vpack.c.b16 %v969, %v964
  %v1330 = vpack.c.b16 %v970, %v965
  %v1331 = vpack.c.b16 %v971, %v966
  %v1332 = vpack.c.b16 %v972, %v967
  %v1333 = vpack.c.b16 %v973, %v968
  %v1334 = vpack.c.b16 %v979, %v974
  %v1335 = vpack.c.b16 %v980, %v975
  %v1336 = vpack.c.b16 %v981, %v976
  %v1337 = vpack.c.b16 %v982, %v977
  %v1338 = vpack.c.b16 %v983, %v978
  %v1339 = vpack.c.b16 %v989, %v984
  %v1340 = vpack.c.b16 %v990, %v985
  %v1341 = vpack.c.b16 %v991, %v986
  %v1342 = vpack.c.b16 %v992, %v987
  %v1343 = vpack.c.b16 %v993, %v988
  %v1344 = vpack.c.b16 %v999, %v994
  %v1345 = vpack.c.b16 %v1000, %v995
  %v1346 = vpack.c.b16 %v1001, %v996
  %v1347 = vpack.c.b16 %v1002, %v997
  %v1348 = vpack.c.b16 %v1003, %v998
  %v1349 = vpack.c.b16 %v1009, %v1004
  %v1350 = vpack.c.b16 %v1010, %v1005
  %v1351 = vpack.c.b16 %v1011, %v1006
  %v1352 = vpack.c.b16 %v1012, %v1007
  %v1353 = vpack.c.b16 %v1013, %v1008
  %v1354 = vpack.c.b16 %v1019, %v1014
  %v1355 = vpack.c.b16 %v1020, %v1015
  %v1356 = vpack.c.b16 %v1021, %v1016
  %v1357 = vpack.c.b16 %v1022, %v1017
  %v1358 = vpack.c.b16 %v1023, %v1018
  %v1359 = vpack.c.b16 %v1029, %v1024
  %v1360 = vpack.c.b16 %v1030, %v1025
  %v1361 = vpack.c.b16 %v1031, %v1026
  %v1362 = vpack.c.b16 %v1032, %v1027
  %v1363 = vpack.c.b16 %v1033, %v1028
  %v1364 = vpack.c.b16 %v1039, %v1034
  %v1365 = vpack.c.b16 %v1040, %v1035
  %v1366 = vpack.c.b16 %v1041, %v1036
  %v1367 = vpack.c.b16 %v1042, %v1037
  %v1368 = vpack.c.b16 %v1043, %v1038
  %v1369 = vpack.c.b16 %v1049, %v1044
  %v1370 = vpack.c.b16 %v1050, %v1045
  %v1371 = vpack.c.b16 %v1051, %v1046
  %v1372 = vpack.c.b16 %v1052, %v1047
  %v1373 = vpack.c.b16 %v1053, %v1048
  %v1374 = vpack.c.b16 %v1059, %v1054
  %v1375 = vpack.c.b16 %v1060, %v1055
  %v1376 = vpack.c.b16 %v1061, %v1056
  %v1377 = vpack.c.b16 %v1062, %v1057
  %v1378 = vpack.c.b16 %v1063, %v1058
  %v1379 = vpack.c.b16 %v1069, %v1064
  %v1380 = vpack.c.b16 %v1070, %v1065
  %v1381 = vpack.c.b16 %v1071, %v1066
  %v1382 = vpack.c.b16 %v1072, %v1067
  %v1383 = vpack.c.b16 %v1073, %v1068
  %v1384 = vpack.c.b16 %v1079, %v1074
  %v1385 = vpack.c.b16 %v1080, %v1075
  %v1386 = vpack.c.b16 %v1081, %v1076
  %v1387 = vpack.c.b16 %v1082, %v1077
  %v1388 = vpack.c.b16 %v1083, %v1078
  %v1389 = vpack.c.b16 %v1089, %v1084
  %v1390 = vpack.c.b16 %v1090, %v1085
  %v1391 = vpack.c.b16 %v1091, %v1086
  %v1392 = vpack.c.b16 %v1092, %v1087
  %v1393 = vpack.c.b16 %v1093, %v1088
  %v1394 = vpack.c.b16 %v1099, %v1094
  %v1395 = vpack.c.b16 %v1100, %v1095
  %v1396 = vpack.c.b16 %v1101, %v1096
  %v1397 = vpack.c.b16 %v1102, %v1097
  %v1398 = vpack.c.b16 %v1103, %v1098
  %v1399 = vpack.c.b16 %v1109, %v1104
  %v1400 = vpack.c.b16 %v1110, %v1105
  %v1401 = vpack.c.b16 %v1111, %v1106
  %v1402 = vpack.c.b16 %v1112, %v1107
  %v1403 = vpack.c.b16 %v1113, %v1108
  %v1404 = vpack.c.b16 %v1119, %v1114
  %v1405 = vpack.c.b16 %v1120, %v1115
  %v1406 = vpack.c.b16 %v1121, %v1116
  %v1407 = vpack.c.b16 %v1122, %v1117
  %v1408 = vpack.c.b16 %v1123, %v1118
  %v1409 = vpack.c.b16 %v1129, %v1124
  %v1410 = vpack.c.b16 %v1130, %v1125
  %v1411 = vpack.c.b16 %v1131, %v1126
  %v1412 = vpack.c.b16 %v1132, %v1127
  %v1413 = vpack.c.b16 %v1133, %v1128
  %v1414 = vpack.c.b16 %v1139, %v1134
  %v1415 = vpack.c.b16 %v1140, %v1135
  %v1416 = vpack.c.b16 %v1141, %v1136
  %v1417 = vpack.c.b16 %v1142, %v1137
  %v1418 = vpack.c.b16 %v1143, %v1138
  %v1419 = vpack.c.b16 %v1149, %v1144
  %v1420 = vpack.c.b16 %v1150, %v1145
  %v1421 = vpack.c.b16 %v1151, %v1146
  %v1422 = vpack.c.b16 %v1152, %v1147
  %v1423 = vpack.c.b16 %v1153, %v1148
  %v1424 = vpack.c.b16 %v1159, %v1154
  %v1425 = vpack.c.b16 %v1160, %v1155
  %v1426 = vpack.c.b16 %v1161, %v1156
  %v1427 = vpack.c.b16 %v1162, %v1157
  %v1428 = vpack.c.b16 %v1163, %v1158
  %v1429 = vpack.c.b16 %v1169, %v1164
  %v1430 = vpack.c.b16 %v1170, %v1165
  %v1431 = vpack.c.b16 %v1171, %v1166
  %v1432 = vpack.c.b16 %v1172, %v1167
  %v1433 = vpack.c.b16 %v1173, %v1168
  %v1434 = vpack.c.b16 %v1179, %v1174
  %v1435 = vpack.c.b16 %v1180, %v1175
  %v1436 = vpack.c.b16 %v1181, %v1176
  %v1437 = vpack.c.b16 %v1182, %v1177
  %v1438 = vpack.c.b16 %v1183, %v1178
  %v1439 = vpack.c.b16 %v1189, %v1184
  %v1440 = vpack.c.b16 %v1190, %v1185
  %v1441 = vpack.c.b16 %v1191, %v1186
  %v1442 = vpack.c.b16 %v1192, %v1187
  %v1443 = vpack.c.b16 %v1193, %v1188
  %v1716 = vunpack.c.l.b16 %v315
  %v1717 = vunpack.c.l.b16 %v316
  %v1718 = vunpack.c.l.b16 %v317
  %v1719 = vunpack.c.l.b16 %v318
  %v1720 = vunpack.c.l.b16 %v319
  %v1721 = vunpack.c.l.b16 %v320
  %v1722 = vunpack.c.l.b16 %v321
  %v1723 = vunpack.c.l.b16 %v322
  %v1724 = vunpack.c.l.b16 %v323
  %v1725 = vunpack.c.l.b16 %v324
  %v1726 = vunpack.c.l.b16 %v325
  %v1727 = vunpack.c.l.b16 %v326
  %v1728 = vunpack.c.l.b16 %v327
  %v1729 = vunpack.c.l.b16 %v328
  %v1730 = vunpack.c.l.b16 %v329
  %v1731 = vunpack.c.l.b16 %v330
  %v1732 = vunpack.c.l.b16 %v331
  %v1733 = vunpack.c.l.b16 %v332
  %v1734 = vunpack.c.l.b16 %v333
  %v1735 = vunpack.c.l.b16 %v334
  %v1736 = vunpack.c.l.b16 %v335
  %v1737 = vunpack.c.l.b16 %v336
  %v1738 = vunpack.c.l.b16 %v337
  %v1739 = vunpack.c.l.b16 %v338
  %v1740 = vunpack.c.l.b16 %v339
  %v1741 = vunpack.c.l.b16 %v340
  %v1742 = vunpack.c.l.b16 %v341
  %v1743 = vunpack.c.l.b16 %v342
  %v1744 = vunpack.c.l.b16 %v343
  %v1745 = vunpack.c.l.b16 %v344
  %v1746 = vunpack.c.l.b16 %v345
  %v1747 = vunpack.c.l.b16 %v346
  %v1748 = vunpack.c.l.b16 %v347
  %v1749 = vunpack.c.l.b16 %v348
  %v1750 = vunpack.c.l.b16 %v349
  %v1751 = vunpack.c.l.b16 %v350
  %v1752 = vunpack.c.l.b16 %v351
  %v1753 = vunpack.c.l.b16 %v352
  %v1754 = vunpack.c.l.b16 %v353
  %v1755 = vunpack.c.l.b16 %v354
  %v1756 = vunpack.c.l.b16 %v355
  %v1757 = vunpack.c.l.b16 %v356
  %v1758 = vunpack.c.l.b16 %v357
  %v1759 = vunpack.c.l.b16 %v358
  %v1760 = vunpack.c.l.b16 %v359
  %v1761 = vunpack.c.l.b16 %v360
  %v1762 = vunpack.c.l.b16 %v361
  %v1763 = vunpack.c.l.b16 %v362
  %v1764 = vunpack.c.l.b16 %v363
  %v1765 = vunpack.c.l.b16 %v364
  %v1766 = vunpack.c.l.b16 %v365
  %v1767 = vunpack.c.l.b16 %v366
  %v1768 = vunpack.c.l.b16 %v367
  %v1769 = vunpack.c.l.b16 %v368
  %v1770 = vunpack.c.l.b16 %v369
  %v1771 = vunpack.c.l.b16 %v370
  %v1772 = vunpack.c.l.b16 %v371
  %v1773 = vunpack.c.l.b16 %v372
  %v1774 = vunpack.c.l.b16 %v373
  %v1775 = vunpack.c.l.b16 %v374
  %v1776 = vunpack.c.l.b16 %v375
  %v1777 = vunpack.c.l.b16 %v376
  %v1778 = vunpack.c.l.b16 %v377
  %v1779 = vunpack.c.l.b16 %v378
  %v1780 = vunpack.c.l.b16 %v379
  %v1781 = vunpack.c.l.b16 %v380
  %v1782 = vunpack.c.l.b16 %v381
  %v1783 = vunpack.c.l.b16 %v382
  %v1784 = vunpack.c.l.b16 %v383
  %v1785 = vunpack.c.l.b16 %v384
  %v1786 = vunpack.c.l.b16 %v385
  %v1787 = vunpack.c.l.b16 %v386
  %v1788 = vpack.c.b16 %v1717, %v1716
  %v1789 = vpack.c.b16 %v1719, %v1718
  %v1790 = vpack.c.b16 %v1721, %v1720
  %v1791 = vpack.c.b16 %v1723, %v1722
  %v1792 = vpack.c.b16 %v1725, %v1724
  %v1793 = vpack.c.b16 %v1727, %v1726
  %v1794 = vpack.c.b16 %v1729, %v1728
  %v1795 = vpack.c.b16 %v1731, %v1730
  %v1796 = vpack.c.b16 %v1733, %v1732
  %v1797 = vpack.c.b16 %v1735, %v1734
  %v1798 = vpack.c.b16 %v1737, %v1736
  %v1799 = vpack.c.b16 %v1739, %v1738
  %v1800 = vpack.c.b16 %v1741, %v1740
  %v1801 = vpack.c.b16 %v1743, %v1742
  %v1802 = vpack.c.b16 %v1745, %v1744
  %v1803 = vpack.c.b16 %v1747, %v1746
  %v1804 = vpack.c.b16 %v1749, %v1748
  %v1805 = vpack.c.b16 %v1751, %v1750
  %v1806 = vpack.c.b16 %v1753, %v1752
  %v1807 = vpack.c.b16 %v1755, %v1754
  %v1808 = vpack.c.b16 %v1757, %v1756
  %v1809 = vpack.c.b16 %v1759, %v1758
  %v1810 = vpack.c.b16 %v1761, %v1760
  %v1811 = vpack.c.b16 %v1763, %v1762
  %v1812 = vpack.c.b16 %v1765, %v1764
  %v1813 = vpack.c.b16 %v1767, %v1766
  %v1814 = vpack.c.b16 %v1769, %v1768
  %v1815 = vpack.c.b16 %v1771, %v1770
  %v1816 = vpack.c.b16 %v1773, %v1772
  %v1817 = vpack.c.b16 %v1775, %v1774
  %v1818 = vpack.c.b16 %v1777, %v1776
  %v1819 = vpack.c.b16 %v1779, %v1778
  %v1820 = vpack.c.b16 %v1781, %v1780
  %v1821 = vpack.c.b16 %v1783, %v1782
  %v1822 = vpack.c.b16 %v1785, %v1784
  %v1823 = vpack.c.b16 %v1787, %v1786
  %vm1860 = vcmask 523264
  %v1862 = vsel %vm1860, %v1198, 0
  %v1865 = vsel %vm1860, %v1203, 0
  %v1868 = vsel %vm1860, %v1208, 0
  %v1871 = vsel %vm1860, %v1213, 0
  %v1874 = vsel %vm1860, %v1218, 0
  %v1877 = vsel %vm1860, %v1223, 0
  %v1880 = vsel %vm1860, %v1228, 0
  %v1883 = vsel %vm1860, %v1233, 0
  %v1886 = vsel %vm1860, %v1238, 0
  %v1889 = vsel %vm1860, %v1243, 0
  %v1892 = vsel %vm1860, %v1248, 0
  %v1895 = vsel %vm1860, %v1253, 0
  %v1898 = vsel %vm1860, %v1258, 0
  %v1901 = vsel %vm1860, %v1263, 0
  %v1904 = vsel %vm1860, %v1268, 0
  %v1907 = vsel %vm1860, %v1273, 0
  %v1910 = vsel %vm1860, %v1278, 0
  %v1913 = vsel %vm1860, %v1283, 0
  %v1916 = vsel %vm1860, %v1288, 0
  %v1919 = vsel %vm1860, %v1293, 0
  %v1922 = vsel %vm1860, %v1298, 0
  %v1925 = vsel %vm1860, %v1303, 0
  %v1928 = vsel %vm1860, %v1308, 0
  %v1931 = vsel %vm1860, %v1313, 0
  %v1934 = vsel %vm1860, %v1318, 0
  %v1937 = vsel %vm1860, %v1323, 0
  %v1940 = vsel %vm1860, %v1328, 0
  %v1943 = vsel %vm1860, %v1333, 0
  %v1946 = vsel %vm1860, %v1338, 0
  %v1949 = vsel %vm1860, %v1343, 0
  %v1952 = vsel %vm1860, %v1348, 0
  %v1955 = vsel %vm1860, %v1353, 0
  %v1958 = vsel %vm1860, %v1358, 0
  %v1961 = vsel %vm1860, %v1363, 0
  %v1964 = vsel %vm1860, %v1368, 0
  %v1967 = vsel %vm1860, %v1373, 0
  %v1970 = vsel %vm1860, %v1378, 0
  %v1973 = vsel %vm1860, %v1383, 0
  %v1976 = vsel %vm1860, %v1388, 0
  %v1979 = vsel %vm1860, %v1393, 0
  %v1982 = vsel %vm1860, %v1398, 0
  %v1985 = vsel %vm1860, %v1403, 0
  %v1988 = vsel %vm1860, %v1408, 0
  %v1991 = vsel %vm1860, %v1413, 0
  %v1994 = vsel %vm1860, %v1418, 0
  %v1997 = vsel %vm1860, %v1423, 0
  %v2000 = vsel %vm1860, %v1428, 0
  %v2003 = vsel %vm1860, %v1433, 0
  %v2006 = vsel %vm1860, %v1438, 0
  %v2009 = vsel %vm1860, %v1443, 0
  %2011 = vmatprep.subr.bf16.mxu0 0
  %2012 = vmatpush1.bf16.msra.mxu0 %v1788
  %2013 = vmatprep.subr.bf16.mxu0 0
  %2014 = vmatpush1.bf16.msra.mxu0 %v1789
  %2015 = vmatprep.subr.bf16.mxu0 0
  %2016 = vmatpush1.bf16.msra.mxu0 %v1790
  %2017 = vmatprep.subr.bf16.mxu0 0
  %2018 = vmatpush1.bf16.msra.mxu0 %v1791
  %2019 = vmatprep.subr.bf16.mxu0 0
  %2020 = vmatpush1.bf16.msra.mxu0 %v1792
  %2021 = vmatprep.subr.bf16.mxu0 0
  %2022 = vmatpush1.bf16.msra.mxu0 %v1793
  %2023 = vmatprep.subr.bf16.mxu0 0
  %2024 = vmatpush1.bf16.msra.mxu0 %v1794
  %2025 = vmatprep.subr.bf16.mxu0 0
  %2026 = vmatpush1.bf16.msra.mxu0 %v1795
  %2027 = vmatprep.subr.bf16.mxu0 0
  %2028 = vmatpush1.bf16.msra.mxu0 %v1796
  %2029 = vmatprep.subr.bf16.mxu0 0
  %2030 = vmatpush1.bf16.msra.mxu0 %v1797
  %2031 = vmatprep.subr.bf16.mxu0 0
  %2032 = vmatpush1.bf16.msra.mxu0 %v1798
  %2033 = vmatprep.subr.bf16.mxu0 0
  %2034 = vmatpush1.bf16.msra.mxu0 %v1799
  %2035 = vmatprep.subr.bf16.mxu0 0
  %2036 = vmatpush1.bf16.msra.mxu0 %v1800
  %2037 = vmatprep.subr.bf16.mxu0 0
  %2038 = vmatpush1.bf16.msra.mxu0 %v1801
  %2039 = vmatprep.subr.bf16.mxu0 0
  %2040 = vmatpush1.bf16.msra.mxu0 %v1802
  %2041 = vmatprep.subr.bf16.mxu0 0
  %2042 = vmatpush1.bf16.msra.mxu0 %v1803
  %2043 = vmatprep.mubr.bf16.mxu0 %v1195
  %2044 = vmatmul.mubr.bf16.gmra.mrb[0].mxu0 %v1194
  %v2045 = vpop.f32.mrb[0].mxu0
  %v2046 = vadd.f32 %v392, %v2045
  %v2047 = vpop.f32.mrb[0].mxu0
  %v2048 = vpop.f32.mrb[0].mxu0
  %v2049 = vadd.f32 %v392, %v2048
  %v2050 = vpop.f32.mrb[0].mxu0
  %2051 = vmatprep.mubr.bf16.mxu0 %v1200
  %2052 = vmatmul.mubr.bf16.gmra.mrb[0].mxu0 %v1199
  %v2053 = vpop.f32.mrb[0].mxu0
  %v2054 = vadd.f32 %v392, %v2053
  %v2055 = vpop.f32.mrb[0].mxu0
  %v2056 = vpop.f32.mrb[0].mxu0
  %v2057 = vadd.f32 %v392, %v2056
  %v2058 = vpop.f32.mrb[0].mxu0
  %2059 = vmatprep.mubr.bf16.mxu0 %v1205
  %2060 = vmatmul.mubr.bf16.gmra.mrb[0].mxu0 %v1204
  %v2061 = vpop.f32.mrb[0].mxu0
  %v2062 = vadd.f32 %v392, %v2061
  %v2063 = vpop.f32.mrb[0].mxu0
  %v2064 = vpop.f32.mrb[0].mxu0
  %v2065 = vadd.f32 %v392, %v2064
  %v2066 = vpop.f32.mrb[0].mxu0
  %2067 = vmatprep.mubr.bf16.mxu0 %v1210
  %2068 = vmatmul.mubr.bf16.gmra.mrb[0].mxu0 %v1209
  %v2069 = vpop.f32.mrb[0].mxu0
  %v2070 = vadd.f32 %v392, %v2069
  %v2071 = vpop.f32.mrb[0].mxu0
  %v2072 = vpop.f32.mrb[0].mxu0
  %v2073 = vadd.f32 %v392, %v2072
  %v2074 = vpop.f32.mrb[0].mxu0
  %2075 = vmatprep.mubr.bf16.mxu0 %v1215
  %2076 = vmatmul.mubr.bf16.gmra.mrb[0].mxu0 %v1214
  %v2077 = vpop.f32.mrb[0].mxu0
  %v2078 = vadd.f32 %v392, %v2077
  %v2079 = vpop.f32.mrb[0].mxu0
  %v2080 = vpop.f32.mrb[0].mxu0
  %v2081 = vadd.f32 %v392, %v2080
  %v2082 = vpop.f32.mrb[0].mxu0
  %2083 = vmatprep.mubr.bf16.mxu0 %v1220
  %2084 = vmatmul.mubr.bf16.gmra.mrb[0].mxu0 %v1219
  %v2085 = vpop.f32.mrb[0].mxu0
  %v2086 = vadd.f32 %v392, %v2085
  %v2087 = vpop.f32.mrb[0].mxu0
  %v2088 = vpop.f32.mrb[0].mxu0
  %v2089 = vadd.f32 %v392, %v2088
  %v2090 = vpop.f32.mrb[0].mxu0
  %2091 = vmatprep.mubr.bf16.mxu0 %v1225
  %2092 = vmatmul.mubr.bf16.gmra.mrb[0].mxu0 %v1224
  %v2093 = vpop.f32.mrb[0].mxu0
  %v2094 = vadd.f32 %v392, %v2093
  %v2095 = vpop.f32.mrb[0].mxu0
  %v2096 = vpop.f32.mrb[0].mxu0
  %v2097 = vadd.f32 %v392, %v2096
  %v2098 = vpop.f32.mrb[0].mxu0
  %2099 = vmatprep.mubr.bf16.mxu0 %v1230
  %2100 = vmatmul.mubr.bf16.gmra.mrb[0].mxu0 %v1229
  %v2101 = vpop.f32.mrb[0].mxu0
  %v2102 = vadd.f32 %v392, %v2101
  %v2103 = vpop.f32.mrb[0].mxu0
  %v2104 = vpop.f32.mrb[0].mxu0
  %v2105 = vadd.f32 %v392, %v2104
  %v2106 = vpop.f32.mrb[0].mxu0
  %2107 = vmatprep.mubr.bf16.mxu0 %v1235
  %2108 = vmatmul.mubr.bf16.gmra.mrb[0].mxu0 %v1234
  %v2109 = vpop.f32.mrb[0].mxu0
  %v2110 = vadd.f32 %v392, %v2109
  %v2111 = vpop.f32.mrb[0].mxu0
  %v2112 = vpop.f32.mrb[0].mxu0
  %v2113 = vadd.f32 %v392, %v2112
  %v2114 = vpop.f32.mrb[0].mxu0
  %2115 = vmatprep.mubr.bf16.mxu0 %v1240
  %2116 = vmatmul.mubr.bf16.gmra.mrb[0].mxu0 %v1239
  %v2117 = vpop.f32.mrb[0].mxu0
  %v2118 = vadd.f32 %v392, %v2117
  %v2119 = vpop.f32.mrb[0].mxu0
  %v2120 = vpop.f32.mrb[0].mxu0
  %v2121 = vadd.f32 %v392, %v2120
  %v2122 = vpop.f32.mrb[0].mxu0
  %2123 = vmatprep.mubr.bf16.mxu0 %v1245
  %2124 = vmatmul.mubr.bf16.gmra.mrb[0].mxu0 %v1244
  %v2125 = vpop.f32.mrb[0].mxu0
  %v2126 = vadd.f32 %v392, %v2125
  %v2127 = vpop.f32.mrb[0].mxu0
  %v2128 = vpop.f32.mrb[0].mxu0
  %v2129 = vadd.f32 %v392, %v2128
  %v2130 = vpop.f32.mrb[0].mxu0
  %2131 = vmatprep.mubr.bf16.mxu0 %v1250
  %2132 = vmatmul.mubr.bf16.gmra.mrb[0].mxu0 %v1249
  %v2133 = vpop.f32.mrb[0].mxu0
  %v2134 = vadd.f32 %v392, %v2133
  %v2135 = vpop.f32.mrb[0].mxu0
  %v2136 = vpop.f32.mrb[0].mxu0
  %v2137 = vadd.f32 %v392, %v2136
  %v2138 = vpop.f32.mrb[0].mxu0
  %2139 = vmatprep.mubr.bf16.mxu0 %v1255
  %2140 = vmatmul.mubr.bf16.gmra.mrb[0].mxu0 %v1254
  %v2141 = vpop.f32.mrb[0].mxu0
  %v2142 = vadd.f32 %v392, %v2141
  %v2143 = vpop.f32.mrb[0].mxu0
  %v2144 = vpop.f32.mrb[0].mxu0
  %v2145 = vadd.f32 %v392, %v2144
  %v2146 = vpop.f32.mrb[0].mxu0
  %2147 = vmatprep.mubr.bf16.mxu0 %v1260
  %2148 = vmatmul.mubr.bf16.gmra.mrb[0].mxu0 %v1259
  %v2149 = vpop.f32.mrb[0].mxu0
  %v2150 = vadd.f32 %v392, %v2149
  %v2151 = vpop.f32.mrb[0].mxu0
  %v2152 = vpop.f32.mrb[0].mxu0
  %v2153 = vadd.f32 %v392, %v2152
  %v2154 = vpop.f32.mrb[0].mxu0
  %2155 = vmatprep.mubr.bf16.mxu0 %v1265
  %2156 = vmatmul.mubr.bf16.gmra.mrb[0].mxu0 %v1264
  %v2157 = vpop.f32.mrb[0].mxu0
  %v2158 = vadd.f32 %v392, %v2157
  %v2159 = vpop.f32.mrb[0].mxu0
  %v2160 = vpop.f32.mrb[0].mxu0
  %v2161 = vadd.f32 %v392, %v2160
  %v2162 = vpop.f32.mrb[0].mxu0
  %2163 = vmatprep.mubr.bf16.mxu0 %v1270
  %2164 = vmatmul.mubr.bf16.gmra.mrb[0].mxu0 %v1269
  %v2165 = vpop.f32.mrb[0].mxu0
  %v2166 = vadd.f32 %v392, %v2165
  %v2167 = vpop.f32.mrb[0].mxu0
  %v2168 = vpop.f32.mrb[0].mxu0
  %v2169 = vadd.f32 %v392, %v2168
  %v2170 = vpop.f32.mrb[0].mxu0
  %2171 = vmatprep.mubr.bf16.mxu0 %v1275
  %2172 = vmatmul.mubr.bf16.gmra.mrb[0].mxu0 %v1274
  %v2173 = vpop.f32.mrb[0].mxu0
  %v2174 = vadd.f32 %v392, %v2173
  %v2175 = vpop.f32.mrb[0].mxu0
  %v2176 = vpop.f32.mrb[0].mxu0
  %v2177 = vadd.f32 %v392, %v2176
  %v2178 = vpop.f32.mrb[0].mxu0
  %2179 = vmatprep.mubr.bf16.mxu0 %v1280
  %2180 = vmatmul.mubr.bf16.gmra.mrb[0].mxu0 %v1279
  %v2181 = vpop.f32.mrb[0].mxu0
  %v2182 = vadd.f32 %v392, %v2181
  %v2183 = vpop.f32.mrb[0].mxu0
  %v2184 = vpop.f32.mrb[0].mxu0
  %v2185 = vadd.f32 %v392, %v2184
  %v2186 = vpop.f32.mrb[0].mxu0
  %2187 = vmatprep.mubr.bf16.mxu0 %v1285
  %2188 = vmatmul.mubr.bf16.gmra.mrb[0].mxu0 %v1284
  %v2189 = vpop.f32.mrb[0].mxu0
  %v2190 = vadd.f32 %v392, %v2189
  %v2191 = vpop.f32.mrb[0].mxu0
  %v2192 = vpop.f32.mrb[0].mxu0
  %v2193 = vadd.f32 %v392, %v2192
  %v2194 = vpop.f32.mrb[0].mxu0
  %2195 = vmatprep.mubr.bf16.mxu0 %v1290
  %2196 = vmatmul.mubr.bf16.gmra.mrb[0].mxu0 %v1289
  %v2197 = vpop.f32.mrb[0].mxu0
  %v2198 = vadd.f32 %v392, %v2197
  %v2199 = vpop.f32.mrb[0].mxu0
  %v2200 = vpop.f32.mrb[0].mxu0
  %v2201 = vadd.f32 %v392, %v2200
  %v2202 = vpop.f32.mrb[0].mxu0
  %2203 = vmatprep.mubr.bf16.mxu0 %v1295
  %2204 = vmatmul.mubr.bf16.gmra.mrb[0].mxu0 %v1294
  %v2205 = vpop.f32.mrb[0].mxu0
  %v2206 = vadd.f32 %v392, %v2205
  %v2207 = vpop.f32.mrb[0].mxu0
  %v2208 = vpop.f32.mrb[0].mxu0
  %v2209 = vadd.f32 %v392, %v2208
  %v2210 = vpop.f32.mrb[0].mxu0
  %2211 = vmatprep.mubr.bf16.mxu0 %v1300
  %2212 = vmatmul.mubr.bf16.gmra.mrb[0].mxu0 %v1299
  %v2213 = vpop.f32.mrb[0].mxu0
  %v2214 = vadd.f32 %v392, %v2213
  %v2215 = vpop.f32.mrb[0].mxu0
  %v2216 = vpop.f32.mrb[0].mxu0
  %v2217 = vadd.f32 %v392, %v2216
  %v2218 = vpop.f32.mrb[0].mxu0
  %2219 = vmatprep.mubr.bf16.mxu0 %v1305
  %2220 = vmatmul.mubr.bf16.gmra.mrb[0].mxu0 %v1304
  %v2221 = vpop.f32.mrb[0].mxu0
  %v2222 = vadd.f32 %v392, %v2221
  %v2223 = vpop.f32.mrb[0].mxu0
  %v2224 = vpop.f32.mrb[0].mxu0
  %v2225 = vadd.f32 %v392, %v2224
  %v2226 = vpop.f32.mrb[0].mxu0
  %2227 = vmatprep.mubr.bf16.mxu0 %v1310
  %2228 = vmatmul.mubr.bf16.gmra.mrb[0].mxu0 %v1309
  %v2229 = vpop.f32.mrb[0].mxu0
  %v2230 = vadd.f32 %v392, %v2229
  %v2231 = vpop.f32.mrb[0].mxu0
  %v2232 = vpop.f32.mrb[0].mxu0
  %v2233 = vadd.f32 %v392, %v2232
  %v2234 = vpop.f32.mrb[0].mxu0
  %2235 = vmatprep.mubr.bf16.mxu0 %v1315
  %2236 = vmatmul.mubr.bf16.gmra.mrb[0].mxu0 %v1314
  %v2237 = vpop.f32.mrb[0].mxu0
  %v2238 = vadd.f32 %v392, %v2237
  %v2239 = vpop.f32.mrb[0].mxu0
  %v2240 = vpop.f32.mrb[0].mxu0
  %v2241 = vadd.f32 %v392, %v2240
  %v2242 = vpop.f32.mrb[0].mxu0
  %2243 = vmatprep.mubr.bf16.mxu0 %v1320
  %2244 = vmatmul.mubr.bf16.gmra.mrb[0].mxu0 %v1319
  %v2245 = vpop.f32.mrb[0].mxu0
  %v2246 = vadd.f32 %v392, %v2245
  %v2247 = vpop.f32.mrb[0].mxu0
  %v2248 = vpop.f32.mrb[0].mxu0
  %v2249 = vadd.f32 %v392, %v2248
  %v2250 = vpop.f32.mrb[0].mxu0
  %2251 = vmatprep.mubr.bf16.mxu0 %v1325
  %2252 = vmatmul.mubr.bf16.gmra.mrb[0].mxu0 %v1324
  %v2253 = vpop.f32.mrb[0].mxu0
  %v2254 = vadd.f32 %v392, %v2253
  %v2255 = vpop.f32.mrb[0].mxu0
  %v2256 = vpop.f32.mrb[0].mxu0
  %v2257 = vadd.f32 %v392, %v2256
  %v2258 = vpop.f32.mrb[0].mxu0
  %2259 = vmatprep.mubr.bf16.mxu0 %v1330
  %2260 = vmatmul.mubr.bf16.gmra.mrb[0].mxu0 %v1329
  %v2261 = vpop.f32.mrb[0].mxu0
  %v2262 = vadd.f32 %v392, %v2261
  %v2263 = vpop.f32.mrb[0].mxu0
  %v2264 = vpop.f32.mrb[0].mxu0
  %v2265 = vadd.f32 %v392, %v2264
  %v2266 = vpop.f32.mrb[0].mxu0
  %2267 = vmatprep.mubr.bf16.mxu0 %v1335
  %2268 = vmatmul.mubr.bf16.gmra.mrb[0].mxu0 %v1334
  %v2269 = vpop.f32.mrb[0].mxu0
  %v2270 = vadd.f32 %v392, %v2269
  %v2271 = vpop.f32.mrb[0].mxu0
  %v2272 = vpop.f32.mrb[0].mxu0
  %v2273 = vadd.f32 %v392, %v2272
  %v2274 = vpop.f32.mrb[0].mxu0
  %2275 = vmatprep.mubr.bf16.mxu0 %v1340
  %2276 = vmatmul.mubr.bf16.gmra.mrb[0].mxu0 %v1339
  %v2277 = vpop.f32.mrb[0].mxu0
  %v2278 = vadd.f32 %v392, %v2277
  %v2279 = vpop.f32.mrb[0].mxu0
  %v2280 = vpop.f32.mrb[0].mxu0
  %v2281 = vadd.f32 %v392, %v2280
  %v2282 = vpop.f32.mrb[0].mxu0
  %2283 = vmatprep.mubr.bf16.mxu0 %v1345
  %2284 = vmatmul.mubr.bf16.gmra.mrb[0].mxu0 %v1344
  %v2285 = vpop.f32.mrb[0].mxu0
  %v2286 = vadd.f32 %v392, %v2285
  %v2287 = vpop.f32.mrb[0].mxu0
  %v2288 = vpop.f32.mrb[0].mxu0
  %v2289 = vadd.f32 %v392, %v2288
  %v2290 = vpop.f32.mrb[0].mxu0
  %2291 = vmatprep.mubr.bf16.mxu0 %v1350
  %2292 = vmatmul.mubr.bf16.gmra.mrb[0].mxu0 %v1349
  %v2293 = vpop.f32.mrb[0].mxu0
  %v2294 = vadd.f32 %v392, %v2293
  %v2295 = vpop.f32.mrb[0].mxu0
  %v2296 = vpop.f32.mrb[0].mxu0
  %v2297 = vadd.f32 %v392, %v2296
  %v2298 = vpop.f32.mrb[0].mxu0
  %2299 = vmatprep.mubr.bf16.mxu0 %v1355
  %2300 = vmatmul.mubr.bf16.gmra.mrb[0].mxu0 %v1354
  %v2301 = vpop.f32.mrb[0].mxu0
  %v2302 = vadd.f32 %v392, %v2301
  %v2303 = vpop.f32.mrb[0].mxu0
  %v2304 = vpop.f32.mrb[0].mxu0
  %v2305 = vadd.f32 %v392, %v2304
  %v2306 = vpop.f32.mrb[0].mxu0
  %2307 = vmatprep.mubr.bf16.mxu0 %v1360
  %2308 = vmatmul.mubr.bf16.gmra.mrb[0].mxu0 %v1359
  %v2309 = vpop.f32.mrb[0].mxu0
  %v2310 = vadd.f32 %v392, %v2309
  %v2311 = vpop.f32.mrb[0].mxu0
  %v2312 = vpop.f32.mrb[0].mxu0
  %v2313 = vadd.f32 %v392, %v2312
  %v2314 = vpop.f32.mrb[0].mxu0
  %2315 = vmatprep.mubr.bf16.mxu0 %v1365
  %2316 = vmatmul.mubr.bf16.gmra.mrb[0].mxu0 %v1364
  %v2317 = vpop.f32.mrb[0].mxu0
  %v2318 = vadd.f32 %v392, %v2317
  %v2319 = vpop.f32.mrb[0].mxu0
  %v2320 = vpop.f32.mrb[0].mxu0
  %v2321 = vadd.f32 %v392, %v2320
  %v2322 = vpop.f32.mrb[0].mxu0
  %2323 = vmatprep.mubr.bf16.mxu0 %v1370
  %2324 = vmatmul.mubr.bf16.gmra.mrb[0].mxu0 %v1369
  %v2325 = vpop.f32.mrb[0].mxu0
  %v2326 = vadd.f32 %v392, %v2325
  %v2327 = vpop.f32.mrb[0].mxu0
  %v2328 = vpop.f32.mrb[0].mxu0
  %v2329 = vadd.f32 %v392, %v2328
  %v2330 = vpop.f32.mrb[0].mxu0
  %2331 = vmatprep.mubr.bf16.mxu0 %v1375
  %2332 = vmatmul.mubr.bf16.gmra.mrb[0].mxu0 %v1374
  %v2333 = vpop.f32.mrb[0].mxu0
  %v2334 = vadd.f32 %v392, %v2333
  %v2335 = vpop.f32.mrb[0].mxu0
  %v2336 = vpop.f32.mrb[0].mxu0
  %v2337 = vadd.f32 %v392, %v2336
  %v2338 = vpop.f32.mrb[0].mxu0
  %2339 = vmatprep.mubr.bf16.mxu0 %v1380
  %2340 = vmatmul.mubr.bf16.gmra.mrb[0].mxu0 %v1379
  %v2341 = vpop.f32.mrb[0].mxu0
  %v2342 = vadd.f32 %v392, %v2341
  %v2343 = vpop.f32.mrb[0].mxu0
  %v2344 = vpop.f32.mrb[0].mxu0
  %v2345 = vadd.f32 %v392, %v2344
  %v2346 = vpop.f32.mrb[0].mxu0
  %2347 = vmatprep.mubr.bf16.mxu0 %v1385
  %2348 = vmatmul.mubr.bf16.gmra.mrb[0].mxu0 %v1384
  %v2349 = vpop.f32.mrb[0].mxu0
  %v2350 = vadd.f32 %v392, %v2349
  %v2351 = vpop.f32.mrb[0].mxu0
  %v2352 = vpop.f32.mrb[0].mxu0
  %v2353 = vadd.f32 %v392, %v2352
  %v2354 = vpop.f32.mrb[0].mxu0
  %2355 = vmatprep.mubr.bf16.mxu0 %v1390
  %2356 = vmatmul.mubr.bf16.gmra.mrb[0].mxu0 %v1389
  %v2357 = vpop.f32.mrb[0].mxu0
  %v2358 = vadd.f32 %v392, %v2357
  %v2359 = vpop.f32.mrb[0].mxu0
  %v2360 = vpop.f32.mrb[0].mxu0
  %v2361 = vadd.f32 %v392, %v2360
  %v2362 = vpop.f32.mrb[0].mxu0
  %2363 = vmatprep.mubr.bf16.mxu0 %v1395
  %2364 = vmatmul.mubr.bf16.gmra.mrb[0].mxu0 %v1394
  %v2365 = vpop.f32.mrb[0].mxu0
  %v2366 = vadd.f32 %v392, %v2365
  %v2367 = vpop.f32.mrb[0].mxu0
  %v2368 = vpop.f32.mrb[0].mxu0
  %v2369 = vadd.f32 %v392, %v2368
  %v2370 = vpop.f32.mrb[0].mxu0
  %2371 = vmatprep.mubr.bf16.mxu0 %v1400
  %2372 = vmatmul.mubr.bf16.gmra.mrb[0].mxu0 %v1399
  %v2373 = vpop.f32.mrb[0].mxu0
  %v2374 = vadd.f32 %v392, %v2373
  %v2375 = vpop.f32.mrb[0].mxu0
  %v2376 = vpop.f32.mrb[0].mxu0
  %v2377 = vadd.f32 %v392, %v2376
  %v2378 = vpop.f32.mrb[0].mxu0
  %2379 = vmatprep.mubr.bf16.mxu0 %v1405
  %2380 = vmatmul.mubr.bf16.gmra.mrb[0].mxu0 %v1404
  %v2381 = vpop.f32.mrb[0].mxu0
  %v2382 = vadd.f32 %v392, %v2381
  %v2383 = vpop.f32.mrb[0].mxu0
  %v2384 = vpop.f32.mrb[0].mxu0
  %v2385 = vadd.f32 %v392, %v2384
  %v2386 = vpop.f32.mrb[0].mxu0
  %2387 = vmatprep.mubr.bf16.mxu0 %v1410
  %2388 = vmatmul.mubr.bf16.gmra.mrb[0].mxu0 %v1409
  %v2389 = vpop.f32.mrb[0].mxu0
  %v2390 = vadd.f32 %v392, %v2389
  %v2391 = vpop.f32.mrb[0].mxu0
  %v2392 = vpop.f32.mrb[0].mxu0
  %v2393 = vadd.f32 %v392, %v2392
  %v2394 = vpop.f32.mrb[0].mxu0
  %2395 = vmatprep.mubr.bf16.mxu0 %v1415
  %2396 = vmatmul.mubr.bf16.gmra.mrb[0].mxu0 %v1414
  %v2397 = vpop.f32.mrb[0].mxu0
  %v2398 = vadd.f32 %v392, %v2397
  %v2399 = vpop.f32.mrb[0].mxu0
  %v2400 = vpop.f32.mrb[0].mxu0
  %v2401 = vadd.f32 %v392, %v2400
  %v2402 = vpop.f32.mrb[0].mxu0
  %2403 = vmatprep.mubr.bf16.mxu0 %v1420
  %2404 = vmatmul.mubr.bf16.gmra.mrb[0].mxu0 %v1419
  %v2405 = vpop.f32.mrb[0].mxu0
  %v2406 = vadd.f32 %v392, %v2405
  %v2407 = vpop.f32.mrb[0].mxu0
  %v2408 = vpop.f32.mrb[0].mxu0
  %v2409 = vadd.f32 %v392, %v2408
  %v2410 = vpop.f32.mrb[0].mxu0
  %2411 = vmatprep.mubr.bf16.mxu0 %v1425
  %2412 = vmatmul.mubr.bf16.gmra.mrb[0].mxu0 %v1424
  %v2413 = vpop.f32.mrb[0].mxu0
  %v2414 = vadd.f32 %v392, %v2413
  %v2415 = vpop.f32.mrb[0].mxu0
  %v2416 = vpop.f32.mrb[0].mxu0
  %v2417 = vadd.f32 %v392, %v2416
  %v2418 = vpop.f32.mrb[0].mxu0
  %2419 = vmatprep.mubr.bf16.mxu0 %v1430
  %2420 = vmatmul.mubr.bf16.gmra.mrb[0].mxu0 %v1429
  %v2421 = vpop.f32.mrb[0].mxu0
  %v2422 = vadd.f32 %v392, %v2421
  %v2423 = vpop.f32.mrb[0].mxu0
  %v2424 = vpop.f32.mrb[0].mxu0
  %v2425 = vadd.f32 %v392, %v2424
  %v2426 = vpop.f32.mrb[0].mxu0
  %2427 = vmatprep.mubr.bf16.mxu0 %v1435
  %2428 = vmatmul.mubr.bf16.gmra.mrb[0].mxu0 %v1434
  %v2429 = vpop.f32.mrb[0].mxu0
  %v2430 = vadd.f32 %v392, %v2429
  %v2431 = vpop.f32.mrb[0].mxu0
  %v2432 = vpop.f32.mrb[0].mxu0
  %v2433 = vadd.f32 %v392, %v2432
  %v2434 = vpop.f32.mrb[0].mxu0
  %2435 = vmatprep.mubr.bf16.mxu0 %v1440
  %2436 = vmatmul.mubr.bf16.gmra.mrb[0].mxu0 %v1439
  %v2437 = vpop.f32.mrb[0].mxu0
  %v2438 = vadd.f32 %v392, %v2437
  %v2439 = vpop.f32.mrb[0].mxu0
  %v2440 = vpop.f32.mrb[0].mxu0
  %v2441 = vadd.f32 %v392, %v2440
  %v2442 = vpop.f32.mrb[0].mxu0
  %2443 = vdwg.mxu0
  %2444 = vmatprep.subr.bf16.mxu0 0
  %2445 = vmatpush1.bf16.msra.mxu0 %v1804
  %2446 = vmatprep.subr.bf16.mxu0 0
  %2447 = vmatpush1.bf16.msra.mxu0 %v1805
  %2448 = vmatprep.subr.bf16.mxu0 0
  %2449 = vmatpush1.bf16.msra.mxu0 %v1806
  %2450 = vmatprep.subr.bf16.mxu0 0
  %2451 = vmatpush1.bf16.msra.mxu0 %v1807
  %2452 = vmatprep.subr.bf16.mxu0 0
  %2453 = vmatpush1.bf16.msra.mxu0 %v1808
  %2454 = vmatprep.subr.bf16.mxu0 0
  %2455 = vmatpush1.bf16.msra.mxu0 %v1809
  %2456 = vmatprep.subr.bf16.mxu0 0
  %2457 = vmatpush1.bf16.msra.mxu0 %v1810
  %2458 = vmatprep.subr.bf16.mxu0 0
  %2459 = vmatpush1.bf16.msra.mxu0 %v1811
  %2460 = vmatprep.subr.bf16.mxu0 0
  %2461 = vmatpush1.bf16.msra.mxu0 %v1812
  %2462 = vmatprep.subr.bf16.mxu0 0
  %2463 = vmatpush1.bf16.msra.mxu0 %v1813
  %2464 = vmatprep.subr.bf16.mxu0 0
  %2465 = vmatpush1.bf16.msra.mxu0 %v1814
  %2466 = vmatprep.subr.bf16.mxu0 0
  %2467 = vmatpush1.bf16.msra.mxu0 %v1815
  %2468 = vmatprep.subr.bf16.mxu0 0
  %2469 = vmatpush1.bf16.msra.mxu0 %v1816
  %2470 = vmatprep.subr.bf16.mxu0 0
  %2471 = vmatpush1.bf16.msra.mxu0 %v1817
  %2472 = vmatprep.subr.bf16.mxu0 0
  %2473 = vmatpush1.bf16.msra.mxu0 %v1818
  %2474 = vmatprep.subr.bf16.mxu0 0
  %2475 = vmatpush1.bf16.msra.mxu0 %v1819
  %2476 = vmatprep.mubr.bf16.mxu0 %v1197
  %2477 = vmatmul.mubr.bf16.gmra.mrb[0].mxu0 %v1196
  %v2478 = vpop.f32.mrb[0].mxu0
  %v2479 = vadd.f32 %v2046, %v2478
  %v2480 = vpop.f32.mrb[0].mxu0
  %v2481 = vpop.f32.mrb[0].mxu0
  %v2482 = vadd.f32 %v2049, %v2481
  %v2483 = vpop.f32.mrb[0].mxu0
  %2484 = vmatprep.mubr.bf16.mxu0 %v1202
  %2485 = vmatmul.mubr.bf16.gmra.mrb[0].mxu0 %v1201
  %v2486 = vpop.f32.mrb[0].mxu0
  %v2487 = vadd.f32 %v2054, %v2486
  %v2488 = vpop.f32.mrb[0].mxu0
  %v2489 = vpop.f32.mrb[0].mxu0
  %v2490 = vadd.f32 %v2057, %v2489
  %v2491 = vpop.f32.mrb[0].mxu0
  %2492 = vmatprep.mubr.bf16.mxu0 %v1207
  %2493 = vmatmul.mubr.bf16.gmra.mrb[0].mxu0 %v1206
  %v2494 = vpop.f32.mrb[0].mxu0
  %v2495 = vadd.f32 %v2062, %v2494
  %v2496 = vpop.f32.mrb[0].mxu0
  %v2497 = vpop.f32.mrb[0].mxu0
  %v2498 = vadd.f32 %v2065, %v2497
  %v2499 = vpop.f32.mrb[0].mxu0
  %2500 = vmatprep.mubr.bf16.mxu0 %v1212
  %2501 = vmatmul.mubr.bf16.gmra.mrb[0].mxu0 %v1211
  %v2502 = vpop.f32.mrb[0].mxu0
  %v2503 = vadd.f32 %v2070, %v2502
  %v2504 = vpop.f32.mrb[0].mxu0
  %v2505 = vpop.f32.mrb[0].mxu0
  %v2506 = vadd.f32 %v2073, %v2505
  %v2507 = vpop.f32.mrb[0].mxu0
  %2508 = vmatprep.mubr.bf16.mxu0 %v1217
  %2509 = vmatmul.mubr.bf16.gmra.mrb[0].mxu0 %v1216
  %v2510 = vpop.f32.mrb[0].mxu0
  %v2511 = vadd.f32 %v2078, %v2510
  %v2512 = vpop.f32.mrb[0].mxu0
  %v2513 = vpop.f32.mrb[0].mxu0
  %v2514 = vadd.f32 %v2081, %v2513
  %v2515 = vpop.f32.mrb[0].mxu0
  %2516 = vmatprep.mubr.bf16.mxu0 %v1222
  %2517 = vmatmul.mubr.bf16.gmra.mrb[0].mxu0 %v1221
  %v2518 = vpop.f32.mrb[0].mxu0
  %v2519 = vadd.f32 %v2086, %v2518
  %v2520 = vpop.f32.mrb[0].mxu0
  %v2521 = vpop.f32.mrb[0].mxu0
  %v2522 = vadd.f32 %v2089, %v2521
  %v2523 = vpop.f32.mrb[0].mxu0
  %2524 = vmatprep.mubr.bf16.mxu0 %v1227
  %2525 = vmatmul.mubr.bf16.gmra.mrb[0].mxu0 %v1226
  %v2526 = vpop.f32.mrb[0].mxu0
  %v2527 = vadd.f32 %v2094, %v2526
  %v2528 = vpop.f32.mrb[0].mxu0
  %v2529 = vpop.f32.mrb[0].mxu0
  %v2530 = vadd.f32 %v2097, %v2529
  %v2531 = vpop.f32.mrb[0].mxu0
  %2532 = vmatprep.mubr.bf16.mxu0 %v1232
  %2533 = vmatmul.mubr.bf16.gmra.mrb[0].mxu0 %v1231
  %v2534 = vpop.f32.mrb[0].mxu0
  %v2535 = vadd.f32 %v2102, %v2534
  %v2536 = vpop.f32.mrb[0].mxu0
  %v2537 = vpop.f32.mrb[0].mxu0
  %v2538 = vadd.f32 %v2105, %v2537
  %v2539 = vpop.f32.mrb[0].mxu0
  %2540 = vmatprep.mubr.bf16.mxu0 %v1237
  %2541 = vmatmul.mubr.bf16.gmra.mrb[0].mxu0 %v1236
  %v2542 = vpop.f32.mrb[0].mxu0
  %v2543 = vadd.f32 %v2110, %v2542
  %v2544 = vpop.f32.mrb[0].mxu0
  %v2545 = vpop.f32.mrb[0].mxu0
  %v2546 = vadd.f32 %v2113, %v2545
  %v2547 = vpop.f32.mrb[0].mxu0
  %2548 = vmatprep.mubr.bf16.mxu0 %v1242
  %2549 = vmatmul.mubr.bf16.gmra.mrb[0].mxu0 %v1241
  %v2550 = vpop.f32.mrb[0].mxu0
  %v2551 = vadd.f32 %v2118, %v2550
  %v2552 = vpop.f32.mrb[0].mxu0
  %v2553 = vpop.f32.mrb[0].mxu0
  %v2554 = vadd.f32 %v2121, %v2553
  %v2555 = vpop.f32.mrb[0].mxu0
  %2556 = vmatprep.mubr.bf16.mxu0 %v1247
  %2557 = vmatmul.mubr.bf16.gmra.mrb[0].mxu0 %v1246
  %v2558 = vpop.f32.mrb[0].mxu0
  %v2559 = vadd.f32 %v2126, %v2558
  %v2560 = vpop.f32.mrb[0].mxu0
  %v2561 = vpop.f32.mrb[0].mxu0
  %v2562 = vadd.f32 %v2129, %v2561
  %v2563 = vpop.f32.mrb[0].mxu0
  %2564 = vmatprep.mubr.bf16.mxu0 %v1252
  %2565 = vmatmul.mubr.bf16.gmra.mrb[0].mxu0 %v1251
  %v2566 = vpop.f32.mrb[0].mxu0
  %v2567 = vadd.f32 %v2134, %v2566
  %v2568 = vpop.f32.mrb[0].mxu0
  %v2569 = vpop.f32.mrb[0].mxu0
  %v2570 = vadd.f32 %v2137, %v2569
  %v2571 = vpop.f32.mrb[0].mxu0
  %2572 = vmatprep.mubr.bf16.mxu0 %v1257
  %2573 = vmatmul.mubr.bf16.gmra.mrb[0].mxu0 %v1256
  %v2574 = vpop.f32.mrb[0].mxu0
  %v2575 = vadd.f32 %v2142, %v2574
  %v2576 = vpop.f32.mrb[0].mxu0
  %v2577 = vpop.f32.mrb[0].mxu0
  %v2578 = vadd.f32 %v2145, %v2577
  %v2579 = vpop.f32.mrb[0].mxu0
  %2580 = vmatprep.mubr.bf16.mxu0 %v1262
  %2581 = vmatmul.mubr.bf16.gmra.mrb[0].mxu0 %v1261
  %v2582 = vpop.f32.mrb[0].mxu0
  %v2583 = vadd.f32 %v2150, %v2582
  %v2584 = vpop.f32.mrb[0].mxu0
  %v2585 = vpop.f32.mrb[0].mxu0
  %v2586 = vadd.f32 %v2153, %v2585
  %v2587 = vpop.f32.mrb[0].mxu0
  %2588 = vmatprep.mubr.bf16.mxu0 %v1267
  %2589 = vmatmul.mubr.bf16.gmra.mrb[0].mxu0 %v1266
  %v2590 = vpop.f32.mrb[0].mxu0
  %v2591 = vadd.f32 %v2158, %v2590
  %v2592 = vpop.f32.mrb[0].mxu0
  %v2593 = vpop.f32.mrb[0].mxu0
  %v2594 = vadd.f32 %v2161, %v2593
  %v2595 = vpop.f32.mrb[0].mxu0
  %2596 = vmatprep.mubr.bf16.mxu0 %v1272
  %2597 = vmatmul.mubr.bf16.gmra.mrb[0].mxu0 %v1271
  %v2598 = vpop.f32.mrb[0].mxu0
  %v2599 = vadd.f32 %v2166, %v2598
  %v2600 = vpop.f32.mrb[0].mxu0
  %v2601 = vpop.f32.mrb[0].mxu0
  %v2602 = vadd.f32 %v2169, %v2601
  %v2603 = vpop.f32.mrb[0].mxu0
  %2604 = vmatprep.mubr.bf16.mxu0 %v1277
  %2605 = vmatmul.mubr.bf16.gmra.mrb[0].mxu0 %v1276
  %v2606 = vpop.f32.mrb[0].mxu0
  %v2607 = vadd.f32 %v2174, %v2606
  %v2608 = vpop.f32.mrb[0].mxu0
  %v2609 = vpop.f32.mrb[0].mxu0
  %v2610 = vadd.f32 %v2177, %v2609
  %v2611 = vpop.f32.mrb[0].mxu0
  %2612 = vmatprep.mubr.bf16.mxu0 %v1282
  %2613 = vmatmul.mubr.bf16.gmra.mrb[0].mxu0 %v1281
  %v2614 = vpop.f32.mrb[0].mxu0
  %v2615 = vadd.f32 %v2182, %v2614
  %v2616 = vpop.f32.mrb[0].mxu0
  %v2617 = vpop.f32.mrb[0].mxu0
  %v2618 = vadd.f32 %v2185, %v2617
  %v2619 = vpop.f32.mrb[0].mxu0
  %2620 = vmatprep.mubr.bf16.mxu0 %v1287
  %2621 = vmatmul.mubr.bf16.gmra.mrb[0].mxu0 %v1286
  %v2622 = vpop.f32.mrb[0].mxu0
  %v2623 = vadd.f32 %v2190, %v2622
  %v2624 = vpop.f32.mrb[0].mxu0
  %v2625 = vpop.f32.mrb[0].mxu0
  %v2626 = vadd.f32 %v2193, %v2625
  %v2627 = vpop.f32.mrb[0].mxu0
  %2628 = vmatprep.mubr.bf16.mxu0 %v1292
  %2629 = vmatmul.mubr.bf16.gmra.mrb[0].mxu0 %v1291
  %v2630 = vpop.f32.mrb[0].mxu0
  %v2631 = vadd.f32 %v2198, %v2630
  %v2632 = vpop.f32.mrb[0].mxu0
  %v2633 = vpop.f32.mrb[0].mxu0
  %v2634 = vadd.f32 %v2201, %v2633
  %v2635 = vpop.f32.mrb[0].mxu0
  %2636 = vmatprep.mubr.bf16.mxu0 %v1297
  %2637 = vmatmul.mubr.bf16.gmra.mrb[0].mxu0 %v1296
  %v2638 = vpop.f32.mrb[0].mxu0
  %v2639 = vadd.f32 %v2206, %v2638
  %v2640 = vpop.f32.mrb[0].mxu0
  %v2641 = vpop.f32.mrb[0].mxu0
  %v2642 = vadd.f32 %v2209, %v2641
  %v2643 = vpop.f32.mrb[0].mxu0
  %2644 = vmatprep.mubr.bf16.mxu0 %v1302
  %2645 = vmatmul.mubr.bf16.gmra.mrb[0].mxu0 %v1301
  %v2646 = vpop.f32.mrb[0].mxu0
  %v2647 = vadd.f32 %v2214, %v2646
  %v2648 = vpop.f32.mrb[0].mxu0
  %v2649 = vpop.f32.mrb[0].mxu0
  %v2650 = vadd.f32 %v2217, %v2649
  %v2651 = vpop.f32.mrb[0].mxu0
  %2652 = vmatprep.mubr.bf16.mxu0 %v1307
  %2653 = vmatmul.mubr.bf16.gmra.mrb[0].mxu0 %v1306
  %v2654 = vpop.f32.mrb[0].mxu0
  %v2655 = vadd.f32 %v2222, %v2654
  %v2656 = vpop.f32.mrb[0].mxu0
  %v2657 = vpop.f32.mrb[0].mxu0
  %v2658 = vadd.f32 %v2225, %v2657
  %v2659 = vpop.f32.mrb[0].mxu0
  %2660 = vmatprep.mubr.bf16.mxu0 %v1312
  %2661 = vmatmul.mubr.bf16.gmra.mrb[0].mxu0 %v1311
  %v2662 = vpop.f32.mrb[0].mxu0
  %v2663 = vadd.f32 %v2230, %v2662
  %v2664 = vpop.f32.mrb[0].mxu0
  %v2665 = vpop.f32.mrb[0].mxu0
  %v2666 = vadd.f32 %v2233, %v2665
  %v2667 = vpop.f32.mrb[0].mxu0
  %2668 = vmatprep.mubr.bf16.mxu0 %v1317
  %2669 = vmatmul.mubr.bf16.gmra.mrb[0].mxu0 %v1316
  %v2670 = vpop.f32.mrb[0].mxu0
  %v2671 = vadd.f32 %v2238, %v2670
  %v2672 = vpop.f32.mrb[0].mxu0
  %v2673 = vpop.f32.mrb[0].mxu0
  %v2674 = vadd.f32 %v2241, %v2673
  %v2675 = vpop.f32.mrb[0].mxu0
  %2676 = vmatprep.mubr.bf16.mxu0 %v1322
  %2677 = vmatmul.mubr.bf16.gmra.mrb[0].mxu0 %v1321
  %v2678 = vpop.f32.mrb[0].mxu0
  %v2679 = vadd.f32 %v2246, %v2678
  %v2680 = vpop.f32.mrb[0].mxu0
  %v2681 = vpop.f32.mrb[0].mxu0
  %v2682 = vadd.f32 %v2249, %v2681
  %v2683 = vpop.f32.mrb[0].mxu0
  %2684 = vmatprep.mubr.bf16.mxu0 %v1327
  %2685 = vmatmul.mubr.bf16.gmra.mrb[0].mxu0 %v1326
  %v2686 = vpop.f32.mrb[0].mxu0
  %v2687 = vadd.f32 %v2254, %v2686
  %v2688 = vpop.f32.mrb[0].mxu0
  %v2689 = vpop.f32.mrb[0].mxu0
  %v2690 = vadd.f32 %v2257, %v2689
  %v2691 = vpop.f32.mrb[0].mxu0
  %2692 = vmatprep.mubr.bf16.mxu0 %v1332
  %2693 = vmatmul.mubr.bf16.gmra.mrb[0].mxu0 %v1331
  %v2694 = vpop.f32.mrb[0].mxu0
  %v2695 = vadd.f32 %v2262, %v2694
  %v2696 = vpop.f32.mrb[0].mxu0
  %v2697 = vpop.f32.mrb[0].mxu0
  %v2698 = vadd.f32 %v2265, %v2697
  %v2699 = vpop.f32.mrb[0].mxu0
  %2700 = vmatprep.mubr.bf16.mxu0 %v1337
  %2701 = vmatmul.mubr.bf16.gmra.mrb[0].mxu0 %v1336
  %v2702 = vpop.f32.mrb[0].mxu0
  %v2703 = vadd.f32 %v2270, %v2702
  %v2704 = vpop.f32.mrb[0].mxu0
  %v2705 = vpop.f32.mrb[0].mxu0
  %v2706 = vadd.f32 %v2273, %v2705
  %v2707 = vpop.f32.mrb[0].mxu0
  %2708 = vmatprep.mubr.bf16.mxu0 %v1342
  %2709 = vmatmul.mubr.bf16.gmra.mrb[0].mxu0 %v1341
  %v2710 = vpop.f32.mrb[0].mxu0
  %v2711 = vadd.f32 %v2278, %v2710
  %v2712 = vpop.f32.mrb[0].mxu0
  %v2713 = vpop.f32.mrb[0].mxu0
  %v2714 = vadd.f32 %v2281, %v2713
  %v2715 = vpop.f32.mrb[0].mxu0
  %2716 = vmatprep.mubr.bf16.mxu0 %v1347
  %2717 = vmatmul.mubr.bf16.gmra.mrb[0].mxu0 %v1346
  %v2718 = vpop.f32.mrb[0].mxu0
  %v2719 = vadd.f32 %v2286, %v2718
  %v2720 = vpop.f32.mrb[0].mxu0
  %v2721 = vpop.f32.mrb[0].mxu0
  %v2722 = vadd.f32 %v2289, %v2721
  %v2723 = vpop.f32.mrb[0].mxu0
  %2724 = vmatprep.mubr.bf16.mxu0 %v1352
  %2725 = vmatmul.mubr.bf16.gmra.mrb[0].mxu0 %v1351
  %v2726 = vpop.f32.mrb[0].mxu0
  %v2727 = vadd.f32 %v2294, %v2726
  %v2728 = vpop.f32.mrb[0].mxu0
  %v2729 = vpop.f32.mrb[0].mxu0
  %v2730 = vadd.f32 %v2297, %v2729
  %v2731 = vpop.f32.mrb[0].mxu0
  %2732 = vmatprep.mubr.bf16.mxu0 %v1357
  %2733 = vmatmul.mubr.bf16.gmra.mrb[0].mxu0 %v1356
  %v2734 = vpop.f32.mrb[0].mxu0
  %v2735 = vadd.f32 %v2302, %v2734
  %v2736 = vpop.f32.mrb[0].mxu0
  %v2737 = vpop.f32.mrb[0].mxu0
  %v2738 = vadd.f32 %v2305, %v2737
  %v2739 = vpop.f32.mrb[0].mxu0
  %2740 = vmatprep.mubr.bf16.mxu0 %v1362
  %2741 = vmatmul.mubr.bf16.gmra.mrb[0].mxu0 %v1361
  %v2742 = vpop.f32.mrb[0].mxu0
  %v2743 = vadd.f32 %v2310, %v2742
  %v2744 = vpop.f32.mrb[0].mxu0
  %v2745 = vpop.f32.mrb[0].mxu0
  %v2746 = vadd.f32 %v2313, %v2745
  %v2747 = vpop.f32.mrb[0].mxu0
  %2748 = vmatprep.mubr.bf16.mxu0 %v1367
  %2749 = vmatmul.mubr.bf16.gmra.mrb[0].mxu0 %v1366
  %v2750 = vpop.f32.mrb[0].mxu0
  %v2751 = vadd.f32 %v2318, %v2750
  %v2752 = vpop.f32.mrb[0].mxu0
  %v2753 = vpop.f32.mrb[0].mxu0
  %v2754 = vadd.f32 %v2321, %v2753
  %v2755 = vpop.f32.mrb[0].mxu0
  %2756 = vmatprep.mubr.bf16.mxu0 %v1372
  %2757 = vmatmul.mubr.bf16.gmra.mrb[0].mxu0 %v1371
  %v2758 = vpop.f32.mrb[0].mxu0
  %v2759 = vadd.f32 %v2326, %v2758
  %v2760 = vpop.f32.mrb[0].mxu0
  %v2761 = vpop.f32.mrb[0].mxu0
  %v2762 = vadd.f32 %v2329, %v2761
  %v2763 = vpop.f32.mrb[0].mxu0
  %2764 = vmatprep.mubr.bf16.mxu0 %v1377
  %2765 = vmatmul.mubr.bf16.gmra.mrb[0].mxu0 %v1376
  %v2766 = vpop.f32.mrb[0].mxu0
  %v2767 = vadd.f32 %v2334, %v2766
  %v2768 = vpop.f32.mrb[0].mxu0
  %v2769 = vpop.f32.mrb[0].mxu0
  %v2770 = vadd.f32 %v2337, %v2769
  %v2771 = vpop.f32.mrb[0].mxu0
  %2772 = vmatprep.mubr.bf16.mxu0 %v1382
  %2773 = vmatmul.mubr.bf16.gmra.mrb[0].mxu0 %v1381
  %v2774 = vpop.f32.mrb[0].mxu0
  %v2775 = vadd.f32 %v2342, %v2774
  %v2776 = vpop.f32.mrb[0].mxu0
  %v2777 = vpop.f32.mrb[0].mxu0
  %v2778 = vadd.f32 %v2345, %v2777
  %v2779 = vpop.f32.mrb[0].mxu0
  %2780 = vmatprep.mubr.bf16.mxu0 %v1387
  %2781 = vmatmul.mubr.bf16.gmra.mrb[0].mxu0 %v1386
  %v2782 = vpop.f32.mrb[0].mxu0
  %v2783 = vadd.f32 %v2350, %v2782
  %v2784 = vpop.f32.mrb[0].mxu0
  %v2785 = vpop.f32.mrb[0].mxu0
  %v2786 = vadd.f32 %v2353, %v2785
  %v2787 = vpop.f32.mrb[0].mxu0
  %2788 = vmatprep.mubr.bf16.mxu0 %v1392
  %2789 = vmatmul.mubr.bf16.gmra.mrb[0].mxu0 %v1391
  %v2790 = vpop.f32.mrb[0].mxu0
  %v2791 = vadd.f32 %v2358, %v2790
  %v2792 = vpop.f32.mrb[0].mxu0
  %v2793 = vpop.f32.mrb[0].mxu0
  %v2794 = vadd.f32 %v2361, %v2793
  %v2795 = vpop.f32.mrb[0].mxu0
  %2796 = vmatprep.mubr.bf16.mxu0 %v1397
  %2797 = vmatmul.mubr.bf16.gmra.mrb[0].mxu0 %v1396
  %v2798 = vpop.f32.mrb[0].mxu0
  %v2799 = vadd.f32 %v2366, %v2798
  %v2800 = vpop.f32.mrb[0].mxu0
  %v2801 = vpop.f32.mrb[0].mxu0
  %v2802 = vadd.f32 %v2369, %v2801
  %v2803 = vpop.f32.mrb[0].mxu0
  %2804 = vmatprep.mubr.bf16.mxu0 %v1402
  %2805 = vmatmul.mubr.bf16.gmra.mrb[0].mxu0 %v1401
  %v2806 = vpop.f32.mrb[0].mxu0
  %v2807 = vadd.f32 %v2374, %v2806
  %v2808 = vpop.f32.mrb[0].mxu0
  %v2809 = vpop.f32.mrb[0].mxu0
  %v2810 = vadd.f32 %v2377, %v2809
  %v2811 = vpop.f32.mrb[0].mxu0
  %2812 = vmatprep.mubr.bf16.mxu0 %v1407
  %2813 = vmatmul.mubr.bf16.gmra.mrb[0].mxu0 %v1406
  %v2814 = vpop.f32.mrb[0].mxu0
  %v2815 = vadd.f32 %v2382, %v2814
  %v2816 = vpop.f32.mrb[0].mxu0
  %v2817 = vpop.f32.mrb[0].mxu0
  %v2818 = vadd.f32 %v2385, %v2817
  %v2819 = vpop.f32.mrb[0].mxu0
  %2820 = vmatprep.mubr.bf16.mxu0 %v1412
  %2821 = vmatmul.mubr.bf16.gmra.mrb[0].mxu0 %v1411
  %v2822 = vpop.f32.mrb[0].mxu0
  %v2823 = vadd.f32 %v2390, %v2822
  %v2824 = vpop.f32.mrb[0].mxu0
  %v2825 = vpop.f32.mrb[0].mxu0
  %v2826 = vadd.f32 %v2393, %v2825
  %v2827 = vpop.f32.mrb[0].mxu0
  %2828 = vmatprep.mubr.bf16.mxu0 %v1417
  %2829 = vmatmul.mubr.bf16.gmra.mrb[0].mxu0 %v1416
  %v2830 = vpop.f32.mrb[0].mxu0
  %v2831 = vadd.f32 %v2398, %v2830
  %v2832 = vpop.f32.mrb[0].mxu0
  %v2833 = vpop.f32.mrb[0].mxu0
  %v2834 = vadd.f32 %v2401, %v2833
  %v2835 = vpop.f32.mrb[0].mxu0
  %2836 = vmatprep.mubr.bf16.mxu0 %v1422
  %2837 = vmatmul.mubr.bf16.gmra.mrb[0].mxu0 %v1421
  %v2838 = vpop.f32.mrb[0].mxu0
  %v2839 = vadd.f32 %v2406, %v2838
  %v2840 = vpop.f32.mrb[0].mxu0
  %v2841 = vpop.f32.mrb[0].mxu0
  %v2842 = vadd.f32 %v2409, %v2841
  %v2843 = vpop.f32.mrb[0].mxu0
  %2844 = vmatprep.mubr.bf16.mxu0 %v1427
  %2845 = vmatmul.mubr.bf16.gmra.mrb[0].mxu0 %v1426
  %v2846 = vpop.f32.mrb[0].mxu0
  %v2847 = vadd.f32 %v2414, %v2846
  %v2848 = vpop.f32.mrb[0].mxu0
  %v2849 = vpop.f32.mrb[0].mxu0
  %v2850 = vadd.f32 %v2417, %v2849
  %v2851 = vpop.f32.mrb[0].mxu0
  %2852 = vmatprep.mubr.bf16.mxu0 %v1432
  %2853 = vmatmul.mubr.bf16.gmra.mrb[0].mxu0 %v1431
  %v2854 = vpop.f32.mrb[0].mxu0
  %v2855 = vadd.f32 %v2422, %v2854
  %v2856 = vpop.f32.mrb[0].mxu0
  %v2857 = vpop.f32.mrb[0].mxu0
  %v2858 = vadd.f32 %v2425, %v2857
  %v2859 = vpop.f32.mrb[0].mxu0
  %2860 = vmatprep.mubr.bf16.mxu0 %v1437
  %2861 = vmatmul.mubr.bf16.gmra.mrb[0].mxu0 %v1436
  %v2862 = vpop.f32.mrb[0].mxu0
  %v2863 = vadd.f32 %v2430, %v2862
  %v2864 = vpop.f32.mrb[0].mxu0
  %v2865 = vpop.f32.mrb[0].mxu0
  %v2866 = vadd.f32 %v2433, %v2865
  %v2867 = vpop.f32.mrb[0].mxu0
  %2868 = vmatprep.mubr.bf16.mxu0 %v1442
  %2869 = vmatmul.mubr.bf16.gmra.mrb[0].mxu0 %v1441
  %v2870 = vpop.f32.mrb[0].mxu0
  %v2871 = vadd.f32 %v2438, %v2870
  %v2872 = vpop.f32.mrb[0].mxu0
  %v2873 = vpop.f32.mrb[0].mxu0
  %v2874 = vadd.f32 %v2441, %v2873
  %v2875 = vpop.f32.mrb[0].mxu0
  %2876 = vdwg.mxu0
  %2877 = vmatprep.subr.bf16.mxu0 0
  %2878 = vmatpush1.bf16.msra.mxu0 %v1820
  %2879 = vmatprep.subr.bf16.mxu0 0
  %2880 = vmatpush1.bf16.msra.mxu0 %v1821
  %2881 = vmatprep.subr.bf16.mxu0 0
  %2882 = vmatpush1.bf16.msra.mxu0 %v1822
  %2883 = vmatprep.subr.bf16.mxu0 0
  %2884 = vmatpush1.bf16.msra.mxu0 %v1823
  %2885 = vmatprep.subr.bf16.mxu0 0
  %2886 = vmatpush1.bf16.msra.mxu0 0
  %2887 = vmatprep.subr.bf16.mxu0 0
  %2888 = vmatpush1.bf16.msra.mxu0 0
  %2889 = vmatprep.subr.bf16.mxu0 0
  %2890 = vmatpush1.bf16.msra.mxu0 0
  %2891 = vmatprep.subr.bf16.mxu0 0
  %2892 = vmatpush1.bf16.msra.mxu0 0
  %2893 = vmatprep.subr.bf16.mxu0 0
  %2894 = vmatpush1.bf16.msra.mxu0 0
  %2895 = vmatprep.subr.bf16.mxu0 0
  %2896 = vmatpush1.bf16.msra.mxu0 0
  %2897 = vmatprep.subr.bf16.mxu0 0
  %2898 = vmatpush1.bf16.msra.mxu0 0
  %2899 = vmatprep.subr.bf16.mxu0 0
  %2900 = vmatpush1.bf16.msra.mxu0 0
  %2901 = vmatprep.subr.bf16.mxu0 0
  %2902 = vmatpush1.bf16.msra.mxu0 0
  %2903 = vmatprep.subr.bf16.mxu0 0
  %2904 = vmatpush1.bf16.msra.mxu0 0
  %2905 = vmatprep.subr.bf16.mxu0 0
  %2906 = vmatpush1.bf16.msra.mxu0 0
  %2907 = vmatprep.subr.bf16.mxu0 0
  %2908 = vmatpush1.bf16.msra.mxu0 0
  %2909 = vmatprep.mubr.bf16.mxu0 0
  %2910 = vmatmul.mubr.bf16.gmra.mrb[0].mxu0 %v1862
  %v2911 = vpop.f32.mrb[0].mxu0
  %v2912 = vadd.f32 %v2479, %v2911
  %v2913 = vpop.f32.mrb[0].mxu0
  %v2914 = vpop.f32.mrb[0].mxu0
  %v2915 = vadd.f32 %v2482, %v2914
  %v2916 = vpop.f32.mrb[0].mxu0
  %2917 = vmatprep.mubr.bf16.mxu0 0
  %2918 = vmatmul.mubr.bf16.gmra.mrb[0].mxu0 %v1865
  %v2919 = vpop.f32.mrb[0].mxu0
  %v2920 = vadd.f32 %v2487, %v2919
  %v2921 = vpop.f32.mrb[0].mxu0
  %v2922 = vpop.f32.mrb[0].mxu0
  %v2923 = vadd.f32 %v2490, %v2922
  %v2924 = vpop.f32.mrb[0].mxu0
  %2925 = vmatprep.mubr.bf16.mxu0 0
  %2926 = vmatmul.mubr.bf16.gmra.mrb[0].mxu0 %v1868
  %v2927 = vpop.f32.mrb[0].mxu0
  %v2928 = vadd.f32 %v2495, %v2927
  %v2929 = vpop.f32.mrb[0].mxu0
  %v2930 = vpop.f32.mrb[0].mxu0
  %v2931 = vadd.f32 %v2498, %v2930
  %v2932 = vpop.f32.mrb[0].mxu0
  %2933 = vmatprep.mubr.bf16.mxu0 0
  %2934 = vmatmul.mubr.bf16.gmra.mrb[0].mxu0 %v1871
  %v2935 = vpop.f32.mrb[0].mxu0
  %v2936 = vadd.f32 %v2503, %v2935
  %v2937 = vpop.f32.mrb[0].mxu0
  %v2938 = vpop.f32.mrb[0].mxu0
  %v2939 = vadd.f32 %v2506, %v2938
  %v2940 = vpop.f32.mrb[0].mxu0
  %2941 = vmatprep.mubr.bf16.mxu0 0
  %2942 = vmatmul.mubr.bf16.gmra.mrb[0].mxu0 %v1874
  %v2943 = vpop.f32.mrb[0].mxu0
  %v2944 = vadd.f32 %v2511, %v2943
  %v2945 = vpop.f32.mrb[0].mxu0
  %v2946 = vpop.f32.mrb[0].mxu0
  %v2947 = vadd.f32 %v2514, %v2946
  %v2948 = vpop.f32.mrb[0].mxu0
  %2949 = vmatprep.mubr.bf16.mxu0 0
  %2950 = vmatmul.mubr.bf16.gmra.mrb[0].mxu0 %v1877
  %v2951 = vpop.f32.mrb[0].mxu0
  %v2952 = vadd.f32 %v2519, %v2951
  %v2953 = vpop.f32.mrb[0].mxu0
  %v2954 = vpop.f32.mrb[0].mxu0
  %v2955 = vadd.f32 %v2522, %v2954
  %v2956 = vpop.f32.mrb[0].mxu0
  %2957 = vmatprep.mubr.bf16.mxu0 0
  %2958 = vmatmul.mubr.bf16.gmra.mrb[0].mxu0 %v1880
  %v2959 = vpop.f32.mrb[0].mxu0
  %v2960 = vadd.f32 %v2527, %v2959
  %v2961 = vpop.f32.mrb[0].mxu0
  %v2962 = vpop.f32.mrb[0].mxu0
  %v2963 = vadd.f32 %v2530, %v2962
  %v2964 = vpop.f32.mrb[0].mxu0
  %2965 = vmatprep.mubr.bf16.mxu0 0
  %2966 = vmatmul.mubr.bf16.gmra.mrb[0].mxu0 %v1883
  %v2967 = vpop.f32.mrb[0].mxu0
  %v2968 = vadd.f32 %v2535, %v2967
  %v2969 = vpop.f32.mrb[0].mxu0
  %v2970 = vpop.f32.mrb[0].mxu0
  %v2971 = vadd.f32 %v2538, %v2970
  %v2972 = vpop.f32.mrb[0].mxu0
  %2973 = vmatprep.mubr.bf16.mxu0 0
  %2974 = vmatmul.mubr.bf16.gmra.mrb[0].mxu0 %v1886
  %v2975 = vpop.f32.mrb[0].mxu0
  %v2976 = vadd.f32 %v2543, %v2975
  %v2977 = vpop.f32.mrb[0].mxu0
  %v2978 = vpop.f32.mrb[0].mxu0
  %v2979 = vadd.f32 %v2546, %v2978
  %v2980 = vpop.f32.mrb[0].mxu0
  %2981 = vmatprep.mubr.bf16.mxu0 0
  %2982 = vmatmul.mubr.bf16.gmra.mrb[0].mxu0 %v1889
  %v2983 = vpop.f32.mrb[0].mxu0
  %v2984 = vadd.f32 %v2551, %v2983
  %v2985 = vpop.f32.mrb[0].mxu0
  %v2986 = vpop.f32.mrb[0].mxu0
  %v2987 = vadd.f32 %v2554, %v2986
  %v2988 = vpop.f32.mrb[0].mxu0
  %2989 = vmatprep.mubr.bf16.mxu0 0
  %2990 = vmatmul.mubr.bf16.gmra.mrb[0].mxu0 %v1892
  %v2991 = vpop.f32.mrb[0].mxu0
  %v2992 = vadd.f32 %v2559, %v2991
  %v2993 = vpop.f32.mrb[0].mxu0
  %v2994 = vpop.f32.mrb[0].mxu0
  %v2995 = vadd.f32 %v2562, %v2994
  %v2996 = vpop.f32.mrb[0].mxu0
  %2997 = vmatprep.mubr.bf16.mxu0 0
  %2998 = vmatmul.mubr.bf16.gmra.mrb[0].mxu0 %v1895
  %v2999 = vpop.f32.mrb[0].mxu0
  %v3000 = vadd.f32 %v2567, %v2999
  %v3001 = vpop.f32.mrb[0].mxu0
  %v3002 = vpop.f32.mrb[0].mxu0
  %v3003 = vadd.f32 %v2570, %v3002
  %v3004 = vpop.f32.mrb[0].mxu0
  %3005 = vmatprep.mubr.bf16.mxu0 0
  %3006 = vmatmul.mubr.bf16.gmra.mrb[0].mxu0 %v1898
  %v3007 = vpop.f32.mrb[0].mxu0
  %v3008 = vadd.f32 %v2575, %v3007
  %v3009 = vpop.f32.mrb[0].mxu0
  %v3010 = vpop.f32.mrb[0].mxu0
  %v3011 = vadd.f32 %v2578, %v3010
  %v3012 = vpop.f32.mrb[0].mxu0
  %3013 = vmatprep.mubr.bf16.mxu0 0
  %3014 = vmatmul.mubr.bf16.gmra.mrb[0].mxu0 %v1901
  %v3015 = vpop.f32.mrb[0].mxu0
  %v3016 = vadd.f32 %v2583, %v3015
  %v3017 = vpop.f32.mrb[0].mxu0
  %v3018 = vpop.f32.mrb[0].mxu0
  %v3019 = vadd.f32 %v2586, %v3018
  %v3020 = vpop.f32.mrb[0].mxu0
  %3021 = vmatprep.mubr.bf16.mxu0 0
  %3022 = vmatmul.mubr.bf16.gmra.mrb[0].mxu0 %v1904
  %v3023 = vpop.f32.mrb[0].mxu0
  %v3024 = vadd.f32 %v2591, %v3023
  %v3025 = vpop.f32.mrb[0].mxu0
  %v3026 = vpop.f32.mrb[0].mxu0
  %v3027 = vadd.f32 %v2594, %v3026
  %v3028 = vpop.f32.mrb[0].mxu0
  %3029 = vmatprep.mubr.bf16.mxu0 0
  %3030 = vmatmul.mubr.bf16.gmra.mrb[0].mxu0 %v1907
  %v3031 = vpop.f32.mrb[0].mxu0
  %v3032 = vadd.f32 %v2599, %v3031
  %v3033 = vpop.f32.mrb[0].mxu0
  %v3034 = vpop.f32.mrb[0].mxu0
  %v3035 = vadd.f32 %v2602, %v3034
  %v3036 = vpop.f32.mrb[0].mxu0
  %3037 = vmatprep.mubr.bf16.mxu0 0
  %3038 = vmatmul.mubr.bf16.gmra.mrb[0].mxu0 %v1910
  %v3039 = vpop.f32.mrb[0].mxu0
  %v3040 = vadd.f32 %v2607, %v3039
  %v3041 = vpop.f32.mrb[0].mxu0
  %v3042 = vpop.f32.mrb[0].mxu0
  %v3043 = vadd.f32 %v2610, %v3042
  %v3044 = vpop.f32.mrb[0].mxu0
  %3045 = vmatprep.mubr.bf16.mxu0 0
  %3046 = vmatmul.mubr.bf16.gmra.mrb[0].mxu0 %v1913
  %v3047 = vpop.f32.mrb[0].mxu0
  %v3048 = vadd.f32 %v2615, %v3047
  %v3049 = vpop.f32.mrb[0].mxu0
  %v3050 = vpop.f32.mrb[0].mxu0
  %v3051 = vadd.f32 %v2618, %v3050
  %v3052 = vpop.f32.mrb[0].mxu0
  %3053 = vmatprep.mubr.bf16.mxu0 0
  %3054 = vmatmul.mubr.bf16.gmra.mrb[0].mxu0 %v1916
  %v3055 = vpop.f32.mrb[0].mxu0
  %v3056 = vadd.f32 %v2623, %v3055
  %v3057 = vpop.f32.mrb[0].mxu0
  %v3058 = vpop.f32.mrb[0].mxu0
  %v3059 = vadd.f32 %v2626, %v3058
  %v3060 = vpop.f32.mrb[0].mxu0
  %3061 = vmatprep.mubr.bf16.mxu0 0
  %3062 = vmatmul.mubr.bf16.gmra.mrb[0].mxu0 %v1919
  %v3063 = vpop.f32.mrb[0].mxu0
  %v3064 = vadd.f32 %v2631, %v3063
  %v3065 = vpop.f32.mrb[0].mxu0
  %v3066 = vpop.f32.mrb[0].mxu0
  %v3067 = vadd.f32 %v2634, %v3066
  %v3068 = vpop.f32.mrb[0].mxu0
  %3069 = vmatprep.mubr.bf16.mxu0 0
  %3070 = vmatmul.mubr.bf16.gmra.mrb[0].mxu0 %v1922
  %v3071 = vpop.f32.mrb[0].mxu0
  %v3072 = vadd.f32 %v2639, %v3071
  %v3073 = vpop.f32.mrb[0].mxu0
  %v3074 = vpop.f32.mrb[0].mxu0
  %v3075 = vadd.f32 %v2642, %v3074
  %v3076 = vpop.f32.mrb[0].mxu0
  %3077 = vmatprep.mubr.bf16.mxu0 0
  %3078 = vmatmul.mubr.bf16.gmra.mrb[0].mxu0 %v1925
  %v3079 = vpop.f32.mrb[0].mxu0
  %v3080 = vadd.f32 %v2647, %v3079
  %v3081 = vpop.f32.mrb[0].mxu0
  %v3082 = vpop.f32.mrb[0].mxu0
  %v3083 = vadd.f32 %v2650, %v3082
  %v3084 = vpop.f32.mrb[0].mxu0
  %3085 = vmatprep.mubr.bf16.mxu0 0
  %3086 = vmatmul.mubr.bf16.gmra.mrb[0].mxu0 %v1928
  %v3087 = vpop.f32.mrb[0].mxu0
  %v3088 = vadd.f32 %v2655, %v3087
  %v3089 = vpop.f32.mrb[0].mxu0
  %v3090 = vpop.f32.mrb[0].mxu0
  %v3091 = vadd.f32 %v2658, %v3090
  %v3092 = vpop.f32.mrb[0].mxu0
  %3093 = vmatprep.mubr.bf16.mxu0 0
  %3094 = vmatmul.mubr.bf16.gmra.mrb[0].mxu0 %v1931
  %v3095 = vpop.f32.mrb[0].mxu0
  %v3096 = vadd.f32 %v2663, %v3095
  %v3097 = vpop.f32.mrb[0].mxu0
  %v3098 = vpop.f32.mrb[0].mxu0
  %v3099 = vadd.f32 %v2666, %v3098
  %v3100 = vpop.f32.mrb[0].mxu0
  %3101 = vmatprep.mubr.bf16.mxu0 0
  %3102 = vmatmul.mubr.bf16.gmra.mrb[0].mxu0 %v1934
  %v3103 = vpop.f32.mrb[0].mxu0
  %v3104 = vadd.f32 %v2671, %v3103
  %v3105 = vpop.f32.mrb[0].mxu0
  %v3106 = vpop.f32.mrb[0].mxu0
  %v3107 = vadd.f32 %v2674, %v3106
  %v3108 = vpop.f32.mrb[0].mxu0
  %3109 = vmatprep.mubr.bf16.mxu0 0
  %3110 = vmatmul.mubr.bf16.gmra.mrb[0].mxu0 %v1937
  %v3111 = vpop.f32.mrb[0].mxu0
  %v3112 = vadd.f32 %v2679, %v3111
  %v3113 = vpop.f32.mrb[0].mxu0
  %v3114 = vpop.f32.mrb[0].mxu0
  %v3115 = vadd.f32 %v2682, %v3114
  %v3116 = vpop.f32.mrb[0].mxu0
  %3117 = vmatprep.mubr.bf16.mxu0 0
  %3118 = vmatmul.mubr.bf16.gmra.mrb[0].mxu0 %v1940
  %v3119 = vpop.f32.mrb[0].mxu0
  %v3120 = vadd.f32 %v2687, %v3119
  %v3121 = vpop.f32.mrb[0].mxu0
  %v3122 = vpop.f32.mrb[0].mxu0
  %v3123 = vadd.f32 %v2690, %v3122
  %v3124 = vpop.f32.mrb[0].mxu0
  %3125 = vmatprep.mubr.bf16.mxu0 0
  %3126 = vmatmul.mubr.bf16.gmra.mrb[0].mxu0 %v1943
  %v3127 = vpop.f32.mrb[0].mxu0
  %v3128 = vadd.f32 %v2695, %v3127
  %v3129 = vpop.f32.mrb[0].mxu0
  %v3130 = vpop.f32.mrb[0].mxu0
  %v3131 = vadd.f32 %v2698, %v3130
  %v3132 = vpop.f32.mrb[0].mxu0
  %3133 = vmatprep.mubr.bf16.mxu0 0
  %3134 = vmatmul.mubr.bf16.gmra.mrb[0].mxu0 %v1946
  %v3135 = vpop.f32.mrb[0].mxu0
  %v3136 = vadd.f32 %v2703, %v3135
  %v3137 = vpop.f32.mrb[0].mxu0
  %v3138 = vpop.f32.mrb[0].mxu0
  %v3139 = vadd.f32 %v2706, %v3138
  %v3140 = vpop.f32.mrb[0].mxu0
  %3141 = vmatprep.mubr.bf16.mxu0 0
  %3142 = vmatmul.mubr.bf16.gmra.mrb[0].mxu0 %v1949
  %v3143 = vpop.f32.mrb[0].mxu0
  %v3144 = vadd.f32 %v2711, %v3143
  %v3145 = vpop.f32.mrb[0].mxu0
  %v3146 = vpop.f32.mrb[0].mxu0
  %v3147 = vadd.f32 %v2714, %v3146
  %v3148 = vpop.f32.mrb[0].mxu0
  %3149 = vmatprep.mubr.bf16.mxu0 0
  %3150 = vmatmul.mubr.bf16.gmra.mrb[0].mxu0 %v1952
  %v3151 = vpop.f32.mrb[0].mxu0
  %v3152 = vadd.f32 %v2719, %v3151
  %v3153 = vpop.f32.mrb[0].mxu0
  %v3154 = vpop.f32.mrb[0].mxu0
  %v3155 = vadd.f32 %v2722, %v3154
  %v3156 = vpop.f32.mrb[0].mxu0
  %3157 = vmatprep.mubr.bf16.mxu0 0
  %3158 = vmatmul.mubr.bf16.gmra.mrb[0].mxu0 %v1955
  %v3159 = vpop.f32.mrb[0].mxu0
  %v3160 = vadd.f32 %v2727, %v3159
  %v3161 = vpop.f32.mrb[0].mxu0
  %v3162 = vpop.f32.mrb[0].mxu0
  %v3163 = vadd.f32 %v2730, %v3162
  %v3164 = vpop.f32.mrb[0].mxu0
  %3165 = vmatprep.mubr.bf16.mxu0 0
  %3166 = vmatmul.mubr.bf16.gmra.mrb[0].mxu0 %v1958
  %v3167 = vpop.f32.mrb[0].mxu0
  %v3168 = vadd.f32 %v2735, %v3167
  %v3169 = vpop.f32.mrb[0].mxu0
  %v3170 = vpop.f32.mrb[0].mxu0
  %v3171 = vadd.f32 %v2738, %v3170
  %v3172 = vpop.f32.mrb[0].mxu0
  %3173 = vmatprep.mubr.bf16.mxu0 0
  %3174 = vmatmul.mubr.bf16.gmra.mrb[0].mxu0 %v1961
  %v3175 = vpop.f32.mrb[0].mxu0
  %v3176 = vadd.f32 %v2743, %v3175
  %v3177 = vpop.f32.mrb[0].mxu0
  %v3178 = vpop.f32.mrb[0].mxu0
  %v3179 = vadd.f32 %v2746, %v3178
  %v3180 = vpop.f32.mrb[0].mxu0
  %3181 = vmatprep.mubr.bf16.mxu0 0
  %3182 = vmatmul.mubr.bf16.gmra.mrb[0].mxu0 %v1964
  %v3183 = vpop.f32.mrb[0].mxu0
  %v3184 = vadd.f32 %v2751, %v3183
  %v3185 = vpop.f32.mrb[0].mxu0
  %v3186 = vpop.f32.mrb[0].mxu0
  %v3187 = vadd.f32 %v2754, %v3186
  %v3188 = vpop.f32.mrb[0].mxu0
  %3189 = vmatprep.mubr.bf16.mxu0 0
  %3190 = vmatmul.mubr.bf16.gmra.mrb[0].mxu0 %v1967
  %v3191 = vpop.f32.mrb[0].mxu0
  %v3192 = vadd.f32 %v2759, %v3191
  %v3193 = vpop.f32.mrb[0].mxu0
  %v3194 = vpop.f32.mrb[0].mxu0
  %v3195 = vadd.f32 %v2762, %v3194
  %v3196 = vpop.f32.mrb[0].mxu0
  %3197 = vmatprep.mubr.bf16.mxu0 0
  %3198 = vmatmul.mubr.bf16.gmra.mrb[0].mxu0 %v1970
  %v3199 = vpop.f32.mrb[0].mxu0
  %v3200 = vadd.f32 %v2767, %v3199
  %v3201 = vpop.f32.mrb[0].mxu0
  %v3202 = vpop.f32.mrb[0].mxu0
  %v3203 = vadd.f32 %v2770, %v3202
  %v3204 = vpop.f32.mrb[0].mxu0
  %3205 = vmatprep.mubr.bf16.mxu0 0
  %3206 = vmatmul.mubr.bf16.gmra.mrb[0].mxu0 %v1973
  %v3207 = vpop.f32.mrb[0].mxu0
  %v3208 = vadd.f32 %v2775, %v3207
  %v3209 = vpop.f32.mrb[0].mxu0
  %v3210 = vpop.f32.mrb[0].mxu0
  %v3211 = vadd.f32 %v2778, %v3210
  %v3212 = vpop.f32.mrb[0].mxu0
  %3213 = vmatprep.mubr.bf16.mxu0 0
  %3214 = vmatmul.mubr.bf16.gmra.mrb[0].mxu0 %v1976
  %v3215 = vpop.f32.mrb[0].mxu0
  %v3216 = vadd.f32 %v2783, %v3215
  %v3217 = vpop.f32.mrb[0].mxu0
  %v3218 = vpop.f32.mrb[0].mxu0
  %v3219 = vadd.f32 %v2786, %v3218
  %v3220 = vpop.f32.mrb[0].mxu0
  %3221 = vmatprep.mubr.bf16.mxu0 0
  %3222 = vmatmul.mubr.bf16.gmra.mrb[0].mxu0 %v1979
  %v3223 = vpop.f32.mrb[0].mxu0
  %v3224 = vadd.f32 %v2791, %v3223
  %v3225 = vpop.f32.mrb[0].mxu0
  %v3226 = vpop.f32.mrb[0].mxu0
  %v3227 = vadd.f32 %v2794, %v3226
  %v3228 = vpop.f32.mrb[0].mxu0
  %3229 = vmatprep.mubr.bf16.mxu0 0
  %3230 = vmatmul.mubr.bf16.gmra.mrb[0].mxu0 %v1982
  %v3231 = vpop.f32.mrb[0].mxu0
  %v3232 = vadd.f32 %v2799, %v3231
  %v3233 = vpop.f32.mrb[0].mxu0
  %v3234 = vpop.f32.mrb[0].mxu0
  %v3235 = vadd.f32 %v2802, %v3234
  %v3236 = vpop.f32.mrb[0].mxu0
  %3237 = vmatprep.mubr.bf16.mxu0 0
  %3238 = vmatmul.mubr.bf16.gmra.mrb[0].mxu0 %v1985
  %v3239 = vpop.f32.mrb[0].mxu0
  %v3240 = vadd.f32 %v2807, %v3239
  %v3241 = vpop.f32.mrb[0].mxu0
  %v3242 = vpop.f32.mrb[0].mxu0
  %v3243 = vadd.f32 %v2810, %v3242
  %v3244 = vpop.f32.mrb[0].mxu0
  %3245 = vmatprep.mubr.bf16.mxu0 0
  %3246 = vmatmul.mubr.bf16.gmra.mrb[0].mxu0 %v1988
  %v3247 = vpop.f32.mrb[0].mxu0
  %v3248 = vadd.f32 %v2815, %v3247
  %v3249 = vpop.f32.mrb[0].mxu0
  %v3250 = vpop.f32.mrb[0].mxu0
  %v3251 = vadd.f32 %v2818, %v3250
  %v3252 = vpop.f32.mrb[0].mxu0
  %3253 = vmatprep.mubr.bf16.mxu0 0
  %3254 = vmatmul.mubr.bf16.gmra.mrb[0].mxu0 %v1991
  %v3255 = vpop.f32.mrb[0].mxu0
  %v3256 = vadd.f32 %v2823, %v3255
  %v3257 = vpop.f32.mrb[0].mxu0
  %v3258 = vpop.f32.mrb[0].mxu0
  %v3259 = vadd.f32 %v2826, %v3258
  %v3260 = vpop.f32.mrb[0].mxu0
  %3261 = vmatprep.mubr.bf16.mxu0 0
  %3262 = vmatmul.mubr.bf16.gmra.mrb[0].mxu0 %v1994
  %v3263 = vpop.f32.mrb[0].mxu0
  %v3264 = vadd.f32 %v2831, %v3263
  %v3265 = vpop.f32.mrb[0].mxu0
  %v3266 = vpop.f32.mrb[0].mxu0
  %v3267 = vadd.f32 %v2834, %v3266
  %v3268 = vpop.f32.mrb[0].mxu0
  %3269 = vmatprep.mubr.bf16.mxu0 0
  %3270 = vmatmul.mubr.bf16.gmra.mrb[0].mxu0 %v1997
  %v3271 = vpop.f32.mrb[0].mxu0
  %v3272 = vadd.f32 %v2839, %v3271
  %v3273 = vpop.f32.mrb[0].mxu0
  %v3274 = vpop.f32.mrb[0].mxu0
  %v3275 = vadd.f32 %v2842, %v3274
  %v3276 = vpop.f32.mrb[0].mxu0
  %3277 = vmatprep.mubr.bf16.mxu0 0
  %3278 = vmatmul.mubr.bf16.gmra.mrb[0].mxu0 %v2000
  %v3279 = vpop.f32.mrb[0].mxu0
  %v3280 = vadd.f32 %v2847, %v3279
  %v3281 = vpop.f32.mrb[0].mxu0
  %v3282 = vpop.f32.mrb[0].mxu0
  %v3283 = vadd.f32 %v2850, %v3282
  %v3284 = vpop.f32.mrb[0].mxu0
  %3285 = vmatprep.mubr.bf16.mxu0 0
  %3286 = vmatmul.mubr.bf16.gmra.mrb[0].mxu0 %v2003
  %v3287 = vpop.f32.mrb[0].mxu0
  %v3288 = vadd.f32 %v2855, %v3287
  %v3289 = vpop.f32.mrb[0].mxu0
  %v3290 = vpop.f32.mrb[0].mxu0
  %v3291 = vadd.f32 %v2858, %v3290
  %v3292 = vpop.f32.mrb[0].mxu0
  %3293 = vmatprep.mubr.bf16.mxu0 0
  %3294 = vmatmul.mubr.bf16.gmra.mrb[0].mxu0 %v2006
  %v3295 = vpop.f32.mrb[0].mxu0
  %v3296 = vadd.f32 %v2863, %v3295
  %v3297 = vpop.f32.mrb[0].mxu0
  %v3298 = vpop.f32.mrb[0].mxu0
  %v3299 = vadd.f32 %v2866, %v3298
  %v3300 = vpop.f32.mrb[0].mxu0
  %3301 = vmatprep.mubr.bf16.mxu0 0
  %3302 = vmatmul.mubr.bf16.gmra.mrb[0].mxu0 %v2009
  %v3303 = vpop.f32.mrb[0].mxu0
  %v3304 = vadd.f32 %v2871, %v3303
  %v3305 = vpop.f32.mrb[0].mxu0
  %v3306 = vpop.f32.mrb[0].mxu0
  %v3307 = vadd.f32 %v2874, %v3306
  %v3308 = vpop.f32.mrb[0].mxu0
  %3309 = vdwg.mxu0
  %v3310 = vmax.f32 %v2912, 0.0
  %v3311 = vmax.f32 %v2915, 0.0
  %v3312 = vmax.f32 %v2920, 0.0
  %v3313 = vmax.f32 %v2923, 0.0
  %v3314 = vmax.f32 %v2928, 0.0
  %v3315 = vmax.f32 %v2931, 0.0
  %v3316 = vmax.f32 %v2936, 0.0
  %v3317 = vmax.f32 %v2939, 0.0
  %v3318 = vmax.f32 %v2944, 0.0
  %v3319 = vmax.f32 %v2947, 0.0
  %v3320 = vmax.f32 %v2952, 0.0
  %v3321 = vmax.f32 %v2955, 0.0
  %v3322 = vmax.f32 %v2960, 0.0
  %v3323 = vmax.f32 %v2963, 0.0
  %v3324 = vmax.f32 %v2968, 0.0
  %v3325 = vmax.f32 %v2971, 0.0
  %v3326 = vmax.f32 %v2976, 0.0
  %v3327 = vmax.f32 %v2979, 0.0
  %v3328 = vmax.f32 %v2984, 0.0
  %v3329 = vmax.f32 %v2987, 0.0
  %v3330 = vmax.f32 %v2992, 0.0
  %v3331 = vmax.f32 %v2995, 0.0
  %v3332 = vmax.f32 %v3000, 0.0
  %v3333 = vmax.f32 %v3003, 0.0
  %v3334 = vmax.f32 %v3008, 0.0
  %v3335 = vmax.f32 %v3011, 0.0
  %v3336 = vmax.f32 %v3016, 0.0
  %v3337 = vmax.f32 %v3019, 0.0
  %v3338 = vmax.f32 %v3024, 0.0
  %v3339 = vmax.f32 %v3027, 0.0
  %v3340 = vmax.f32 %v3032, 0.0
  %v3341 = vmax.f32 %v3035, 0.0
  %v3342 = vmax.f32 %v3040, 0.0
  %v3343 = vmax.f32 %v3043, 0.0
  %v3344 = vmax.f32 %v3048, 0.0
  %v3345 = vmax.f32 %v3051, 0.0
  %v3346 = vmax.f32 %v3056, 0.0
  %v3347 = vmax.f32 %v3059, 0.0
  %v3348 = vmax.f32 %v3064, 0.0
  %v3349 = vmax.f32 %v3067, 0.0
  %v3350 = vmax.f32 %v3072, 0.0
  %v3351 = vmax.f32 %v3075, 0.0
  %v3352 = vmax.f32 %v3080, 0.0
  %v3353 = vmax.f32 %v3083, 0.0
  %v3354 = vmax.f32 %v3088, 0.0
  %v3355 = vmax.f32 %v3091, 0.0
  %v3356 = vmax.f32 %v3096, 0.0
  %v3357 = vmax.f32 %v3099, 0.0
  %v3358 = vmax.f32 %v3104, 0.0
  %v3359 = vmax.f32 %v3107, 0.0
  %v3360 = vmax.f32 %v3112, 0.0
  %v3361 = vmax.f32 %v3115, 0.0
  %v3362 = vmax.f32 %v3120, 0.0
  %v3363 = vmax.f32 %v3123, 0.0
  %v3364 = vmax.f32 %v3128, 0.0
  %v3365 = vmax.f32 %v3131, 0.0
  %v3366 = vmax.f32 %v3136, 0.0
  %v3367 = vmax.f32 %v3139, 0.0
  %v3368 = vmax.f32 %v3144, 0.0
  %v3369 = vmax.f32 %v3147, 0.0
  %v3370 = vmax.f32 %v3152, 0.0
  %v3371 = vmax.f32 %v3155, 0.0
  %v3372 = vmax.f32 %v3160, 0.0
  %v3373 = vmax.f32 %v3163, 0.0
  %v3374 = vmax.f32 %v3168, 0.0
  %v3375 = vmax.f32 %v3171, 0.0
  %v3376 = vmax.f32 %v3176, 0.0
  %v3377 = vmax.f32 %v3179, 0.0
  %v3378 = vmax.f32 %v3184, 0.0
  %v3379 = vmax.f32 %v3187, 0.0
  %v3380 = vmax.f32 %v3192, 0.0
  %v3381 = vmax.f32 %v3195, 0.0
  %v3382 = vmax.f32 %v3200, 0.0
  %v3383 = vmax.f32 %v3203, 0.0
  %v3384 = vmax.f32 %v3208, 0.0
  %v3385 = vmax.f32 %v3211, 0.0
  %v3386 = vmax.f32 %v3216, 0.0
  %v3387 = vmax.f32 %v3219, 0.0
  %v3388 = vmax.f32 %v3224, 0.0
  %v3389 = vmax.f32 %v3227, 0.0
  %v3390 = vmax.f32 %v3232, 0.0
  %v3391 = vmax.f32 %v3235, 0.0
  %v3392 = vmax.f32 %v3240, 0.0
  %v3393 = vmax.f32 %v3243, 0.0
  %v3394 = vmax.f32 %v3248, 0.0
  %v3395 = vmax.f32 %v3251, 0.0
  %v3396 = vmax.f32 %v3256, 0.0
  %v3397 = vmax.f32 %v3259, 0.0
  %v3398 = vmax.f32 %v3264, 0.0
  %v3399 = vmax.f32 %v3267, 0.0
  %v3400 = vmax.f32 %v3272, 0.0
  %v3401 = vmax.f32 %v3275, 0.0
  %v3402 = vmax.f32 %v3280, 0.0
  %v3403 = vmax.f32 %v3283, 0.0
  %v3404 = vmax.f32 %v3288, 0.0
  %v3405 = vmax.f32 %v3291, 0.0
  %v3406 = vmax.f32 %v3296, 0.0
  %v3407 = vmax.f32 %v3299, 0.0
  %v3408 = vmax.f32 %v3304, 0.0
  %v3409 = vmax.f32 %v3307, 0.0
  %3410 = vst [vmem:[%s3] sm:$0xff] %v3310
  %3411 = vst [vmem:[%s3 + $0x8] sm:$0xff] %v3311
  %3412 = vst [vmem:[%s3 + $0x10] sm:$0xff] %v3312
  %3413 = vst [vmem:[%s3 + $0x18] sm:$0xff] %v3313
  %3414 = vst [vmem:[%s3 + $0x20] sm:$0xff] %v3314
  %3415 = vst [vmem:[%s3 + $0x28] sm:$0xff] %v3315
  %3416 = vst [vmem:[%s3 + $0x30] sm:$0xff] %v3316
  %3417 = vst [vmem:[%s3 + $0x38] sm:$0xff] %v3317
  %3418 = vst [vmem:[%s3 + $0x40] sm:$0xff] %v3318
  %3419 = vst [vmem:[%s3 + $0x48] sm:$0xff] %v3319
  %3420 = vst [vmem:[%s3 + $0x50] sm:$0xff] %v3320
  %3421 = vst [vmem:[%s3 + $0x58] sm:$0xff] %v3321
  %3422 = vst [vmem:[%s3 + $0x60] sm:$0xff] %v3322
  %3423 = vst [vmem:[%s3 + $0x68] sm:$0xff] %v3323
  %3424 = vst [vmem:[%s3 + $0x70] sm:$0xff] %v3324
  %3425 = vst [vmem:[%s3 + $0x78] sm:$0xff] %v3325
  %3426 = vst [vmem:[%s3 + $0x80] sm:$0xff] %v3326
  %3427 = vst [vmem:[%s3 + $0x88] sm:$0xff] %v3327
  %3428 = vst [vmem:[%s3 + $0x90] sm:$0xff] %v3328
  %3429 = vst [vmem:[%s3 + $0x98] sm:$0xff] %v3329
  %3430 = vst [vmem:[%s3 + $0xa0] sm:$0xff] %v3330
  %3431 = vst [vmem:[%s3 + $0xa8] sm:$0xff] %v3331
  %3432 = vst [vmem:[%s3 + $0xb0] sm:$0xff] %v3332
  %3433 = vst [vmem:[%s3 + $0xb8] sm:$0xff] %v3333
  %3434 = vst [vmem:[%s3 + $0xc0] sm:$0xff] %v3334
  %3435 = vst [vmem:[%s3 + $0xc8] sm:$0xff] %v3335
  %3436 = vst [vmem:[%s3 + $0xd0] sm:$0xff] %v3336
  %3437 = vst [vmem:[%s3 + $0xd8] sm:$0xff] %v3337
  %3438 = vst [vmem:[%s3 + $0xe0] sm:$0xff] %v3338
  %3439 = vst [vmem:[%s3 + $0xe8] sm:$0xff] %v3339
  %3440 = vst [vmem:[%s3 + $0xf0] sm:$0xff] %v3340
  %3441 = vst [vmem:[%s3 + $0xf8] sm:$0xff] %v3341
  %3442 = vst [vmem:[%s3 + $0x100] sm:$0xff] %v3342
  %3443 = vst [vmem:[%s3 + $0x108] sm:$0xff] %v3343
  %3444 = vst [vmem:[%s3 + $0x110] sm:$0xff] %v3344
  %3445 = vst [vmem:[%s3 + $0x118] sm:$0xff] %v3345
  %3446 = vst [vmem:[%s3 + $0x120] sm:$0xff] %v3346
  %3447 = vst [vmem:[%s3 + $0x128] sm:$0xff] %v3347
  %3448 = vst [vmem:[%s3 + $0x130] sm:$0xff] %v3348
  %3449 = vst [vmem:[%s3 + $0x138] sm:$0xff] %v3349
  %3450 = vst [vmem:[%s3 + $0x140] sm:$0xff] %v3350
  %3451 = vst [vmem:[%s3 + $0x148] sm:$0xff] %v3351
  %3452 = vst [vmem:[%s3 + $0x150] sm:$0xff] %v3352
  %3453 = vst [vmem:[%s3 + $0x158] sm:$0xff] %v3353
  %3454 = vst [vmem:[%s3 + $0x160] sm:$0xff] %v3354
  %3455 = vst [vmem:[%s3 + $0x168] sm:$0xff] %v3355
  %3456 = vst [vmem:[%s3 + $0x170] sm:$0xff] %v3356
  %3457 = vst [vmem:[%s3 + $0x178] sm:$0xff] %v3357
  %3458 = vst [vmem:[%s3 + $0x180] sm:$0xff] %v3358
  %3459 = vst [vmem:[%s3 + $0x188] sm:$0xff] %v3359
  %3460 = vst [vmem:[%s3 + $0x190] sm:$0xff] %v3360
  %3461 = vst [vmem:[%s3 + $0x198] sm:$0xff] %v3361
  %3462 = vst [vmem:[%s3 + $0x1a0] sm:$0xff] %v3362
  %3463 = vst [vmem:[%s3 + $0x1a8] sm:$0xff] %v3363
  %3464 = vst [vmem:[%s3 + $0x1b0] sm:$0xff] %v3364
  %3465 = vst [vmem:[%s3 + $0x1b8] sm:$0xff] %v3365
  %3466 = vst [vmem:[%s3 + $0x1c0] sm:$0xff] %v3366
  %3467 = vst [vmem:[%s3 + $0x1c8] sm:$0xff] %v3367
  %3468 = vst [vmem:[%s3 + $0x1d0] sm:$0xff] %v3368
  %3469 = vst [vmem:[%s3 + $0x1d8] sm:$0xff] %v3369
  %3470 = vst [vmem:[%s3 + $0x1e0] sm:$0xff] %v3370
  %3471 = vst [vmem:[%s3 + $0x1e8] sm:$0xff] %v3371
  %3472 = vst [vmem:[%s3 + $0x1f0] sm:$0xff] %v3372
  %3473 = vst [vmem:[%s3 + $0x1f8] sm:$0xff] %v3373
  %3474 = vst [vmem:[%s3 + $0x200] sm:$0xff] %v3374
  %3475 = vst [vmem:[%s3 + $0x208] sm:$0xff] %v3375
  %3476 = vst [vmem:[%s3 + $0x210] sm:$0xff] %v3376
  %3477 = vst [vmem:[%s3 + $0x218] sm:$0xff] %v3377
  %3478 = vst [vmem:[%s3 + $0x220] sm:$0xff] %v3378
  %3479 = vst [vmem:[%s3 + $0x228] sm:$0xff] %v3379
  %3480 = vst [vmem:[%s3 + $0x230] sm:$0xff] %v3380
  %3481 = vst [vmem:[%s3 + $0x238] sm:$0xff] %v3381
  %3482 = vst [vmem:[%s3 + $0x240] sm:$0xff] %v3382
  %3483 = vst [vmem:[%s3 + $0x248] sm:$0xff] %v3383
  %3484 = vst [vmem:[%s3 + $0x250] sm:$0xff] %v3384
  %3485 = vst [vmem:[%s3 + $0x258] sm:$0xff] %v3385
  %3486 = vst [vmem:[%s3 + $0x260] sm:$0xff] %v3386
  %3487 = vst [vmem:[%s3 + $0x268] sm:$0xff] %v3387
  %3488 = vst [vmem:[%s3 + $0x270] sm:$0xff] %v3388
  %3489 = vst [vmem:[%s3 + $0x278] sm:$0xff] %v3389
  %3490 = vst [vmem:[%s3 + $0x280] sm:$0xff] %v3390
  %3491 = vst [vmem:[%s3 + $0x288] sm:$0xff] %v3391
  %3492 = vst [vmem:[%s3 + $0x290] sm:$0xff] %v3392
  %3493 = vst [vmem:[%s3 + $0x298] sm:$0xff] %v3393
  %3494 = vst [vmem:[%s3 + $0x2a0] sm:$0xff] %v3394
  %3495 = vst [vmem:[%s3 + $0x2a8] sm:$0xff] %v3395
  %3496 = vst [vmem:[%s3 + $0x2b0] sm:$0xff] %v3396
  %3497 = vst [vmem:[%s3 + $0x2b8] sm:$0xff] %v3397
  %3498 = vst [vmem:[%s3 + $0x2c0] sm:$0xff] %v3398
  %3499 = vst [vmem:[%s3 + $0x2c8] sm:$0xff] %v3399
  %3500 = vst [vmem:[%s3 + $0x2d0] sm:$0xff] %v3400
  %3501 = vst [vmem:[%s3 + $0x2d8] sm:$0xff] %v3401
  %3502 = vst [vmem:[%s3 + $0x2e0] sm:$0xff] %v3402
  %3503 = vst [vmem:[%s3 + $0x2e8] sm:$0xff] %v3403
  %3504 = vst [vmem:[%s3 + $0x2f0] sm:$0xff] %v3404
  %3505 = vst [vmem:[%s3 + $0x2f8] sm:$0xff] %v3405
  %3506 = vst [vmem:[%s3 + $0x300] sm:$0xff] %v3406
  %3507 = vst [vmem:[%s3 + $0x308] sm:$0xff] %v3407
  %3508 = vst [vmem:[%s3 + $0x310] sm:$0xff] %v3408
  %3509 = vst [vmem:[%s3 + $0x318] sm:$0xff] %v3409
  // Predicated region
  $region14: #{decoder_forward.6} parent=0 // pred_check
    _
  $region15: #{decoder_forward.6} parent=0 // pred_check_branch
    %3511 = sbr.rel (0) target = $region17
  $region16: #{decoder_forward.6} parent=0 // pred_region
    _
  $region17: #{decoder_forward.6} parent=0 // pred_fallthru
    _
  // Predicated region
  $region18: #{decoder_forward.6} parent=0 // pred_check
    _
  $region19: #{decoder_forward.6} parent=0 // pred_check_branch
    %3513 = sbr.rel (0) target = $region21
  $region20: #{decoder_forward.6} parent=0 // pred_region
    _
  $region21: #{decoder_forward.6} parent=0 // pred_fallthru
    _

// kernel: decoder_forward.7
$region0: #{decoder_forward.7}
  #allocation0 [shape = 'u32[]', space=smem, size = 0x4, offset = 0x4, fixed_abs, tag = 'smem constant byte address 0x4 - core index']
  #allocation1 [shape = 'u32[144,128]{1,0:T(1,128)}', space=vmem, size = 0x12000, scoped, tag = 'internal scratch']
  %s0 = inlined_call_operand.vmem [shape: bf16[3200,288], index: 0, kind: input, shape index: {}]
  %s1 = inlined_call_operand.vmem [shape: bf16[288,16], index: 1, kind: input, shape index: {}]
  %s2 = inlined_call_operand.vmem [shape: f32[1,16], index: 2, kind: input, shape index: {}]
  %s3 = inlined_call_operand.vmem [shape: f32[3200,16], index: 3, kind: output, shape index: {}]
  %s4 = sld [smem:[#allocation0]]
  $region45: #{decoder_forward.7} parent=0
    _
  %s6 = ssub.s32 1, %s4
  %s7 = scalar_select 0, %s6, %s4
  loop: start=0, step=1, limit=6
  $region2: #{decoder_forward.7} parent=0 // loop_pre_header
    _
  $region3: #{decoder_forward.7} parent=0 // loop_header
    %s9 = sphi 0, %s13
    %p10 = scmp.ge.s32.totalorder %s9, 6
    %s19 = sphi 0, %s21
    %s22 = sphi 0, %s19
    %s23 = sphi 0, %s22
    %s39 = sphi 0, %s23
    %s43 = sphi 0, %s43
    %s45 = sphi 0, %s43
    %s46 = sphi 0, %s45
    %s60 = sphi 0, %s46
    %s64 = sphi 0, %s64
    %s66 = sphi 0, %s64
    %s67 = sphi 0, %s66
    %s81 = sphi 0, %s67
    %s87 = sphi 0, %s89
    %s90 = sphi 0, %s87
    %s91 = sphi 0, %s90
    %s107 = sphi 0, %s91
  $region4: #{decoder_forward.7} parent=0 // loop_header_branch
    %12 = sbr.rel (%p10) target = $region8
  $region5: #{decoder_forward.7} parent=0 // loop_body
    %s14 = ssub.s32 %s9, 1
    %s15 = ssub.s32 %s9, 2
    %s16 = sadd.s32 %s9, 1
    %s17 = ssub.s32 %s9, %s16
    %p18 = scmp.eq.s32.totalorder %s17, 0
    %s20 = sadd.s32 %s19, 1
    %s21 = scalar_select %p18, %s19, %s20
    %p24 = pneg %p18
    %p25 = scmp.eq.s32.totalorder %s9, 3
    %p26 = por %p24, %p25
    %p27 = scmp.ne.s32.totalorder %s19, %s22
    %p28 = scmp.eq.s32.totalorder %s9, 0
    %p29 = por %p27, %p28
    %p30 = scmp.ne.s32.totalorder %s19, %s22
    %p31 = scmp.eq.s32.totalorder %s14, 3
    %p32 = por %p30, %p31
    %p33 = scmp.ne.s32.totalorder %s22, %s23
    %p34 = scmp.eq.s32.totalorder %s14, 0
    %p35 = por %p33, %p34
    %p36 = scmp.ne.s32.totalorder %s22, %s23
    %p37 = scmp.eq.s32.totalorder %s15, 3
    %p38 = por %p36, %p37
    %p40 = scmp.ne.s32.totalorder %s23, %s39
    %p41 = scmp.eq.s32.totalorder %s15, 0
    %p42 = por %p40, %p41
    %s44 = sadd.s32 %s43, 1
    %p47 = scmp.eq.s32.totalorder %s9, 3
    %p48 = scmp.ne.s32.totalorder %s43, %s45
    %p49 = scmp.eq.s32.totalorder %s9, 0
    %p50 = por %p48, %p49
    %p51 = scmp.ne.s32.totalorder %s43, %s45
    %p52 = scmp.eq.s32.totalorder %s14, 3
    %p53 = por %p51, %p52
    %p54 = scmp.ne.s32.totalorder %s45, %s46
    %p55 = scmp.eq.s32.totalorder %s14, 0
    %p56 = por %p54, %p55
    %p57 = scmp.ne.s32.totalorder %s45, %s46
    %p58 = scmp.eq.s32.totalorder %s15, 3
    %p59 = por %p57, %p58
    %p61 = scmp.ne.s32.totalorder %s46, %s60
    %p62 = scmp.eq.s32.totalorder %s15, 0
    %p63 = por %p61, %p62
    %s65 = sadd.s32 %s64, 1
    %p68 = scmp.eq.s32.totalorder %s9, 3
    %p69 = scmp.ne.s32.totalorder %s64, %s66
    %p70 = scmp.eq.s32.totalorder %s9, 0
    %p71 = por %p69, %p70
    %p72 = scmp.ne.s32.totalorder %s64, %s66
    %p73 = scmp.eq.s32.totalorder %s14, 3
    %p74 = por %p72, %p73
    %p75 = scmp.ne.s32.totalorder %s66, %s67
    %p76 = scmp.eq.s32.totalorder %s14, 0
    %p77 = por %p75, %p76
    %p78 = scmp.ne.s32.totalorder %s66, %s67
    %p79 = scmp.eq.s32.totalorder %s15, 3
    %p80 = por %p78, %p79
    %p82 = scmp.ne.s32.totalorder %s67, %s81
    %p83 = scmp.eq.s32.totalorder %s15, 0
    %p84 = por %p82, %p83
    %s85 = ssub.s32 %s9, %s16
    %p86 = scmp.eq.s32.totalorder %s85, 0
    %s88 = sadd.s32 %s87, 1
    %s89 = scalar_select %p86, %s87, %s88
    %p92 = pneg %p86
    %p93 = scmp.eq.s32.totalorder %s9, 3
    %p94 = por %p92, %p93
    %p95 = scmp.ne.s32.totalorder %s87, %s90
    %p96 = scmp.eq.s32.totalorder %s9, 0
    %p97 = por %p95, %p96
    %p98 = scmp.ne.s32.totalorder %s87, %s90
    %p99 = scmp.eq.s32.totalorder %s14, 3
    %p100 = por %p98, %p99
    %p101 = scmp.ne.s32.totalorder %s90, %s91
    %p102 = scmp.eq.s32.totalorder %s14, 0
    %p103 = por %p101, %p102
    %p104 = scmp.ne.s32.totalorder %s90, %s91
    %p105 = scmp.eq.s32.totalorder %s15, 3
    %p106 = por %p104, %p105
    %p108 = scmp.ne.s32.totalorder %s91, %s107
    %p109 = scmp.eq.s32.totalorder %s15, 0
    %p110 = por %p108, %p109
    %p111 = scmp.le.s32.totalorder 1, %s9
    %p112 = scmp.lt.s32.totalorder %s9, 5
    %p113 = pnand %p111, %p112
    %p114 = pneg %p113
    // Predicated region
    $region9: #{decoder_forward.7} parent=5 // pred_check
      _
    $region10: #{decoder_forward.7} parent=5 // pred_check_branch
      %116 = sbr.rel (%p113) target = $region12
    $region11: #{decoder_forward.7} parent=5 // pred_region
      %s117 = ssub.s32 %s9, 1
      // Predicated region
      $region13: #{decoder_forward.7} parent=11 // pred_check
        %p118 = pneg %p56
      $region14: #{decoder_forward.7} parent=11 // pred_check_branch
        %120 = sbr.rel (%p118) target = $region16
      $region15: #{decoder_forward.7} parent=11 // pred_region
        _
      $region16: #{decoder_forward.7} parent=11 // pred_fallthru
        _
      // Predicated region
      $region17: #{decoder_forward.7} parent=11 // pred_check
        %p121 = pneg %p77
      $region18: #{decoder_forward.7} parent=11 // pred_check_branch
        %123 = sbr.rel (%p121) target = $region20
      $region19: #{decoder_forward.7} parent=11 // pred_region
        _
      $region20: #{decoder_forward.7} parent=11 // pred_fallthru
        _
    $region12: #{decoder_forward.7} parent=5 // pred_fallthru
      _
    %p124 = scmp.lt.s32.totalorder %s9, 4
    // Predicated region
    $region21: #{decoder_forward.7} parent=5 // pred_check
      %p125 = pneg %p124
    $region22: #{decoder_forward.7} parent=5 // pred_check_branch
      %127 = sbr.rel (%p125) target = $region24
    $region23: #{decoder_forward.7} parent=5 // pred_region
      // Predicated region
      $region25: #{decoder_forward.7} parent=23 // pred_check
        %p128 = pneg %p29
      $region26: #{decoder_forward.7} parent=23 // pred_check_branch
        %130 = sbr.rel (%p128) target = $region28
      $region27: #{decoder_forward.7} parent=23 // pred_region
        %s131 = smul.u32 100, %s9
        %p132 = scmp.lt.s32.totalorder %s131, 399
        %s133 = scalar_select %p132, %s131, 399
        %s134 = smul.addr %s133, 3
        %s135 = smul.addr %s134, 4
        %s136 = scalar_lea.vmem %s0, %s135
        %s137 = smul.u32 100, %s9
      $region28: #{decoder_forward.7} parent=23 // pred_fallthru
        _
    $region24: #{decoder_forward.7} parent=5 // pred_fallthru
      _
    %p138 = scmp.le.s32.totalorder 1, %s9
    %p139 = scmp.lt.s32.totalorder %s9, 5
    %p140 = pnand %p138, %p139
    %p141 = pneg %p140
    // Predicated region
    $region29: #{decoder_forward.7} parent=5 // pred_check
      _
    $region30: #{decoder_forward.7} parent=5 // pred_check_branch
      %143 = sbr.rel (%p140) target = $region32
    $region31: #{decoder_forward.7} parent=5 // pred_region
      %s144 = ssub.s32 %s9, 1
      %s145 = smul.u32 100, %s14
      %p146 = scmp.lt.s32.totalorder %s145, 399
      %s147 = scalar_select %p146, %s145, 399
      %s148 = smul.addr %s147, 3
      %s149 = smul.addr %s148, 4
      %s150 = scalar_lea.vmem %s0, %s149
      %p151 = pneg %p35
      %p152 = pneg %p32
      %p153 = pneg %p56
      %p154 = pneg %p53
      %p155 = pneg %p77
      %p156 = pneg %p74
      %p157 = pneg %p103
      %p158 = pneg %p100
      %s159 = smul.u32 100, %s14
      %p160 = scmp.lt.s32.totalorder %s159, 399
      %s161 = scalar_select %p160, %s159, 399
      %s162 = smul.addr %s161, 8
      %s163 = scalar_lea.vmem %s3, %s162
      %s164 = smul.u32 100, %s14
      %p165 = scmp.lt.s32.totalorder %s164, 399
      %s166 = scalar_select %p165, %s164, 399
      %s167 = smul.addr %s166, 3
      %s168 = smul.addr %s167, 4
      %s169 = scalar_lea.vmem %s0, %s168
      %s170 = smul.u32 100, %s14
      %s171 = smul.u32 100, %s14
      %p172 = scmp.lt.s32.totalorder %s171, 399
      %s173 = scalar_select %p172, %s171, 399
      %s174 = smul.addr %s173, 8
      %s175 = scalar_lea.vmem %s3, %s174
      %s176 = smul.u32 100, %s14
      %v178 = vld [vmem:[%s169] sm:$0xff]
      %v179 = vld [vmem:[%s169 + $0x8] sm:$0xf]
      %v180 = vld [vmem:[%s169 + $0xc] sm:$0xff]
      %v181 = vld [vmem:[%s169 + $0x14] sm:$0xf]
      %v182 = vld [vmem:[%s169 + $0x18] sm:$0xff]
      %v183 = vld [vmem:[%s169 + $0x20] sm:$0xf]
      %v184 = vld [vmem:[%s169 + $0x24] sm:$0xff]
      %v185 = vld [vmem:[%s169 + $0x2c] sm:$0xf]
      %v186 = vld [vmem:[%s169 + $0x30] sm:$0xff]
      %v187 = vld [vmem:[%s169 + $0x38] sm:$0xf]
      %v188 = vld [vmem:[%s169 + $0x3c] sm:$0xff]
      %v189 = vld [vmem:[%s169 + $0x44] sm:$0xf]
      %v190 = vld [vmem:[%s169 + $0x48] sm:$0xff]
      %v191 = vld [vmem:[%s169 + $0x50] sm:$0xf]
      %v192 = vld [vmem:[%s169 + $0x54] sm:$0xff]
      %v193 = vld [vmem:[%s169 + $0x5c] sm:$0xf]
      %v194 = vld [vmem:[%s169 + $0x60] sm:$0xff]
      %v195 = vld [vmem:[%s169 + $0x68] sm:$0xf]
      %v196 = vld [vmem:[%s169 + $0x6c] sm:$0xff]
      %v197 = vld [vmem:[%s169 + $0x74] sm:$0xf]
      %v198 = vld [vmem:[%s169 + $0x78] sm:$0xff]
      %v199 = vld [vmem:[%s169 + $0x80] sm:$0xf]
      %v200 = vld [vmem:[%s169 + $0x84] sm:$0xff]
      %v201 = vld [vmem:[%s169 + $0x8c] sm:$0xf]
      %v202 = vld [vmem:[%s169 + $0x90] sm:$0xff]
      %v203 = vld [vmem:[%s169 + $0x98] sm:$0xf]
      %v204 = vld [vmem:[%s169 + $0x9c] sm:$0xff]
      %v205 = vld [vmem:[%s169 + $0xa4] sm:$0xf]
      %v206 = vld [vmem:[%s169 + $0xa8] sm:$0xff]
      %v207 = vld [vmem:[%s169 + $0xb0] sm:$0xf]
      %v208 = vld [vmem:[%s169 + $0xb4] sm:$0xff]
      %v209 = vld [vmem:[%s169 + $0xbc] sm:$0xf]
      %v210 = vld [vmem:[%s169 + $0xc0] sm:$0xff]
      %v211 = vld [vmem:[%s169 + $0xc8] sm:$0xf]
      %v212 = vld [vmem:[%s169 + $0xcc] sm:$0xff]
      %v213 = vld [vmem:[%s169 + $0xd4] sm:$0xf]
      %v214 = vld [vmem:[%s169 + $0xd8] sm:$0xff]
      %v215 = vld [vmem:[%s169 + $0xe0] sm:$0xf]
      %v216 = vld [vmem:[%s169 + $0xe4] sm:$0xff]
      %v217 = vld [vmem:[%s169 + $0xec] sm:$0xf]
      %v218 = vld [vmem:[%s169 + $0xf0] sm:$0xff]
      %v219 = vld [vmem:[%s169 + $0xf8] sm:$0xf]
      %v220 = vld [vmem:[%s169 + $0xfc] sm:$0xff]
      %v221 = vld [vmem:[%s169 + $0x104] sm:$0xf]
      %v222 = vld [vmem:[%s169 + $0x108] sm:$0xff]
      %v223 = vld [vmem:[%s169 + $0x110] sm:$0xf]
      %v224 = vld [vmem:[%s169 + $0x114] sm:$0xff]
      %v225 = vld [vmem:[%s169 + $0x11c] sm:$0xf]
      %v226 = vld [vmem:[%s169 + $0x120] sm:$0xff]
      %v227 = vld [vmem:[%s169 + $0x128] sm:$0xf]
      %v228 = vld [vmem:[%s169 + $0x12c] sm:$0xff]
      %v229 = vld [vmem:[%s169 + $0x134] sm:$0xf]
      %v230 = vld [vmem:[%s169 + $0x138] sm:$0xff]
      %v231 = vld [vmem:[%s169 + $0x140] sm:$0xf]
      %v232 = vld [vmem:[%s169 + $0x144] sm:$0xff]
      %v233 = vld [vmem:[%s169 + $0x14c] sm:$0xf]
      %v234 = vld [vmem:[%s169 + $0x150] sm:$0xff]
      %v235 = vld [vmem:[%s169 + $0x158] sm:$0xf]
      %v236 = vld [vmem:[%s169 + $0x15c] sm:$0xff]
      %v237 = vld [vmem:[%s169 + $0x164] sm:$0xf]
      %v238 = vld [vmem:[%s169 + $0x168] sm:$0xff]
      %v239 = vld [vmem:[%s169 + $0x170] sm:$0xf]
      %v240 = vld [vmem:[%s169 + $0x174] sm:$0xff]
      %v241 = vld [vmem:[%s169 + $0x17c] sm:$0xf]
      %v242 = vld [vmem:[%s169 + $0x180] sm:$0xff]
      %v243 = vld [vmem:[%s169 + $0x188] sm:$0xf]
      %v244 = vld [vmem:[%s169 + $0x18c] sm:$0xff]
      %v245 = vld [vmem:[%s169 + $0x194] sm:$0xf]
      %v246 = vld [vmem:[%s169 + $0x198] sm:$0xff]
      %v247 = vld [vmem:[%s169 + $0x1a0] sm:$0xf]
      %v248 = vld [vmem:[%s169 + $0x1a4] sm:$0xff]
      %v249 = vld [vmem:[%s169 + $0x1ac] sm:$0xf]
      %v250 = vld [vmem:[%s169 + $0x1b0] sm:$0xff]
      %v251 = vld [vmem:[%s169 + $0x1b8] sm:$0xf]
      %v252 = vld [vmem:[%s169 + $0x1bc] sm:$0xff]
      %v253 = vld [vmem:[%s169 + $0x1c4] sm:$0xf]
      %v254 = vld [vmem:[%s169 + $0x1c8] sm:$0xff]
      %v255 = vld [vmem:[%s169 + $0x1d0] sm:$0xf]
      %v256 = vld [vmem:[%s169 + $0x1d4] sm:$0xff]
      %v257 = vld [vmem:[%s169 + $0x1dc] sm:$0xf]
      %v258 = vld [vmem:[%s169 + $0x1e0] sm:$0xff]
      %v259 = vld [vmem:[%s169 + $0x1e8] sm:$0xf]
      %v260 = vld [vmem:[%s169 + $0x1ec] sm:$0xff]
      %v261 = vld [vmem:[%s169 + $0x1f4] sm:$0xf]
      %v262 = vld [vmem:[%s169 + $0x1f8] sm:$0xff]
      %v263 = vld [vmem:[%s169 + $0x200] sm:$0xf]
      %v264 = vld [vmem:[%s169 + $0x204] sm:$0xff]
      %v265 = vld [vmem:[%s169 + $0x20c] sm:$0xf]
      %v266 = vld [vmem:[%s169 + $0x210] sm:$0xff]
      %v267 = vld [vmem:[%s169 + $0x218] sm:$0xf]
      %v268 = vld [vmem:[%s169 + $0x21c] sm:$0xff]
      %v269 = vld [vmem:[%s169 + $0x224] sm:$0xf]
      %v270 = vld [vmem:[%s169 + $0x228] sm:$0xff]
      %v271 = vld [vmem:[%s169 + $0x230] sm:$0xf]
      %v272 = vld [vmem:[%s169 + $0x234] sm:$0xff]
      %v273 = vld [vmem:[%s169 + $0x23c] sm:$0xf]
      %v274 = vld [vmem:[%s169 + $0x240] sm:$0xff]
      %v275 = vld [vmem:[%s169 + $0x248] sm:$0xf]
      %v276 = vld [vmem:[%s169 + $0x24c] sm:$0xff]
      %v277 = vld [vmem:[%s169 + $0x254] sm:$0xf]
      %v278 = vld [vmem:[%s169 + $0x258] sm:$0xff]
      %v279 = vld [vmem:[%s169 + $0x260] sm:$0xf]
      %v280 = vld [vmem:[%s169 + $0x264] sm:$0xff]
      %v281 = vld [vmem:[%s169 + $0x26c] sm:$0xf]
      %v282 = vld [vmem:[%s169 + $0x270] sm:$0xff]
      %v283 = vld [vmem:[%s169 + $0x278] sm:$0xf]
      %v284 = vld [vmem:[%s169 + $0x27c] sm:$0xff]
      %v285 = vld [vmem:[%s169 + $0x284] sm:$0xf]
      %v286 = vld [vmem:[%s169 + $0x288] sm:$0xff]
      %v287 = vld [vmem:[%s169 + $0x290] sm:$0xf]
      %v288 = vld [vmem:[%s169 + $0x294] sm:$0xff]
      %v289 = vld [vmem:[%s169 + $0x29c] sm:$0xf]
      %v290 = vld [vmem:[%s169 + $0x2a0] sm:$0xff]
      %v291 = vld [vmem:[%s169 + $0x2a8] sm:$0xf]
      %v292 = vld [vmem:[%s169 + $0x2ac] sm:$0xff]
      %v293 = vld [vmem:[%s169 + $0x2b4] sm:$0xf]
      %v294 = vld [vmem:[%s169 + $0x2b8] sm:$0xff]
      %v295 = vld [vmem:[%s169 + $0x2c0] sm:$0xf]
      %v296 = vld [vmem:[%s169 + $0x2c4] sm:$0xff]
      %v297 = vld [vmem:[%s169 + $0x2cc] sm:$0xf]
      %v298 = vld [vmem:[%s169 + $0x2d0] sm:$0xff]
      %v299 = vld [vmem:[%s169 + $0x2d8] sm:$0xf]
      %v300 = vld [vmem:[%s169 + $0x2dc] sm:$0xff]
      %v301 = vld [vmem:[%s169 + $0x2e4] sm:$0xf]
      %v302 = vld [vmem:[%s169 + $0x2e8] sm:$0xff]
      %v303 = vld [vmem:[%s169 + $0x2f0] sm:$0xf]
      %v304 = vld [vmem:[%s169 + $0x2f4] sm:$0xff]
      %v305 = vld [vmem:[%s169 + $0x2fc] sm:$0xf]
      %v306 = vld [vmem:[%s169 + $0x300] sm:$0xff]
      %v307 = vld [vmem:[%s169 + $0x308] sm:$0xf]
      %v308 = vld [vmem:[%s169 + $0x30c] sm:$0xff]
      %v309 = vld [vmem:[%s169 + $0x314] sm:$0xf]
      %v310 = vld [vmem:[%s169 + $0x318] sm:$0xff]
      %v311 = vld [vmem:[%s169 + $0x320] sm:$0xf]
      %v312 = vld [vmem:[%s169 + $0x324] sm:$0xff]
      %v313 = vld [vmem:[%s169 + $0x32c] sm:$0xf]
      %v314 = vld [vmem:[%s169 + $0x330] sm:$0xff]
      %v315 = vld [vmem:[%s169 + $0x338] sm:$0xf]
      %v316 = vld [vmem:[%s169 + $0x33c] sm:$0xff]
      %v317 = vld [vmem:[%s169 + $0x344] sm:$0xf]
      %v318 = vld [vmem:[%s169 + $0x348] sm:$0xff]
      %v319 = vld [vmem:[%s169 + $0x350] sm:$0xf]
      %v320 = vld [vmem:[%s169 + $0x354] sm:$0xff]
      %v321 = vld [vmem:[%s169 + $0x35c] sm:$0xf]
      %v322 = vld [vmem:[%s169 + $0x360] sm:$0xff]
      %v323 = vld [vmem:[%s169 + $0x368] sm:$0xf]
      %v324 = vld [vmem:[%s169 + $0x36c] sm:$0xff]
      %v325 = vld [vmem:[%s169 + $0x374] sm:$0xf]
      %v326 = vld [vmem:[%s169 + $0x378] sm:$0xff]
      %v327 = vld [vmem:[%s169 + $0x380] sm:$0xf]
      %v328 = vld [vmem:[%s169 + $0x384] sm:$0xff]
      %v329 = vld [vmem:[%s169 + $0x38c] sm:$0xf]
      %v330 = vld [vmem:[%s169 + $0x390] sm:$0xff]
      %v331 = vld [vmem:[%s169 + $0x398] sm:$0xf]
      %v332 = vld [vmem:[%s169 + $0x39c] sm:$0xff]
      %v333 = vld [vmem:[%s169 + $0x3a4] sm:$0xf]
      %v334 = vld [vmem:[%s169 + $0x3a8] sm:$0xff]
      %v335 = vld [vmem:[%s169 + $0x3b0] sm:$0xf]
      %v336 = vld [vmem:[%s169 + $0x3b4] sm:$0xff]
      %v337 = vld [vmem:[%s169 + $0x3bc] sm:$0xf]
      %v338 = vld [vmem:[%s169 + $0x3c0] sm:$0xff]
      %v339 = vld [vmem:[%s169 + $0x3c8] sm:$0xf]
      %v340 = vld [vmem:[%s169 + $0x3cc] sm:$0xff]
      %v341 = vld [vmem:[%s169 + $0x3d4] sm:$0xf]
      %v342 = vld [vmem:[%s169 + $0x3d8] sm:$0xff]
      %v343 = vld [vmem:[%s169 + $0x3e0] sm:$0xf]
      %v344 = vld [vmem:[%s169 + $0x3e4] sm:$0xff]
      %v345 = vld [vmem:[%s169 + $0x3ec] sm:$0xf]
      %v346 = vld [vmem:[%s169 + $0x3f0] sm:$0xff]
      %v347 = vld [vmem:[%s169 + $0x3f8] sm:$0xf]
      %v348 = vld [vmem:[%s169 + $0x3fc] sm:$0xff]
      %v349 = vld [vmem:[%s169 + $0x404] sm:$0xf]
      %v350 = vld [vmem:[%s169 + $0x408] sm:$0xff]
      %v351 = vld [vmem:[%s169 + $0x410] sm:$0xf]
      %v352 = vld [vmem:[%s169 + $0x414] sm:$0xff]
      %v353 = vld [vmem:[%s169 + $0x41c] sm:$0xf]
      %v354 = vld [vmem:[%s169 + $0x420] sm:$0xff]
      %v355 = vld [vmem:[%s169 + $0x428] sm:$0xf]
      %v356 = vld [vmem:[%s169 + $0x42c] sm:$0xff]
      %v357 = vld [vmem:[%s169 + $0x434] sm:$0xf]
      %v358 = vld [vmem:[%s169 + $0x438] sm:$0xff]
      %v359 = vld [vmem:[%s169 + $0x440] sm:$0xf]
      %v360 = vld [vmem:[%s169 + $0x444] sm:$0xff]
      %v361 = vld [vmem:[%s169 + $0x44c] sm:$0xf]
      %v362 = vld [vmem:[%s169 + $0x450] sm:$0xff]
      %v363 = vld [vmem:[%s169 + $0x458] sm:$0xf]
      %v364 = vld [vmem:[%s169 + $0x45c] sm:$0xff]
      %v365 = vld [vmem:[%s169 + $0x464] sm:$0xf]
      %v366 = vld [vmem:[%s169 + $0x468] sm:$0xff]
      %v367 = vld [vmem:[%s169 + $0x470] sm:$0xf]
      %v368 = vld [vmem:[%s169 + $0x474] sm:$0xff]
      %v369 = vld [vmem:[%s169 + $0x47c] sm:$0xf]
      %v370 = vld [vmem:[%s169 + $0x480] sm:$0xff]
      %v371 = vld [vmem:[%s169 + $0x488] sm:$0xf]
      %v372 = vld [vmem:[%s169 + $0x48c] sm:$0xff]
      %v373 = vld [vmem:[%s169 + $0x494] sm:$0xf]
      %v374 = vld [vmem:[%s169 + $0x498] sm:$0xff]
      %v375 = vld [vmem:[%s169 + $0x4a0] sm:$0xf]
      %v376 = vld [vmem:[%s169 + $0x4a4] sm:$0xff]
      %v377 = vld [vmem:[%s169 + $0x4ac] sm:$0xf]
      %v378 = vld [vmem:[%s1] sm:$0xf]
      %v379 = vld [vmem:[%s1 + $0x4] sm:$0xf]
      %v380 = vld [vmem:[%s1 + $0x8] sm:$0xf]
      %v381 = vld [vmem:[%s1 + $0xc] sm:$0xf]
      %v382 = vld [vmem:[%s1 + $0x10] sm:$0xf]
      %v383 = vld [vmem:[%s1 + $0x14] sm:$0xf]
      %v384 = vld [vmem:[%s1 + $0x18] sm:$0xf]
      %v385 = vld [vmem:[%s1 + $0x1c] sm:$0xf]
      %v386 = vld [vmem:[%s1 + $0x20] sm:$0xf]
      %v387 = vld [vmem:[%s1 + $0x24] sm:$0xf]
      %v388 = vld [vmem:[%s1 + $0x28] sm:$0xf]
      %v389 = vld [vmem:[%s1 + $0x2c] sm:$0xf]
      %v390 = vld [vmem:[%s1 + $0x30] sm:$0xf]
      %v391 = vld [vmem:[%s1 + $0x34] sm:$0xf]
      %v392 = vld [vmem:[%s1 + $0x38] sm:$0xf]
      %v393 = vld [vmem:[%s1 + $0x3c] sm:$0xf]
      %v394 = vld [vmem:[%s1 + $0x40] sm:$0xf]
      %v395 = vld [vmem:[%s1 + $0x44] sm:$0xf]
      %v396 = vld [vmem:[%s1 + $0x48] sm:$0xf]
      %v397 = vld [vmem:[%s1 + $0x4c] sm:$0xf]
      %v398 = vld [vmem:[%s1 + $0x50] sm:$0xf]
      %v399 = vld [vmem:[%s1 + $0x54] sm:$0xf]
      %v400 = vld [vmem:[%s1 + $0x58] sm:$0xf]
      %v401 = vld [vmem:[%s1 + $0x5c] sm:$0xf]
      %v402 = vld [vmem:[%s1 + $0x60] sm:$0xf]
      %v403 = vld [vmem:[%s1 + $0x64] sm:$0xf]
      %v404 = vld [vmem:[%s1 + $0x68] sm:$0xf]
      %v405 = vld [vmem:[%s1 + $0x6c] sm:$0xf]
      %v406 = vld [vmem:[%s1 + $0x70] sm:$0xf]
      %v407 = vld [vmem:[%s1 + $0x74] sm:$0xf]
      %v408 = vld [vmem:[%s1 + $0x78] sm:$0xf]
      %v409 = vld [vmem:[%s1 + $0x7c] sm:$0xf]
      %v410 = vld [vmem:[%s1 + $0x80] sm:$0xf]
      %v411 = vld [vmem:[%s1 + $0x84] sm:$0xf]
      %v412 = vld [vmem:[%s1 + $0x88] sm:$0xf]
      %v413 = vld [vmem:[%s1 + $0x8c] sm:$0xf]
      %v414 = vld [vmem:[%s2] sm:$0x1]
      %v416 = vlaneseq
      %v417 = vshrl.u32 %v416, 7
      %v418 = vsub.s32 0, %v417
      %v419 = vrot.slane %v414, %v418
      %v621 = vunpack.c.l.b16 %v178
      %v622 = vunpack.c.h.b16 %v178
      %v623 = vunpack.c.l.b16 %v179
      %v624 = vunpack.c.l.b16 %v180
      %v625 = vunpack.c.h.b16 %v180
      %v626 = vunpack.c.l.b16 %v181
      %v627 = vunpack.c.l.b16 %v182
      %v628 = vunpack.c.h.b16 %v182
      %v629 = vunpack.c.l.b16 %v183
      %v630 = vunpack.c.l.b16 %v184
      %v631 = vunpack.c.h.b16 %v184
      %v632 = vunpack.c.l.b16 %v185
      %v633 = vunpack.c.l.b16 %v186
      %v634 = vunpack.c.h.b16 %v186
      %v635 = vunpack.c.l.b16 %v187
      %v636 = vunpack.c.l.b16 %v188
      %v637 = vunpack.c.h.b16 %v188
      %v638 = vunpack.c.l.b16 %v189
      %v639 = vunpack.c.l.b16 %v190
      %v640 = vunpack.c.h.b16 %v190
      %v641 = vunpack.c.l.b16 %v191
      %v642 = vunpack.c.l.b16 %v192
      %v643 = vunpack.c.h.b16 %v192
      %v644 = vunpack.c.l.b16 %v193
      %v645 = vunpack.c.l.b16 %v194
      %v646 = vunpack.c.h.b16 %v194
      %v647 = vunpack.c.l.b16 %v195
      %v648 = vunpack.c.l.b16 %v196
      %v649 = vunpack.c.h.b16 %v196
      %v650 = vunpack.c.l.b16 %v197
      %v651 = vunpack.c.l.b16 %v198
      %v652 = vunpack.c.h.b16 %v198
      %v653 = vunpack.c.l.b16 %v199
      %v654 = vunpack.c.l.b16 %v200
      %v655 = vunpack.c.h.b16 %v200
      %v656 = vunpack.c.l.b16 %v201
      %v657 = vunpack.c.l.b16 %v202
      %v658 = vunpack.c.h.b16 %v202
      %v659 = vunpack.c.l.b16 %v203
      %v660 = vunpack.c.l.b16 %v204
      %v661 = vunpack.c.h.b16 %v204
      %v662 = vunpack.c.l.b16 %v205
      %v663 = vunpack.c.l.b16 %v206
      %v664 = vunpack.c.h.b16 %v206
      %v665 = vunpack.c.l.b16 %v207
      %v666 = vunpack.c.l.b16 %v208
      %v667 = vunpack.c.h.b16 %v208
      %v668 = vunpack.c.l.b16 %v209
      %v669 = vunpack.c.l.b16 %v210
      %v670 = vunpack.c.h.b16 %v210
      %v671 = vunpack.c.l.b16 %v211
      %v672 = vunpack.c.l.b16 %v212
      %v673 = vunpack.c.h.b16 %v212
      %v674 = vunpack.c.l.b16 %v213
      %v675 = vunpack.c.l.b16 %v214
      %v676 = vunpack.c.h.b16 %v214
      %v677 = vunpack.c.l.b16 %v215
      %v678 = vunpack.c.l.b16 %v216
      %v679 = vunpack.c.h.b16 %v216
      %v680 = vunpack.c.l.b16 %v217
      %v681 = vunpack.c.l.b16 %v218
      %v682 = vunpack.c.h.b16 %v218
      %v683 = vunpack.c.l.b16 %v219
      %v684 = vunpack.c.l.b16 %v220
      %v685 = vunpack.c.h.b16 %v220
      %v686 = vunpack.c.l.b16 %v221
      %v687 = vunpack.c.l.b16 %v222
      %v688 = vunpack.c.h.b16 %v222
      %v689 = vunpack.c.l.b16 %v223
      %v690 = vunpack.c.l.b16 %v224
      %v691 = vunpack.c.h.b16 %v224
      %v692 = vunpack.c.l.b16 %v225
      %v693 = vunpack.c.l.b16 %v226
      %v694 = vunpack.c.h.b16 %v226
      %v695 = vunpack.c.l.b16 %v227
      %v696 = vunpack.c.l.b16 %v228
      %v697 = vunpack.c.h.b16 %v228
      %v698 = vunpack.c.l.b16 %v229
      %v699 = vunpack.c.l.b16 %v230
      %v700 = vunpack.c.h.b16 %v230
      %v701 = vunpack.c.l.b16 %v231
      %v702 = vunpack.c.l.b16 %v232
      %v703 = vunpack.c.h.b16 %v232
      %v704 = vunpack.c.l.b16 %v233
      %v705 = vunpack.c.l.b16 %v234
      %v706 = vunpack.c.h.b16 %v234
      %v707 = vunpack.c.l.b16 %v235
      %v708 = vunpack.c.l.b16 %v236
      %v709 = vunpack.c.h.b16 %v236
      %v710 = vunpack.c.l.b16 %v237
      %v711 = vunpack.c.l.b16 %v238
      %v712 = vunpack.c.h.b16 %v238
      %v713 = vunpack.c.l.b16 %v239
      %v714 = vunpack.c.l.b16 %v240
      %v715 = vunpack.c.h.b16 %v240
      %v716 = vunpack.c.l.b16 %v241
      %v717 = vunpack.c.l.b16 %v242
      %v718 = vunpack.c.h.b16 %v242
      %v719 = vunpack.c.l.b16 %v243
      %v720 = vunpack.c.l.b16 %v244
      %v721 = vunpack.c.h.b16 %v244
      %v722 = vunpack.c.l.b16 %v245
      %v723 = vunpack.c.l.b16 %v246
      %v724 = vunpack.c.h.b16 %v246
      %v725 = vunpack.c.l.b16 %v247
      %v726 = vunpack.c.l.b16 %v248
      %v727 = vunpack.c.h.b16 %v248
      %v728 = vunpack.c.l.b16 %v249
      %v729 = vunpack.c.l.b16 %v250
      %v730 = vunpack.c.h.b16 %v250
      %v731 = vunpack.c.l.b16 %v251
      %v732 = vunpack.c.l.b16 %v252
      %v733 = vunpack.c.h.b16 %v252
      %v734 = vunpack.c.l.b16 %v253
      %v735 = vunpack.c.l.b16 %v254
      %v736 = vunpack.c.h.b16 %v254
      %v737 = vunpack.c.l.b16 %v255
      %v738 = vunpack.c.l.b16 %v256
      %v739 = vunpack.c.h.b16 %v256
      %v740 = vunpack.c.l.b16 %v257
      %v741 = vunpack.c.l.b16 %v258
      %v742 = vunpack.c.h.b16 %v258
      %v743 = vunpack.c.l.b16 %v259
      %v744 = vunpack.c.l.b16 %v260
      %v745 = vunpack.c.h.b16 %v260
      %v746 = vunpack.c.l.b16 %v261
      %v747 = vunpack.c.l.b16 %v262
      %v748 = vunpack.c.h.b16 %v262
      %v749 = vunpack.c.l.b16 %v263
      %v750 = vunpack.c.l.b16 %v264
      %v751 = vunpack.c.h.b16 %v264
      %v752 = vunpack.c.l.b16 %v265
      %v753 = vunpack.c.l.b16 %v266
      %v754 = vunpack.c.h.b16 %v266
      %v755 = vunpack.c.l.b16 %v267
      %v756 = vunpack.c.l.b16 %v268
      %v757 = vunpack.c.h.b16 %v268
      %v758 = vunpack.c.l.b16 %v269
      %v759 = vunpack.c.l.b16 %v270
      %v760 = vunpack.c.h.b16 %v270
      %v761 = vunpack.c.l.b16 %v271
      %v762 = vunpack.c.l.b16 %v272
      %v763 = vunpack.c.h.b16 %v272
      %v764 = vunpack.c.l.b16 %v273
      %v765 = vunpack.c.l.b16 %v274
      %v766 = vunpack.c.h.b16 %v274
      %v767 = vunpack.c.l.b16 %v275
      %v768 = vunpack.c.l.b16 %v276
      %v769 = vunpack.c.h.b16 %v276
      %v770 = vunpack.c.l.b16 %v277
      %v771 = vunpack.c.l.b16 %v278
      %v772 = vunpack.c.h.b16 %v278
      %v773 = vunpack.c.l.b16 %v279
      %v774 = vunpack.c.l.b16 %v280
      %v775 = vunpack.c.h.b16 %v280
      %v776 = vunpack.c.l.b16 %v281
      %v777 = vunpack.c.l.b16 %v282
      %v778 = vunpack.c.h.b16 %v282
      %v779 = vunpack.c.l.b16 %v283
      %v780 = vunpack.c.l.b16 %v284
      %v781 = vunpack.c.h.b16 %v284
      %v782 = vunpack.c.l.b16 %v285
      %v783 = vunpack.c.l.b16 %v286
      %v784 = vunpack.c.h.b16 %v286
      %v785 = vunpack.c.l.b16 %v287
      %v786 = vunpack.c.l.b16 %v288
      %v787 = vunpack.c.h.b16 %v288
      %v788 = vunpack.c.l.b16 %v289
      %v789 = vunpack.c.l.b16 %v290
      %v790 = vunpack.c.h.b16 %v290
      %v791 = vunpack.c.l.b16 %v291
      %v792 = vunpack.c.l.b16 %v292
      %v793 = vunpack.c.h.b16 %v292
      %v794 = vunpack.c.l.b16 %v293
      %v795 = vunpack.c.l.b16 %v294
      %v796 = vunpack.c.h.b16 %v294
      %v797 = vunpack.c.l.b16 %v295
      %v798 = vunpack.c.l.b16 %v296
      %v799 = vunpack.c.h.b16 %v296
      %v800 = vunpack.c.l.b16 %v297
      %v801 = vunpack.c.l.b16 %v298
      %v802 = vunpack.c.h.b16 %v298
      %v803 = vunpack.c.l.b16 %v299
      %v804 = vunpack.c.l.b16 %v300
      %v805 = vunpack.c.h.b16 %v300
      %v806 = vunpack.c.l.b16 %v301
      %v807 = vunpack.c.l.b16 %v302
      %v808 = vunpack.c.h.b16 %v302
      %v809 = vunpack.c.l.b16 %v303
      %v810 = vunpack.c.l.b16 %v304
      %v811 = vunpack.c.h.b16 %v304
      %v812 = vunpack.c.l.b16 %v305
      %v813 = vunpack.c.l.b16 %v306
      %v814 = vunpack.c.h.b16 %v306
      %v815 = vunpack.c.l.b16 %v307
      %v816 = vunpack.c.l.b16 %v308
      %v817 = vunpack.c.h.b16 %v308
      %v818 = vunpack.c.l.b16 %v309
      %v819 = vunpack.c.l.b16 %v310
      %v820 = vunpack.c.h.b16 %v310
      %v821 = vunpack.c.l.b16 %v311
      %v822 = vunpack.c.l.b16 %v312
      %v823 = vunpack.c.h.b16 %v312
      %v824 = vunpack.c.l.b16 %v313
      %v825 = vunpack.c.l.b16 %v314
      %v826 = vunpack.c.h.b16 %v314
      %v827 = vunpack.c.l.b16 %v315
      %v828 = vunpack.c.l.b16 %v316
      %v829 = vunpack.c.h.b16 %v316
      %v830 = vunpack.c.l.b16 %v317
      %v831 = vunpack.c.l.b16 %v318
      %v832 = vunpack.c.h.b16 %v318
      %v833 = vunpack.c.l.b16 %v319
      %v834 = vunpack.c.l.b16 %v320
      %v835 = vunpack.c.h.b16 %v320
      %v836 = vunpack.c.l.b16 %v321
      %v837 = vunpack.c.l.b16 %v322
      %v838 = vunpack.c.h.b16 %v322
      %v839 = vunpack.c.l.b16 %v323
      %v840 = vunpack.c.l.b16 %v324
      %v841 = vunpack.c.h.b16 %v324
      %v842 = vunpack.c.l.b16 %v325
      %v843 = vunpack.c.l.b16 %v326
      %v844 = vunpack.c.h.b16 %v326
      %v845 = vunpack.c.l.b16 %v327
      %v846 = vunpack.c.l.b16 %v328
      %v847 = vunpack.c.h.b16 %v328
      %v848 = vunpack.c.l.b16 %v329
      %v849 = vunpack.c.l.b16 %v330
      %v850 = vunpack.c.h.b16 %v330
      %v851 = vunpack.c.l.b16 %v331
      %v852 = vunpack.c.l.b16 %v332
      %v853 = vunpack.c.h.b16 %v332
      %v854 = vunpack.c.l.b16 %v333
      %v855 = vunpack.c.l.b16 %v334
      %v856 = vunpack.c.h.b16 %v334
      %v857 = vunpack.c.l.b16 %v335
      %v858 = vunpack.c.l.b16 %v336
      %v859 = vunpack.c.h.b16 %v336
      %v860 = vunpack.c.l.b16 %v337
      %v861 = vunpack.c.l.b16 %v338
      %v862 = vunpack.c.h.b16 %v338
      %v863 = vunpack.c.l.b16 %v339
      %v864 = vunpack.c.l.b16 %v340
      %v865 = vunpack.c.h.b16 %v340
      %v866 = vunpack.c.l.b16 %v341
      %v867 = vunpack.c.l.b16 %v342
      %v868 = vunpack.c.h.b16 %v342
      %v869 = vunpack.c.l.b16 %v343
      %v870 = vunpack.c.l.b16 %v344
      %v871 = vunpack.c.h.b16 %v344
      %v872 = vunpack.c.l.b16 %v345
      %v873 = vunpack.c.l.b16 %v346
      %v874 = vunpack.c.h.b16 %v346
      %v875 = vunpack.c.l.b16 %v347
      %v876 = vunpack.c.l.b16 %v348
      %v877 = vunpack.c.h.b16 %v348
      %v878 = vunpack.c.l.b16 %v349
      %v879 = vunpack.c.l.b16 %v350
      %v880 = vunpack.c.h.b16 %v350
      %v881 = vunpack.c.l.b16 %v351
      %v882 = vunpack.c.l.b16 %v352
      %v883 = vunpack.c.h.b16 %v352
      %v884 = vunpack.c.l.b16 %v353
      %v885 = vunpack.c.l.b16 %v354
      %v886 = vunpack.c.h.b16 %v354
      %v887 = vunpack.c.l.b16 %v355
      %v888 = vunpack.c.l.b16 %v356
      %v889 = vunpack.c.h.b16 %v356
      %v890 = vunpack.c.l.b16 %v357
      %v891 = vunpack.c.l.b16 %v358
      %v892 = vunpack.c.h.b16 %v358
      %v893 = vunpack.c.l.b16 %v359
      %v894 = vunpack.c.l.b16 %v360
      %v895 = vunpack.c.h.b16 %v360
      %v896 = vunpack.c.l.b16 %v361
      %v897 = vunpack.c.l.b16 %v362
      %v898 = vunpack.c.h.b16 %v362
      %v899 = vunpack.c.l.b16 %v363
      %v900 = vunpack.c.l.b16 %v364
      %v901 = vunpack.c.h.b16 %v364
      %v902 = vunpack.c.l.b16 %v365
      %v903 = vunpack.c.l.b16 %v366
      %v904 = vunpack.c.h.b16 %v366
      %v905 = vunpack.c.l.b16 %v367
      %v906 = vunpack.c.l.b16 %v368
      %v907 = vunpack.c.h.b16 %v368
      %v908 = vunpack.c.l.b16 %v369
      %v909 = vunpack.c.l.b16 %v370
      %v910 = vunpack.c.h.b16 %v370
      %v911 = vunpack.c.l.b16 %v371
      %v912 = vunpack.c.l.b16 %v372
      %v913 = vunpack.c.h.b16 %v372
      %v914 = vunpack.c.l.b16 %v373
      %v915 = vunpack.c.l.b16 %v374
      %v916 = vunpack.c.h.b16 %v374
      %v917 = vunpack.c.l.b16 %v375
      %v918 = vunpack.c.l.b16 %v376
      %v919 = vunpack.c.h.b16 %v376
      %v920 = vunpack.c.l.b16 %v377
      %v921 = vpack.c.b16 %v624, %v621
      %v922 = vpack.c.b16 %v625, %v622
      %v923 = vpack.c.b16 %v626, %v623
      %v924 = vpack.c.b16 %v630, %v627
      %v925 = vpack.c.b16 %v631, %v628
      %v926 = vpack.c.b16 %v632, %v629
      %v927 = vpack.c.b16 %v636, %v633
      %v928 = vpack.c.b16 %v637, %v634
      %v929 = vpack.c.b16 %v638, %v635
      %v930 = vpack.c.b16 %v642, %v639
      %v931 = vpack.c.b16 %v643, %v640
      %v932 = vpack.c.b16 %v644, %v641
      %v933 = vpack.c.b16 %v648, %v645
      %v934 = vpack.c.b16 %v649, %v646
      %v935 = vpack.c.b16 %v650, %v647
      %v936 = vpack.c.b16 %v654, %v651
      %v937 = vpack.c.b16 %v655, %v652
      %v938 = vpack.c.b16 %v656, %v653
      %v939 = vpack.c.b16 %v660, %v657
      %v940 = vpack.c.b16 %v661, %v658
      %v941 = vpack.c.b16 %v662, %v659
      %v942 = vpack.c.b16 %v666, %v663
      %v943 = vpack.c.b16 %v667, %v664
      %v944 = vpack.c.b16 %v668, %v665
      %v945 = vpack.c.b16 %v672, %v669
      %v946 = vpack.c.b16 %v673, %v670
      %v947 = vpack.c.b16 %v674, %v671
      %v948 = vpack.c.b16 %v678, %v675
      %v949 = vpack.c.b16 %v679, %v676
      %v950 = vpack.c.b16 %v680, %v677
      %v951 = vpack.c.b16 %v684, %v681
      %v952 = vpack.c.b16 %v685, %v682
      %v953 = vpack.c.b16 %v686, %v683
      %v954 = vpack.c.b16 %v690, %v687
      %v955 = vpack.c.b16 %v691, %v688
      %v956 = vpack.c.b16 %v692, %v689
      %v957 = vpack.c.b16 %v696, %v693
      %v958 = vpack.c.b16 %v697, %v694
      %v959 = vpack.c.b16 %v698, %v695
      %v960 = vpack.c.b16 %v702, %v699
      %v961 = vpack.c.b16 %v703, %v700
      %v962 = vpack.c.b16 %v704, %v701
      %v963 = vpack.c.b16 %v708, %v705
      %v964 = vpack.c.b16 %v709, %v706
      %v965 = vpack.c.b16 %v710, %v707
      %v966 = vpack.c.b16 %v714, %v711
      %v967 = vpack.c.b16 %v715, %v712
      %v968 = vpack.c.b16 %v716, %v713
      %v969 = vpack.c.b16 %v720, %v717
      %v970 = vpack.c.b16 %v721, %v718
      %v971 = vpack.c.b16 %v722, %v719
      %v972 = vpack.c.b16 %v726, %v723
      %v973 = vpack.c.b16 %v727, %v724
      %v974 = vpack.c.b16 %v728, %v725
      %v975 = vpack.c.b16 %v732, %v729
      %v976 = vpack.c.b16 %v733, %v730
      %v977 = vpack.c.b16 %v734, %v731
      %v978 = vpack.c.b16 %v738, %v735
      %v979 = vpack.c.b16 %v739, %v736
      %v980 = vpack.c.b16 %v740, %v737
      %v981 = vpack.c.b16 %v744, %v741
      %v982 = vpack.c.b16 %v745, %v742
      %v983 = vpack.c.b16 %v746, %v743
      %v984 = vpack.c.b16 %v750, %v747
      %v985 = vpack.c.b16 %v751, %v748
      %v986 = vpack.c.b16 %v752, %v749
      %v987 = vpack.c.b16 %v756, %v753
      %v988 = vpack.c.b16 %v757, %v754
      %v989 = vpack.c.b16 %v758, %v755
      %v990 = vpack.c.b16 %v762, %v759
      %v991 = vpack.c.b16 %v763, %v760
      %v992 = vpack.c.b16 %v764, %v761
      %v993 = vpack.c.b16 %v768, %v765
      %v994 = vpack.c.b16 %v769, %v766
      %v995 = vpack.c.b16 %v770, %v767
      %v996 = vpack.c.b16 %v774, %v771
      %v997 = vpack.c.b16 %v775, %v772
      %v998 = vpack.c.b16 %v776, %v773
      %v999 = vpack.c.b16 %v780, %v777
      %v1000 = vpack.c.b16 %v781, %v778
      %v1001 = vpack.c.b16 %v782, %v779
      %v1002 = vpack.c.b16 %v786, %v783
      %v1003 = vpack.c.b16 %v787, %v784
      %v1004 = vpack.c.b16 %v788, %v785
      %v1005 = vpack.c.b16 %v792, %v789
      %v1006 = vpack.c.b16 %v793, %v790
      %v1007 = vpack.c.b16 %v794, %v791
      %v1008 = vpack.c.b16 %v798, %v795
      %v1009 = vpack.c.b16 %v799, %v796
      %v1010 = vpack.c.b16 %v800, %v797
      %v1011 = vpack.c.b16 %v804, %v801
      %v1012 = vpack.c.b16 %v805, %v802
      %v1013 = vpack.c.b16 %v806, %v803
      %v1014 = vpack.c.b16 %v810, %v807
      %v1015 = vpack.c.b16 %v811, %v808
      %v1016 = vpack.c.b16 %v812, %v809
      %v1017 = vpack.c.b16 %v816, %v813
      %v1018 = vpack.c.b16 %v817, %v814
      %v1019 = vpack.c.b16 %v818, %v815
      %v1020 = vpack.c.b16 %v822, %v819
      %v1021 = vpack.c.b16 %v823, %v820
      %v1022 = vpack.c.b16 %v824, %v821
      %v1023 = vpack.c.b16 %v828, %v825
      %v1024 = vpack.c.b16 %v829, %v826
      %v1025 = vpack.c.b16 %v830, %v827
      %v1026 = vpack.c.b16 %v834, %v831
      %v1027 = vpack.c.b16 %v835, %v832
      %v1028 = vpack.c.b16 %v836, %v833
      %v1029 = vpack.c.b16 %v840, %v837
      %v1030 = vpack.c.b16 %v841, %v838
      %v1031 = vpack.c.b16 %v842, %v839
      %v1032 = vpack.c.b16 %v846, %v843
      %v1033 = vpack.c.b16 %v847, %v844
      %v1034 = vpack.c.b16 %v848, %v845
      %v1035 = vpack.c.b16 %v852, %v849
      %v1036 = vpack.c.b16 %v853, %v850
      %v1037 = vpack.c.b16 %v854, %v851
      %v1038 = vpack.c.b16 %v858, %v855
      %v1039 = vpack.c.b16 %v859, %v856
      %v1040 = vpack.c.b16 %v860, %v857
      %v1041 = vpack.c.b16 %v864, %v861
      %v1042 = vpack.c.b16 %v865, %v862
      %v1043 = vpack.c.b16 %v866, %v863
      %v1044 = vpack.c.b16 %v870, %v867
      %v1045 = vpack.c.b16 %v871, %v868
      %v1046 = vpack.c.b16 %v872, %v869
      %v1047 = vpack.c.b16 %v876, %v873
      %v1048 = vpack.c.b16 %v877, %v874
      %v1049 = vpack.c.b16 %v878, %v875
      %v1050 = vpack.c.b16 %v882, %v879
      %v1051 = vpack.c.b16 %v883, %v880
      %v1052 = vpack.c.b16 %v884, %v881
      %v1053 = vpack.c.b16 %v888, %v885
      %v1054 = vpack.c.b16 %v889, %v886
      %v1055 = vpack.c.b16 %v890, %v887
      %v1056 = vpack.c.b16 %v894, %v891
      %v1057 = vpack.c.b16 %v895, %v892
      %v1058 = vpack.c.b16 %v896, %v893
      %v1059 = vpack.c.b16 %v900, %v897
      %v1060 = vpack.c.b16 %v901, %v898
      %v1061 = vpack.c.b16 %v902, %v899
      %v1062 = vpack.c.b16 %v906, %v903
      %v1063 = vpack.c.b16 %v907, %v904
      %v1064 = vpack.c.b16 %v908, %v905
      %v1065 = vpack.c.b16 %v912, %v909
      %v1066 = vpack.c.b16 %v913, %v910
      %v1067 = vpack.c.b16 %v914, %v911
      %v1068 = vpack.c.b16 %v918, %v915
      %v1069 = vpack.c.b16 %v919, %v916
      %v1070 = vpack.c.b16 %v920, %v917
      %v1207 = vunpack.c.l.b16 %v378
      %v1208 = vunpack.c.l.b16 %v379
      %v1209 = vunpack.c.l.b16 %v380
      %v1210 = vunpack.c.l.b16 %v381
      %v1211 = vunpack.c.l.b16 %v382
      %v1212 = vunpack.c.l.b16 %v383
      %v1213 = vunpack.c.l.b16 %v384
      %v1214 = vunpack.c.l.b16 %v385
      %v1215 = vunpack.c.l.b16 %v386
      %v1216 = vunpack.c.l.b16 %v387
      %v1217 = vunpack.c.l.b16 %v388
      %v1218 = vunpack.c.l.b16 %v389
      %v1219 = vunpack.c.l.b16 %v390
      %v1220 = vunpack.c.l.b16 %v391
      %v1221 = vunpack.c.l.b16 %v392
      %v1222 = vunpack.c.l.b16 %v393
      %v1223 = vunpack.c.l.b16 %v394
      %v1224 = vunpack.c.l.b16 %v395
      %v1225 = vunpack.c.l.b16 %v396
      %v1226 = vunpack.c.l.b16 %v397
      %v1227 = vunpack.c.l.b16 %v398
      %v1228 = vunpack.c.l.b16 %v399
      %v1229 = vunpack.c.l.b16 %v400
      %v1230 = vunpack.c.l.b16 %v401
      %v1231 = vunpack.c.l.b16 %v402
      %v1232 = vunpack.c.l.b16 %v403
      %v1233 = vunpack.c.l.b16 %v404
      %v1234 = vunpack.c.l.b16 %v405
      %v1235 = vunpack.c.l.b16 %v406
      %v1236 = vunpack.c.l.b16 %v407
      %v1237 = vunpack.c.l.b16 %v408
      %v1238 = vunpack.c.l.b16 %v409
      %v1239 = vunpack.c.l.b16 %v410
      %v1240 = vunpack.c.l.b16 %v411
      %v1241 = vunpack.c.l.b16 %v412
      %v1242 = vunpack.c.l.b16 %v413
      %v1243 = vpack.c.b16 %v1208, %v1207
      %v1244 = vpack.c.b16 %v1210, %v1209
      %v1245 = vpack.c.b16 %v1212, %v1211
      %v1246 = vpack.c.b16 %v1214, %v1213
      %v1247 = vpack.c.b16 %v1216, %v1215
      %v1248 = vpack.c.b16 %v1218, %v1217
      %v1249 = vpack.c.b16 %v1220, %v1219
      %v1250 = vpack.c.b16 %v1222, %v1221
      %v1251 = vpack.c.b16 %v1224, %v1223
      %v1252 = vpack.c.b16 %v1226, %v1225
      %v1253 = vpack.c.b16 %v1228, %v1227
      %v1254 = vpack.c.b16 %v1230, %v1229
      %v1255 = vpack.c.b16 %v1232, %v1231
      %v1256 = vpack.c.b16 %v1234, %v1233
      %v1257 = vpack.c.b16 %v1236, %v1235
      %v1258 = vpack.c.b16 %v1238, %v1237
      %v1259 = vpack.c.b16 %v1240, %v1239
      %v1260 = vpack.c.b16 %v1242, %v1241
      %vm1279 = vcmask 261120
      %v1281 = vsel %vm1279, %v923, 0
      %v1284 = vsel %vm1279, %v926, 0
      %v1287 = vsel %vm1279, %v929, 0
      %v1290 = vsel %vm1279, %v932, 0
      %v1293 = vsel %vm1279, %v935, 0
      %v1296 = vsel %vm1279, %v938, 0
      %v1299 = vsel %vm1279, %v941, 0
      %v1302 = vsel %vm1279, %v944, 0
      %v1305 = vsel %vm1279, %v947, 0
      %v1308 = vsel %vm1279, %v950, 0
      %v1311 = vsel %vm1279, %v953, 0
      %v1314 = vsel %vm1279, %v956, 0
      %v1317 = vsel %vm1279, %v959, 0
      %v1320 = vsel %vm1279, %v962, 0
      %v1323 = vsel %vm1279, %v965, 0
      %v1326 = vsel %vm1279, %v968, 0
      %v1329 = vsel %vm1279, %v971, 0
      %v1332 = vsel %vm1279, %v974, 0
      %v1335 = vsel %vm1279, %v977, 0
      %v1338 = vsel %vm1279, %v980, 0
      %v1341 = vsel %vm1279, %v983, 0
      %v1344 = vsel %vm1279, %v986, 0
      %v1347 = vsel %vm1279, %v989, 0
      %v1350 = vsel %vm1279, %v992, 0
      %v1353 = vsel %vm1279, %v995, 0
      %v1356 = vsel %vm1279, %v998, 0
      %v1359 = vsel %vm1279, %v1001, 0
      %v1362 = vsel %vm1279, %v1004, 0
      %v1365 = vsel %vm1279, %v1007, 0
      %v1368 = vsel %vm1279, %v1010, 0
      %v1371 = vsel %vm1279, %v1013, 0
      %v1374 = vsel %vm1279, %v1016, 0
      %v1377 = vsel %vm1279, %v1019, 0
      %v1380 = vsel %vm1279, %v1022, 0
      %v1383 = vsel %vm1279, %v1025, 0
      %v1386 = vsel %vm1279, %v1028, 0
      %v1389 = vsel %vm1279, %v1031, 0
      %v1392 = vsel %vm1279, %v1034, 0
      %v1395 = vsel %vm1279, %v1037, 0
      %v1398 = vsel %vm1279, %v1040, 0
      %v1401 = vsel %vm1279, %v1043, 0
      %v1404 = vsel %vm1279, %v1046, 0
      %v1407 = vsel %vm1279, %v1049, 0
      %v1410 = vsel %vm1279, %v1052, 0
      %v1413 = vsel %vm1279, %v1055, 0
      %v1416 = vsel %vm1279, %v1058, 0
      %v1419 = vsel %vm1279, %v1061, 0
      %v1422 = vsel %vm1279, %v1064, 0
      %v1425 = vsel %vm1279, %v1067, 0
      %v1428 = vsel %vm1279, %v1070, 0
      %1430 = vmatprep.subr.bf16.mxu0 0
      %1431 = vmatpush1.bf16.msra.mxu0 %v1243
      %1432 = vmatprep.subr.bf16.mxu0 0
      %1433 = vmatpush1.bf16.msra.mxu0 %v1244
      %1434 = vmatprep.subr.bf16.mxu0 0
      %1435 = vmatpush1.bf16.msra.mxu0 %v1245
      %1436 = vmatprep.subr.bf16.mxu0 0
      %1437 = vmatpush1.bf16.msra.mxu0 %v1246
      %1438 = vmatprep.subr.bf16.mxu0 0
      %1439 = vmatpush1.bf16.msra.mxu0 %v1247
      %1440 = vmatprep.subr.bf16.mxu0 0
      %1441 = vmatpush1.bf16.msra.mxu0 %v1248
      %1442 = vmatprep.subr.bf16.mxu0 0
      %1443 = vmatpush1.bf16.msra.mxu0 %v1249
      %1444 = vmatprep.subr.bf16.mxu0 0
      %1445 = vmatpush1.bf16.msra.mxu0 %v1250
      %1446 = vmatprep.subr.bf16.mxu0 0
      %1447 = vmatpush1.bf16.msra.mxu0 %v1251
      %1448 = vmatprep.subr.bf16.mxu0 0
      %1449 = vmatpush1.bf16.msra.mxu0 %v1252
      %1450 = vmatprep.subr.bf16.mxu0 0
      %1451 = vmatpush1.bf16.msra.mxu0 %v1253
      %1452 = vmatprep.subr.bf16.mxu0 0
      %1453 = vmatpush1.bf16.msra.mxu0 %v1254
      %1454 = vmatprep.subr.bf16.mxu0 0
      %1455 = vmatpush1.bf16.msra.mxu0 %v1255
      %1456 = vmatprep.subr.bf16.mxu0 0
      %1457 = vmatpush1.bf16.msra.mxu0 %v1256
      %1458 = vmatprep.subr.bf16.mxu0 0
      %1459 = vmatpush1.bf16.msra.mxu0 %v1257
      %1460 = vmatprep.subr.bf16.mxu0 0
      %1461 = vmatpush1.bf16.msra.mxu0 %v1258
      %1462 = vmatprep.mubr.bf16.mxu0 %v922
      %1463 = vmatmul.mubr.bf16.gmra.mrb[0].mxu0 %v921
      %v1464 = vpop.f32.mrb[0].mxu0
      %v1465 = vadd.f32 %v419, %v1464
      %v1466 = vpop.f32.mrb[0].mxu0
      %v1467 = vpop.f32.mrb[0].mxu0
      %v1468 = vadd.f32 %v419, %v1467
      %v1469 = vpop.f32.mrb[0].mxu0
      %1470 = vmatprep.mubr.bf16.mxu0 %v925
      %1471 = vmatmul.mubr.bf16.gmra.mrb[0].mxu0 %v924
      %v1472 = vpop.f32.mrb[0].mxu0
      %v1473 = vadd.f32 %v419, %v1472
      %v1474 = vpop.f32.mrb[0].mxu0
      %v1475 = vpop.f32.mrb[0].mxu0
      %v1476 = vadd.f32 %v419, %v1475
      %v1477 = vpop.f32.mrb[0].mxu0
      %1478 = vmatprep.mubr.bf16.mxu0 %v928
      %1479 = vmatmul.mubr.bf16.gmra.mrb[0].mxu0 %v927
      %v1480 = vpop.f32.mrb[0].mxu0
      %v1481 = vadd.f32 %v419, %v1480
      %v1482 = vpop.f32.mrb[0].mxu0
      %v1483 = vpop.f32.mrb[0].mxu0
      %v1484 = vadd.f32 %v419, %v1483
      %v1485 = vpop.f32.mrb[0].mxu0
      %1486 = vmatprep.mubr.bf16.mxu0 %v931
      %1487 = vmatmul.mubr.bf16.gmra.mrb[0].mxu0 %v930
      %v1488 = vpop.f32.mrb[0].mxu0
      %v1489 = vadd.f32 %v419, %v1488
      %v1490 = vpop.f32.mrb[0].mxu0
      %v1491 = vpop.f32.mrb[0].mxu0
      %v1492 = vadd.f32 %v419, %v1491
      %v1493 = vpop.f32.mrb[0].mxu0
      %1494 = vmatprep.mubr.bf16.mxu0 %v934
      %1495 = vmatmul.mubr.bf16.gmra.mrb[0].mxu0 %v933
      %v1496 = vpop.f32.mrb[0].mxu0
      %v1497 = vadd.f32 %v419, %v1496
      %v1498 = vpop.f32.mrb[0].mxu0
      %v1499 = vpop.f32.mrb[0].mxu0
      %v1500 = vadd.f32 %v419, %v1499
      %v1501 = vpop.f32.mrb[0].mxu0
      %1502 = vmatprep.mubr.bf16.mxu0 %v937
      %1503 = vmatmul.mubr.bf16.gmra.mrb[0].mxu0 %v936
      %v1504 = vpop.f32.mrb[0].mxu0
      %v1505 = vadd.f32 %v419, %v1504
      %v1506 = vpop.f32.mrb[0].mxu0
      %v1507 = vpop.f32.mrb[0].mxu0
      %v1508 = vadd.f32 %v419, %v1507
      %v1509 = vpop.f32.mrb[0].mxu0
      %1510 = vmatprep.mubr.bf16.mxu0 %v940
      %1511 = vmatmul.mubr.bf16.gmra.mrb[0].mxu0 %v939
      %v1512 = vpop.f32.mrb[0].mxu0
      %v1513 = vadd.f32 %v419, %v1512
      %v1514 = vpop.f32.mrb[0].mxu0
      %v1515 = vpop.f32.mrb[0].mxu0
      %v1516 = vadd.f32 %v419, %v1515
      %v1517 = vpop.f32.mrb[0].mxu0
      %1518 = vmatprep.mubr.bf16.mxu0 %v943
      %1519 = vmatmul.mubr.bf16.gmra.mrb[0].mxu0 %v942
      %v1520 = vpop.f32.mrb[0].mxu0
      %v1521 = vadd.f32 %v419, %v1520
      %v1522 = vpop.f32.mrb[0].mxu0
      %v1523 = vpop.f32.mrb[0].mxu0
      %v1524 = vadd.f32 %v419, %v1523
      %v1525 = vpop.f32.mrb[0].mxu0
      %1526 = vmatprep.mubr.bf16.mxu0 %v946
      %1527 = vmatmul.mubr.bf16.gmra.mrb[0].mxu0 %v945
      %v1528 = vpop.f32.mrb[0].mxu0
      %v1529 = vadd.f32 %v419, %v1528
      %v1530 = vpop.f32.mrb[0].mxu0
      %v1531 = vpop.f32.mrb[0].mxu0
      %v1532 = vadd.f32 %v419, %v1531
      %v1533 = vpop.f32.mrb[0].mxu0
      %1534 = vmatprep.mubr.bf16.mxu0 %v949
      %1535 = vmatmul.mubr.bf16.gmra.mrb[0].mxu0 %v948
      %v1536 = vpop.f32.mrb[0].mxu0
      %v1537 = vadd.f32 %v419, %v1536
      %v1538 = vpop.f32.mrb[0].mxu0
      %v1539 = vpop.f32.mrb[0].mxu0
      %v1540 = vadd.f32 %v419, %v1539
      %v1541 = vpop.f32.mrb[0].mxu0
      %1542 = vmatprep.mubr.bf16.mxu0 %v952
      %1543 = vmatmul.mubr.bf16.gmra.mrb[0].mxu0 %v951
      %v1544 = vpop.f32.mrb[0].mxu0
      %v1545 = vadd.f32 %v419, %v1544
      %v1546 = vpop.f32.mrb[0].mxu0
      %v1547 = vpop.f32.mrb[0].mxu0
      %v1548 = vadd.f32 %v419, %v1547
      %v1549 = vpop.f32.mrb[0].mxu0
      %1550 = vmatprep.mubr.bf16.mxu0 %v955
      %1551 = vmatmul.mubr.bf16.gmra.mrb[0].mxu0 %v954
      %v1552 = vpop.f32.mrb[0].mxu0
      %v1553 = vadd.f32 %v419, %v1552
      %v1554 = vpop.f32.mrb[0].mxu0
      %v1555 = vpop.f32.mrb[0].mxu0
      %v1556 = vadd.f32 %v419, %v1555
      %v1557 = vpop.f32.mrb[0].mxu0
      %1558 = vmatprep.mubr.bf16.mxu0 %v958
      %1559 = vmatmul.mubr.bf16.gmra.mrb[0].mxu0 %v957
      %v1560 = vpop.f32.mrb[0].mxu0
      %v1561 = vadd.f32 %v419, %v1560
      %v1562 = vpop.f32.mrb[0].mxu0
      %v1563 = vpop.f32.mrb[0].mxu0
      %v1564 = vadd.f32 %v419, %v1563
      %v1565 = vpop.f32.mrb[0].mxu0
      %1566 = vmatprep.mubr.bf16.mxu0 %v961
      %1567 = vmatmul.mubr.bf16.gmra.mrb[0].mxu0 %v960
      %v1568 = vpop.f32.mrb[0].mxu0
      %v1569 = vadd.f32 %v419, %v1568
      %v1570 = vpop.f32.mrb[0].mxu0
      %v1571 = vpop.f32.mrb[0].mxu0
      %v1572 = vadd.f32 %v419, %v1571
      %v1573 = vpop.f32.mrb[0].mxu0
      %1574 = vmatprep.mubr.bf16.mxu0 %v964
      %1575 = vmatmul.mubr.bf16.gmra.mrb[0].mxu0 %v963
      %v1576 = vpop.f32.mrb[0].mxu0
      %v1577 = vadd.f32 %v419, %v1576
      %v1578 = vpop.f32.mrb[0].mxu0
      %v1579 = vpop.f32.mrb[0].mxu0
      %v1580 = vadd.f32 %v419, %v1579
      %v1581 = vpop.f32.mrb[0].mxu0
      %1582 = vmatprep.mubr.bf16.mxu0 %v967
      %1583 = vmatmul.mubr.bf16.gmra.mrb[0].mxu0 %v966
      %v1584 = vpop.f32.mrb[0].mxu0
      %v1585 = vadd.f32 %v419, %v1584
      %v1586 = vpop.f32.mrb[0].mxu0
      %v1587 = vpop.f32.mrb[0].mxu0
      %v1588 = vadd.f32 %v419, %v1587
      %v1589 = vpop.f32.mrb[0].mxu0
      %1590 = vmatprep.mubr.bf16.mxu0 %v970
      %1591 = vmatmul.mubr.bf16.gmra.mrb[0].mxu0 %v969
      %v1592 = vpop.f32.mrb[0].mxu0
      %v1593 = vadd.f32 %v419, %v1592
      %v1594 = vpop.f32.mrb[0].mxu0
      %v1595 = vpop.f32.mrb[0].mxu0
      %v1596 = vadd.f32 %v419, %v1595
      %v1597 = vpop.f32.mrb[0].mxu0
      %1598 = vmatprep.mubr.bf16.mxu0 %v973
      %1599 = vmatmul.mubr.bf16.gmra.mrb[0].mxu0 %v972
      %v1600 = vpop.f32.mrb[0].mxu0
      %v1601 = vadd.f32 %v419, %v1600
      %v1602 = vpop.f32.mrb[0].mxu0
      %v1603 = vpop.f32.mrb[0].mxu0
      %v1604 = vadd.f32 %v419, %v1603
      %v1605 = vpop.f32.mrb[0].mxu0
      %1606 = vmatprep.mubr.bf16.mxu0 %v976
      %1607 = vmatmul.mubr.bf16.gmra.mrb[0].mxu0 %v975
      %v1608 = vpop.f32.mrb[0].mxu0
      %v1609 = vadd.f32 %v419, %v1608
      %v1610 = vpop.f32.mrb[0].mxu0
      %v1611 = vpop.f32.mrb[0].mxu0
      %v1612 = vadd.f32 %v419, %v1611
      %v1613 = vpop.f32.mrb[0].mxu0
      %1614 = vmatprep.mubr.bf16.mxu0 %v979
      %1615 = vmatmul.mubr.bf16.gmra.mrb[0].mxu0 %v978
      %v1616 = vpop.f32.mrb[0].mxu0
      %v1617 = vadd.f32 %v419, %v1616
      %v1618 = vpop.f32.mrb[0].mxu0
      %v1619 = vpop.f32.mrb[0].mxu0
      %v1620 = vadd.f32 %v419, %v1619
      %v1621 = vpop.f32.mrb[0].mxu0
      %1622 = vmatprep.mubr.bf16.mxu0 %v982
      %1623 = vmatmul.mubr.bf16.gmra.mrb[0].mxu0 %v981
      %v1624 = vpop.f32.mrb[0].mxu0
      %v1625 = vadd.f32 %v419, %v1624
      %v1626 = vpop.f32.mrb[0].mxu0
      %v1627 = vpop.f32.mrb[0].mxu0
      %v1628 = vadd.f32 %v419, %v1627
      %v1629 = vpop.f32.mrb[0].mxu0
      %1630 = vmatprep.mubr.bf16.mxu0 %v985
      %1631 = vmatmul.mubr.bf16.gmra.mrb[0].mxu0 %v984
      %v1632 = vpop.f32.mrb[0].mxu0
      %v1633 = vadd.f32 %v419, %v1632
      %v1634 = vpop.f32.mrb[0].mxu0
      %v1635 = vpop.f32.mrb[0].mxu0
      %v1636 = vadd.f32 %v419, %v1635
      %v1637 = vpop.f32.mrb[0].mxu0
      %1638 = vmatprep.mubr.bf16.mxu0 %v988
      %1639 = vmatmul.mubr.bf16.gmra.mrb[0].mxu0 %v987
      %v1640 = vpop.f32.mrb[0].mxu0
      %v1641 = vadd.f32 %v419, %v1640
      %v1642 = vpop.f32.mrb[0].mxu0
      %v1643 = vpop.f32.mrb[0].mxu0
      %v1644 = vadd.f32 %v419, %v1643
      %v1645 = vpop.f32.mrb[0].mxu0
      %1646 = vmatprep.mubr.bf16.mxu0 %v991
      %1647 = vmatmul.mubr.bf16.gmra.mrb[0].mxu0 %v990
      %v1648 = vpop.f32.mrb[0].mxu0
      %v1649 = vadd.f32 %v419, %v1648
      %v1650 = vpop.f32.mrb[0].mxu0
      %v1651 = vpop.f32.mrb[0].mxu0
      %v1652 = vadd.f32 %v419, %v1651
      %v1653 = vpop.f32.mrb[0].mxu0
      %1654 = vmatprep.mubr.bf16.mxu0 %v994
      %1655 = vmatmul.mubr.bf16.gmra.mrb[0].mxu0 %v993
      %v1656 = vpop.f32.mrb[0].mxu0
      %v1657 = vadd.f32 %v419, %v1656
      %v1658 = vpop.f32.mrb[0].mxu0
      %v1659 = vpop.f32.mrb[0].mxu0
      %v1660 = vadd.f32 %v419, %v1659
      %v1661 = vpop.f32.mrb[0].mxu0
      %1662 = vmatprep.mubr.bf16.mxu0 %v997
      %1663 = vmatmul.mubr.bf16.gmra.mrb[0].mxu0 %v996
      %v1664 = vpop.f32.mrb[0].mxu0
      %v1665 = vadd.f32 %v419, %v1664
      %v1666 = vpop.f32.mrb[0].mxu0
      %v1667 = vpop.f32.mrb[0].mxu0
      %v1668 = vadd.f32 %v419, %v1667
      %v1669 = vpop.f32.mrb[0].mxu0
      %1670 = vmatprep.mubr.bf16.mxu0 %v1000
      %1671 = vmatmul.mubr.bf16.gmra.mrb[0].mxu0 %v999
      %v1672 = vpop.f32.mrb[0].mxu0
      %v1673 = vadd.f32 %v419, %v1672
      %v1674 = vpop.f32.mrb[0].mxu0
      %v1675 = vpop.f32.mrb[0].mxu0
      %v1676 = vadd.f32 %v419, %v1675
      %v1677 = vpop.f32.mrb[0].mxu0
      %1678 = vmatprep.mubr.bf16.mxu0 %v1003
      %1679 = vmatmul.mubr.bf16.gmra.mrb[0].mxu0 %v1002
      %v1680 = vpop.f32.mrb[0].mxu0
      %v1681 = vadd.f32 %v419, %v1680
      %v1682 = vpop.f32.mrb[0].mxu0
      %v1683 = vpop.f32.mrb[0].mxu0
      %v1684 = vadd.f32 %v419, %v1683
      %v1685 = vpop.f32.mrb[0].mxu0
      %1686 = vmatprep.mubr.bf16.mxu0 %v1006
      %1687 = vmatmul.mubr.bf16.gmra.mrb[0].mxu0 %v1005
      %v1688 = vpop.f32.mrb[0].mxu0
      %v1689 = vadd.f32 %v419, %v1688
      %v1690 = vpop.f32.mrb[0].mxu0
      %v1691 = vpop.f32.mrb[0].mxu0
      %v1692 = vadd.f32 %v419, %v1691
      %v1693 = vpop.f32.mrb[0].mxu0
      %1694 = vmatprep.mubr.bf16.mxu0 %v1009
      %1695 = vmatmul.mubr.bf16.gmra.mrb[0].mxu0 %v1008
      %v1696 = vpop.f32.mrb[0].mxu0
      %v1697 = vadd.f32 %v419, %v1696
      %v1698 = vpop.f32.mrb[0].mxu0
      %v1699 = vpop.f32.mrb[0].mxu0
      %v1700 = vadd.f32 %v419, %v1699
      %v1701 = vpop.f32.mrb[0].mxu0
      %1702 = vmatprep.mubr.bf16.mxu0 %v1012
      %1703 = vmatmul.mubr.bf16.gmra.mrb[0].mxu0 %v1011
      %v1704 = vpop.f32.mrb[0].mxu0
      %v1705 = vadd.f32 %v419, %v1704
      %v1706 = vpop.f32.mrb[0].mxu0
      %v1707 = vpop.f32.mrb[0].mxu0
      %v1708 = vadd.f32 %v419, %v1707
      %v1709 = vpop.f32.mrb[0].mxu0
      %1710 = vmatprep.mubr.bf16.mxu0 %v1015
      %1711 = vmatmul.mubr.bf16.gmra.mrb[0].mxu0 %v1014
      %v1712 = vpop.f32.mrb[0].mxu0
      %v1713 = vadd.f32 %v419, %v1712
      %v1714 = vpop.f32.mrb[0].mxu0
      %v1715 = vpop.f32.mrb[0].mxu0
      %v1716 = vadd.f32 %v419, %v1715
      %v1717 = vpop.f32.mrb[0].mxu0
      %1718 = vmatprep.mubr.bf16.mxu0 %v1018
      %1719 = vmatmul.mubr.bf16.gmra.mrb[0].mxu0 %v1017
      %v1720 = vpop.f32.mrb[0].mxu0
      %v1721 = vadd.f32 %v419, %v1720
      %v1722 = vpop.f32.mrb[0].mxu0
      %v1723 = vpop.f32.mrb[0].mxu0
      %v1724 = vadd.f32 %v419, %v1723
      %v1725 = vpop.f32.mrb[0].mxu0
      %1726 = vmatprep.mubr.bf16.mxu0 %v1021
      %1727 = vmatmul.mubr.bf16.gmra.mrb[0].mxu0 %v1020
      %v1728 = vpop.f32.mrb[0].mxu0
      %v1729 = vadd.f32 %v419, %v1728
      %v1730 = vpop.f32.mrb[0].mxu0
      %v1731 = vpop.f32.mrb[0].mxu0
      %v1732 = vadd.f32 %v419, %v1731
      %v1733 = vpop.f32.mrb[0].mxu0
      %1734 = vmatprep.mubr.bf16.mxu0 %v1024
      %1735 = vmatmul.mubr.bf16.gmra.mrb[0].mxu0 %v1023
      %v1736 = vpop.f32.mrb[0].mxu0
      %v1737 = vadd.f32 %v419, %v1736
      %v1738 = vpop.f32.mrb[0].mxu0
      %v1739 = vpop.f32.mrb[0].mxu0
      %v1740 = vadd.f32 %v419, %v1739
      %v1741 = vpop.f32.mrb[0].mxu0
      %1742 = vmatprep.mubr.bf16.mxu0 %v1027
      %1743 = vmatmul.mubr.bf16.gmra.mrb[0].mxu0 %v1026
      %v1744 = vpop.f32.mrb[0].mxu0
      %v1745 = vadd.f32 %v419, %v1744
      %v1746 = vpop.f32.mrb[0].mxu0
      %v1747 = vpop.f32.mrb[0].mxu0
      %v1748 = vadd.f32 %v419, %v1747
      %v1749 = vpop.f32.mrb[0].mxu0
      %1750 = vmatprep.mubr.bf16.mxu0 %v1030
      %1751 = vmatmul.mubr.bf16.gmra.mrb[0].mxu0 %v1029
      %v1752 = vpop.f32.mrb[0].mxu0
      %v1753 = vadd.f32 %v419, %v1752
      %v1754 = vpop.f32.mrb[0].mxu0
      %v1755 = vpop.f32.mrb[0].mxu0
      %v1756 = vadd.f32 %v419, %v1755
      %v1757 = vpop.f32.mrb[0].mxu0
      %1758 = vmatprep.mubr.bf16.mxu0 %v1033
      %1759 = vmatmul.mubr.bf16.gmra.mrb[0].mxu0 %v1032
      %v1760 = vpop.f32.mrb[0].mxu0
      %v1761 = vadd.f32 %v419, %v1760
      %v1762 = vpop.f32.mrb[0].mxu0
      %v1763 = vpop.f32.mrb[0].mxu0
      %v1764 = vadd.f32 %v419, %v1763
      %v1765 = vpop.f32.mrb[0].mxu0
      %1766 = vmatprep.mubr.bf16.mxu0 %v1036
      %1767 = vmatmul.mubr.bf16.gmra.mrb[0].mxu0 %v1035
      %v1768 = vpop.f32.mrb[0].mxu0
      %v1769 = vadd.f32 %v419, %v1768
      %v1770 = vpop.f32.mrb[0].mxu0
      %v1771 = vpop.f32.mrb[0].mxu0
      %v1772 = vadd.f32 %v419, %v1771
      %v1773 = vpop.f32.mrb[0].mxu0
      %1774 = vmatprep.mubr.bf16.mxu0 %v1039
      %1775 = vmatmul.mubr.bf16.gmra.mrb[0].mxu0 %v1038
      %v1776 = vpop.f32.mrb[0].mxu0
      %v1777 = vadd.f32 %v419, %v1776
      %v1778 = vpop.f32.mrb[0].mxu0
      %v1779 = vpop.f32.mrb[0].mxu0
      %v1780 = vadd.f32 %v419, %v1779
      %v1781 = vpop.f32.mrb[0].mxu0
      %1782 = vmatprep.mubr.bf16.mxu0 %v1042
      %1783 = vmatmul.mubr.bf16.gmra.mrb[0].mxu0 %v1041
      %v1784 = vpop.f32.mrb[0].mxu0
      %v1785 = vadd.f32 %v419, %v1784
      %v1786 = vpop.f32.mrb[0].mxu0
      %v1787 = vpop.f32.mrb[0].mxu0
      %v1788 = vadd.f32 %v419, %v1787
      %v1789 = vpop.f32.mrb[0].mxu0
      %1790 = vmatprep.mubr.bf16.mxu0 %v1045
      %1791 = vmatmul.mubr.bf16.gmra.mrb[0].mxu0 %v1044
      %v1792 = vpop.f32.mrb[0].mxu0
      %v1793 = vadd.f32 %v419, %v1792
      %v1794 = vpop.f32.mrb[0].mxu0
      %v1795 = vpop.f32.mrb[0].mxu0
      %v1796 = vadd.f32 %v419, %v1795
      %v1797 = vpop.f32.mrb[0].mxu0
      %1798 = vmatprep.mubr.bf16.mxu0 %v1048
      %1799 = vmatmul.mubr.bf16.gmra.mrb[0].mxu0 %v1047
      %v1800 = vpop.f32.mrb[0].mxu0
      %v1801 = vadd.f32 %v419, %v1800
      %v1802 = vpop.f32.mrb[0].mxu0
      %v1803 = vpop.f32.mrb[0].mxu0
      %v1804 = vadd.f32 %v419, %v1803
      %v1805 = vpop.f32.mrb[0].mxu0
      %1806 = vmatprep.mubr.bf16.mxu0 %v1051
      %1807 = vmatmul.mubr.bf16.gmra.mrb[0].mxu0 %v1050
      %v1808 = vpop.f32.mrb[0].mxu0
      %v1809 = vadd.f32 %v419, %v1808
      %v1810 = vpop.f32.mrb[0].mxu0
      %v1811 = vpop.f32.mrb[0].mxu0
      %v1812 = vadd.f32 %v419, %v1811
      %v1813 = vpop.f32.mrb[0].mxu0
      %1814 = vmatprep.mubr.bf16.mxu0 %v1054
      %1815 = vmatmul.mubr.bf16.gmra.mrb[0].mxu0 %v1053
      %v1816 = vpop.f32.mrb[0].mxu0
      %v1817 = vadd.f32 %v419, %v1816
      %v1818 = vpop.f32.mrb[0].mxu0
      %v1819 = vpop.f32.mrb[0].mxu0
      %v1820 = vadd.f32 %v419, %v1819
      %v1821 = vpop.f32.mrb[0].mxu0
      %1822 = vmatprep.mubr.bf16.mxu0 %v1057
      %1823 = vmatmul.mubr.bf16.gmra.mrb[0].mxu0 %v1056
      %v1824 = vpop.f32.mrb[0].mxu0
      %v1825 = vadd.f32 %v419, %v1824
      %v1826 = vpop.f32.mrb[0].mxu0
      %v1827 = vpop.f32.mrb[0].mxu0
      %v1828 = vadd.f32 %v419, %v1827
      %v1829 = vpop.f32.mrb[0].mxu0
      %1830 = vmatprep.mubr.bf16.mxu0 %v1060
      %1831 = vmatmul.mubr.bf16.gmra.mrb[0].mxu0 %v1059
      %v1832 = vpop.f32.mrb[0].mxu0
      %v1833 = vadd.f32 %v419, %v1832
      %v1834 = vpop.f32.mrb[0].mxu0
      %v1835 = vpop.f32.mrb[0].mxu0
      %v1836 = vadd.f32 %v419, %v1835
      %v1837 = vpop.f32.mrb[0].mxu0
      %1838 = vmatprep.mubr.bf16.mxu0 %v1063
      %1839 = vmatmul.mubr.bf16.gmra.mrb[0].mxu0 %v1062
      %v1840 = vpop.f32.mrb[0].mxu0
      %v1841 = vadd.f32 %v419, %v1840
      %v1842 = vpop.f32.mrb[0].mxu0
      %v1843 = vpop.f32.mrb[0].mxu0
      %v1844 = vadd.f32 %v419, %v1843
      %v1845 = vpop.f32.mrb[0].mxu0
      %1846 = vmatprep.mubr.bf16.mxu0 %v1066
      %1847 = vmatmul.mubr.bf16.gmra.mrb[0].mxu0 %v1065
      %v1848 = vpop.f32.mrb[0].mxu0
      %v1849 = vadd.f32 %v419, %v1848
      %v1850 = vpop.f32.mrb[0].mxu0
      %v1851 = vpop.f32.mrb[0].mxu0
      %v1852 = vadd.f32 %v419, %v1851
      %v1853 = vpop.f32.mrb[0].mxu0
      %1854 = vmatprep.mubr.bf16.mxu0 %v1069
      %1855 = vmatmul.mubr.bf16.gmra.mrb[0].mxu0 %v1068
      %v1856 = vpop.f32.mrb[0].mxu0
      %v1857 = vadd.f32 %v419, %v1856
      %v1858 = vpop.f32.mrb[0].mxu0
      %v1859 = vpop.f32.mrb[0].mxu0
      %v1860 = vadd.f32 %v419, %v1859
      %v1861 = vpop.f32.mrb[0].mxu0
      %1862 = vdwg.mxu0
      %1863 = vmatprep.subr.bf16.mxu0 0
      %1864 = vmatpush1.bf16.msra.mxu0 %v1259
      %1865 = vmatprep.subr.bf16.mxu0 0
      %1866 = vmatpush1.bf16.msra.mxu0 %v1260
      %1867 = vmatprep.subr.bf16.mxu0 0
      %1868 = vmatpush1.bf16.msra.mxu0 0
      %1869 = vmatprep.subr.bf16.mxu0 0
      %1870 = vmatpush1.bf16.msra.mxu0 0
      %1871 = vmatprep.subr.bf16.mxu0 0
      %1872 = vmatpush1.bf16.msra.mxu0 0
      %1873 = vmatprep.subr.bf16.mxu0 0
      %1874 = vmatpush1.bf16.msra.mxu0 0
      %1875 = vmatprep.subr.bf16.mxu0 0
      %1876 = vmatpush1.bf16.msra.mxu0 0
      %1877 = vmatprep.subr.bf16.mxu0 0
      %1878 = vmatpush1.bf16.msra.mxu0 0
      %1879 = vmatprep.subr.bf16.mxu0 0
      %1880 = vmatpush1.bf16.msra.mxu0 0
      %1881 = vmatprep.subr.bf16.mxu0 0
      %1882 = vmatpush1.bf16.msra.mxu0 0
      %1883 = vmatprep.subr.bf16.mxu0 0
      %1884 = vmatpush1.bf16.msra.mxu0 0
      %1885 = vmatprep.subr.bf16.mxu0 0
      %1886 = vmatpush1.bf16.msra.mxu0 0
      %1887 = vmatprep.subr.bf16.mxu0 0
      %1888 = vmatpush1.bf16.msra.mxu0 0
      %1889 = vmatprep.subr.bf16.mxu0 0
      %1890 = vmatpush1.bf16.msra.mxu0 0
      %1891 = vmatprep.subr.bf16.mxu0 0
      %1892 = vmatpush1.bf16.msra.mxu0 0
      %1893 = vmatprep.subr.bf16.mxu0 0
      %1894 = vmatpush1.bf16.msra.mxu0 0
      %1895 = vmatprep.mubr.bf16.mxu0 0
      %1896 = vmatmul.mubr.bf16.gmra.mrb[0].mxu0 %v1281
      %v1897 = vpop.f32.mrb[0].mxu0
      %v1898 = vadd.f32 %v1465, %v1897
      %v1899 = vpop.f32.mrb[0].mxu0
      %v1900 = vpop.f32.mrb[0].mxu0
      %v1901 = vadd.f32 %v1468, %v1900
      %v1902 = vpop.f32.mrb[0].mxu0
      %1903 = vmatprep.mubr.bf16.mxu0 0
      %1904 = vmatmul.mubr.bf16.gmra.mrb[0].mxu0 %v1284
      %v1905 = vpop.f32.mrb[0].mxu0
      %v1906 = vadd.f32 %v1473, %v1905
      %v1907 = vpop.f32.mrb[0].mxu0
      %v1908 = vpop.f32.mrb[0].mxu0
      %v1909 = vadd.f32 %v1476, %v1908
      %v1910 = vpop.f32.mrb[0].mxu0
      %1911 = vmatprep.mubr.bf16.mxu0 0
      %1912 = vmatmul.mubr.bf16.gmra.mrb[0].mxu0 %v1287
      %v1913 = vpop.f32.mrb[0].mxu0
      %v1914 = vadd.f32 %v1481, %v1913
      %v1915 = vpop.f32.mrb[0].mxu0
      %v1916 = vpop.f32.mrb[0].mxu0
      %v1917 = vadd.f32 %v1484, %v1916
      %v1918 = vpop.f32.mrb[0].mxu0
      %1919 = vmatprep.mubr.bf16.mxu0 0
      %1920 = vmatmul.mubr.bf16.gmra.mrb[0].mxu0 %v1290
      %v1921 = vpop.f32.mrb[0].mxu0
      %v1922 = vadd.f32 %v1489, %v1921
      %v1923 = vpop.f32.mrb[0].mxu0
      %v1924 = vpop.f32.mrb[0].mxu0
      %v1925 = vadd.f32 %v1492, %v1924
      %v1926 = vpop.f32.mrb[0].mxu0
      %1927 = vmatprep.mubr.bf16.mxu0 0
      %1928 = vmatmul.mubr.bf16.gmra.mrb[0].mxu0 %v1293
      %v1929 = vpop.f32.mrb[0].mxu0
      %v1930 = vadd.f32 %v1497, %v1929
      %v1931 = vpop.f32.mrb[0].mxu0
      %v1932 = vpop.f32.mrb[0].mxu0
      %v1933 = vadd.f32 %v1500, %v1932
      %v1934 = vpop.f32.mrb[0].mxu0
      %1935 = vmatprep.mubr.bf16.mxu0 0
      %1936 = vmatmul.mubr.bf16.gmra.mrb[0].mxu0 %v1296
      %v1937 = vpop.f32.mrb[0].mxu0
      %v1938 = vadd.f32 %v1505, %v1937
      %v1939 = vpop.f32.mrb[0].mxu0
      %v1940 = vpop.f32.mrb[0].mxu0
      %v1941 = vadd.f32 %v1508, %v1940
      %v1942 = vpop.f32.mrb[0].mxu0
      %1943 = vmatprep.mubr.bf16.mxu0 0
      %1944 = vmatmul.mubr.bf16.gmra.mrb[0].mxu0 %v1299
      %v1945 = vpop.f32.mrb[0].mxu0
      %v1946 = vadd.f32 %v1513, %v1945
      %v1947 = vpop.f32.mrb[0].mxu0
      %v1948 = vpop.f32.mrb[0].mxu0
      %v1949 = vadd.f32 %v1516, %v1948
      %v1950 = vpop.f32.mrb[0].mxu0
      %1951 = vmatprep.mubr.bf16.mxu0 0
      %1952 = vmatmul.mubr.bf16.gmra.mrb[0].mxu0 %v1302
      %v1953 = vpop.f32.mrb[0].mxu0
      %v1954 = vadd.f32 %v1521, %v1953
      %v1955 = vpop.f32.mrb[0].mxu0
      %v1956 = vpop.f32.mrb[0].mxu0
      %v1957 = vadd.f32 %v1524, %v1956
      %v1958 = vpop.f32.mrb[0].mxu0
      %1959 = vmatprep.mubr.bf16.mxu0 0
      %1960 = vmatmul.mubr.bf16.gmra.mrb[0].mxu0 %v1305
      %v1961 = vpop.f32.mrb[0].mxu0
      %v1962 = vadd.f32 %v1529, %v1961
      %v1963 = vpop.f32.mrb[0].mxu0
      %v1964 = vpop.f32.mrb[0].mxu0
      %v1965 = vadd.f32 %v1532, %v1964
      %v1966 = vpop.f32.mrb[0].mxu0
      %1967 = vmatprep.mubr.bf16.mxu0 0
      %1968 = vmatmul.mubr.bf16.gmra.mrb[0].mxu0 %v1308
      %v1969 = vpop.f32.mrb[0].mxu0
      %v1970 = vadd.f32 %v1537, %v1969
      %v1971 = vpop.f32.mrb[0].mxu0
      %v1972 = vpop.f32.mrb[0].mxu0
      %v1973 = vadd.f32 %v1540, %v1972
      %v1974 = vpop.f32.mrb[0].mxu0
      %1975 = vmatprep.mubr.bf16.mxu0 0
      %1976 = vmatmul.mubr.bf16.gmra.mrb[0].mxu0 %v1311
      %v1977 = vpop.f32.mrb[0].mxu0
      %v1978 = vadd.f32 %v1545, %v1977
      %v1979 = vpop.f32.mrb[0].mxu0
      %v1980 = vpop.f32.mrb[0].mxu0
      %v1981 = vadd.f32 %v1548, %v1980
      %v1982 = vpop.f32.mrb[0].mxu0
      %1983 = vmatprep.mubr.bf16.mxu0 0
      %1984 = vmatmul.mubr.bf16.gmra.mrb[0].mxu0 %v1314
      %v1985 = vpop.f32.mrb[0].mxu0
      %v1986 = vadd.f32 %v1553, %v1985
      %v1987 = vpop.f32.mrb[0].mxu0
      %v1988 = vpop.f32.mrb[0].mxu0
      %v1989 = vadd.f32 %v1556, %v1988
      %v1990 = vpop.f32.mrb[0].mxu0
      %1991 = vmatprep.mubr.bf16.mxu0 0
      %1992 = vmatmul.mubr.bf16.gmra.mrb[0].mxu0 %v1317
      %v1993 = vpop.f32.mrb[0].mxu0
      %v1994 = vadd.f32 %v1561, %v1993
      %v1995 = vpop.f32.mrb[0].mxu0
      %v1996 = vpop.f32.mrb[0].mxu0
      %v1997 = vadd.f32 %v1564, %v1996
      %v1998 = vpop.f32.mrb[0].mxu0
      %1999 = vmatprep.mubr.bf16.mxu0 0
      %2000 = vmatmul.mubr.bf16.gmra.mrb[0].mxu0 %v1320
      %v2001 = vpop.f32.mrb[0].mxu0
      %v2002 = vadd.f32 %v1569, %v2001
      %v2003 = vpop.f32.mrb[0].mxu0
      %v2004 = vpop.f32.mrb[0].mxu0
      %v2005 = vadd.f32 %v1572, %v2004
      %v2006 = vpop.f32.mrb[0].mxu0
      %2007 = vmatprep.mubr.bf16.mxu0 0
      %2008 = vmatmul.mubr.bf16.gmra.mrb[0].mxu0 %v1323
      %v2009 = vpop.f32.mrb[0].mxu0
      %v2010 = vadd.f32 %v1577, %v2009
      %v2011 = vpop.f32.mrb[0].mxu0
      %v2012 = vpop.f32.mrb[0].mxu0
      %v2013 = vadd.f32 %v1580, %v2012
      %v2014 = vpop.f32.mrb[0].mxu0
      %2015 = vmatprep.mubr.bf16.mxu0 0
      %2016 = vmatmul.mubr.bf16.gmra.mrb[0].mxu0 %v1326
      %v2017 = vpop.f32.mrb[0].mxu0
      %v2018 = vadd.f32 %v1585, %v2017
      %v2019 = vpop.f32.mrb[0].mxu0
      %v2020 = vpop.f32.mrb[0].mxu0
      %v2021 = vadd.f32 %v1588, %v2020
      %v2022 = vpop.f32.mrb[0].mxu0
      %2023 = vmatprep.mubr.bf16.mxu0 0
      %2024 = vmatmul.mubr.bf16.gmra.mrb[0].mxu0 %v1329
      %v2025 = vpop.f32.mrb[0].mxu0
      %v2026 = vadd.f32 %v1593, %v2025
      %v2027 = vpop.f32.mrb[0].mxu0
      %v2028 = vpop.f32.mrb[0].mxu0
      %v2029 = vadd.f32 %v1596, %v2028
      %v2030 = vpop.f32.mrb[0].mxu0
      %2031 = vmatprep.mubr.bf16.mxu0 0
      %2032 = vmatmul.mubr.bf16.gmra.mrb[0].mxu0 %v1332
      %v2033 = vpop.f32.mrb[0].mxu0
      %v2034 = vadd.f32 %v1601, %v2033
      %v2035 = vpop.f32.mrb[0].mxu0
      %v2036 = vpop.f32.mrb[0].mxu0
      %v2037 = vadd.f32 %v1604, %v2036
      %v2038 = vpop.f32.mrb[0].mxu0
      %2039 = vmatprep.mubr.bf16.mxu0 0
      %2040 = vmatmul.mubr.bf16.gmra.mrb[0].mxu0 %v1335
      %v2041 = vpop.f32.mrb[0].mxu0
      %v2042 = vadd.f32 %v1609, %v2041
      %v2043 = vpop.f32.mrb[0].mxu0
      %v2044 = vpop.f32.mrb[0].mxu0
      %v2045 = vadd.f32 %v1612, %v2044
      %v2046 = vpop.f32.mrb[0].mxu0
      %2047 = vmatprep.mubr.bf16.mxu0 0
      %2048 = vmatmul.mubr.bf16.gmra.mrb[0].mxu0 %v1338
      %v2049 = vpop.f32.mrb[0].mxu0
      %v2050 = vadd.f32 %v1617, %v2049
      %v2051 = vpop.f32.mrb[0].mxu0
      %v2052 = vpop.f32.mrb[0].mxu0
      %v2053 = vadd.f32 %v1620, %v2052
      %v2054 = vpop.f32.mrb[0].mxu0
      %2055 = vmatprep.mubr.bf16.mxu0 0
      %2056 = vmatmul.mubr.bf16.gmra.mrb[0].mxu0 %v1341
      %v2057 = vpop.f32.mrb[0].mxu0
      %v2058 = vadd.f32 %v1625, %v2057
      %v2059 = vpop.f32.mrb[0].mxu0
      %v2060 = vpop.f32.mrb[0].mxu0
      %v2061 = vadd.f32 %v1628, %v2060
      %v2062 = vpop.f32.mrb[0].mxu0
      %2063 = vmatprep.mubr.bf16.mxu0 0
      %2064 = vmatmul.mubr.bf16.gmra.mrb[0].mxu0 %v1344
      %v2065 = vpop.f32.mrb[0].mxu0
      %v2066 = vadd.f32 %v1633, %v2065
      %v2067 = vpop.f32.mrb[0].mxu0
      %v2068 = vpop.f32.mrb[0].mxu0
      %v2069 = vadd.f32 %v1636, %v2068
      %v2070 = vpop.f32.mrb[0].mxu0
      %2071 = vmatprep.mubr.bf16.mxu0 0
      %2072 = vmatmul.mubr.bf16.gmra.mrb[0].mxu0 %v1347
      %v2073 = vpop.f32.mrb[0].mxu0
      %v2074 = vadd.f32 %v1641, %v2073
      %v2075 = vpop.f32.mrb[0].mxu0
      %v2076 = vpop.f32.mrb[0].mxu0
      %v2077 = vadd.f32 %v1644, %v2076
      %v2078 = vpop.f32.mrb[0].mxu0
      %2079 = vmatprep.mubr.bf16.mxu0 0
      %2080 = vmatmul.mubr.bf16.gmra.mrb[0].mxu0 %v1350
      %v2081 = vpop.f32.mrb[0].mxu0
      %v2082 = vadd.f32 %v1649, %v2081
      %v2083 = vpop.f32.mrb[0].mxu0
      %v2084 = vpop.f32.mrb[0].mxu0
      %v2085 = vadd.f32 %v1652, %v2084
      %v2086 = vpop.f32.mrb[0].mxu0
      %2087 = vmatprep.mubr.bf16.mxu0 0
      %2088 = vmatmul.mubr.bf16.gmra.mrb[0].mxu0 %v1353
      %v2089 = vpop.f32.mrb[0].mxu0
      %v2090 = vadd.f32 %v1657, %v2089
      %v2091 = vpop.f32.mrb[0].mxu0
      %v2092 = vpop.f32.mrb[0].mxu0
      %v2093 = vadd.f32 %v1660, %v2092
      %v2094 = vpop.f32.mrb[0].mxu0
      %2095 = vmatprep.mubr.bf16.mxu0 0
      %2096 = vmatmul.mubr.bf16.gmra.mrb[0].mxu0 %v1356
      %v2097 = vpop.f32.mrb[0].mxu0
      %v2098 = vadd.f32 %v1665, %v2097
      %v2099 = vpop.f32.mrb[0].mxu0
      %v2100 = vpop.f32.mrb[0].mxu0
      %v2101 = vadd.f32 %v1668, %v2100
      %v2102 = vpop.f32.mrb[0].mxu0
      %2103 = vmatprep.mubr.bf16.mxu0 0
      %2104 = vmatmul.mubr.bf16.gmra.mrb[0].mxu0 %v1359
      %v2105 = vpop.f32.mrb[0].mxu0
      %v2106 = vadd.f32 %v1673, %v2105
      %v2107 = vpop.f32.mrb[0].mxu0
      %v2108 = vpop.f32.mrb[0].mxu0
      %v2109 = vadd.f32 %v1676, %v2108
      %v2110 = vpop.f32.mrb[0].mxu0
      %2111 = vmatprep.mubr.bf16.mxu0 0
      %2112 = vmatmul.mubr.bf16.gmra.mrb[0].mxu0 %v1362
      %v2113 = vpop.f32.mrb[0].mxu0
      %v2114 = vadd.f32 %v1681, %v2113
      %v2115 = vpop.f32.mrb[0].mxu0
      %v2116 = vpop.f32.mrb[0].mxu0
      %v2117 = vadd.f32 %v1684, %v2116
      %v2118 = vpop.f32.mrb[0].mxu0
      %2119 = vmatprep.mubr.bf16.mxu0 0
      %2120 = vmatmul.mubr.bf16.gmra.mrb[0].mxu0 %v1365
      %v2121 = vpop.f32.mrb[0].mxu0
      %v2122 = vadd.f32 %v1689, %v2121
      %v2123 = vpop.f32.mrb[0].mxu0
      %v2124 = vpop.f32.mrb[0].mxu0
      %v2125 = vadd.f32 %v1692, %v2124
      %v2126 = vpop.f32.mrb[0].mxu0
      %2127 = vmatprep.mubr.bf16.mxu0 0
      %2128 = vmatmul.mubr.bf16.gmra.mrb[0].mxu0 %v1368
      %v2129 = vpop.f32.mrb[0].mxu0
      %v2130 = vadd.f32 %v1697, %v2129
      %v2131 = vpop.f32.mrb[0].mxu0
      %v2132 = vpop.f32.mrb[0].mxu0
      %v2133 = vadd.f32 %v1700, %v2132
      %v2134 = vpop.f32.mrb[0].mxu0
      %2135 = vmatprep.mubr.bf16.mxu0 0
      %2136 = vmatmul.mubr.bf16.gmra.mrb[0].mxu0 %v1371
      %v2137 = vpop.f32.mrb[0].mxu0
      %v2138 = vadd.f32 %v1705, %v2137
      %v2139 = vpop.f32.mrb[0].mxu0
      %v2140 = vpop.f32.mrb[0].mxu0
      %v2141 = vadd.f32 %v1708, %v2140
      %v2142 = vpop.f32.mrb[0].mxu0
      %2143 = vmatprep.mubr.bf16.mxu0 0
      %2144 = vmatmul.mubr.bf16.gmra.mrb[0].mxu0 %v1374
      %v2145 = vpop.f32.mrb[0].mxu0
      %v2146 = vadd.f32 %v1713, %v2145
      %v2147 = vpop.f32.mrb[0].mxu0
      %v2148 = vpop.f32.mrb[0].mxu0
      %v2149 = vadd.f32 %v1716, %v2148
      %v2150 = vpop.f32.mrb[0].mxu0
      %2151 = vmatprep.mubr.bf16.mxu0 0
      %2152 = vmatmul.mubr.bf16.gmra.mrb[0].mxu0 %v1377
      %v2153 = vpop.f32.mrb[0].mxu0
      %v2154 = vadd.f32 %v1721, %v2153
      %v2155 = vpop.f32.mrb[0].mxu0
      %v2156 = vpop.f32.mrb[0].mxu0
      %v2157 = vadd.f32 %v1724, %v2156
      %v2158 = vpop.f32.mrb[0].mxu0
      %2159 = vmatprep.mubr.bf16.mxu0 0
      %2160 = vmatmul.mubr.bf16.gmra.mrb[0].mxu0 %v1380
      %v2161 = vpop.f32.mrb[0].mxu0
      %v2162 = vadd.f32 %v1729, %v2161
      %v2163 = vpop.f32.mrb[0].mxu0
      %v2164 = vpop.f32.mrb[0].mxu0
      %v2165 = vadd.f32 %v1732, %v2164
      %v2166 = vpop.f32.mrb[0].mxu0
      %2167 = vmatprep.mubr.bf16.mxu0 0
      %2168 = vmatmul.mubr.bf16.gmra.mrb[0].mxu0 %v1383
      %v2169 = vpop.f32.mrb[0].mxu0
      %v2170 = vadd.f32 %v1737, %v2169
      %v2171 = vpop.f32.mrb[0].mxu0
      %v2172 = vpop.f32.mrb[0].mxu0
      %v2173 = vadd.f32 %v1740, %v2172
      %v2174 = vpop.f32.mrb[0].mxu0
      %2175 = vmatprep.mubr.bf16.mxu0 0
      %2176 = vmatmul.mubr.bf16.gmra.mrb[0].mxu0 %v1386
      %v2177 = vpop.f32.mrb[0].mxu0
      %v2178 = vadd.f32 %v1745, %v2177
      %v2179 = vpop.f32.mrb[0].mxu0
      %v2180 = vpop.f32.mrb[0].mxu0
      %v2181 = vadd.f32 %v1748, %v2180
      %v2182 = vpop.f32.mrb[0].mxu0
      %2183 = vmatprep.mubr.bf16.mxu0 0
      %2184 = vmatmul.mubr.bf16.gmra.mrb[0].mxu0 %v1389
      %v2185 = vpop.f32.mrb[0].mxu0
      %v2186 = vadd.f32 %v1753, %v2185
      %v2187 = vpop.f32.mrb[0].mxu0
      %v2188 = vpop.f32.mrb[0].mxu0
      %v2189 = vadd.f32 %v1756, %v2188
      %v2190 = vpop.f32.mrb[0].mxu0
      %2191 = vmatprep.mubr.bf16.mxu0 0
      %2192 = vmatmul.mubr.bf16.gmra.mrb[0].mxu0 %v1392
      %v2193 = vpop.f32.mrb[0].mxu0
      %v2194 = vadd.f32 %v1761, %v2193
      %v2195 = vpop.f32.mrb[0].mxu0
      %v2196 = vpop.f32.mrb[0].mxu0
      %v2197 = vadd.f32 %v1764, %v2196
      %v2198 = vpop.f32.mrb[0].mxu0
      %2199 = vmatprep.mubr.bf16.mxu0 0
      %2200 = vmatmul.mubr.bf16.gmra.mrb[0].mxu0 %v1395
      %v2201 = vpop.f32.mrb[0].mxu0
      %v2202 = vadd.f32 %v1769, %v2201
      %v2203 = vpop.f32.mrb[0].mxu0
      %v2204 = vpop.f32.mrb[0].mxu0
      %v2205 = vadd.f32 %v1772, %v2204
      %v2206 = vpop.f32.mrb[0].mxu0
      %2207 = vmatprep.mubr.bf16.mxu0 0
      %2208 = vmatmul.mubr.bf16.gmra.mrb[0].mxu0 %v1398
      %v2209 = vpop.f32.mrb[0].mxu0
      %v2210 = vadd.f32 %v1777, %v2209
      %v2211 = vpop.f32.mrb[0].mxu0
      %v2212 = vpop.f32.mrb[0].mxu0
      %v2213 = vadd.f32 %v1780, %v2212
      %v2214 = vpop.f32.mrb[0].mxu0
      %2215 = vmatprep.mubr.bf16.mxu0 0
      %2216 = vmatmul.mubr.bf16.gmra.mrb[0].mxu0 %v1401
      %v2217 = vpop.f32.mrb[0].mxu0
      %v2218 = vadd.f32 %v1785, %v2217
      %v2219 = vpop.f32.mrb[0].mxu0
      %v2220 = vpop.f32.mrb[0].mxu0
      %v2221 = vadd.f32 %v1788, %v2220
      %v2222 = vpop.f32.mrb[0].mxu0
      %2223 = vmatprep.mubr.bf16.mxu0 0
      %2224 = vmatmul.mubr.bf16.gmra.mrb[0].mxu0 %v1404
      %v2225 = vpop.f32.mrb[0].mxu0
      %v2226 = vadd.f32 %v1793, %v2225
      %v2227 = vpop.f32.mrb[0].mxu0
      %v2228 = vpop.f32.mrb[0].mxu0
      %v2229 = vadd.f32 %v1796, %v2228
      %v2230 = vpop.f32.mrb[0].mxu0
      %2231 = vmatprep.mubr.bf16.mxu0 0
      %2232 = vmatmul.mubr.bf16.gmra.mrb[0].mxu0 %v1407
      %v2233 = vpop.f32.mrb[0].mxu0
      %v2234 = vadd.f32 %v1801, %v2233
      %v2235 = vpop.f32.mrb[0].mxu0
      %v2236 = vpop.f32.mrb[0].mxu0
      %v2237 = vadd.f32 %v1804, %v2236
      %v2238 = vpop.f32.mrb[0].mxu0
      %2239 = vmatprep.mubr.bf16.mxu0 0
      %2240 = vmatmul.mubr.bf16.gmra.mrb[0].mxu0 %v1410
      %v2241 = vpop.f32.mrb[0].mxu0
      %v2242 = vadd.f32 %v1809, %v2241
      %v2243 = vpop.f32.mrb[0].mxu0
      %v2244 = vpop.f32.mrb[0].mxu0
      %v2245 = vadd.f32 %v1812, %v2244
      %v2246 = vpop.f32.mrb[0].mxu0
      %2247 = vmatprep.mubr.bf16.mxu0 0
      %2248 = vmatmul.mubr.bf16.gmra.mrb[0].mxu0 %v1413
      %v2249 = vpop.f32.mrb[0].mxu0
      %v2250 = vadd.f32 %v1817, %v2249
      %v2251 = vpop.f32.mrb[0].mxu0
      %v2252 = vpop.f32.mrb[0].mxu0
      %v2253 = vadd.f32 %v1820, %v2252
      %v2254 = vpop.f32.mrb[0].mxu0
      %2255 = vmatprep.mubr.bf16.mxu0 0
      %2256 = vmatmul.mubr.bf16.gmra.mrb[0].mxu0 %v1416
      %v2257 = vpop.f32.mrb[0].mxu0
      %v2258 = vadd.f32 %v1825, %v2257
      %v2259 = vpop.f32.mrb[0].mxu0
      %v2260 = vpop.f32.mrb[0].mxu0
      %v2261 = vadd.f32 %v1828, %v2260
      %v2262 = vpop.f32.mrb[0].mxu0
      %2263 = vmatprep.mubr.bf16.mxu0 0
      %2264 = vmatmul.mubr.bf16.gmra.mrb[0].mxu0 %v1419
      %v2265 = vpop.f32.mrb[0].mxu0
      %v2266 = vadd.f32 %v1833, %v2265
      %v2267 = vpop.f32.mrb[0].mxu0
      %v2268 = vpop.f32.mrb[0].mxu0
      %v2269 = vadd.f32 %v1836, %v2268
      %v2270 = vpop.f32.mrb[0].mxu0
      %2271 = vmatprep.mubr.bf16.mxu0 0
      %2272 = vmatmul.mubr.bf16.gmra.mrb[0].mxu0 %v1422
      %v2273 = vpop.f32.mrb[0].mxu0
      %v2274 = vadd.f32 %v1841, %v2273
      %v2275 = vpop.f32.mrb[0].mxu0
      %v2276 = vpop.f32.mrb[0].mxu0
      %v2277 = vadd.f32 %v1844, %v2276
      %v2278 = vpop.f32.mrb[0].mxu0
      %2279 = vmatprep.mubr.bf16.mxu0 0
      %2280 = vmatmul.mubr.bf16.gmra.mrb[0].mxu0 %v1425
      %v2281 = vpop.f32.mrb[0].mxu0
      %v2282 = vadd.f32 %v1849, %v2281
      %v2283 = vpop.f32.mrb[0].mxu0
      %v2284 = vpop.f32.mrb[0].mxu0
      %v2285 = vadd.f32 %v1852, %v2284
      %v2286 = vpop.f32.mrb[0].mxu0
      %2287 = vmatprep.mubr.bf16.mxu0 0
      %2288 = vmatmul.mubr.bf16.gmra.mrb[0].mxu0 %v1428
      %v2289 = vpop.f32.mrb[0].mxu0
      %v2290 = vadd.f32 %v1857, %v2289
      %v2291 = vpop.f32.mrb[0].mxu0
      %v2292 = vpop.f32.mrb[0].mxu0
      %v2293 = vadd.f32 %v1860, %v2292
      %v2294 = vpop.f32.mrb[0].mxu0
      %2295 = vdwg.mxu0
      %v2296 = vxor.u32 %v1898, 2147483648
      %v2297 = vxor.u32 %v1901, 2147483648
      %v2298 = vxor.u32 %v1906, 2147483648
      %v2299 = vxor.u32 %v1909, 2147483648
      %v2300 = vxor.u32 %v1914, 2147483648
      %v2301 = vxor.u32 %v1917, 2147483648
      %v2302 = vxor.u32 %v1922, 2147483648
      %v2303 = vxor.u32 %v1925, 2147483648
      %v2304 = vxor.u32 %v1930, 2147483648
      %v2305 = vxor.u32 %v1933, 2147483648
      %v2306 = vxor.u32 %v1938, 2147483648
      %v2307 = vxor.u32 %v1941, 2147483648
      %v2308 = vxor.u32 %v1946, 2147483648
      %v2309 = vxor.u32 %v1949, 2147483648
      %v2310 = vxor.u32 %v1954, 2147483648
      %v2311 = vxor.u32 %v1957, 2147483648
      %v2312 = vxor.u32 %v1962, 2147483648
      %v2313 = vxor.u32 %v1965, 2147483648
      %v2314 = vxor.u32 %v1970, 2147483648
      %v2315 = vxor.u32 %v1973, 2147483648
      %v2316 = vxor.u32 %v1978, 2147483648
      %v2317 = vxor.u32 %v1981, 2147483648
      %v2318 = vxor.u32 %v1986, 2147483648
      %v2319 = vxor.u32 %v1989, 2147483648
      %v2320 = vxor.u32 %v1994, 2147483648
      %v2321 = vxor.u32 %v1997, 2147483648
      %v2322 = vxor.u32 %v2002, 2147483648
      %v2323 = vxor.u32 %v2005, 2147483648
      %v2324 = vxor.u32 %v2010, 2147483648
      %v2325 = vxor.u32 %v2013, 2147483648
      %v2326 = vxor.u32 %v2018, 2147483648
      %v2327 = vxor.u32 %v2021, 2147483648
      %v2328 = vxor.u32 %v2026, 2147483648
      %v2329 = vxor.u32 %v2029, 2147483648
      %v2330 = vxor.u32 %v2034, 2147483648
      %v2331 = vxor.u32 %v2037, 2147483648
      %v2332 = vxor.u32 %v2042, 2147483648
      %v2333 = vxor.u32 %v2045, 2147483648
      %v2334 = vxor.u32 %v2050, 2147483648
      %v2335 = vxor.u32 %v2053, 2147483648
      %v2336 = vxor.u32 %v2058, 2147483648
      %v2337 = vxor.u32 %v2061, 2147483648
      %v2338 = vxor.u32 %v2066, 2147483648
      %v2339 = vxor.u32 %v2069, 2147483648
      %v2340 = vxor.u32 %v2074, 2147483648
      %v2341 = vxor.u32 %v2077, 2147483648
      %v2342 = vxor.u32 %v2082, 2147483648
      %v2343 = vxor.u32 %v2085, 2147483648
      %v2344 = vxor.u32 %v2090, 2147483648
      %v2345 = vxor.u32 %v2093, 2147483648
      %v2346 = vxor.u32 %v2098, 2147483648
      %v2347 = vxor.u32 %v2101, 2147483648
      %v2348 = vxor.u32 %v2106, 2147483648
      %v2349 = vxor.u32 %v2109, 2147483648
      %v2350 = vxor.u32 %v2114, 2147483648
      %v2351 = vxor.u32 %v2117, 2147483648
      %v2352 = vxor.u32 %v2122, 2147483648
      %v2353 = vxor.u32 %v2125, 2147483648
      %v2354 = vxor.u32 %v2130, 2147483648
      %v2355 = vxor.u32 %v2133, 2147483648
      %v2356 = vxor.u32 %v2138, 2147483648
      %v2357 = vxor.u32 %v2141, 2147483648
      %v2358 = vxor.u32 %v2146, 2147483648
      %v2359 = vxor.u32 %v2149, 2147483648
      %v2360 = vxor.u32 %v2154, 2147483648
      %v2361 = vxor.u32 %v2157, 2147483648
      %v2362 = vxor.u32 %v2162, 2147483648
      %v2363 = vxor.u32 %v2165, 2147483648
      %v2364 = vxor.u32 %v2170, 2147483648
      %v2365 = vxor.u32 %v2173, 2147483648
      %v2366 = vxor.u32 %v2178, 2147483648
      %v2367 = vxor.u32 %v2181, 2147483648
      %v2368 = vxor.u32 %v2186, 2147483648
      %v2369 = vxor.u32 %v2189, 2147483648
      %v2370 = vxor.u32 %v2194, 2147483648
      %v2371 = vxor.u32 %v2197, 2147483648
      %v2372 = vxor.u32 %v2202, 2147483648
      %v2373 = vxor.u32 %v2205, 2147483648
      %v2374 = vxor.u32 %v2210, 2147483648
      %v2375 = vxor.u32 %v2213, 2147483648
      %v2376 = vxor.u32 %v2218, 2147483648
      %v2377 = vxor.u32 %v2221, 2147483648
      %v2378 = vxor.u32 %v2226, 2147483648
      %v2379 = vxor.u32 %v2229, 2147483648
      %v2380 = vxor.u32 %v2234, 2147483648
      %v2381 = vxor.u32 %v2237, 2147483648
      %v2382 = vxor.u32 %v2242, 2147483648
      %v2383 = vxor.u32 %v2245, 2147483648
      %v2384 = vxor.u32 %v2250, 2147483648
      %v2385 = vxor.u32 %v2253, 2147483648
      %v2386 = vxor.u32 %v2258, 2147483648
      %v2387 = vxor.u32 %v2261, 2147483648
      %v2388 = vxor.u32 %v2266, 2147483648
      %v2389 = vxor.u32 %v2269, 2147483648
      %v2390 = vxor.u32 %v2274, 2147483648
      %v2391 = vxor.u32 %v2277, 2147483648
      %v2392 = vxor.u32 %v2282, 2147483648
      %v2393 = vxor.u32 %v2285, 2147483648
      %v2394 = vxor.u32 %v2290, 2147483648
      %v2395 = vxor.u32 %v2293, 2147483648
      %v2396 = vmul.f32 %v2296, 1.442695
      %v2397 = vpow.pop %v2396
      %v2398 = vmul.f32 %v2297, 1.442695
      %v2399 = vpow.pop %v2398
      %v2400 = vmul.f32 %v2298, 1.442695
      %v2401 = vpow.pop %v2400
      %v2402 = vmul.f32 %v2299, 1.442695
      %v2403 = vpow.pop %v2402
      %v2404 = vmul.f32 %v2300, 1.442695
      %v2405 = vpow.pop %v2404
      %v2406 = vmul.f32 %v2301, 1.442695
      %v2407 = vpow.pop %v2406
      %v2408 = vmul.f32 %v2302, 1.442695
      %v2409 = vpow.pop %v2408
      %v2410 = vmul.f32 %v2303, 1.442695
      %v2411 = vpow.pop %v2410
      %v2412 = vmul.f32 %v2304, 1.442695
      %v2413 = vpow.pop %v2412
      %v2414 = vmul.f32 %v2305, 1.442695
      %v2415 = vpow.pop %v2414
      %v2416 = vmul.f32 %v2306, 1.442695
      %v2417 = vpow.pop %v2416
      %v2418 = vmul.f32 %v2307, 1.442695
      %v2419 = vpow.pop %v2418
      %v2420 = vmul.f32 %v2308, 1.442695
      %v2421 = vpow.pop %v2420
      %v2422 = vmul.f32 %v2309, 1.442695
      %v2423 = vpow.pop %v2422
      %v2424 = vmul.f32 %v2310, 1.442695
      %v2425 = vpow.pop %v2424
      %v2426 = vmul.f32 %v2311, 1.442695
      %v2427 = vpow.pop %v2426
      %v2428 = vmul.f32 %v2312, 1.442695
      %v2429 = vpow.pop %v2428
      %v2430 = vmul.f32 %v2313, 1.442695
      %v2431 = vpow.pop %v2430
      %v2432 = vmul.f32 %v2314, 1.442695
      %v2433 = vpow.pop %v2432
      %v2434 = vmul.f32 %v2315, 1.442695
      %v2435 = vpow.pop %v2434
      %v2436 = vmul.f32 %v2316, 1.442695
      %v2437 = vpow.pop %v2436
      %v2438 = vmul.f32 %v2317, 1.442695
      %v2439 = vpow.pop %v2438
      %v2440 = vmul.f32 %v2318, 1.442695
      %v2441 = vpow.pop %v2440
      %v2442 = vmul.f32 %v2319, 1.442695
      %v2443 = vpow.pop %v2442
      %v2444 = vmul.f32 %v2320, 1.442695
      %v2445 = vpow.pop %v2444
      %v2446 = vmul.f32 %v2321, 1.442695
      %v2447 = vpow.pop %v2446
      %v2448 = vmul.f32 %v2322, 1.442695
      %v2449 = vpow.pop %v2448
      %v2450 = vmul.f32 %v2323, 1.442695
      %v2451 = vpow.pop %v2450
      %v2452 = vmul.f32 %v2324, 1.442695
      %v2453 = vpow.pop %v2452
      %v2454 = vmul.f32 %v2325, 1.442695
      %v2455 = vpow.pop %v2454
      %v2456 = vmul.f32 %v2326, 1.442695
      %v2457 = vpow.pop %v2456
      %v2458 = vmul.f32 %v2327, 1.442695
      %v2459 = vpow.pop %v2458
      %v2460 = vmul.f32 %v2328, 1.442695
      %v2461 = vpow.pop %v2460
      %v2462 = vmul.f32 %v2329, 1.442695
      %v2463 = vpow.pop %v2462
      %v2464 = vmul.f32 %v2330, 1.442695
      %v2465 = vpow.pop %v2464
      %v2466 = vmul.f32 %v2331, 1.442695
      %v2467 = vpow.pop %v2466
      %v2468 = vmul.f32 %v2332, 1.442695
      %v2469 = vpow.pop %v2468
      %v2470 = vmul.f32 %v2333, 1.442695
      %v2471 = vpow.pop %v2470
      %v2472 = vmul.f32 %v2334, 1.442695
      %v2473 = vpow.pop %v2472
      %v2474 = vmul.f32 %v2335, 1.442695
      %v2475 = vpow.pop %v2474
      %v2476 = vmul.f32 %v2336, 1.442695
      %v2477 = vpow.pop %v2476
      %v2478 = vmul.f32 %v2337, 1.442695
      %v2479 = vpow.pop %v2478
      %v2480 = vmul.f32 %v2338, 1.442695
      %v2481 = vpow.pop %v2480
      %v2482 = vmul.f32 %v2339, 1.442695
      %v2483 = vpow.pop %v2482
      %v2484 = vmul.f32 %v2340, 1.442695
      %v2485 = vpow.pop %v2484
      %v2486 = vmul.f32 %v2341, 1.442695
      %v2487 = vpow.pop %v2486
      %v2488 = vmul.f32 %v2342, 1.442695
      %v2489 = vpow.pop %v2488
      %v2490 = vmul.f32 %v2343, 1.442695
      %v2491 = vpow.pop %v2490
      %v2492 = vmul.f32 %v2344, 1.442695
      %v2493 = vpow.pop %v2492
      %v2494 = vmul.f32 %v2345, 1.442695
      %v2495 = vpow.pop %v2494
      %v2496 = vmul.f32 %v2346, 1.442695
      %v2497 = vpow.pop %v2496
      %v2498 = vmul.f32 %v2347, 1.442695
      %v2499 = vpow.pop %v2498
      %v2500 = vmul.f32 %v2348, 1.442695
      %v2501 = vpow.pop %v2500
      %v2502 = vmul.f32 %v2349, 1.442695
      %v2503 = vpow.pop %v2502
      %v2504 = vmul.f32 %v2350, 1.442695
      %v2505 = vpow.pop %v2504
      %v2506 = vmul.f32 %v2351, 1.442695
      %v2507 = vpow.pop %v2506
      %v2508 = vmul.f32 %v2352, 1.442695
      %v2509 = vpow.pop %v2508
      %v2510 = vmul.f32 %v2353, 1.442695
      %v2511 = vpow.pop %v2510
      %v2512 = vmul.f32 %v2354, 1.442695
      %v2513 = vpow.pop %v2512
      %v2514 = vmul.f32 %v2355, 1.442695
      %v2515 = vpow.pop %v2514
      %v2516 = vmul.f32 %v2356, 1.442695
      %v2517 = vpow.pop %v2516
      %v2518 = vmul.f32 %v2357, 1.442695
      %v2519 = vpow.pop %v2518
      %v2520 = vmul.f32 %v2358, 1.442695
      %v2521 = vpow.pop %v2520
      %v2522 = vmul.f32 %v2359, 1.442695
      %v2523 = vpow.pop %v2522
      %v2524 = vmul.f32 %v2360, 1.442695
      %v2525 = vpow.pop %v2524
      %v2526 = vmul.f32 %v2361, 1.442695
      %v2527 = vpow.pop %v2526
      %v2528 = vmul.f32 %v2362, 1.442695
      %v2529 = vpow.pop %v2528
      %v2530 = vmul.f32 %v2363, 1.442695
      %v2531 = vpow.pop %v2530
      %v2532 = vmul.f32 %v2364, 1.442695
      %v2533 = vpow.pop %v2532
      %v2534 = vmul.f32 %v2365, 1.442695
      %v2535 = vpow.pop %v2534
      %v2536 = vmul.f32 %v2366, 1.442695
      %v2537 = vpow.pop %v2536
      %v2538 = vmul.f32 %v2367, 1.442695
      %v2539 = vpow.pop %v2538
      %v2540 = vmul.f32 %v2368, 1.442695
      %v2541 = vpow.pop %v2540
      %v2542 = vmul.f32 %v2369, 1.442695
      %v2543 = vpow.pop %v2542
      %v2544 = vmul.f32 %v2370, 1.442695
      %v2545 = vpow.pop %v2544
      %v2546 = vmul.f32 %v2371, 1.442695
      %v2547 = vpow.pop %v2546
      %v2548 = vmul.f32 %v2372, 1.442695
      %v2549 = vpow.pop %v2548
      %v2550 = vmul.f32 %v2373, 1.442695
      %v2551 = vpow.pop %v2550
      %v2552 = vmul.f32 %v2374, 1.442695
      %v2553 = vpow.pop %v2552
      %v2554 = vmul.f32 %v2375, 1.442695
      %v2555 = vpow.pop %v2554
      %v2556 = vmul.f32 %v2376, 1.442695
      %v2557 = vpow.pop %v2556
      %v2558 = vmul.f32 %v2377, 1.442695
      %v2559 = vpow.pop %v2558
      %v2560 = vmul.f32 %v2378, 1.442695
      %v2561 = vpow.pop %v2560
      %v2562 = vmul.f32 %v2379, 1.442695
      %v2563 = vpow.pop %v2562
      %v2564 = vmul.f32 %v2380, 1.442695
      %v2565 = vpow.pop %v2564
      %v2566 = vmul.f32 %v2381, 1.442695
      %v2567 = vpow.pop %v2566
      %v2568 = vmul.f32 %v2382, 1.442695
      %v2569 = vpow.pop %v2568
      %v2570 = vmul.f32 %v2383, 1.442695
      %v2571 = vpow.pop %v2570
      %v2572 = vmul.f32 %v2384, 1.442695
      %v2573 = vpow.pop %v2572
      %v2574 = vmul.f32 %v2385, 1.442695
      %v2575 = vpow.pop %v2574
      %v2576 = vmul.f32 %v2386, 1.442695
      %v2577 = vpow.pop %v2576
      %v2578 = vmul.f32 %v2387, 1.442695
      %v2579 = vpow.pop %v2578
      %v2580 = vmul.f32 %v2388, 1.442695
      %v2581 = vpow.pop %v2580
      %v2582 = vmul.f32 %v2389, 1.442695
      %v2583 = vpow.pop %v2582
      %v2584 = vmul.f32 %v2390, 1.442695
      %v2585 = vpow.pop %v2584
      %v2586 = vmul.f32 %v2391, 1.442695
      %v2587 = vpow.pop %v2586
      %v2588 = vmul.f32 %v2392, 1.442695
      %v2589 = vpow.pop %v2588
      %v2590 = vmul.f32 %v2393, 1.442695
      %v2591 = vpow.pop %v2590
      %v2592 = vmul.f32 %v2394, 1.442695
      %v2593 = vpow.pop %v2592
      %v2594 = vmul.f32 %v2395, 1.442695
      %v2595 = vpow.pop %v2594
      %v2596 = vadd.f32 %v2397, 1.0
      %v2597 = vadd.f32 %v2399, 1.0
      %v2598 = vadd.f32 %v2401, 1.0
      %v2599 = vadd.f32 %v2403, 1.0
      %v2600 = vadd.f32 %v2405, 1.0
      %v2601 = vadd.f32 %v2407, 1.0
      %v2602 = vadd.f32 %v2409, 1.0
      %v2603 = vadd.f32 %v2411, 1.0
      %v2604 = vadd.f32 %v2413, 1.0
      %v2605 = vadd.f32 %v2415, 1.0
      %v2606 = vadd.f32 %v2417, 1.0
      %v2607 = vadd.f32 %v2419, 1.0
      %v2608 = vadd.f32 %v2421, 1.0
      %v2609 = vadd.f32 %v2423, 1.0
      %v2610 = vadd.f32 %v2425, 1.0
      %v2611 = vadd.f32 %v2427, 1.0
      %v2612 = vadd.f32 %v2429, 1.0
      %v2613 = vadd.f32 %v2431, 1.0
      %v2614 = vadd.f32 %v2433, 1.0
      %v2615 = vadd.f32 %v2435, 1.0
      %v2616 = vadd.f32 %v2437, 1.0
      %v2617 = vadd.f32 %v2439, 1.0
      %v2618 = vadd.f32 %v2441, 1.0
      %v2619 = vadd.f32 %v2443, 1.0
      %v2620 = vadd.f32 %v2445, 1.0
      %v2621 = vadd.f32 %v2447, 1.0
      %v2622 = vadd.f32 %v2449, 1.0
      %v2623 = vadd.f32 %v2451, 1.0
      %v2624 = vadd.f32 %v2453, 1.0
      %v2625 = vadd.f32 %v2455, 1.0
      %v2626 = vadd.f32 %v2457, 1.0
      %v2627 = vadd.f32 %v2459, 1.0
      %v2628 = vadd.f32 %v2461, 1.0
      %v2629 = vadd.f32 %v2463, 1.0
      %v2630 = vadd.f32 %v2465, 1.0
      %v2631 = vadd.f32 %v2467, 1.0
      %v2632 = vadd.f32 %v2469, 1.0
      %v2633 = vadd.f32 %v2471, 1.0
      %v2634 = vadd.f32 %v2473, 1.0
      %v2635 = vadd.f32 %v2475, 1.0
      %v2636 = vadd.f32 %v2477, 1.0
      %v2637 = vadd.f32 %v2479, 1.0
      %v2638 = vadd.f32 %v2481, 1.0
      %v2639 = vadd.f32 %v2483, 1.0
      %v2640 = vadd.f32 %v2485, 1.0
      %v2641 = vadd.f32 %v2487, 1.0
      %v2642 = vadd.f32 %v2489, 1.0
      %v2643 = vadd.f32 %v2491, 1.0
      %v2644 = vadd.f32 %v2493, 1.0
      %v2645 = vadd.f32 %v2495, 1.0
      %v2646 = vadd.f32 %v2497, 1.0
      %v2647 = vadd.f32 %v2499, 1.0
      %v2648 = vadd.f32 %v2501, 1.0
      %v2649 = vadd.f32 %v2503, 1.0
      %v2650 = vadd.f32 %v2505, 1.0
      %v2651 = vadd.f32 %v2507, 1.0
      %v2652 = vadd.f32 %v2509, 1.0
      %v2653 = vadd.f32 %v2511, 1.0
      %v2654 = vadd.f32 %v2513, 1.0
      %v2655 = vadd.f32 %v2515, 1.0
      %v2656 = vadd.f32 %v2517, 1.0
      %v2657 = vadd.f32 %v2519, 1.0
      %v2658 = vadd.f32 %v2521, 1.0
      %v2659 = vadd.f32 %v2523, 1.0
      %v2660 = vadd.f32 %v2525, 1.0
      %v2661 = vadd.f32 %v2527, 1.0
      %v2662 = vadd.f32 %v2529, 1.0
      %v2663 = vadd.f32 %v2531, 1.0
      %v2664 = vadd.f32 %v2533, 1.0
      %v2665 = vadd.f32 %v2535, 1.0
      %v2666 = vadd.f32 %v2537, 1.0
      %v2667 = vadd.f32 %v2539, 1.0
      %v2668 = vadd.f32 %v2541, 1.0
      %v2669 = vadd.f32 %v2543, 1.0
      %v2670 = vadd.f32 %v2545, 1.0
      %v2671 = vadd.f32 %v2547, 1.0
      %v2672 = vadd.f32 %v2549, 1.0
      %v2673 = vadd.f32 %v2551, 1.0
      %v2674 = vadd.f32 %v2553, 1.0
      %v2675 = vadd.f32 %v2555, 1.0
      %v2676 = vadd.f32 %v2557, 1.0
      %v2677 = vadd.f32 %v2559, 1.0
      %v2678 = vadd.f32 %v2561, 1.0
      %v2679 = vadd.f32 %v2563, 1.0
      %v2680 = vadd.f32 %v2565, 1.0
      %v2681 = vadd.f32 %v2567, 1.0
      %v2682 = vadd.f32 %v2569, 1.0
      %v2683 = vadd.f32 %v2571, 1.0
      %v2684 = vadd.f32 %v2573, 1.0
      %v2685 = vadd.f32 %v2575, 1.0
      %v2686 = vadd.f32 %v2577, 1.0
      %v2687 = vadd.f32 %v2579, 1.0
      %v2688 = vadd.f32 %v2581, 1.0
      %v2689 = vadd.f32 %v2583, 1.0
      %v2690 = vadd.f32 %v2585, 1.0
      %v2691 = vadd.f32 %v2587, 1.0
      %v2692 = vadd.f32 %v2589, 1.0
      %v2693 = vadd.f32 %v2591, 1.0
      %v2694 = vadd.f32 %v2593, 1.0
      %v2695 = vadd.f32 %v2595, 1.0
      %v2696 = vrcp.pop %v2596
      %v2697 = vmul.f32 1.0, %v2696
      %v2698 = vrcp.pop %v2597
      %v2699 = vmul.f32 1.0, %v2698
      %v2700 = vrcp.pop %v2598
      %v2701 = vmul.f32 1.0, %v2700
      %v2702 = vrcp.pop %v2599
      %v2703 = vmul.f32 1.0, %v2702
      %v2704 = vrcp.pop %v2600
      %v2705 = vmul.f32 1.0, %v2704
      %v2706 = vrcp.pop %v2601
      %v2707 = vmul.f32 1.0, %v2706
      %v2708 = vrcp.pop %v2602
      %v2709 = vmul.f32 1.0, %v2708
      %v2710 = vrcp.pop %v2603
      %v2711 = vmul.f32 1.0, %v2710
      %v2712 = vrcp.pop %v2604
      %v2713 = vmul.f32 1.0, %v2712
      %v2714 = vrcp.pop %v2605
      %v2715 = vmul.f32 1.0, %v2714
      %v2716 = vrcp.pop %v2606
      %v2717 = vmul.f32 1.0, %v2716
      %v2718 = vrcp.pop %v2607
      %v2719 = vmul.f32 1.0, %v2718
      %v2720 = vrcp.pop %v2608
      %v2721 = vmul.f32 1.0, %v2720
      %v2722 = vrcp.pop %v2609
      %v2723 = vmul.f32 1.0, %v2722
      %v2724 = vrcp.pop %v2610
      %v2725 = vmul.f32 1.0, %v2724
      %v2726 = vrcp.pop %v2611
      %v2727 = vmul.f32 1.0, %v2726
      %v2728 = vrcp.pop %v2612
      %v2729 = vmul.f32 1.0, %v2728
      %v2730 = vrcp.pop %v2613
      %v2731 = vmul.f32 1.0, %v2730
      %v2732 = vrcp.pop %v2614
      %v2733 = vmul.f32 1.0, %v2732
      %v2734 = vrcp.pop %v2615
      %v2735 = vmul.f32 1.0, %v2734
      %v2736 = vrcp.pop %v2616
      %v2737 = vmul.f32 1.0, %v2736
      %v2738 = vrcp.pop %v2617
      %v2739 = vmul.f32 1.0, %v2738
      %v2740 = vrcp.pop %v2618
      %v2741 = vmul.f32 1.0, %v2740
      %v2742 = vrcp.pop %v2619
      %v2743 = vmul.f32 1.0, %v2742
      %v2744 = vrcp.pop %v2620
      %v2745 = vmul.f32 1.0, %v2744
      %v2746 = vrcp.pop %v2621
      %v2747 = vmul.f32 1.0, %v2746
      %v2748 = vrcp.pop %v2622
      %v2749 = vmul.f32 1.0, %v2748
      %v2750 = vrcp.pop %v2623
      %v2751 = vmul.f32 1.0, %v2750
      %v2752 = vrcp.pop %v2624
      %v2753 = vmul.f32 1.0, %v2752
      %v2754 = vrcp.pop %v2625
      %v2755 = vmul.f32 1.0, %v2754
      %v2756 = vrcp.pop %v2626
      %v2757 = vmul.f32 1.0, %v2756
      %v2758 = vrcp.pop %v2627
      %v2759 = vmul.f32 1.0, %v2758
      %v2760 = vrcp.pop %v2628
      %v2761 = vmul.f32 1.0, %v2760
      %v2762 = vrcp.pop %v2629
      %v2763 = vmul.f32 1.0, %v2762
      %v2764 = vrcp.pop %v2630
      %v2765 = vmul.f32 1.0, %v2764
      %v2766 = vrcp.pop %v2631
      %v2767 = vmul.f32 1.0, %v2766
      %v2768 = vrcp.pop %v2632
      %v2769 = vmul.f32 1.0, %v2768
      %v2770 = vrcp.pop %v2633
      %v2771 = vmul.f32 1.0, %v2770
      %v2772 = vrcp.pop %v2634
      %v2773 = vmul.f32 1.0, %v2772
      %v2774 = vrcp.pop %v2635
      %v2775 = vmul.f32 1.0, %v2774
      %v2776 = vrcp.pop %v2636
      %v2777 = vmul.f32 1.0, %v2776
      %v2778 = vrcp.pop %v2637
      %v2779 = vmul.f32 1.0, %v2778
      %v2780 = vrcp.pop %v2638
      %v2781 = vmul.f32 1.0, %v2780
      %v2782 = vrcp.pop %v2639
      %v2783 = vmul.f32 1.0, %v2782
      %v2784 = vrcp.pop %v2640
      %v2785 = vmul.f32 1.0, %v2784
      %v2786 = vrcp.pop %v2641
      %v2787 = vmul.f32 1.0, %v2786
      %v2788 = vrcp.pop %v2642
      %v2789 = vmul.f32 1.0, %v2788
      %v2790 = vrcp.pop %v2643
      %v2791 = vmul.f32 1.0, %v2790
      %v2792 = vrcp.pop %v2644
      %v2793 = vmul.f32 1.0, %v2792
      %v2794 = vrcp.pop %v2645
      %v2795 = vmul.f32 1.0, %v2794
      %v2796 = vrcp.pop %v2646
      %v2797 = vmul.f32 1.0, %v2796
      %v2798 = vrcp.pop %v2647
      %v2799 = vmul.f32 1.0, %v2798
      %v2800 = vrcp.pop %v2648
      %v2801 = vmul.f32 1.0, %v2800
      %v2802 = vrcp.pop %v2649
      %v2803 = vmul.f32 1.0, %v2802
      %v2804 = vrcp.pop %v2650
      %v2805 = vmul.f32 1.0, %v2804
      %v2806 = vrcp.pop %v2651
      %v2807 = vmul.f32 1.0, %v2806
      %v2808 = vrcp.pop %v2652
      %v2809 = vmul.f32 1.0, %v2808
      %v2810 = vrcp.pop %v2653
      %v2811 = vmul.f32 1.0, %v2810
      %v2812 = vrcp.pop %v2654
      %v2813 = vmul.f32 1.0, %v2812
      %v2814 = vrcp.pop %v2655
      %v2815 = vmul.f32 1.0, %v2814
      %v2816 = vrcp.pop %v2656
      %v2817 = vmul.f32 1.0, %v2816
      %v2818 = vrcp.pop %v2657
      %v2819 = vmul.f32 1.0, %v2818
      %v2820 = vrcp.pop %v2658
      %v2821 = vmul.f32 1.0, %v2820
      %v2822 = vrcp.pop %v2659
      %v2823 = vmul.f32 1.0, %v2822
      %v2824 = vrcp.pop %v2660
      %v2825 = vmul.f32 1.0, %v2824
      %v2826 = vrcp.pop %v2661
      %v2827 = vmul.f32 1.0, %v2826
      %v2828 = vrcp.pop %v2662
      %v2829 = vmul.f32 1.0, %v2828
      %v2830 = vrcp.pop %v2663
      %v2831 = vmul.f32 1.0, %v2830
      %v2832 = vrcp.pop %v2664
      %v2833 = vmul.f32 1.0, %v2832
      %v2834 = vrcp.pop %v2665
      %v2835 = vmul.f32 1.0, %v2834
      %v2836 = vrcp.pop %v2666
      %v2837 = vmul.f32 1.0, %v2836
      %v2838 = vrcp.pop %v2667
      %v2839 = vmul.f32 1.0, %v2838
      %v2840 = vrcp.pop %v2668
      %v2841 = vmul.f32 1.0, %v2840
      %v2842 = vrcp.pop %v2669
      %v2843 = vmul.f32 1.0, %v2842
      %v2844 = vrcp.pop %v2670
      %v2845 = vmul.f32 1.0, %v2844
      %v2846 = vrcp.pop %v2671
      %v2847 = vmul.f32 1.0, %v2846
      %v2848 = vrcp.pop %v2672
      %v2849 = vmul.f32 1.0, %v2848
      %v2850 = vrcp.pop %v2673
      %v2851 = vmul.f32 1.0, %v2850
      %v2852 = vrcp.pop %v2674
      %v2853 = vmul.f32 1.0, %v2852
      %v2854 = vrcp.pop %v2675
      %v2855 = vmul.f32 1.0, %v2854
      %v2856 = vrcp.pop %v2676
      %v2857 = vmul.f32 1.0, %v2856
      %v2858 = vrcp.pop %v2677
      %v2859 = vmul.f32 1.0, %v2858
      %v2860 = vrcp.pop %v2678
      %v2861 = vmul.f32 1.0, %v2860
      %v2862 = vrcp.pop %v2679
      %v2863 = vmul.f32 1.0, %v2862
      %v2864 = vrcp.pop %v2680
      %v2865 = vmul.f32 1.0, %v2864
      %v2866 = vrcp.pop %v2681
      %v2867 = vmul.f32 1.0, %v2866
      %v2868 = vrcp.pop %v2682
      %v2869 = vmul.f32 1.0, %v2868
      %v2870 = vrcp.pop %v2683
      %v2871 = vmul.f32 1.0, %v2870
      %v2872 = vrcp.pop %v2684
      %v2873 = vmul.f32 1.0, %v2872
      %v2874 = vrcp.pop %v2685
      %v2875 = vmul.f32 1.0, %v2874
      %v2876 = vrcp.pop %v2686
      %v2877 = vmul.f32 1.0, %v2876
      %v2878 = vrcp.pop %v2687
      %v2879 = vmul.f32 1.0, %v2878
      %v2880 = vrcp.pop %v2688
      %v2881 = vmul.f32 1.0, %v2880
      %v2882 = vrcp.pop %v2689
      %v2883 = vmul.f32 1.0, %v2882
      %v2884 = vrcp.pop %v2690
      %v2885 = vmul.f32 1.0, %v2884
      %v2886 = vrcp.pop %v2691
      %v2887 = vmul.f32 1.0, %v2886
      %v2888 = vrcp.pop %v2692
      %v2889 = vmul.f32 1.0, %v2888
      %v2890 = vrcp.pop %v2693
      %v2891 = vmul.f32 1.0, %v2890
      %v2892 = vrcp.pop %v2694
      %v2893 = vmul.f32 1.0, %v2892
      %v2894 = vrcp.pop %v2695
      %v2895 = vmul.f32 1.0, %v2894
      %vm2896 = vcmask 130048
      %2897 = vst.msk [vmem:[%s175] sm:$0xff] %vm2896, %v2697
      %2898 = vst.msk [vmem:[%s175 + $0x8] sm:$0xff] %vm2896, %v2699
      %2899 = vst.msk [vmem:[%s175 + $0x10] sm:$0xff] %vm2896, %v2701
      %2900 = vst.msk [vmem:[%s175 + $0x18] sm:$0xff] %vm2896, %v2703
      %2901 = vst.msk [vmem:[%s175 + $0x20] sm:$0xff] %vm2896, %v2705
      %2902 = vst.msk [vmem:[%s175 + $0x28] sm:$0xff] %vm2896, %v2707
      %2903 = vst.msk [vmem:[%s175 + $0x30] sm:$0xff] %vm2896, %v2709
      %2904 = vst.msk [vmem:[%s175 + $0x38] sm:$0xff] %vm2896, %v2711
      %2905 = vst.msk [vmem:[%s175 + $0x40] sm:$0xff] %vm2896, %v2713
      %2906 = vst.msk [vmem:[%s175 + $0x48] sm:$0xff] %vm2896, %v2715
      %2907 = vst.msk [vmem:[%s175 + $0x50] sm:$0xff] %vm2896, %v2717
      %2908 = vst.msk [vmem:[%s175 + $0x58] sm:$0xff] %vm2896, %v2719
      %2909 = vst.msk [vmem:[%s175 + $0x60] sm:$0xff] %vm2896, %v2721
      %2910 = vst.msk [vmem:[%s175 + $0x68] sm:$0xff] %vm2896, %v2723
      %2911 = vst.msk [vmem:[%s175 + $0x70] sm:$0xff] %vm2896, %v2725
      %2912 = vst.msk [vmem:[%s175 + $0x78] sm:$0xff] %vm2896, %v2727
      %2913 = vst.msk [vmem:[%s175 + $0x80] sm:$0xff] %vm2896, %v2729
      %2914 = vst.msk [vmem:[%s175 + $0x88] sm:$0xff] %vm2896, %v2731
      %2915 = vst.msk [vmem:[%s175 + $0x90] sm:$0xff] %vm2896, %v2733
      %2916 = vst.msk [vmem:[%s175 + $0x98] sm:$0xff] %vm2896, %v2735
      %2917 = vst.msk [vmem:[%s175 + $0xa0] sm:$0xff] %vm2896, %v2737
      %2918 = vst.msk [vmem:[%s175 + $0xa8] sm:$0xff] %vm2896, %v2739
      %2919 = vst.msk [vmem:[%s175 + $0xb0] sm:$0xff] %vm2896, %v2741
      %2920 = vst.msk [vmem:[%s175 + $0xb8] sm:$0xff] %vm2896, %v2743
      %2921 = vst.msk [vmem:[%s175 + $0xc0] sm:$0xff] %vm2896, %v2745
      %2922 = vst.msk [vmem:[%s175 + $0xc8] sm:$0xff] %vm2896, %v2747
      %2923 = vst.msk [vmem:[%s175 + $0xd0] sm:$0xff] %vm2896, %v2749
      %2924 = vst.msk [vmem:[%s175 + $0xd8] sm:$0xff] %vm2896, %v2751
      %2925 = vst.msk [vmem:[%s175 + $0xe0] sm:$0xff] %vm2896, %v2753
      %2926 = vst.msk [vmem:[%s175 + $0xe8] sm:$0xff] %vm2896, %v2755
      %2927 = vst.msk [vmem:[%s175 + $0xf0] sm:$0xff] %vm2896, %v2757
      %2928 = vst.msk [vmem:[%s175 + $0xf8] sm:$0xff] %vm2896, %v2759
      %2929 = vst.msk [vmem:[%s175 + $0x100] sm:$0xff] %vm2896, %v2761
      %2930 = vst.msk [vmem:[%s175 + $0x108] sm:$0xff] %vm2896, %v2763
      %2931 = vst.msk [vmem:[%s175 + $0x110] sm:$0xff] %vm2896, %v2765
      %2932 = vst.msk [vmem:[%s175 + $0x118] sm:$0xff] %vm2896, %v2767
      %2933 = vst.msk [vmem:[%s175 + $0x120] sm:$0xff] %vm2896, %v2769
      %2934 = vst.msk [vmem:[%s175 + $0x128] sm:$0xff] %vm2896, %v2771
      %2935 = vst.msk [vmem:[%s175 + $0x130] sm:$0xff] %vm2896, %v2773
      %2936 = vst.msk [vmem:[%s175 + $0x138] sm:$0xff] %vm2896, %v2775
      %2937 = vst.msk [vmem:[%s175 + $0x140] sm:$0xff] %vm2896, %v2777
      %2938 = vst.msk [vmem:[%s175 + $0x148] sm:$0xff] %vm2896, %v2779
      %2939 = vst.msk [vmem:[%s175 + $0x150] sm:$0xff] %vm2896, %v2781
      %2940 = vst.msk [vmem:[%s175 + $0x158] sm:$0xff] %vm2896, %v2783
      %2941 = vst.msk [vmem:[%s175 + $0x160] sm:$0xff] %vm2896, %v2785
      %2942 = vst.msk [vmem:[%s175 + $0x168] sm:$0xff] %vm2896, %v2787
      %2943 = vst.msk [vmem:[%s175 + $0x170] sm:$0xff] %vm2896, %v2789
      %2944 = vst.msk [vmem:[%s175 + $0x178] sm:$0xff] %vm2896, %v2791
      %2945 = vst.msk [vmem:[%s175 + $0x180] sm:$0xff] %vm2896, %v2793
      %2946 = vst.msk [vmem:[%s175 + $0x188] sm:$0xff] %vm2896, %v2795
      %2947 = vst.msk [vmem:[%s175 + $0x190] sm:$0xff] %vm2896, %v2797
      %2948 = vst.msk [vmem:[%s175 + $0x198] sm:$0xff] %vm2896, %v2799
      %2949 = vst.msk [vmem:[%s175 + $0x1a0] sm:$0xff] %vm2896, %v2801
      %2950 = vst.msk [vmem:[%s175 + $0x1a8] sm:$0xff] %vm2896, %v2803
      %2951 = vst.msk [vmem:[%s175 + $0x1b0] sm:$0xff] %vm2896, %v2805
      %2952 = vst.msk [vmem:[%s175 + $0x1b8] sm:$0xff] %vm2896, %v2807
      %2953 = vst.msk [vmem:[%s175 + $0x1c0] sm:$0xff] %vm2896, %v2809
      %2954 = vst.msk [vmem:[%s175 + $0x1c8] sm:$0xff] %vm2896, %v2811
      %2955 = vst.msk [vmem:[%s175 + $0x1d0] sm:$0xff] %vm2896, %v2813
      %2956 = vst.msk [vmem:[%s175 + $0x1d8] sm:$0xff] %vm2896, %v2815
      %2957 = vst.msk [vmem:[%s175 + $0x1e0] sm:$0xff] %vm2896, %v2817
      %2958 = vst.msk [vmem:[%s175 + $0x1e8] sm:$0xff] %vm2896, %v2819
      %2959 = vst.msk [vmem:[%s175 + $0x1f0] sm:$0xff] %vm2896, %v2821
      %2960 = vst.msk [vmem:[%s175 + $0x1f8] sm:$0xff] %vm2896, %v2823
      %2961 = vst.msk [vmem:[%s175 + $0x200] sm:$0xff] %vm2896, %v2825
      %2962 = vst.msk [vmem:[%s175 + $0x208] sm:$0xff] %vm2896, %v2827
      %2963 = vst.msk [vmem:[%s175 + $0x210] sm:$0xff] %vm2896, %v2829
      %2964 = vst.msk [vmem:[%s175 + $0x218] sm:$0xff] %vm2896, %v2831
      %2965 = vst.msk [vmem:[%s175 + $0x220] sm:$0xff] %vm2896, %v2833
      %2966 = vst.msk [vmem:[%s175 + $0x228] sm:$0xff] %vm2896, %v2835
      %2967 = vst.msk [vmem:[%s175 + $0x230] sm:$0xff] %vm2896, %v2837
      %2968 = vst.msk [vmem:[%s175 + $0x238] sm:$0xff] %vm2896, %v2839
      %2969 = vst.msk [vmem:[%s175 + $0x240] sm:$0xff] %vm2896, %v2841
      %2970 = vst.msk [vmem:[%s175 + $0x248] sm:$0xff] %vm2896, %v2843
      %2971 = vst.msk [vmem:[%s175 + $0x250] sm:$0xff] %vm2896, %v2845
      %2972 = vst.msk [vmem:[%s175 + $0x258] sm:$0xff] %vm2896, %v2847
      %2973 = vst.msk [vmem:[%s175 + $0x260] sm:$0xff] %vm2896, %v2849
      %2974 = vst.msk [vmem:[%s175 + $0x268] sm:$0xff] %vm2896, %v2851
      %2975 = vst.msk [vmem:[%s175 + $0x270] sm:$0xff] %vm2896, %v2853
      %2976 = vst.msk [vmem:[%s175 + $0x278] sm:$0xff] %vm2896, %v2855
      %2977 = vst.msk [vmem:[%s175 + $0x280] sm:$0xff] %vm2896, %v2857
      %2978 = vst.msk [vmem:[%s175 + $0x288] sm:$0xff] %vm2896, %v2859
      %2979 = vst.msk [vmem:[%s175 + $0x290] sm:$0xff] %vm2896, %v2861
      %2980 = vst.msk [vmem:[%s175 + $0x298] sm:$0xff] %vm2896, %v2863
      %2981 = vst.msk [vmem:[%s175 + $0x2a0] sm:$0xff] %vm2896, %v2865
      %2982 = vst.msk [vmem:[%s175 + $0x2a8] sm:$0xff] %vm2896, %v2867
      %2983 = vst.msk [vmem:[%s175 + $0x2b0] sm:$0xff] %vm2896, %v2869
      %2984 = vst.msk [vmem:[%s175 + $0x2b8] sm:$0xff] %vm2896, %v2871
      %2985 = vst.msk [vmem:[%s175 + $0x2c0] sm:$0xff] %vm2896, %v2873
      %2986 = vst.msk [vmem:[%s175 + $0x2c8] sm:$0xff] %vm2896, %v2875
      %2987 = vst.msk [vmem:[%s175 + $0x2d0] sm:$0xff] %vm2896, %v2877
      %2988 = vst.msk [vmem:[%s175 + $0x2d8] sm:$0xff] %vm2896, %v2879
      %2989 = vst.msk [vmem:[%s175 + $0x2e0] sm:$0xff] %vm2896, %v2881
      %2990 = vst.msk [vmem:[%s175 + $0x2e8] sm:$0xff] %vm2896, %v2883
      %2991 = vst.msk [vmem:[%s175 + $0x2f0] sm:$0xff] %vm2896, %v2885
      %2992 = vst.msk [vmem:[%s175 + $0x2f8] sm:$0xff] %vm2896, %v2887
      %2993 = vst.msk [vmem:[%s175 + $0x300] sm:$0xff] %vm2896, %v2889
      %2994 = vst.msk [vmem:[%s175 + $0x308] sm:$0xff] %vm2896, %v2891
      %2995 = vst.msk [vmem:[%s175 + $0x310] sm:$0xff] %vm2896, %v2893
      %2996 = vst.msk [vmem:[%s175 + $0x318] sm:$0xff] %vm2896, %v2895
      %s2997 = smul.u32 100, %s14
      %p2998 = scmp.lt.s32.totalorder %s2997, 399
      %s2999 = scalar_select %p2998, %s2997, 399
      %s3000 = smul.addr %s2999, 8
      %s3001 = scalar_lea.vmem %s3, %s3000
      // Predicated region
      $region33: #{decoder_forward.7} parent=31 // pred_check
        %p3002 = pneg %p100
      $region34: #{decoder_forward.7} parent=31 // pred_check_branch
        %3004 = sbr.rel (%p3002) target = $region36
      $region35: #{decoder_forward.7} parent=31 // pred_region
        %s3005 = smul.u32 100, %s14
      $region36: #{decoder_forward.7} parent=31 // pred_fallthru
        _
    $region32: #{decoder_forward.7} parent=5 // pred_fallthru
      _
    %p3006 = scmp.le.s32.totalorder 2, %s9
    // Predicated region
    $region37: #{decoder_forward.7} parent=5 // pred_check
      %p3007 = pneg %p3006
    $region38: #{decoder_forward.7} parent=5 // pred_check_branch
      %3009 = sbr.rel (%p3007) target = $region40
    $region39: #{decoder_forward.7} parent=5 // pred_region
      %s3010 = ssub.s32 %s9, 2
      // Predicated region
      $region41: #{decoder_forward.7} parent=39 // pred_check
        %p3011 = pneg %p106
      $region42: #{decoder_forward.7} parent=39 // pred_check_branch
        %3013 = sbr.rel (%p3011) target = $region44
      $region43: #{decoder_forward.7} parent=39 // pred_region
        %s3014 = smul.u32 100, %s15
        %p3015 = scmp.lt.s32.totalorder %s3014, 399
        %s3016 = scalar_select %p3015, %s3014, 399
        %s3017 = smul.addr %s3016, 8
        %s3018 = scalar_lea.vmem %s3, %s3017
      $region44: #{decoder_forward.7} parent=39 // pred_fallthru
        _
    $region40: #{decoder_forward.7} parent=5 // pred_fallthru
      _
  $region6: #{decoder_forward.7} parent=0 // loop_footer
    %s13 = sadd.s32 1, %s9
  $region7: #{decoder_forward.7} parent=0 // loop_footer_branch
    %8 = sbr.rel target = $region3
  $region8: #{decoder_forward.7} parent=0 // loop_exit
    _

</llo_original>
